<compile_context>
chip_gen: v7x
topology: tpu7x:2x2x1
jax: 0.10.0
libtpu: 0.0.40
codegen_flags: <defaults>
</compile_context>

<pallas_src>
import jax
import jax.numpy as jnp
from jax.experimental import pallas as pl
from jax.experimental.pallas import tpu as pltpu

LEAK_SLOPE = 0.2          # module uses negative_slope=0.2
BN_EPS = 1e-5


# --------------------------------------------------------------------------
# Pallas kernels
# --------------------------------------------------------------------------
def conv_bn_lrelu_kernel(x_ref, w_ref, shift_ref, o_ref):
    # x: (tm, K) bf16 patches, w: (K, N) bf16 (BN scale pre-folded),
    # shift: (1, N) f32, o: (tm, N) f32
    y = jnp.dot(x_ref[...], w_ref[...], preferred_element_type=jnp.float32)
    y = y + shift_ref[...]                               # folded conv bias + BN
    o_ref[...] = jnp.where(y >= 0.0, y, LEAK_SLOPE * y)  # leaky ReLU


def conv4_fc_sigmoid_kernel(x_ref, w_ref, shift_ref, fcw_ref, seg_ref,
                            fcb_ref, o_ref):
    # Layer-4 conv (+BN+leakyReLU) fused with the final Linear + sigmoid.
    # x: (P4, K) bf16, w: (K, 64) bf16, shift: (1, 64) f32,
    # fcw: (P4, 64) f32  fc weight with the NCHW-flatten permutation folded in
    #                    and tiled per batch,
    # seg: (B, P4) f32   one-hot batch-segment matrix,
    # fcb: (1, 1) f32,  o: (B, 1) f32.
    y = jnp.dot(x_ref[...], w_ref[...], preferred_element_type=jnp.float32)
    y = y + shift_ref[...]
    act = jnp.where(y >= 0.0, y, LEAK_SLOPE * y)          # (P4, 64)
    prod = act * fcw_ref[...]                             # (P4, 64)
    zc = jnp.dot(seg_ref[...], prod,
                 preferred_element_type=jnp.float32)      # (B, 64) per-batch partials
    z = jnp.sum(zc, axis=-1, keepdims=True) + fcb_ref[...]  # (B, 1) logits
    o_ref[...] = 1.0 / (1.0 + jnp.exp(-z))                # sigmoid


# --------------------------------------------------------------------------
# Wrappers
# --------------------------------------------------------------------------
def pick_tm(P, lo=256, hi=4096):
    """Largest multiple-of-8 tile <= hi that divides P (no padding waste);
    fall back to a padded 1024 tile otherwise."""
    cap = min(P, hi)
    best = 0
    t = 8
    while t <= cap:
        if P % t == 0:
            best = t
        t += 8
    if best >= lo or best == P:
        return best
    return 1024


def conv_bn_lrelu(patches, w_mat, shift):
    """patches: (P, K) bf16, w_mat: (K, N) bf16, shift: (1, N) f32 -> (P, N) f32."""
    P, K = patches.shape
    N = w_mat.shape[1]
    tm = pick_tm(P)
    P_pad = pl.cdiv(P, tm) * tm
    padded = P_pad != P
    if padded:
        patches = jnp.pad(patches, ((0, P_pad - P), (0, 0)))

    out = pl.pallas_call(
        conv_bn_lrelu_kernel,
        out_shape=jax.ShapeDtypeStruct((P_pad, N), jnp.float32),
        grid_spec=pltpu.PrefetchScalarGridSpec(
            num_scalar_prefetch=0,
            grid=(P_pad // tm,),
            in_specs=[
                pl.BlockSpec((tm, K), lambda i: (i, 0)),
                pl.BlockSpec((K, N), lambda i: (0, 0)),
                pl.BlockSpec((1, N), lambda i: (0, 0)),
            ],
            out_specs=pl.BlockSpec((tm, N), lambda i: (i, 0)),
        ),
        compiler_params=pltpu.CompilerParams(
            dimension_semantics=("parallel",)),
    )(patches, w_mat, shift)
    return out[:P] if padded else out


def conv4_fc_sigmoid(patches, w_mat, shift, fcw_tiled, seg, fc_b):
    """Fused layer-4 conv + BN + leakyReLU + Linear + sigmoid.  -> (B, 1)."""
    P, K = patches.shape
    N = w_mat.shape[1]
    B = seg.shape[0]
    return pl.pallas_call(
        conv4_fc_sigmoid_kernel,
        out_shape=jax.ShapeDtypeStruct((B, 1), jnp.float32),
        grid_spec=pltpu.PrefetchScalarGridSpec(
            num_scalar_prefetch=0,
            grid=(1,),
            in_specs=[
                pl.BlockSpec((P, K), lambda i: (0, 0)),
                pl.BlockSpec((K, N), lambda i: (0, 0)),
                pl.BlockSpec((1, N), lambda i: (0, 0)),
                pl.BlockSpec((P, N), lambda i: (0, 0)),
                pl.BlockSpec((B, P), lambda i: (0, 0)),
                pl.BlockSpec((1, 1), lambda i: (0, 0)),
            ],
            out_specs=pl.BlockSpec((B, 1), lambda i: (0, 0)),
        ),
        compiler_params=pltpu.CompilerParams(
            dimension_semantics=("parallel",)),
    )(patches, w_mat, shift, fcw_tiled, seg, fc_b)


# --------------------------------------------------------------------------
# Glue: transpose-free NHWC im2col, parameter prep, forward
# --------------------------------------------------------------------------
def im2col_nhwc(x, kh, kw, stride):
    """x: (B, H, W, C) -> ((B*Ho*Wo, kh*kw*C), (B, Ho, Wo)).

    K index order = i*(kw*C) + j*C + c — matched by reordering the torch
    conv weight (Cout, Cin, kh, kw) -> (kh, kw, Cin, Cout) at param prep.
    No transposes: just strided slices + concat along the channel axis.
    """
    B, H, W, C = x.shape
    Ho = (H - kh) // stride + 1
    Wo = (W - kw) // stride + 1
    cols = []
    for i in range(kh):
        for j in range(kw):
            cols.append(x[:, i:i + stride * Ho:stride,
                          j:j + stride * Wo:stride, :])
    p = jnp.concatenate(cols, axis=-1)          # (B, Ho, Wo, kh*kw*C)
    return p.reshape(B * Ho * Wo, kh * kw * C), (B, Ho, Wo)


def init_params(key):
    """Parameters in the PyTorch module's native layout / init convention."""
    params = {}
    dims = [(1, 16), (16, 32), (32, 48), (48, 64)]
    for li, (cin, cout) in enumerate(dims, start=1):
        key, k1, k2 = jax.random.split(key, 3)
        fan_in = cin * 4 * 4
        bound = 1.0 / jnp.sqrt(fan_in)
        w = jax.random.uniform(k1, (cout, cin, 4, 4), jnp.float32, -bound, bound)
        b = jax.random.uniform(k2, (cout,), jnp.float32, -bound, bound)
        gamma = jnp.ones((cout,), jnp.float32)   # BN weight (torch default)
        beta = jnp.zeros((cout,), jnp.float32)   # BN bias
        rmean = jnp.zeros((cout,), jnp.float32)  # BN running_mean
        rvar = jnp.ones((cout,), jnp.float32)    # BN running_var
        params[f"layer{li}"] = (w, b, gamma, beta, rmean, rvar)

    key, k1, k2 = jax.random.split(key, 3)
    fc_in = 4 * 11 * 64                          # fan-in index f = c*44 + h*11 + w
    bound = 1.0 / jnp.sqrt(fc_in)
    params["fc_w"] = jax.random.uniform(k1, (fc_in, 1), jnp.float32, -bound, bound)
    params["fc_b"] = jax.random.uniform(k2, (1, 1), jnp.float32, -bound, bound)
    return params


def prepare_params(params, batch):
    """One-time weight reorder / BN fold / bf16 cast (all outside the hot path)."""
    prepped = {}
    for li in range(1, 5):
        w, b, gamma, beta, rmean, rvar = params[f"layer{li}"]
        cout, cin, kh, kw = w.shape
        scale = gamma / jnp.sqrt(rvar + BN_EPS)                  # inference BN
        shift = (b - rmean) * scale + beta                       # conv bias folded
        w_mat = jnp.transpose(w, (2, 3, 1, 0)).reshape(kh * kw * cin, cout)
        w_mat = (w_mat * scale[None, :]).astype(jnp.bfloat16)    # fold BN scale
        prepped[f"conv{li}"] = (w_mat, shift[None, :].astype(jnp.float32))

    # Fold the NCHW .view() flatten permutation into the fc weight:
    # torch index f = c*44 + h*11 + w  ->  NHWC row index (h*11 + w), column c.
    fcw = params["fc_w"][:, 0].reshape(64, 4, 11)                # (c, h, w)
    fcw = jnp.transpose(fcw, (1, 2, 0)).reshape(4 * 11, 64)      # (44, 64)
    prepped["fcw_tiled"] = jnp.tile(fcw, (batch, 1)).astype(jnp.float32)   # (B*44, 64)
    prepped["seg"] = jnp.repeat(jnp.eye(batch, dtype=jnp.float32),
                                4 * 11, axis=1)                  # (B, B*44)
    prepped["fc_b"] = params["fc_b"].astype(jnp.float32)         # (1, 1)
    return prepped


@jax.jit
def discriminator_forward(x_nchw, prepped):
    # x: (B, 1, 94, 206) NCHW f32 (PyTorch convention); convert to NHWC once.
    h = jnp.transpose(x_nchw, (0, 2, 3, 1))
    # TODO(synk): F.dropout2d / training-mode BatchNorm batch stats are
    # stochastic / training-only; treated as inference (identity) here.
    for li in range(1, 4):
        w_mat, shift = prepped[f"conv{li}"]
        patches, (B, Ho, Wo) = im2col_nhwc(h, 4, 4, 2)
        out = conv_bn_lrelu(patches.astype(jnp.bfloat16), w_mat, shift)
        h = out.reshape(B, Ho, Wo, w_mat.shape[1])   # pure reshape, no transpose

    # Layer 4 + fc + sigmoid fused: activation never leaves VMEM.
    w_mat, shift = prepped["conv4"]
    patches, _ = im2col_nhwc(h, 4, 4, 2)
    z = conv4_fc_sigmoid(patches.astype(jnp.bfloat16), w_mat, shift,
                         prepped["fcw_tiled"], prepped["seg"], prepped["fc_b"])
    return jnp.squeeze(z)                            # (B,)


# --------------------------------------------------------------------------
if __name__ == "__main__":
    key = jax.random.PRNGKey(0)
    key, xkey = jax.random.split(key)
    # Smallest input consistent with the module: the conv stack must end at a
    # 4x11 spatial map (fc expects 4*11*64 features) -> (B, 1, 94, 206).
    x = jax.random.normal(xkey, (2, 1, 94, 206), dtype=jnp.float32)
    params = init_params(key)
    prepped = prepare_params(params, batch=2)

    out = jax.block_until_ready(discriminator_forward(x, prepped))
    assert out.shape == (2,)
    assert bool(jnp.all(jnp.isfinite(out)))
    print("KERNEL_OK")
</pallas_src>

<mosaic_0001>
module attributes {stable_mosaic.version = 11 : i64} {
  func.func @conv_bn_lrelu_kernel(%arg0: i32, %arg1: memref<3128x16xbf16, #tpu.memory_space<vmem>>, %arg2: memref<16x16xbf16, #tpu.memory_space<vmem>>, %arg3: memref<1x16xf32, #tpu.memory_space<vmem>>, %arg4: memref<3128x16xf32, #tpu.memory_space<vmem>>) attributes {dimension_semantics = [#tpu.dimension_semantics<parallel>], iteration_bounds = array<i64: 3>, scalar_prefetch = 0 : i64, scratch_operands = 0 : i64, tpu.core_type = #tpu.core_type<tc>, window_params = [{transform_indices = @transform_0, window_bounds = array<i64: 3128, 16>}, {pipeline_mode = #tpu.pipeline_mode<synchronous>, transform_indices = @transform_1, window_bounds = array<i64: 16, 16>}, {pipeline_mode = #tpu.pipeline_mode<synchronous>, transform_indices = @transform_2, window_bounds = array<i64: 1, 16>}, {transform_indices = @transform_3, window_bounds = array<i64: 3128, 16>}]} {
    %c0 = arith.constant 0 : index
    %c0_0 = arith.constant 0 : index
    %0 = vector.load %arg1[%c0, %c0_0] : memref<3128x16xbf16, #tpu.memory_space<vmem>>, vector<3128x16xbf16>
    %c0_1 = arith.constant 0 : index
    %c0_2 = arith.constant 0 : index
    %1 = vector.load %arg2[%c0_1, %c0_2] : memref<16x16xbf16, #tpu.memory_space<vmem>>, vector<16x16xbf16>
    %cst = arith.constant dense<0.000000e+00> : vector<3128x16xf32>
    %2 = tpu.matmul %0, %1, %cst {dimension_numbers = #tpu.dot_dimension_numbers<[1], [0], [0], [1], [0, 0, 1, 1], [], []>} : vector<3128x16xbf16>, vector<16x16xbf16>, vector<3128x16xf32> -> vector<3128x16xf32>
    %c0_3 = arith.constant 0 : index
    %c0_4 = arith.constant 0 : index
    %3 = vector.load %arg3[%c0_3, %c0_4] : memref<1x16xf32, #tpu.memory_space<vmem>>, vector<1x16xf32>
    %4 = vector.broadcast %3 : vector<1x16xf32> to vector<3128x16xf32>
    %5 = arith.addf %2, %4 : vector<3128x16xf32>
    %cst_5 = arith.constant 0.000000e+00 : f32
    %6 = vector.broadcast %cst_5 : f32 to vector<3128x16xf32>
    %7 = arith.cmpf oge, %5, %6 : vector<3128x16xf32>
    %cst_6 = arith.constant 2.000000e-01 : f32
    %8 = vector.broadcast %cst_6 : f32 to vector<3128x16xf32>
    %9 = arith.mulf %8, %5 : vector<3128x16xf32>
    %10 = arith.select %7, %5, %9 : vector<3128x16xi1>, vector<3128x16xf32>
    %c0_7 = arith.constant 0 : index
    %c0_8 = arith.constant 0 : index
    %11 = vector.load %arg4[%c0_7, %c0_8] : memref<3128x16xf32, #tpu.memory_space<vmem>>, vector<3128x16xf32>
    tpu.vector_store %arg4[%c0_7, %c0_8], %10 {strides = array<i32>} : memref<3128x16xf32, #tpu.memory_space<vmem>>, vector<3128x16xf32>,
    return
  }
  func.func @transform_0(%arg0: i32) -> (i32, i32) {
    %c0_i32 = arith.constant 0 : i32
    %c0_i32_0 = arith.constant 0 : i32
    return %arg0, %c0_i32 : i32, i32
  }
  func.func @transform_1(%arg0: i32) -> (i32, i32) {
    %c0_i32 = arith.constant 0 : i32
    %c0_i32_0 = arith.constant 0 : i32
    %c0_i32_1 = arith.constant 0 : i32
    return %c0_i32, %c0_i32_0 : i32, i32
  }
  func.func @transform_2(%arg0: i32) -> (i32, i32) {
    %c0_i32 = arith.constant 0 : i32
    %c0_i32_0 = arith.constant 0 : i32
    %c0_i32_1 = arith.constant 0 : i32
    return %c0_i32, %c0_i32_0 : i32, i32
  }
  func.func @transform_3(%arg0: i32) -> (i32, i32) {
    %c0_i32 = arith.constant 0 : i32
    %c0_i32_0 = arith.constant 0 : i32
    return %arg0, %c0_i32 : i32, i32
  }
}

module attributes {stable_mosaic.version = 11 : i64} {
  func.func @conv_bn_lrelu_kernel(%arg0: i32, %arg1: memref<2200x256xbf16, #tpu.memory_space<vmem>>, %arg2: memref<256x32xbf16, #tpu.memory_space<vmem>>, %arg3: memref<1x32xf32, #tpu.memory_space<vmem>>, %arg4: memref<2200x32xf32, #tpu.memory_space<vmem>>) attributes {dimension_semantics = [#tpu.dimension_semantics<parallel>], iteration_bounds = array<i64: 1>, scalar_prefetch = 0 : i64, scratch_operands = 0 : i64, tpu.core_type = #tpu.core_type<tc>, window_params = [{transform_indices = @transform_0, window_bounds = array<i64: 2200, 256>}, {pipeline_mode = #tpu.pipeline_mode<synchronous>, transform_indices = @transform_1, window_bounds = array<i64: 256, 32>}, {pipeline_mode = #tpu.pipeline_mode<synchronous>, transform_indices = @transform_2, window_bounds = array<i64: 1, 32>}, {transform_indices = @transform_3, window_bounds = array<i64: 2200, 32>}]} {
    %c0 = arith.constant 0 : index
    %c0_0 = arith.constant 0 : index
    %0 = vector.load %arg1[%c0, %c0_0] : memref<2200x256xbf16, #tpu.memory_space<vmem>>, vector<2200x256xbf16>
    %c0_1 = arith.constant 0 : index
    %c0_2 = arith.constant 0 : index
    %1 = vector.load %arg2[%c0_1, %c0_2] : memref<256x32xbf16, #tpu.memory_space<vmem>>, vector<256x32xbf16>
    %cst = arith.constant dense<0.000000e+00> : vector<2200x32xf32>
    %2 = tpu.matmul %0, %1, %cst {dimension_numbers = #tpu.dot_dimension_numbers<[1], [0], [0], [1], [0, 0, 1, 1], [], []>} : vector<2200x256xbf16>, vector<256x32xbf16>, vector<2200x32xf32> -> vector<2200x32xf32>
    %c0_3 = arith.constant 0 : index
    %c0_4 = arith.constant 0 : index
    %3 = vector.load %arg3[%c0_3, %c0_4] : memref<1x32xf32, #tpu.memory_space<vmem>>, vector<1x32xf32>
    %4 = vector.broadcast %3 : vector<1x32xf32> to vector<2200x32xf32>
    %5 = arith.addf %2, %4 : vector<2200x32xf32>
    %cst_5 = arith.constant 0.000000e+00 : f32
    %6 = vector.broadcast %cst_5 : f32 to vector<2200x32xf32>
    %7 = arith.cmpf oge, %5, %6 : vector<2200x32xf32>
    %cst_6 = arith.constant 2.000000e-01 : f32
    %8 = vector.broadcast %cst_6 : f32 to vector<2200x32xf32>
    %9 = arith.mulf %8, %5 : vector<2200x32xf32>
    %10 = arith.select %7, %5, %9 : vector<2200x32xi1>, vector<2200x32xf32>
    %c0_7 = arith.constant 0 : index
    %c0_8 = arith.constant 0 : index
    %11 = vector.load %arg4[%c0_7, %c0_8] : memref<2200x32xf32, #tpu.memory_space<vmem>>, vector<2200x32xf32>
    tpu.vector_store %arg4[%c0_7, %c0_8], %10 {strides = array<i32>} : memref<2200x32xf32, #tpu.memory_space<vmem>>, vector<2200x32xf32>,
    return
  }
  func.func @transform_0(%arg0: i32) -> (i32, i32) {
    %c0_i32 = arith.constant 0 : i32
    %c0_i32_0 = arith.constant 0 : i32
    return %arg0, %c0_i32 : i32, i32
  }
  func.func @transform_1(%arg0: i32) -> (i32, i32) {
    %c0_i32 = arith.constant 0 : i32
    %c0_i32_0 = arith.constant 0 : i32
    %c0_i32_1 = arith.constant 0 : i32
    return %c0_i32, %c0_i32_0 : i32, i32
  }
  func.func @transform_2(%arg0: i32) -> (i32, i32) {
    %c0_i32 = arith.constant 0 : i32
    %c0_i32_0 = arith.constant 0 : i32
    %c0_i32_1 = arith.constant 0 : i32
    return %c0_i32, %c0_i32_0 : i32, i32
  }
  func.func @transform_3(%arg0: i32) -> (i32, i32) {
    %c0_i32 = arith.constant 0 : i32
    %c0_i32_0 = arith.constant 0 : i32
    return %arg0, %c0_i32 : i32, i32
  }
}

module attributes {stable_mosaic.version = 11 : i64} {
  func.func @conv_bn_lrelu_kernel(%arg0: i32, %arg1: memref<480x512xbf16, #tpu.memory_space<vmem>>, %arg2: memref<512x48xbf16, #tpu.memory_space<vmem>>, %arg3: memref<1x48xf32, #tpu.memory_space<vmem>>, %arg4: memref<480x48xf32, #tpu.memory_space<vmem>>) attributes {dimension_semantics = [#tpu.dimension_semantics<parallel>], iteration_bounds = array<i64: 1>, scalar_prefetch = 0 : i64, scratch_operands = 0 : i64, tpu.core_type = #tpu.core_type<tc>, window_params = [{transform_indices = @transform_0, window_bounds = array<i64: 480, 512>}, {pipeline_mode = #tpu.pipeline_mode<synchronous>, transform_indices = @transform_1, window_bounds = array<i64: 512, 48>}, {pipeline_mode = #tpu.pipeline_mode<synchronous>, transform_indices = @transform_2, window_bounds = array<i64: 1, 48>}, {transform_indices = @transform_3, window_bounds = array<i64: 480, 48>}]} {
    %c0 = arith.constant 0 : index
    %c0_0 = arith.constant 0 : index
    %0 = vector.load %arg1[%c0, %c0_0] : memref<480x512xbf16, #tpu.memory_space<vmem>>, vector<480x512xbf16>
    %c0_1 = arith.constant 0 : index
    %c0_2 = arith.constant 0 : index
    %1 = vector.load %arg2[%c0_1, %c0_2] : memref<512x48xbf16, #tpu.memory_space<vmem>>, vector<512x48xbf16>
    %cst = arith.constant dense<0.000000e+00> : vector<480x48xf32>
    %2 = tpu.matmul %0, %1, %cst {dimension_numbers = #tpu.dot_dimension_numbers<[1], [0], [0], [1], [0, 0, 1, 1], [], []>} : vector<480x512xbf16>, vector<512x48xbf16>, vector<480x48xf32> -> vector<480x48xf32>
    %c0_3 = arith.constant 0 : index
    %c0_4 = arith.constant 0 : index
    %3 = vector.load %arg3[%c0_3, %c0_4] : memref<1x48xf32, #tpu.memory_space<vmem>>, vector<1x48xf32>
    %4 = vector.broadcast %3 : vector<1x48xf32> to vector<480x48xf32>
    %5 = arith.addf %2, %4 : vector<480x48xf32>
    %cst_5 = arith.constant 0.000000e+00 : f32
    %6 = vector.broadcast %cst_5 : f32 to vector<480x48xf32>
    %7 = arith.cmpf oge, %5, %6 : vector<480x48xf32>
    %cst_6 = arith.constant 2.000000e-01 : f32
    %8 = vector.broadcast %cst_6 : f32 to vector<480x48xf32>
    %9 = arith.mulf %8, %5 : vector<480x48xf32>
    %10 = arith.select %7, %5, %9 : vector<480x48xi1>, vector<480x48xf32>
    %c0_7 = arith.constant 0 : index
    %c0_8 = arith.constant 0 : index
    %11 = vector.load %arg4[%c0_7, %c0_8] : memref<480x48xf32, #tpu.memory_space<vmem>>, vector<480x48xf32>
    tpu.vector_store %arg4[%c0_7, %c0_8], %10 {strides = array<i32>} : memref<480x48xf32, #tpu.memory_space<vmem>>, vector<480x48xf32>,
    return
  }
  func.func @transform_0(%arg0: i32) -> (i32, i32) {
    %c0_i32 = arith.constant 0 : i32
    %c0_i32_0 = arith.constant 0 : i32
    return %arg0, %c0_i32 : i32, i32
  }
  func.func @transform_1(%arg0: i32) -> (i32, i32) {
    %c0_i32 = arith.constant 0 : i32
    %c0_i32_0 = arith.constant 0 : i32
    %c0_i32_1 = arith.constant 0 : i32
    return %c0_i32, %c0_i32_0 : i32, i32
  }
  func.func @transform_2(%arg0: i32) -> (i32, i32) {
    %c0_i32 = arith.constant 0 : i32
    %c0_i32_0 = arith.constant 0 : i32
    %c0_i32_1 = arith.constant 0 : i32
    return %c0_i32, %c0_i32_0 : i32, i32
  }
  func.func @transform_3(%arg0: i32) -> (i32, i32) {
    %c0_i32 = arith.constant 0 : i32
    %c0_i32_0 = arith.constant 0 : i32
    return %arg0, %c0_i32 : i32, i32
  }
}

module attributes {stable_mosaic.version = 11 : i64} {
  func.func @conv4_fc_sigmoid_kernel(%arg0: i32, %arg1: memref<88x768xbf16, #tpu.memory_space<vmem>>, %arg2: memref<768x64xbf16, #tpu.memory_space<vmem>>, %arg3: memref<1x64xf32, #tpu.memory_space<vmem>>, %arg4: memref<88x64xf32, #tpu.memory_space<vmem>>, %arg5: memref<2x88xf32, #tpu.memory_space<vmem>>, %arg6: memref<1x1xf32, #tpu.memory_space<vmem>>, %arg7: memref<2x1xf32, #tpu.memory_space<vmem>>) attributes {dimension_semantics = [#tpu.dimension_semantics<parallel>], iteration_bounds = array<i64: 1>, scalar_prefetch = 0 : i64, scratch_operands = 0 : i64, tpu.core_type = #tpu.core_type<tc>, window_params = [{pipeline_mode = #tpu.pipeline_mode<synchronous>, transform_indices = @transform_0, window_bounds = array<i64: 88, 768>}, {pipeline_mode = #tpu.pipeline_mode<synchronous>, transform_indices = @transform_1, window_bounds = array<i64: 768, 64>}, {pipeline_mode = #tpu.pipeline_mode<synchronous>, transform_indices = @transform_2, window_bounds = array<i64: 1, 64>}, {pipeline_mode = #tpu.pipeline_mode<synchronous>, transform_indices = @transform_3, window_bounds = array<i64: 88, 64>}, {pipeline_mode = #tpu.pipeline_mode<synchronous>, transform_indices = @transform_4, window_bounds = array<i64: 2, 88>}, {pipeline_mode = #tpu.pipeline_mode<synchronous>, transform_indices = @transform_5, window_bounds = array<i64: 1, 1>}, {pipeline_mode = #tpu.pipeline_mode<synchronous>, transform_indices = @transform_6, window_bounds = array<i64: 2, 1>}]} {
    %c0 = arith.constant 0 : index
    %c0_0 = arith.constant 0 : index
    %0 = vector.load %arg1[%c0, %c0_0] : memref<88x768xbf16, #tpu.memory_space<vmem>>, vector<88x768xbf16>
    %c0_1 = arith.constant 0 : index
    %c0_2 = arith.constant 0 : index
    %1 = vector.load %arg2[%c0_1, %c0_2] : memref<768x64xbf16, #tpu.memory_space<vmem>>, vector<768x64xbf16>
    %cst = arith.constant dense<0.000000e+00> : vector<88x64xf32>
    %2 = tpu.matmul %0, %1, %cst {dimension_numbers = #tpu.dot_dimension_numbers<[1], [0], [0], [1], [0, 0, 1, 1], [], []>} : vector<88x768xbf16>, vector<768x64xbf16>, vector<88x64xf32> -> vector<88x64xf32>
    %c0_3 = arith.constant 0 : index
    %c0_4 = arith.constant 0 : index
    %3 = vector.load %arg3[%c0_3, %c0_4] : memref<1x64xf32, #tpu.memory_space<vmem>>, vector<1x64xf32>
    %4 = vector.broadcast %3 : vector<1x64xf32> to vector<88x64xf32>
    %5 = arith.addf %2, %4 : vector<88x64xf32>
    %cst_5 = arith.constant 0.000000e+00 : f32
    %6 = vector.broadcast %cst_5 : f32 to vector<88x64xf32>
    %7 = arith.cmpf oge, %5, %6 : vector<88x64xf32>
    %cst_6 = arith.constant 2.000000e-01 : f32
    %8 = vector.broadcast %cst_6 : f32 to vector<88x64xf32>
    %9 = arith.mulf %8, %5 : vector<88x64xf32>
    %10 = arith.select %7, %5, %9 : vector<88x64xi1>, vector<88x64xf32>
    %c0_7 = arith.constant 0 : index
    %c0_8 = arith.constant 0 : index
    %11 = vector.load %arg4[%c0_7, %c0_8] : memref<88x64xf32, #tpu.memory_space<vmem>>, vector<88x64xf32>
    %12 = arith.mulf %10, %11 : vector<88x64xf32>
    %c0_9 = arith.constant 0 : index
    %c0_10 = arith.constant 0 : index
    %13 = vector.load %arg5[%c0_9, %c0_10] : memref<2x88xf32, #tpu.memory_space<vmem>>, vector<2x88xf32>
    %cst_11 = arith.constant dense<0.000000e+00> : vector<2x64xf32>
    %14 = tpu.matmul %13, %12, %cst_11 {dimension_numbers = #tpu.dot_dimension_numbers<[1], [0], [0], [1], [0, 0, 1, 1], [], []>} : vector<2x88xf32>, vector<88x64xf32>, vector<2x64xf32> -> vector<2x64xf32>
    %cst_12 = arith.constant dense<0.000000e+00> : vector<2xf32>
    %15 = vector.multi_reduction <add>, %14, %cst_12 [1] : vector<2x64xf32> to vector<2xf32>
    %16 = vector.shape_cast %15 : vector<2xf32> to vector<2x1xf32>
    %c0_13 = arith.constant 0 : index
    %c0_14 = arith.constant 0 : index
    %17 = vector.load %arg6[%c0_13, %c0_14] : memref<1x1xf32, #tpu.memory_space<vmem>>, vector<1x1xf32>
    %18 = vector.broadcast %17 : vector<1x1xf32> to vector<2x1xf32>
    %19 = arith.addf %16, %18 : vector<2x1xf32>
    %cst_15 = arith.constant 0.000000e+00 : f32
    %20 = vector.broadcast %cst_15 : f32 to vector<2x1xf32>
    %21 = arith.subf %20, %19 : vector<2x1xf32>
    %22 = math.exp %21 : vector<2x1xf32>
    %cst_16 = arith.constant 1.000000e+00 : f32
    %23 = vector.broadcast %cst_16 : f32 to vector<2x1xf32>
    %24 = arith.addf %23, %22 : vector<2x1xf32>
    %cst_17 = arith.constant 1.000000e+00 : f32
    %25 = vector.broadcast %cst_17 : f32 to vector<2x1xf32>
    %26 = arith.divf %25, %24 : vector<2x1xf32>
    %c0_18 = arith.constant 0 : index
    %c0_19 = arith.constant 0 : index
    %27 = vector.load %arg7[%c0_18, %c0_19] : memref<2x1xf32, #tpu.memory_space<vmem>>, vector<2x1xf32>
    tpu.vector_store %arg7[%c0_18, %c0_19], %26 {strides = array<i32>} : memref<2x1xf32, #tpu.memory_space<vmem>>, vector<2x1xf32>,
    return
  }
  func.func @transform_0(%arg0: i32) -> (i32, i32) {
    %c0_i32 = arith.constant 0 : i32
    %c0_i32_0 = arith.constant 0 : i32
    %c0_i32_1 = arith.constant 0 : i32
    return %c0_i32, %c0_i32_0 : i32, i32
  }
  func.func @transform_1(%arg0: i32) -> (i32, i32) {
    %c0_i32 = arith.constant 0 : i32
    %c0_i32_0 = arith.constant 0 : i32
    %c0_i32_1 = arith.constant 0 : i32
    return %c0_i32, %c0_i32_0 : i32, i32
  }
  func.func @transform_2(%arg0: i32) -> (i32, i32) {
    %c0_i32 = arith.constant 0 : i32
    %c0_i32_0 = arith.constant 0 : i32
    %c0_i32_1 = arith.constant 0 : i32
    return %c0_i32, %c0_i32_0 : i32, i32
  }
  func.func @transform_3(%arg0: i32) -> (i32, i32) {
    %c0_i32 = arith.constant 0 : i32
    %c0_i32_0 = arith.constant 0 : i32
    %c0_i32_1 = arith.constant 0 : i32
    return %c0_i32, %c0_i32_0 : i32, i32
  }
  func.func @transform_4(%arg0: i32) -> (i32, i32) {
    %c0_i32 = arith.constant 0 : i32
    %c0_i32_0 = arith.constant 0 : i32
    %c0_i32_1 = arith.constant 0 : i32
    return %c0_i32, %c0_i32_0 : i32, i32
  }
  func.func @transform_5(%arg0: i32) -> (i32, i32) {
    %c0_i32 = arith.constant 0 : i32
    %c0_i32_0 = arith.constant 0 : i32
    %c0_i32_1 = arith.constant 0 : i32
    return %c0_i32, %c0_i32_0 : i32, i32
  }
  func.func @transform_6(%arg0: i32) -> (i32, i32) {
    %c0_i32 = arith.constant 0 : i32
    %c0_i32_0 = arith.constant 0 : i32
    %c0_i32_1 = arith.constant 0 : i32
    return %c0_i32, %c0_i32_0 : i32, i32
  }
}

</mosaic_0001>

<llo_original>
// kernel: discriminator_forward.4
$region0: #{discriminator_forward.4}
  #allocation0 [shape = 'u32[]', space=smem, size = 0x4, offset = 0x4, fixed_abs, tag = 'smem constant byte address 0x4 - core index']
  #allocation1 [shape = 'u32[144,128]{1,0:T(1,128)}', space=vmem, size = 0x12000, scoped, tag = 'internal scratch']
  %s0 = inlined_call_operand.vmem [shape: bf16[9384,16], index: 0, kind: input, shape index: {}]
  %s1 = inlined_call_operand.vmem [shape: bf16[16,16], index: 1, kind: input, shape index: {}]
  %s2 = inlined_call_operand.vmem [shape: f32[1,16], index: 2, kind: input, shape index: {}]
  %s3 = inlined_call_operand.vmem [shape: f32[9384,16], index: 3, kind: output, shape index: {}]
  %s4 = sld [smem:[#allocation0]]
  $region45: #{discriminator_forward.4} parent=0
    _
  %s6 = ssub.s32 1, %s4
  %s7 = scalar_select 0, %s6, %s4
  loop: start=0, step=1, limit=5
  $region2: #{discriminator_forward.4} parent=0 // loop_pre_header
    _
  $region3: #{discriminator_forward.4} parent=0 // loop_header
    %s9 = sphi 0, %s13
    %p10 = scmp.ge.s32.totalorder %s9, 5
    %s19 = sphi 0, %s21
    %s22 = sphi 0, %s19
    %s23 = sphi 0, %s22
    %s39 = sphi 0, %s23
    %s43 = sphi 0, %s43
    %s45 = sphi 0, %s43
    %s46 = sphi 0, %s45
    %s60 = sphi 0, %s46
    %s64 = sphi 0, %s64
    %s66 = sphi 0, %s64
    %s67 = sphi 0, %s66
    %s81 = sphi 0, %s67
    %s87 = sphi 0, %s89
    %s90 = sphi 0, %s87
    %s91 = sphi 0, %s90
    %s107 = sphi 0, %s91
  $region4: #{discriminator_forward.4} parent=0 // loop_header_branch
    %12 = sbr.rel (%p10) target = $region8
  $region5: #{discriminator_forward.4} parent=0 // loop_body
    %s14 = ssub.s32 %s9, 1
    %s15 = ssub.s32 %s9, 2
    %s16 = sadd.s32 %s9, 1
    %s17 = ssub.s32 %s9, %s16
    %p18 = scmp.eq.s32.totalorder %s17, 0
    %s20 = sadd.s32 %s19, 1
    %s21 = scalar_select %p18, %s19, %s20
    %p24 = pneg %p18
    %p25 = scmp.eq.s32.totalorder %s9, 2
    %p26 = por %p24, %p25
    %p27 = scmp.ne.s32.totalorder %s19, %s22
    %p28 = scmp.eq.s32.totalorder %s9, 0
    %p29 = por %p27, %p28
    %p30 = scmp.ne.s32.totalorder %s19, %s22
    %p31 = scmp.eq.s32.totalorder %s14, 2
    %p32 = por %p30, %p31
    %p33 = scmp.ne.s32.totalorder %s22, %s23
    %p34 = scmp.eq.s32.totalorder %s14, 0
    %p35 = por %p33, %p34
    %p36 = scmp.ne.s32.totalorder %s22, %s23
    %p37 = scmp.eq.s32.totalorder %s15, 2
    %p38 = por %p36, %p37
    %p40 = scmp.ne.s32.totalorder %s23, %s39
    %p41 = scmp.eq.s32.totalorder %s15, 0
    %p42 = por %p40, %p41
    %s44 = sadd.s32 %s43, 1
    %p47 = scmp.eq.s32.totalorder %s9, 2
    %p48 = scmp.ne.s32.totalorder %s43, %s45
    %p49 = scmp.eq.s32.totalorder %s9, 0
    %p50 = por %p48, %p49
    %p51 = scmp.ne.s32.totalorder %s43, %s45
    %p52 = scmp.eq.s32.totalorder %s14, 2
    %p53 = por %p51, %p52
    %p54 = scmp.ne.s32.totalorder %s45, %s46
    %p55 = scmp.eq.s32.totalorder %s14, 0
    %p56 = por %p54, %p55
    %p57 = scmp.ne.s32.totalorder %s45, %s46
    %p58 = scmp.eq.s32.totalorder %s15, 2
    %p59 = por %p57, %p58
    %p61 = scmp.ne.s32.totalorder %s46, %s60
    %p62 = scmp.eq.s32.totalorder %s15, 0
    %p63 = por %p61, %p62
    %s65 = sadd.s32 %s64, 1
    %p68 = scmp.eq.s32.totalorder %s9, 2
    %p69 = scmp.ne.s32.totalorder %s64, %s66
    %p70 = scmp.eq.s32.totalorder %s9, 0
    %p71 = por %p69, %p70
    %p72 = scmp.ne.s32.totalorder %s64, %s66
    %p73 = scmp.eq.s32.totalorder %s14, 2
    %p74 = por %p72, %p73
    %p75 = scmp.ne.s32.totalorder %s66, %s67
    %p76 = scmp.eq.s32.totalorder %s14, 0
    %p77 = por %p75, %p76
    %p78 = scmp.ne.s32.totalorder %s66, %s67
    %p79 = scmp.eq.s32.totalorder %s15, 2
    %p80 = por %p78, %p79
    %p82 = scmp.ne.s32.totalorder %s67, %s81
    %p83 = scmp.eq.s32.totalorder %s15, 0
    %p84 = por %p82, %p83
    %s85 = ssub.s32 %s9, %s16
    %p86 = scmp.eq.s32.totalorder %s85, 0
    %s88 = sadd.s32 %s87, 1
    %s89 = scalar_select %p86, %s87, %s88
    %p92 = pneg %p86
    %p93 = scmp.eq.s32.totalorder %s9, 2
    %p94 = por %p92, %p93
    %p95 = scmp.ne.s32.totalorder %s87, %s90
    %p96 = scmp.eq.s32.totalorder %s9, 0
    %p97 = por %p95, %p96
    %p98 = scmp.ne.s32.totalorder %s87, %s90
    %p99 = scmp.eq.s32.totalorder %s14, 2
    %p100 = por %p98, %p99
    %p101 = scmp.ne.s32.totalorder %s90, %s91
    %p102 = scmp.eq.s32.totalorder %s14, 0
    %p103 = por %p101, %p102
    %p104 = scmp.ne.s32.totalorder %s90, %s91
    %p105 = scmp.eq.s32.totalorder %s15, 2
    %p106 = por %p104, %p105
    %p108 = scmp.ne.s32.totalorder %s91, %s107
    %p109 = scmp.eq.s32.totalorder %s15, 0
    %p110 = por %p108, %p109
    %p111 = scmp.le.s32.totalorder 1, %s9
    %p112 = scmp.lt.s32.totalorder %s9, 4
    %p113 = pnand %p111, %p112
    %p114 = pneg %p113
    // Predicated region
    $region9: #{discriminator_forward.4} parent=5 // pred_check
      _
    $region10: #{discriminator_forward.4} parent=5 // pred_check_branch
      %116 = sbr.rel (%p113) target = $region12
    $region11: #{discriminator_forward.4} parent=5 // pred_region
      %s117 = ssub.s32 %s9, 1
      // Predicated region
      $region13: #{discriminator_forward.4} parent=11 // pred_check
        %p118 = pneg %p56
      $region14: #{discriminator_forward.4} parent=11 // pred_check_branch
        %120 = sbr.rel (%p118) target = $region16
      $region15: #{discriminator_forward.4} parent=11 // pred_region
        _
      $region16: #{discriminator_forward.4} parent=11 // pred_fallthru
        _
      // Predicated region
      $region17: #{discriminator_forward.4} parent=11 // pred_check
        %p121 = pneg %p77
      $region18: #{discriminator_forward.4} parent=11 // pred_check_branch
        %123 = sbr.rel (%p121) target = $region20
      $region19: #{discriminator_forward.4} parent=11 // pred_region
        _
      $region20: #{discriminator_forward.4} parent=11 // pred_fallthru
        _
    $region12: #{discriminator_forward.4} parent=5 // pred_fallthru
      _
    %p124 = scmp.lt.s32.totalorder %s9, 3
    // Predicated region
    $region21: #{discriminator_forward.4} parent=5 // pred_check
      %p125 = pneg %p124
    $region22: #{discriminator_forward.4} parent=5 // pred_check_branch
      %127 = sbr.rel (%p125) target = $region24
    $region23: #{discriminator_forward.4} parent=5 // pred_region
      // Predicated region
      $region25: #{discriminator_forward.4} parent=23 // pred_check
        %p128 = pneg %p29
      $region26: #{discriminator_forward.4} parent=23 // pred_check_branch
        %130 = sbr.rel (%p128) target = $region28
      $region27: #{discriminator_forward.4} parent=23 // pred_region
        %s131 = smul.u32 391, %s9
        %p132 = scmp.lt.s32.totalorder %s131, 1172
        %s133 = scalar_select %p132, %s131, 1172
        %s134 = smul.addr %s133, 4
        %s135 = scalar_lea.vmem %s0, %s134
        %s136 = smul.u32 391, %s9
      $region28: #{discriminator_forward.4} parent=23 // pred_fallthru
        _
    $region24: #{discriminator_forward.4} parent=5 // pred_fallthru
      _
    %p137 = scmp.le.s32.totalorder 1, %s9
    %p138 = scmp.lt.s32.totalorder %s9, 4
    %p139 = pnand %p137, %p138
    %p140 = pneg %p139
    // Predicated region
    $region29: #{discriminator_forward.4} parent=5 // pred_check
      _
    $region30: #{discriminator_forward.4} parent=5 // pred_check_branch
      %142 = sbr.rel (%p139) target = $region32
    $region31: #{discriminator_forward.4} parent=5 // pred_region
      %s143 = ssub.s32 %s9, 1
      %s144 = smul.u32 391, %s14
      %p145 = scmp.lt.s32.totalorder %s144, 1172
      %s146 = scalar_select %p145, %s144, 1172
      %s147 = smul.addr %s146, 4
      %s148 = scalar_lea.vmem %s0, %s147
      %p149 = pneg %p35
      %p150 = pneg %p32
      %p151 = pneg %p56
      %p152 = pneg %p53
      %p153 = pneg %p77
      %p154 = pneg %p74
      %p155 = pneg %p103
      %p156 = pneg %p100
      %s157 = smul.u32 391, %s14
      %p158 = scmp.lt.s32.totalorder %s157, 1172
      %s159 = scalar_select %p158, %s157, 1172
      %s160 = smul.addr %s159, 8
      %s161 = scalar_lea.vmem %s3, %s160
      %s162 = smul.u32 391, %s14
      %p163 = scmp.lt.s32.totalorder %s162, 1172
      %s164 = scalar_select %p163, %s162, 1172
      %s165 = smul.addr %s164, 4
      %s166 = scalar_lea.vmem %s0, %s165
      %s167 = smul.u32 391, %s14
      %s168 = smul.u32 391, %s14
      %p169 = scmp.lt.s32.totalorder %s168, 1172
      %s170 = scalar_select %p169, %s168, 1172
      %s171 = smul.addr %s170, 8
      %s172 = scalar_lea.vmem %s3, %s171
      %s173 = smul.u32 391, %s14
      %v175 = vld [vmem:[%s166] sm:$0xf]
      %v176 = vld [vmem:[%s166 + $0x4] sm:$0xf]
      %v177 = vld [vmem:[%s166 + $0x8] sm:$0xf]
      %v178 = vld [vmem:[%s166 + $0xc] sm:$0xf]
      %v179 = vld [vmem:[%s166 + $0x10] sm:$0xf]
      %v180 = vld [vmem:[%s166 + $0x14] sm:$0xf]
      %v181 = vld [vmem:[%s166 + $0x18] sm:$0xf]
      %v182 = vld [vmem:[%s166 + $0x1c] sm:$0xf]
      %v183 = vld [vmem:[%s166 + $0x20] sm:$0xf]
      %v184 = vld [vmem:[%s166 + $0x24] sm:$0xf]
      %v185 = vld [vmem:[%s166 + $0x28] sm:$0xf]
      %v186 = vld [vmem:[%s166 + $0x2c] sm:$0xf]
      %v187 = vld [vmem:[%s166 + $0x30] sm:$0xf]
      %v188 = vld [vmem:[%s166 + $0x34] sm:$0xf]
      %v189 = vld [vmem:[%s166 + $0x38] sm:$0xf]
      %v190 = vld [vmem:[%s166 + $0x3c] sm:$0xf]
      %v191 = vld [vmem:[%s166 + $0x40] sm:$0xf]
      %v192 = vld [vmem:[%s166 + $0x44] sm:$0xf]
      %v193 = vld [vmem:[%s166 + $0x48] sm:$0xf]
      %v194 = vld [vmem:[%s166 + $0x4c] sm:$0xf]
      %v195 = vld [vmem:[%s166 + $0x50] sm:$0xf]
      %v196 = vld [vmem:[%s166 + $0x54] sm:$0xf]
      %v197 = vld [vmem:[%s166 + $0x58] sm:$0xf]
      %v198 = vld [vmem:[%s166 + $0x5c] sm:$0xf]
      %v199 = vld [vmem:[%s166 + $0x60] sm:$0xf]
      %v200 = vld [vmem:[%s166 + $0x64] sm:$0xf]
      %v201 = vld [vmem:[%s166 + $0x68] sm:$0xf]
      %v202 = vld [vmem:[%s166 + $0x6c] sm:$0xf]
      %v203 = vld [vmem:[%s166 + $0x70] sm:$0xf]
      %v204 = vld [vmem:[%s166 + $0x74] sm:$0xf]
      %v205 = vld [vmem:[%s166 + $0x78] sm:$0xf]
      %v206 = vld [vmem:[%s166 + $0x7c] sm:$0xf]
      %v207 = vld [vmem:[%s166 + $0x80] sm:$0xf]
      %v208 = vld [vmem:[%s166 + $0x84] sm:$0xf]
      %v209 = vld [vmem:[%s166 + $0x88] sm:$0xf]
      %v210 = vld [vmem:[%s166 + $0x8c] sm:$0xf]
      %v211 = vld [vmem:[%s166 + $0x90] sm:$0xf]
      %v212 = vld [vmem:[%s166 + $0x94] sm:$0xf]
      %v213 = vld [vmem:[%s166 + $0x98] sm:$0xf]
      %v214 = vld [vmem:[%s166 + $0x9c] sm:$0xf]
      %v215 = vld [vmem:[%s166 + $0xa0] sm:$0xf]
      %v216 = vld [vmem:[%s166 + $0xa4] sm:$0xf]
      %v217 = vld [vmem:[%s166 + $0xa8] sm:$0xf]
      %v218 = vld [vmem:[%s166 + $0xac] sm:$0xf]
      %v219 = vld [vmem:[%s166 + $0xb0] sm:$0xf]
      %v220 = vld [vmem:[%s166 + $0xb4] sm:$0xf]
      %v221 = vld [vmem:[%s166 + $0xb8] sm:$0xf]
      %v222 = vld [vmem:[%s166 + $0xbc] sm:$0xf]
      %v223 = vld [vmem:[%s166 + $0xc0] sm:$0xf]
      %v224 = vld [vmem:[%s166 + $0xc4] sm:$0xf]
      %v225 = vld [vmem:[%s166 + $0xc8] sm:$0xf]
      %v226 = vld [vmem:[%s166 + $0xcc] sm:$0xf]
      %v227 = vld [vmem:[%s166 + $0xd0] sm:$0xf]
      %v228 = vld [vmem:[%s166 + $0xd4] sm:$0xf]
      %v229 = vld [vmem:[%s166 + $0xd8] sm:$0xf]
      %v230 = vld [vmem:[%s166 + $0xdc] sm:$0xf]
      %v231 = vld [vmem:[%s166 + $0xe0] sm:$0xf]
      %v232 = vld [vmem:[%s166 + $0xe4] sm:$0xf]
      %v233 = vld [vmem:[%s166 + $0xe8] sm:$0xf]
      %v234 = vld [vmem:[%s166 + $0xec] sm:$0xf]
      %v235 = vld [vmem:[%s166 + $0xf0] sm:$0xf]
      %v236 = vld [vmem:[%s166 + $0xf4] sm:$0xf]
      %v237 = vld [vmem:[%s166 + $0xf8] sm:$0xf]
      %v238 = vld [vmem:[%s166 + $0xfc] sm:$0xf]
      %v239 = vld [vmem:[%s166 + $0x100] sm:$0xf]
      %v240 = vld [vmem:[%s166 + $0x104] sm:$0xf]
      %v241 = vld [vmem:[%s166 + $0x108] sm:$0xf]
      %v242 = vld [vmem:[%s166 + $0x10c] sm:$0xf]
      %v243 = vld [vmem:[%s166 + $0x110] sm:$0xf]
      %v244 = vld [vmem:[%s166 + $0x114] sm:$0xf]
      %v245 = vld [vmem:[%s166 + $0x118] sm:$0xf]
      %v246 = vld [vmem:[%s166 + $0x11c] sm:$0xf]
      %v247 = vld [vmem:[%s166 + $0x120] sm:$0xf]
      %v248 = vld [vmem:[%s166 + $0x124] sm:$0xf]
      %v249 = vld [vmem:[%s166 + $0x128] sm:$0xf]
      %v250 = vld [vmem:[%s166 + $0x12c] sm:$0xf]
      %v251 = vld [vmem:[%s166 + $0x130] sm:$0xf]
      %v252 = vld [vmem:[%s166 + $0x134] sm:$0xf]
      %v253 = vld [vmem:[%s166 + $0x138] sm:$0xf]
      %v254 = vld [vmem:[%s166 + $0x13c] sm:$0xf]
      %v255 = vld [vmem:[%s166 + $0x140] sm:$0xf]
      %v256 = vld [vmem:[%s166 + $0x144] sm:$0xf]
      %v257 = vld [vmem:[%s166 + $0x148] sm:$0xf]
      %v258 = vld [vmem:[%s166 + $0x14c] sm:$0xf]
      %v259 = vld [vmem:[%s166 + $0x150] sm:$0xf]
      %v260 = vld [vmem:[%s166 + $0x154] sm:$0xf]
      %v261 = vld [vmem:[%s166 + $0x158] sm:$0xf]
      %v262 = vld [vmem:[%s166 + $0x15c] sm:$0xf]
      %v263 = vld [vmem:[%s166 + $0x160] sm:$0xf]
      %v264 = vld [vmem:[%s166 + $0x164] sm:$0xf]
      %v265 = vld [vmem:[%s166 + $0x168] sm:$0xf]
      %v266 = vld [vmem:[%s166 + $0x16c] sm:$0xf]
      %v267 = vld [vmem:[%s166 + $0x170] sm:$0xf]
      %v268 = vld [vmem:[%s166 + $0x174] sm:$0xf]
      %v269 = vld [vmem:[%s166 + $0x178] sm:$0xf]
      %v270 = vld [vmem:[%s166 + $0x17c] sm:$0xf]
      %v271 = vld [vmem:[%s166 + $0x180] sm:$0xf]
      %v272 = vld [vmem:[%s166 + $0x184] sm:$0xf]
      %v273 = vld [vmem:[%s166 + $0x188] sm:$0xf]
      %v274 = vld [vmem:[%s166 + $0x18c] sm:$0xf]
      %v275 = vld [vmem:[%s166 + $0x190] sm:$0xf]
      %v276 = vld [vmem:[%s166 + $0x194] sm:$0xf]
      %v277 = vld [vmem:[%s166 + $0x198] sm:$0xf]
      %v278 = vld [vmem:[%s166 + $0x19c] sm:$0xf]
      %v279 = vld [vmem:[%s166 + $0x1a0] sm:$0xf]
      %v280 = vld [vmem:[%s166 + $0x1a4] sm:$0xf]
      %v281 = vld [vmem:[%s166 + $0x1a8] sm:$0xf]
      %v282 = vld [vmem:[%s166 + $0x1ac] sm:$0xf]
      %v283 = vld [vmem:[%s166 + $0x1b0] sm:$0xf]
      %v284 = vld [vmem:[%s166 + $0x1b4] sm:$0xf]
      %v285 = vld [vmem:[%s166 + $0x1b8] sm:$0xf]
      %v286 = vld [vmem:[%s166 + $0x1bc] sm:$0xf]
      %v287 = vld [vmem:[%s166 + $0x1c0] sm:$0xf]
      %v288 = vld [vmem:[%s166 + $0x1c4] sm:$0xf]
      %v289 = vld [vmem:[%s166 + $0x1c8] sm:$0xf]
      %v290 = vld [vmem:[%s166 + $0x1cc] sm:$0xf]
      %v291 = vld [vmem:[%s166 + $0x1d0] sm:$0xf]
      %v292 = vld [vmem:[%s166 + $0x1d4] sm:$0xf]
      %v293 = vld [vmem:[%s166 + $0x1d8] sm:$0xf]
      %v294 = vld [vmem:[%s166 + $0x1dc] sm:$0xf]
      %v295 = vld [vmem:[%s166 + $0x1e0] sm:$0xf]
      %v296 = vld [vmem:[%s166 + $0x1e4] sm:$0xf]
      %v297 = vld [vmem:[%s166 + $0x1e8] sm:$0xf]
      %v298 = vld [vmem:[%s166 + $0x1ec] sm:$0xf]
      %v299 = vld [vmem:[%s166 + $0x1f0] sm:$0xf]
      %v300 = vld [vmem:[%s166 + $0x1f4] sm:$0xf]
      %v301 = vld [vmem:[%s166 + $0x1f8] sm:$0xf]
      %v302 = vld [vmem:[%s166 + $0x1fc] sm:$0xf]
      %v303 = vld [vmem:[%s166 + $0x200] sm:$0xf]
      %v304 = vld [vmem:[%s166 + $0x204] sm:$0xf]
      %v305 = vld [vmem:[%s166 + $0x208] sm:$0xf]
      %v306 = vld [vmem:[%s166 + $0x20c] sm:$0xf]
      %v307 = vld [vmem:[%s166 + $0x210] sm:$0xf]
      %v308 = vld [vmem:[%s166 + $0x214] sm:$0xf]
      %v309 = vld [vmem:[%s166 + $0x218] sm:$0xf]
      %v310 = vld [vmem:[%s166 + $0x21c] sm:$0xf]
      %v311 = vld [vmem:[%s166 + $0x220] sm:$0xf]
      %v312 = vld [vmem:[%s166 + $0x224] sm:$0xf]
      %v313 = vld [vmem:[%s166 + $0x228] sm:$0xf]
      %v314 = vld [vmem:[%s166 + $0x22c] sm:$0xf]
      %v315 = vld [vmem:[%s166 + $0x230] sm:$0xf]
      %v316 = vld [vmem:[%s166 + $0x234] sm:$0xf]
      %v317 = vld [vmem:[%s166 + $0x238] sm:$0xf]
      %v318 = vld [vmem:[%s166 + $0x23c] sm:$0xf]
      %v319 = vld [vmem:[%s166 + $0x240] sm:$0xf]
      %v320 = vld [vmem:[%s166 + $0x244] sm:$0xf]
      %v321 = vld [vmem:[%s166 + $0x248] sm:$0xf]
      %v322 = vld [vmem:[%s166 + $0x24c] sm:$0xf]
      %v323 = vld [vmem:[%s166 + $0x250] sm:$0xf]
      %v324 = vld [vmem:[%s166 + $0x254] sm:$0xf]
      %v325 = vld [vmem:[%s166 + $0x258] sm:$0xf]
      %v326 = vld [vmem:[%s166 + $0x25c] sm:$0xf]
      %v327 = vld [vmem:[%s166 + $0x260] sm:$0xf]
      %v328 = vld [vmem:[%s166 + $0x264] sm:$0xf]
      %v329 = vld [vmem:[%s166 + $0x268] sm:$0xf]
      %v330 = vld [vmem:[%s166 + $0x26c] sm:$0xf]
      %v331 = vld [vmem:[%s166 + $0x270] sm:$0xf]
      %v332 = vld [vmem:[%s166 + $0x274] sm:$0xf]
      %v333 = vld [vmem:[%s166 + $0x278] sm:$0xf]
      %v334 = vld [vmem:[%s166 + $0x27c] sm:$0xf]
      %v335 = vld [vmem:[%s166 + $0x280] sm:$0xf]
      %v336 = vld [vmem:[%s166 + $0x284] sm:$0xf]
      %v337 = vld [vmem:[%s166 + $0x288] sm:$0xf]
      %v338 = vld [vmem:[%s166 + $0x28c] sm:$0xf]
      %v339 = vld [vmem:[%s166 + $0x290] sm:$0xf]
      %v340 = vld [vmem:[%s166 + $0x294] sm:$0xf]
      %v341 = vld [vmem:[%s166 + $0x298] sm:$0xf]
      %v342 = vld [vmem:[%s166 + $0x29c] sm:$0xf]
      %v343 = vld [vmem:[%s166 + $0x2a0] sm:$0xf]
      %v344 = vld [vmem:[%s166 + $0x2a4] sm:$0xf]
      %v345 = vld [vmem:[%s166 + $0x2a8] sm:$0xf]
      %v346 = vld [vmem:[%s166 + $0x2ac] sm:$0xf]
      %v347 = vld [vmem:[%s166 + $0x2b0] sm:$0xf]
      %v348 = vld [vmem:[%s166 + $0x2b4] sm:$0xf]
      %v349 = vld [vmem:[%s166 + $0x2b8] sm:$0xf]
      %v350 = vld [vmem:[%s166 + $0x2bc] sm:$0xf]
      %v351 = vld [vmem:[%s166 + $0x2c0] sm:$0xf]
      %v352 = vld [vmem:[%s166 + $0x2c4] sm:$0xf]
      %v353 = vld [vmem:[%s166 + $0x2c8] sm:$0xf]
      %v354 = vld [vmem:[%s166 + $0x2cc] sm:$0xf]
      %v355 = vld [vmem:[%s166 + $0x2d0] sm:$0xf]
      %v356 = vld [vmem:[%s166 + $0x2d4] sm:$0xf]
      %v357 = vld [vmem:[%s166 + $0x2d8] sm:$0xf]
      %v358 = vld [vmem:[%s166 + $0x2dc] sm:$0xf]
      %v359 = vld [vmem:[%s166 + $0x2e0] sm:$0xf]
      %v360 = vld [vmem:[%s166 + $0x2e4] sm:$0xf]
      %v361 = vld [vmem:[%s166 + $0x2e8] sm:$0xf]
      %v362 = vld [vmem:[%s166 + $0x2ec] sm:$0xf]
      %v363 = vld [vmem:[%s166 + $0x2f0] sm:$0xf]
      %v364 = vld [vmem:[%s166 + $0x2f4] sm:$0xf]
      %v365 = vld [vmem:[%s166 + $0x2f8] sm:$0xf]
      %v366 = vld [vmem:[%s166 + $0x2fc] sm:$0xf]
      %v367 = vld [vmem:[%s166 + $0x300] sm:$0xf]
      %v368 = vld [vmem:[%s166 + $0x304] sm:$0xf]
      %v369 = vld [vmem:[%s166 + $0x308] sm:$0xf]
      %v370 = vld [vmem:[%s166 + $0x30c] sm:$0xf]
      %v371 = vld [vmem:[%s166 + $0x310] sm:$0xf]
      %v372 = vld [vmem:[%s166 + $0x314] sm:$0xf]
      %v373 = vld [vmem:[%s166 + $0x318] sm:$0xf]
      %v374 = vld [vmem:[%s166 + $0x31c] sm:$0xf]
      %v375 = vld [vmem:[%s166 + $0x320] sm:$0xf]
      %v376 = vld [vmem:[%s166 + $0x324] sm:$0xf]
      %v377 = vld [vmem:[%s166 + $0x328] sm:$0xf]
      %v378 = vld [vmem:[%s166 + $0x32c] sm:$0xf]
      %v379 = vld [vmem:[%s166 + $0x330] sm:$0xf]
      %v380 = vld [vmem:[%s166 + $0x334] sm:$0xf]
      %v381 = vld [vmem:[%s166 + $0x338] sm:$0xf]
      %v382 = vld [vmem:[%s166 + $0x33c] sm:$0xf]
      %v383 = vld [vmem:[%s166 + $0x340] sm:$0xf]
      %v384 = vld [vmem:[%s166 + $0x344] sm:$0xf]
      %v385 = vld [vmem:[%s166 + $0x348] sm:$0xf]
      %v386 = vld [vmem:[%s166 + $0x34c] sm:$0xf]
      %v387 = vld [vmem:[%s166 + $0x350] sm:$0xf]
      %v388 = vld [vmem:[%s166 + $0x354] sm:$0xf]
      %v389 = vld [vmem:[%s166 + $0x358] sm:$0xf]
      %v390 = vld [vmem:[%s166 + $0x35c] sm:$0xf]
      %v391 = vld [vmem:[%s166 + $0x360] sm:$0xf]
      %v392 = vld [vmem:[%s166 + $0x364] sm:$0xf]
      %v393 = vld [vmem:[%s166 + $0x368] sm:$0xf]
      %v394 = vld [vmem:[%s166 + $0x36c] sm:$0xf]
      %v395 = vld [vmem:[%s166 + $0x370] sm:$0xf]
      %v396 = vld [vmem:[%s166 + $0x374] sm:$0xf]
      %v397 = vld [vmem:[%s166 + $0x378] sm:$0xf]
      %v398 = vld [vmem:[%s166 + $0x37c] sm:$0xf]
      %v399 = vld [vmem:[%s166 + $0x380] sm:$0xf]
      %v400 = vld [vmem:[%s166 + $0x384] sm:$0xf]
      %v401 = vld [vmem:[%s166 + $0x388] sm:$0xf]
      %v402 = vld [vmem:[%s166 + $0x38c] sm:$0xf]
      %v403 = vld [vmem:[%s166 + $0x390] sm:$0xf]
      %v404 = vld [vmem:[%s166 + $0x394] sm:$0xf]
      %v405 = vld [vmem:[%s166 + $0x398] sm:$0xf]
      %v406 = vld [vmem:[%s166 + $0x39c] sm:$0xf]
      %v407 = vld [vmem:[%s166 + $0x3a0] sm:$0xf]
      %v408 = vld [vmem:[%s166 + $0x3a4] sm:$0xf]
      %v409 = vld [vmem:[%s166 + $0x3a8] sm:$0xf]
      %v410 = vld [vmem:[%s166 + $0x3ac] sm:$0xf]
      %v411 = vld [vmem:[%s166 + $0x3b0] sm:$0xf]
      %v412 = vld [vmem:[%s166 + $0x3b4] sm:$0xf]
      %v413 = vld [vmem:[%s166 + $0x3b8] sm:$0xf]
      %v414 = vld [vmem:[%s166 + $0x3bc] sm:$0xf]
      %v415 = vld [vmem:[%s166 + $0x3c0] sm:$0xf]
      %v416 = vld [vmem:[%s166 + $0x3c4] sm:$0xf]
      %v417 = vld [vmem:[%s166 + $0x3c8] sm:$0xf]
      %v418 = vld [vmem:[%s166 + $0x3cc] sm:$0xf]
      %v419 = vld [vmem:[%s166 + $0x3d0] sm:$0xf]
      %v420 = vld [vmem:[%s166 + $0x3d4] sm:$0xf]
      %v421 = vld [vmem:[%s166 + $0x3d8] sm:$0xf]
      %v422 = vld [vmem:[%s166 + $0x3dc] sm:$0xf]
      %v423 = vld [vmem:[%s166 + $0x3e0] sm:$0xf]
      %v424 = vld [vmem:[%s166 + $0x3e4] sm:$0xf]
      %v425 = vld [vmem:[%s166 + $0x3e8] sm:$0xf]
      %v426 = vld [vmem:[%s166 + $0x3ec] sm:$0xf]
      %v427 = vld [vmem:[%s166 + $0x3f0] sm:$0xf]
      %v428 = vld [vmem:[%s166 + $0x3f4] sm:$0xf]
      %v429 = vld [vmem:[%s166 + $0x3f8] sm:$0xf]
      %v430 = vld [vmem:[%s166 + $0x3fc] sm:$0xf]
      %v431 = vld [vmem:[%s166 + $0x400] sm:$0xf]
      %v432 = vld [vmem:[%s166 + $0x404] sm:$0xf]
      %v433 = vld [vmem:[%s166 + $0x408] sm:$0xf]
      %v434 = vld [vmem:[%s166 + $0x40c] sm:$0xf]
      %v435 = vld [vmem:[%s166 + $0x410] sm:$0xf]
      %v436 = vld [vmem:[%s166 + $0x414] sm:$0xf]
      %v437 = vld [vmem:[%s166 + $0x418] sm:$0xf]
      %v438 = vld [vmem:[%s166 + $0x41c] sm:$0xf]
      %v439 = vld [vmem:[%s166 + $0x420] sm:$0xf]
      %v440 = vld [vmem:[%s166 + $0x424] sm:$0xf]
      %v441 = vld [vmem:[%s166 + $0x428] sm:$0xf]
      %v442 = vld [vmem:[%s166 + $0x42c] sm:$0xf]
      %v443 = vld [vmem:[%s166 + $0x430] sm:$0xf]
      %v444 = vld [vmem:[%s166 + $0x434] sm:$0xf]
      %v445 = vld [vmem:[%s166 + $0x438] sm:$0xf]
      %v446 = vld [vmem:[%s166 + $0x43c] sm:$0xf]
      %v447 = vld [vmem:[%s166 + $0x440] sm:$0xf]
      %v448 = vld [vmem:[%s166 + $0x444] sm:$0xf]
      %v449 = vld [vmem:[%s166 + $0x448] sm:$0xf]
      %v450 = vld [vmem:[%s166 + $0x44c] sm:$0xf]
      %v451 = vld [vmem:[%s166 + $0x450] sm:$0xf]
      %v452 = vld [vmem:[%s166 + $0x454] sm:$0xf]
      %v453 = vld [vmem:[%s166 + $0x458] sm:$0xf]
      %v454 = vld [vmem:[%s166 + $0x45c] sm:$0xf]
      %v455 = vld [vmem:[%s166 + $0x460] sm:$0xf]
      %v456 = vld [vmem:[%s166 + $0x464] sm:$0xf]
      %v457 = vld [vmem:[%s166 + $0x468] sm:$0xf]
      %v458 = vld [vmem:[%s166 + $0x46c] sm:$0xf]
      %v459 = vld [vmem:[%s166 + $0x470] sm:$0xf]
      %v460 = vld [vmem:[%s166 + $0x474] sm:$0xf]
      %v461 = vld [vmem:[%s166 + $0x478] sm:$0xf]
      %v462 = vld [vmem:[%s166 + $0x47c] sm:$0xf]
      %v463 = vld [vmem:[%s166 + $0x480] sm:$0xf]
      %v464 = vld [vmem:[%s166 + $0x484] sm:$0xf]
      %v465 = vld [vmem:[%s166 + $0x488] sm:$0xf]
      %v466 = vld [vmem:[%s166 + $0x48c] sm:$0xf]
      %v467 = vld [vmem:[%s166 + $0x490] sm:$0xf]
      %v468 = vld [vmem:[%s166 + $0x494] sm:$0xf]
      %v469 = vld [vmem:[%s166 + $0x498] sm:$0xf]
      %v470 = vld [vmem:[%s166 + $0x49c] sm:$0xf]
      %v471 = vld [vmem:[%s166 + $0x4a0] sm:$0xf]
      %v472 = vld [vmem:[%s166 + $0x4a4] sm:$0xf]
      %v473 = vld [vmem:[%s166 + $0x4a8] sm:$0xf]
      %v474 = vld [vmem:[%s166 + $0x4ac] sm:$0xf]
      %v475 = vld [vmem:[%s166 + $0x4b0] sm:$0xf]
      %v476 = vld [vmem:[%s166 + $0x4b4] sm:$0xf]
      %v477 = vld [vmem:[%s166 + $0x4b8] sm:$0xf]
      %v478 = vld [vmem:[%s166 + $0x4bc] sm:$0xf]
      %v479 = vld [vmem:[%s166 + $0x4c0] sm:$0xf]
      %v480 = vld [vmem:[%s166 + $0x4c4] sm:$0xf]
      %v481 = vld [vmem:[%s166 + $0x4c8] sm:$0xf]
      %v482 = vld [vmem:[%s166 + $0x4cc] sm:$0xf]
      %v483 = vld [vmem:[%s166 + $0x4d0] sm:$0xf]
      %v484 = vld [vmem:[%s166 + $0x4d4] sm:$0xf]
      %v485 = vld [vmem:[%s166 + $0x4d8] sm:$0xf]
      %v486 = vld [vmem:[%s166 + $0x4dc] sm:$0xf]
      %v487 = vld [vmem:[%s166 + $0x4e0] sm:$0xf]
      %v488 = vld [vmem:[%s166 + $0x4e4] sm:$0xf]
      %v489 = vld [vmem:[%s166 + $0x4e8] sm:$0xf]
      %v490 = vld [vmem:[%s166 + $0x4ec] sm:$0xf]
      %v491 = vld [vmem:[%s166 + $0x4f0] sm:$0xf]
      %v492 = vld [vmem:[%s166 + $0x4f4] sm:$0xf]
      %v493 = vld [vmem:[%s166 + $0x4f8] sm:$0xf]
      %v494 = vld [vmem:[%s166 + $0x4fc] sm:$0xf]
      %v495 = vld [vmem:[%s166 + $0x500] sm:$0xf]
      %v496 = vld [vmem:[%s166 + $0x504] sm:$0xf]
      %v497 = vld [vmem:[%s166 + $0x508] sm:$0xf]
      %v498 = vld [vmem:[%s166 + $0x50c] sm:$0xf]
      %v499 = vld [vmem:[%s166 + $0x510] sm:$0xf]
      %v500 = vld [vmem:[%s166 + $0x514] sm:$0xf]
      %v501 = vld [vmem:[%s166 + $0x518] sm:$0xf]
      %v502 = vld [vmem:[%s166 + $0x51c] sm:$0xf]
      %v503 = vld [vmem:[%s166 + $0x520] sm:$0xf]
      %v504 = vld [vmem:[%s166 + $0x524] sm:$0xf]
      %v505 = vld [vmem:[%s166 + $0x528] sm:$0xf]
      %v506 = vld [vmem:[%s166 + $0x52c] sm:$0xf]
      %v507 = vld [vmem:[%s166 + $0x530] sm:$0xf]
      %v508 = vld [vmem:[%s166 + $0x534] sm:$0xf]
      %v509 = vld [vmem:[%s166 + $0x538] sm:$0xf]
      %v510 = vld [vmem:[%s166 + $0x53c] sm:$0xf]
      %v511 = vld [vmem:[%s166 + $0x540] sm:$0xf]
      %v512 = vld [vmem:[%s166 + $0x544] sm:$0xf]
      %v513 = vld [vmem:[%s166 + $0x548] sm:$0xf]
      %v514 = vld [vmem:[%s166 + $0x54c] sm:$0xf]
      %v515 = vld [vmem:[%s166 + $0x550] sm:$0xf]
      %v516 = vld [vmem:[%s166 + $0x554] sm:$0xf]
      %v517 = vld [vmem:[%s166 + $0x558] sm:$0xf]
      %v518 = vld [vmem:[%s166 + $0x55c] sm:$0xf]
      %v519 = vld [vmem:[%s166 + $0x560] sm:$0xf]
      %v520 = vld [vmem:[%s166 + $0x564] sm:$0xf]
      %v521 = vld [vmem:[%s166 + $0x568] sm:$0xf]
      %v522 = vld [vmem:[%s166 + $0x56c] sm:$0xf]
      %v523 = vld [vmem:[%s166 + $0x570] sm:$0xf]
      %v524 = vld [vmem:[%s166 + $0x574] sm:$0xf]
      %v525 = vld [vmem:[%s166 + $0x578] sm:$0xf]
      %v526 = vld [vmem:[%s166 + $0x57c] sm:$0xf]
      %v527 = vld [vmem:[%s166 + $0x580] sm:$0xf]
      %v528 = vld [vmem:[%s166 + $0x584] sm:$0xf]
      %v529 = vld [vmem:[%s166 + $0x588] sm:$0xf]
      %v530 = vld [vmem:[%s166 + $0x58c] sm:$0xf]
      %v531 = vld [vmem:[%s166 + $0x590] sm:$0xf]
      %v532 = vld [vmem:[%s166 + $0x594] sm:$0xf]
      %v533 = vld [vmem:[%s166 + $0x598] sm:$0xf]
      %v534 = vld [vmem:[%s166 + $0x59c] sm:$0xf]
      %v535 = vld [vmem:[%s166 + $0x5a0] sm:$0xf]
      %v536 = vld [vmem:[%s166 + $0x5a4] sm:$0xf]
      %v537 = vld [vmem:[%s166 + $0x5a8] sm:$0xf]
      %v538 = vld [vmem:[%s166 + $0x5ac] sm:$0xf]
      %v539 = vld [vmem:[%s166 + $0x5b0] sm:$0xf]
      %v540 = vld [vmem:[%s166 + $0x5b4] sm:$0xf]
      %v541 = vld [vmem:[%s166 + $0x5b8] sm:$0xf]
      %v542 = vld [vmem:[%s166 + $0x5bc] sm:$0xf]
      %v543 = vld [vmem:[%s166 + $0x5c0] sm:$0xf]
      %v544 = vld [vmem:[%s166 + $0x5c4] sm:$0xf]
      %v545 = vld [vmem:[%s166 + $0x5c8] sm:$0xf]
      %v546 = vld [vmem:[%s166 + $0x5cc] sm:$0xf]
      %v547 = vld [vmem:[%s166 + $0x5d0] sm:$0xf]
      %v548 = vld [vmem:[%s166 + $0x5d4] sm:$0xf]
      %v549 = vld [vmem:[%s166 + $0x5d8] sm:$0xf]
      %v550 = vld [vmem:[%s166 + $0x5dc] sm:$0xf]
      %v551 = vld [vmem:[%s166 + $0x5e0] sm:$0xf]
      %v552 = vld [vmem:[%s166 + $0x5e4] sm:$0xf]
      %v553 = vld [vmem:[%s166 + $0x5e8] sm:$0xf]
      %v554 = vld [vmem:[%s166 + $0x5ec] sm:$0xf]
      %v555 = vld [vmem:[%s166 + $0x5f0] sm:$0xf]
      %v556 = vld [vmem:[%s166 + $0x5f4] sm:$0xf]
      %v557 = vld [vmem:[%s166 + $0x5f8] sm:$0xf]
      %v558 = vld [vmem:[%s166 + $0x5fc] sm:$0xf]
      %v559 = vld [vmem:[%s166 + $0x600] sm:$0xf]
      %v560 = vld [vmem:[%s166 + $0x604] sm:$0xf]
      %v561 = vld [vmem:[%s166 + $0x608] sm:$0xf]
      %v562 = vld [vmem:[%s166 + $0x60c] sm:$0xf]
      %v563 = vld [vmem:[%s166 + $0x610] sm:$0xf]
      %v564 = vld [vmem:[%s166 + $0x614] sm:$0xf]
      %v565 = vld [vmem:[%s166 + $0x618] sm:$0xf]
      %v566 = vld [vmem:[%s1] sm:$0xf]
      %v567 = vld [vmem:[%s1 + $0x4] sm:$0xf]
      %v568 = vld [vmem:[%s2] sm:$0x1]
      %v570 = vlaneseq
      %v571 = vshrl.u32 %v570, 7
      %v572 = vsub.s32 0, %v571
      %v573 = vrot.slane %v568, %v572
      %v966 = vunpack.c.l.b16 %v175
      %v967 = vunpack.c.l.b16 %v176
      %v968 = vunpack.c.l.b16 %v177
      %v969 = vunpack.c.l.b16 %v178
      %v970 = vunpack.c.l.b16 %v179
      %v971 = vunpack.c.l.b16 %v180
      %v972 = vunpack.c.l.b16 %v181
      %v973 = vunpack.c.l.b16 %v182
      %v974 = vunpack.c.l.b16 %v183
      %v975 = vunpack.c.l.b16 %v184
      %v976 = vunpack.c.l.b16 %v185
      %v977 = vunpack.c.l.b16 %v186
      %v978 = vunpack.c.l.b16 %v187
      %v979 = vunpack.c.l.b16 %v188
      %v980 = vunpack.c.l.b16 %v189
      %v981 = vunpack.c.l.b16 %v190
      %v982 = vunpack.c.l.b16 %v191
      %v983 = vunpack.c.l.b16 %v192
      %v984 = vunpack.c.l.b16 %v193
      %v985 = vunpack.c.l.b16 %v194
      %v986 = vunpack.c.l.b16 %v195
      %v987 = vunpack.c.l.b16 %v196
      %v988 = vunpack.c.l.b16 %v197
      %v989 = vunpack.c.l.b16 %v198
      %v990 = vunpack.c.l.b16 %v199
      %v991 = vunpack.c.l.b16 %v200
      %v992 = vunpack.c.l.b16 %v201
      %v993 = vunpack.c.l.b16 %v202
      %v994 = vunpack.c.l.b16 %v203
      %v995 = vunpack.c.l.b16 %v204
      %v996 = vunpack.c.l.b16 %v205
      %v997 = vunpack.c.l.b16 %v206
      %v998 = vunpack.c.l.b16 %v207
      %v999 = vunpack.c.l.b16 %v208
      %v1000 = vunpack.c.l.b16 %v209
      %v1001 = vunpack.c.l.b16 %v210
      %v1002 = vunpack.c.l.b16 %v211
      %v1003 = vunpack.c.l.b16 %v212
      %v1004 = vunpack.c.l.b16 %v213
      %v1005 = vunpack.c.l.b16 %v214
      %v1006 = vunpack.c.l.b16 %v215
      %v1007 = vunpack.c.l.b16 %v216
      %v1008 = vunpack.c.l.b16 %v217
      %v1009 = vunpack.c.l.b16 %v218
      %v1010 = vunpack.c.l.b16 %v219
      %v1011 = vunpack.c.l.b16 %v220
      %v1012 = vunpack.c.l.b16 %v221
      %v1013 = vunpack.c.l.b16 %v222
      %v1014 = vunpack.c.l.b16 %v223
      %v1015 = vunpack.c.l.b16 %v224
      %v1016 = vunpack.c.l.b16 %v225
      %v1017 = vunpack.c.l.b16 %v226
      %v1018 = vunpack.c.l.b16 %v227
      %v1019 = vunpack.c.l.b16 %v228
      %v1020 = vunpack.c.l.b16 %v229
      %v1021 = vunpack.c.l.b16 %v230
      %v1022 = vunpack.c.l.b16 %v231
      %v1023 = vunpack.c.l.b16 %v232
      %v1024 = vunpack.c.l.b16 %v233
      %v1025 = vunpack.c.l.b16 %v234
      %v1026 = vunpack.c.l.b16 %v235
      %v1027 = vunpack.c.l.b16 %v236
      %v1028 = vunpack.c.l.b16 %v237
      %v1029 = vunpack.c.l.b16 %v238
      %v1030 = vunpack.c.l.b16 %v239
      %v1031 = vunpack.c.l.b16 %v240
      %v1032 = vunpack.c.l.b16 %v241
      %v1033 = vunpack.c.l.b16 %v242
      %v1034 = vunpack.c.l.b16 %v243
      %v1035 = vunpack.c.l.b16 %v244
      %v1036 = vunpack.c.l.b16 %v245
      %v1037 = vunpack.c.l.b16 %v246
      %v1038 = vunpack.c.l.b16 %v247
      %v1039 = vunpack.c.l.b16 %v248
      %v1040 = vunpack.c.l.b16 %v249
      %v1041 = vunpack.c.l.b16 %v250
      %v1042 = vunpack.c.l.b16 %v251
      %v1043 = vunpack.c.l.b16 %v252
      %v1044 = vunpack.c.l.b16 %v253
      %v1045 = vunpack.c.l.b16 %v254
      %v1046 = vunpack.c.l.b16 %v255
      %v1047 = vunpack.c.l.b16 %v256
      %v1048 = vunpack.c.l.b16 %v257
      %v1049 = vunpack.c.l.b16 %v258
      %v1050 = vunpack.c.l.b16 %v259
      %v1051 = vunpack.c.l.b16 %v260
      %v1052 = vunpack.c.l.b16 %v261
      %v1053 = vunpack.c.l.b16 %v262
      %v1054 = vunpack.c.l.b16 %v263
      %v1055 = vunpack.c.l.b16 %v264
      %v1056 = vunpack.c.l.b16 %v265
      %v1057 = vunpack.c.l.b16 %v266
      %v1058 = vunpack.c.l.b16 %v267
      %v1059 = vunpack.c.l.b16 %v268
      %v1060 = vunpack.c.l.b16 %v269
      %v1061 = vunpack.c.l.b16 %v270
      %v1062 = vunpack.c.l.b16 %v271
      %v1063 = vunpack.c.l.b16 %v272
      %v1064 = vunpack.c.l.b16 %v273
      %v1065 = vunpack.c.l.b16 %v274
      %v1066 = vunpack.c.l.b16 %v275
      %v1067 = vunpack.c.l.b16 %v276
      %v1068 = vunpack.c.l.b16 %v277
      %v1069 = vunpack.c.l.b16 %v278
      %v1070 = vunpack.c.l.b16 %v279
      %v1071 = vunpack.c.l.b16 %v280
      %v1072 = vunpack.c.l.b16 %v281
      %v1073 = vunpack.c.l.b16 %v282
      %v1074 = vunpack.c.l.b16 %v283
      %v1075 = vunpack.c.l.b16 %v284
      %v1076 = vunpack.c.l.b16 %v285
      %v1077 = vunpack.c.l.b16 %v286
      %v1078 = vunpack.c.l.b16 %v287
      %v1079 = vunpack.c.l.b16 %v288
      %v1080 = vunpack.c.l.b16 %v289
      %v1081 = vunpack.c.l.b16 %v290
      %v1082 = vunpack.c.l.b16 %v291
      %v1083 = vunpack.c.l.b16 %v292
      %v1084 = vunpack.c.l.b16 %v293
      %v1085 = vunpack.c.l.b16 %v294
      %v1086 = vunpack.c.l.b16 %v295
      %v1087 = vunpack.c.l.b16 %v296
      %v1088 = vunpack.c.l.b16 %v297
      %v1089 = vunpack.c.l.b16 %v298
      %v1090 = vunpack.c.l.b16 %v299
      %v1091 = vunpack.c.l.b16 %v300
      %v1092 = vunpack.c.l.b16 %v301
      %v1093 = vunpack.c.l.b16 %v302
      %v1094 = vunpack.c.l.b16 %v303
      %v1095 = vunpack.c.l.b16 %v304
      %v1096 = vunpack.c.l.b16 %v305
      %v1097 = vunpack.c.l.b16 %v306
      %v1098 = vunpack.c.l.b16 %v307
      %v1099 = vunpack.c.l.b16 %v308
      %v1100 = vunpack.c.l.b16 %v309
      %v1101 = vunpack.c.l.b16 %v310
      %v1102 = vunpack.c.l.b16 %v311
      %v1103 = vunpack.c.l.b16 %v312
      %v1104 = vunpack.c.l.b16 %v313
      %v1105 = vunpack.c.l.b16 %v314
      %v1106 = vunpack.c.l.b16 %v315
      %v1107 = vunpack.c.l.b16 %v316
      %v1108 = vunpack.c.l.b16 %v317
      %v1109 = vunpack.c.l.b16 %v318
      %v1110 = vunpack.c.l.b16 %v319
      %v1111 = vunpack.c.l.b16 %v320
      %v1112 = vunpack.c.l.b16 %v321
      %v1113 = vunpack.c.l.b16 %v322
      %v1114 = vunpack.c.l.b16 %v323
      %v1115 = vunpack.c.l.b16 %v324
      %v1116 = vunpack.c.l.b16 %v325
      %v1117 = vunpack.c.l.b16 %v326
      %v1118 = vunpack.c.l.b16 %v327
      %v1119 = vunpack.c.l.b16 %v328
      %v1120 = vunpack.c.l.b16 %v329
      %v1121 = vunpack.c.l.b16 %v330
      %v1122 = vunpack.c.l.b16 %v331
      %v1123 = vunpack.c.l.b16 %v332
      %v1124 = vunpack.c.l.b16 %v333
      %v1125 = vunpack.c.l.b16 %v334
      %v1126 = vunpack.c.l.b16 %v335
      %v1127 = vunpack.c.l.b16 %v336
      %v1128 = vunpack.c.l.b16 %v337
      %v1129 = vunpack.c.l.b16 %v338
      %v1130 = vunpack.c.l.b16 %v339
      %v1131 = vunpack.c.l.b16 %v340
      %v1132 = vunpack.c.l.b16 %v341
      %v1133 = vunpack.c.l.b16 %v342
      %v1134 = vunpack.c.l.b16 %v343
      %v1135 = vunpack.c.l.b16 %v344
      %v1136 = vunpack.c.l.b16 %v345
      %v1137 = vunpack.c.l.b16 %v346
      %v1138 = vunpack.c.l.b16 %v347
      %v1139 = vunpack.c.l.b16 %v348
      %v1140 = vunpack.c.l.b16 %v349
      %v1141 = vunpack.c.l.b16 %v350
      %v1142 = vunpack.c.l.b16 %v351
      %v1143 = vunpack.c.l.b16 %v352
      %v1144 = vunpack.c.l.b16 %v353
      %v1145 = vunpack.c.l.b16 %v354
      %v1146 = vunpack.c.l.b16 %v355
      %v1147 = vunpack.c.l.b16 %v356
      %v1148 = vunpack.c.l.b16 %v357
      %v1149 = vunpack.c.l.b16 %v358
      %v1150 = vunpack.c.l.b16 %v359
      %v1151 = vunpack.c.l.b16 %v360
      %v1152 = vunpack.c.l.b16 %v361
      %v1153 = vunpack.c.l.b16 %v362
      %v1154 = vunpack.c.l.b16 %v363
      %v1155 = vunpack.c.l.b16 %v364
      %v1156 = vunpack.c.l.b16 %v365
      %v1157 = vunpack.c.l.b16 %v366
      %v1158 = vunpack.c.l.b16 %v367
      %v1159 = vunpack.c.l.b16 %v368
      %v1160 = vunpack.c.l.b16 %v369
      %v1161 = vunpack.c.l.b16 %v370
      %v1162 = vunpack.c.l.b16 %v371
      %v1163 = vunpack.c.l.b16 %v372
      %v1164 = vunpack.c.l.b16 %v373
      %v1165 = vunpack.c.l.b16 %v374
      %v1166 = vunpack.c.l.b16 %v375
      %v1167 = vunpack.c.l.b16 %v376
      %v1168 = vunpack.c.l.b16 %v377
      %v1169 = vunpack.c.l.b16 %v378
      %v1170 = vunpack.c.l.b16 %v379
      %v1171 = vunpack.c.l.b16 %v380
      %v1172 = vunpack.c.l.b16 %v381
      %v1173 = vunpack.c.l.b16 %v382
      %v1174 = vunpack.c.l.b16 %v383
      %v1175 = vunpack.c.l.b16 %v384
      %v1176 = vunpack.c.l.b16 %v385
      %v1177 = vunpack.c.l.b16 %v386
      %v1178 = vunpack.c.l.b16 %v387
      %v1179 = vunpack.c.l.b16 %v388
      %v1180 = vunpack.c.l.b16 %v389
      %v1181 = vunpack.c.l.b16 %v390
      %v1182 = vunpack.c.l.b16 %v391
      %v1183 = vunpack.c.l.b16 %v392
      %v1184 = vunpack.c.l.b16 %v393
      %v1185 = vunpack.c.l.b16 %v394
      %v1186 = vunpack.c.l.b16 %v395
      %v1187 = vunpack.c.l.b16 %v396
      %v1188 = vunpack.c.l.b16 %v397
      %v1189 = vunpack.c.l.b16 %v398
      %v1190 = vunpack.c.l.b16 %v399
      %v1191 = vunpack.c.l.b16 %v400
      %v1192 = vunpack.c.l.b16 %v401
      %v1193 = vunpack.c.l.b16 %v402
      %v1194 = vunpack.c.l.b16 %v403
      %v1195 = vunpack.c.l.b16 %v404
      %v1196 = vunpack.c.l.b16 %v405
      %v1197 = vunpack.c.l.b16 %v406
      %v1198 = vunpack.c.l.b16 %v407
      %v1199 = vunpack.c.l.b16 %v408
      %v1200 = vunpack.c.l.b16 %v409
      %v1201 = vunpack.c.l.b16 %v410
      %v1202 = vunpack.c.l.b16 %v411
      %v1203 = vunpack.c.l.b16 %v412
      %v1204 = vunpack.c.l.b16 %v413
      %v1205 = vunpack.c.l.b16 %v414
      %v1206 = vunpack.c.l.b16 %v415
      %v1207 = vunpack.c.l.b16 %v416
      %v1208 = vunpack.c.l.b16 %v417
      %v1209 = vunpack.c.l.b16 %v418
      %v1210 = vunpack.c.l.b16 %v419
      %v1211 = vunpack.c.l.b16 %v420
      %v1212 = vunpack.c.l.b16 %v421
      %v1213 = vunpack.c.l.b16 %v422
      %v1214 = vunpack.c.l.b16 %v423
      %v1215 = vunpack.c.l.b16 %v424
      %v1216 = vunpack.c.l.b16 %v425
      %v1217 = vunpack.c.l.b16 %v426
      %v1218 = vunpack.c.l.b16 %v427
      %v1219 = vunpack.c.l.b16 %v428
      %v1220 = vunpack.c.l.b16 %v429
      %v1221 = vunpack.c.l.b16 %v430
      %v1222 = vunpack.c.l.b16 %v431
      %v1223 = vunpack.c.l.b16 %v432
      %v1224 = vunpack.c.l.b16 %v433
      %v1225 = vunpack.c.l.b16 %v434
      %v1226 = vunpack.c.l.b16 %v435
      %v1227 = vunpack.c.l.b16 %v436
      %v1228 = vunpack.c.l.b16 %v437
      %v1229 = vunpack.c.l.b16 %v438
      %v1230 = vunpack.c.l.b16 %v439
      %v1231 = vunpack.c.l.b16 %v440
      %v1232 = vunpack.c.l.b16 %v441
      %v1233 = vunpack.c.l.b16 %v442
      %v1234 = vunpack.c.l.b16 %v443
      %v1235 = vunpack.c.l.b16 %v444
      %v1236 = vunpack.c.l.b16 %v445
      %v1237 = vunpack.c.l.b16 %v446
      %v1238 = vunpack.c.l.b16 %v447
      %v1239 = vunpack.c.l.b16 %v448
      %v1240 = vunpack.c.l.b16 %v449
      %v1241 = vunpack.c.l.b16 %v450
      %v1242 = vunpack.c.l.b16 %v451
      %v1243 = vunpack.c.l.b16 %v452
      %v1244 = vunpack.c.l.b16 %v453
      %v1245 = vunpack.c.l.b16 %v454
      %v1246 = vunpack.c.l.b16 %v455
      %v1247 = vunpack.c.l.b16 %v456
      %v1248 = vunpack.c.l.b16 %v457
      %v1249 = vunpack.c.l.b16 %v458
      %v1250 = vunpack.c.l.b16 %v459
      %v1251 = vunpack.c.l.b16 %v460
      %v1252 = vunpack.c.l.b16 %v461
      %v1253 = vunpack.c.l.b16 %v462
      %v1254 = vunpack.c.l.b16 %v463
      %v1255 = vunpack.c.l.b16 %v464
      %v1256 = vunpack.c.l.b16 %v465
      %v1257 = vunpack.c.l.b16 %v466
      %v1258 = vunpack.c.l.b16 %v467
      %v1259 = vunpack.c.l.b16 %v468
      %v1260 = vunpack.c.l.b16 %v469
      %v1261 = vunpack.c.l.b16 %v470
      %v1262 = vunpack.c.l.b16 %v471
      %v1263 = vunpack.c.l.b16 %v472
      %v1264 = vunpack.c.l.b16 %v473
      %v1265 = vunpack.c.l.b16 %v474
      %v1266 = vunpack.c.l.b16 %v475
      %v1267 = vunpack.c.l.b16 %v476
      %v1268 = vunpack.c.l.b16 %v477
      %v1269 = vunpack.c.l.b16 %v478
      %v1270 = vunpack.c.l.b16 %v479
      %v1271 = vunpack.c.l.b16 %v480
      %v1272 = vunpack.c.l.b16 %v481
      %v1273 = vunpack.c.l.b16 %v482
      %v1274 = vunpack.c.l.b16 %v483
      %v1275 = vunpack.c.l.b16 %v484
      %v1276 = vunpack.c.l.b16 %v485
      %v1277 = vunpack.c.l.b16 %v486
      %v1278 = vunpack.c.l.b16 %v487
      %v1279 = vunpack.c.l.b16 %v488
      %v1280 = vunpack.c.l.b16 %v489
      %v1281 = vunpack.c.l.b16 %v490
      %v1282 = vunpack.c.l.b16 %v491
      %v1283 = vunpack.c.l.b16 %v492
      %v1284 = vunpack.c.l.b16 %v493
      %v1285 = vunpack.c.l.b16 %v494
      %v1286 = vunpack.c.l.b16 %v495
      %v1287 = vunpack.c.l.b16 %v496
      %v1288 = vunpack.c.l.b16 %v497
      %v1289 = vunpack.c.l.b16 %v498
      %v1290 = vunpack.c.l.b16 %v499
      %v1291 = vunpack.c.l.b16 %v500
      %v1292 = vunpack.c.l.b16 %v501
      %v1293 = vunpack.c.l.b16 %v502
      %v1294 = vunpack.c.l.b16 %v503
      %v1295 = vunpack.c.l.b16 %v504
      %v1296 = vunpack.c.l.b16 %v505
      %v1297 = vunpack.c.l.b16 %v506
      %v1298 = vunpack.c.l.b16 %v507
      %v1299 = vunpack.c.l.b16 %v508
      %v1300 = vunpack.c.l.b16 %v509
      %v1301 = vunpack.c.l.b16 %v510
      %v1302 = vunpack.c.l.b16 %v511
      %v1303 = vunpack.c.l.b16 %v512
      %v1304 = vunpack.c.l.b16 %v513
      %v1305 = vunpack.c.l.b16 %v514
      %v1306 = vunpack.c.l.b16 %v515
      %v1307 = vunpack.c.l.b16 %v516
      %v1308 = vunpack.c.l.b16 %v517
      %v1309 = vunpack.c.l.b16 %v518
      %v1310 = vunpack.c.l.b16 %v519
      %v1311 = vunpack.c.l.b16 %v520
      %v1312 = vunpack.c.l.b16 %v521
      %v1313 = vunpack.c.l.b16 %v522
      %v1314 = vunpack.c.l.b16 %v523
      %v1315 = vunpack.c.l.b16 %v524
      %v1316 = vunpack.c.l.b16 %v525
      %v1317 = vunpack.c.l.b16 %v526
      %v1318 = vunpack.c.l.b16 %v527
      %v1319 = vunpack.c.l.b16 %v528
      %v1320 = vunpack.c.l.b16 %v529
      %v1321 = vunpack.c.l.b16 %v530
      %v1322 = vunpack.c.l.b16 %v531
      %v1323 = vunpack.c.l.b16 %v532
      %v1324 = vunpack.c.l.b16 %v533
      %v1325 = vunpack.c.l.b16 %v534
      %v1326 = vunpack.c.l.b16 %v535
      %v1327 = vunpack.c.l.b16 %v536
      %v1328 = vunpack.c.l.b16 %v537
      %v1329 = vunpack.c.l.b16 %v538
      %v1330 = vunpack.c.l.b16 %v539
      %v1331 = vunpack.c.l.b16 %v540
      %v1332 = vunpack.c.l.b16 %v541
      %v1333 = vunpack.c.l.b16 %v542
      %v1334 = vunpack.c.l.b16 %v543
      %v1335 = vunpack.c.l.b16 %v544
      %v1336 = vunpack.c.l.b16 %v545
      %v1337 = vunpack.c.l.b16 %v546
      %v1338 = vunpack.c.l.b16 %v547
      %v1339 = vunpack.c.l.b16 %v548
      %v1340 = vunpack.c.l.b16 %v549
      %v1341 = vunpack.c.l.b16 %v550
      %v1342 = vunpack.c.l.b16 %v551
      %v1343 = vunpack.c.l.b16 %v552
      %v1344 = vunpack.c.l.b16 %v553
      %v1345 = vunpack.c.l.b16 %v554
      %v1346 = vunpack.c.l.b16 %v555
      %v1347 = vunpack.c.l.b16 %v556
      %v1348 = vunpack.c.l.b16 %v557
      %v1349 = vunpack.c.l.b16 %v558
      %v1350 = vunpack.c.l.b16 %v559
      %v1351 = vunpack.c.l.b16 %v560
      %v1352 = vunpack.c.l.b16 %v561
      %v1353 = vunpack.c.l.b16 %v562
      %v1354 = vunpack.c.l.b16 %v563
      %v1355 = vunpack.c.l.b16 %v564
      %v1356 = vunpack.c.l.b16 %v565
      %v1357 = vpack.c.b16 %v967, %v966
      %v1358 = vpack.c.b16 %v969, %v968
      %v1359 = vpack.c.b16 %v971, %v970
      %v1360 = vpack.c.b16 %v973, %v972
      %v1361 = vpack.c.b16 %v975, %v974
      %v1362 = vpack.c.b16 %v977, %v976
      %v1363 = vpack.c.b16 %v979, %v978
      %v1364 = vpack.c.b16 %v981, %v980
      %v1365 = vpack.c.b16 %v983, %v982
      %v1366 = vpack.c.b16 %v985, %v984
      %v1367 = vpack.c.b16 %v987, %v986
      %v1368 = vpack.c.b16 %v989, %v988
      %v1369 = vpack.c.b16 %v991, %v990
      %v1370 = vpack.c.b16 %v993, %v992
      %v1371 = vpack.c.b16 %v995, %v994
      %v1372 = vpack.c.b16 %v997, %v996
      %v1373 = vpack.c.b16 %v999, %v998
      %v1374 = vpack.c.b16 %v1001, %v1000
      %v1375 = vpack.c.b16 %v1003, %v1002
      %v1376 = vpack.c.b16 %v1005, %v1004
      %v1377 = vpack.c.b16 %v1007, %v1006
      %v1378 = vpack.c.b16 %v1009, %v1008
      %v1379 = vpack.c.b16 %v1011, %v1010
      %v1380 = vpack.c.b16 %v1013, %v1012
      %v1381 = vpack.c.b16 %v1015, %v1014
      %v1382 = vpack.c.b16 %v1017, %v1016
      %v1383 = vpack.c.b16 %v1019, %v1018
      %v1384 = vpack.c.b16 %v1021, %v1020
      %v1385 = vpack.c.b16 %v1023, %v1022
      %v1386 = vpack.c.b16 %v1025, %v1024
      %v1387 = vpack.c.b16 %v1027, %v1026
      %v1388 = vpack.c.b16 %v1029, %v1028
      %v1389 = vpack.c.b16 %v1031, %v1030
      %v1390 = vpack.c.b16 %v1033, %v1032
      %v1391 = vpack.c.b16 %v1035, %v1034
      %v1392 = vpack.c.b16 %v1037, %v1036
      %v1393 = vpack.c.b16 %v1039, %v1038
      %v1394 = vpack.c.b16 %v1041, %v1040
      %v1395 = vpack.c.b16 %v1043, %v1042
      %v1396 = vpack.c.b16 %v1045, %v1044
      %v1397 = vpack.c.b16 %v1047, %v1046
      %v1398 = vpack.c.b16 %v1049, %v1048
      %v1399 = vpack.c.b16 %v1051, %v1050
      %v1400 = vpack.c.b16 %v1053, %v1052
      %v1401 = vpack.c.b16 %v1055, %v1054
      %v1402 = vpack.c.b16 %v1057, %v1056
      %v1403 = vpack.c.b16 %v1059, %v1058
      %v1404 = vpack.c.b16 %v1061, %v1060
      %v1405 = vpack.c.b16 %v1063, %v1062
      %v1406 = vpack.c.b16 %v1065, %v1064
      %v1407 = vpack.c.b16 %v1067, %v1066
      %v1408 = vpack.c.b16 %v1069, %v1068
      %v1409 = vpack.c.b16 %v1071, %v1070
      %v1410 = vpack.c.b16 %v1073, %v1072
      %v1411 = vpack.c.b16 %v1075, %v1074
      %v1412 = vpack.c.b16 %v1077, %v1076
      %v1413 = vpack.c.b16 %v1079, %v1078
      %v1414 = vpack.c.b16 %v1081, %v1080
      %v1415 = vpack.c.b16 %v1083, %v1082
      %v1416 = vpack.c.b16 %v1085, %v1084
      %v1417 = vpack.c.b16 %v1087, %v1086
      %v1418 = vpack.c.b16 %v1089, %v1088
      %v1419 = vpack.c.b16 %v1091, %v1090
      %v1420 = vpack.c.b16 %v1093, %v1092
      %v1421 = vpack.c.b16 %v1095, %v1094
      %v1422 = vpack.c.b16 %v1097, %v1096
      %v1423 = vpack.c.b16 %v1099, %v1098
      %v1424 = vpack.c.b16 %v1101, %v1100
      %v1425 = vpack.c.b16 %v1103, %v1102
      %v1426 = vpack.c.b16 %v1105, %v1104
      %v1427 = vpack.c.b16 %v1107, %v1106
      %v1428 = vpack.c.b16 %v1109, %v1108
      %v1429 = vpack.c.b16 %v1111, %v1110
      %v1430 = vpack.c.b16 %v1113, %v1112
      %v1431 = vpack.c.b16 %v1115, %v1114
      %v1432 = vpack.c.b16 %v1117, %v1116
      %v1433 = vpack.c.b16 %v1119, %v1118
      %v1434 = vpack.c.b16 %v1121, %v1120
      %v1435 = vpack.c.b16 %v1123, %v1122
      %v1436 = vpack.c.b16 %v1125, %v1124
      %v1437 = vpack.c.b16 %v1127, %v1126
      %v1438 = vpack.c.b16 %v1129, %v1128
      %v1439 = vpack.c.b16 %v1131, %v1130
      %v1440 = vpack.c.b16 %v1133, %v1132
      %v1441 = vpack.c.b16 %v1135, %v1134
      %v1442 = vpack.c.b16 %v1137, %v1136
      %v1443 = vpack.c.b16 %v1139, %v1138
      %v1444 = vpack.c.b16 %v1141, %v1140
      %v1445 = vpack.c.b16 %v1143, %v1142
      %v1446 = vpack.c.b16 %v1145, %v1144
      %v1447 = vpack.c.b16 %v1147, %v1146
      %v1448 = vpack.c.b16 %v1149, %v1148
      %v1449 = vpack.c.b16 %v1151, %v1150
      %v1450 = vpack.c.b16 %v1153, %v1152
      %v1451 = vpack.c.b16 %v1155, %v1154
      %v1452 = vpack.c.b16 %v1157, %v1156
      %v1453 = vpack.c.b16 %v1159, %v1158
      %v1454 = vpack.c.b16 %v1161, %v1160
      %v1455 = vpack.c.b16 %v1163, %v1162
      %v1456 = vpack.c.b16 %v1165, %v1164
      %v1457 = vpack.c.b16 %v1167, %v1166
      %v1458 = vpack.c.b16 %v1169, %v1168
      %v1459 = vpack.c.b16 %v1171, %v1170
      %v1460 = vpack.c.b16 %v1173, %v1172
      %v1461 = vpack.c.b16 %v1175, %v1174
      %v1462 = vpack.c.b16 %v1177, %v1176
      %v1463 = vpack.c.b16 %v1179, %v1178
      %v1464 = vpack.c.b16 %v1181, %v1180
      %v1465 = vpack.c.b16 %v1183, %v1182
      %v1466 = vpack.c.b16 %v1185, %v1184
      %v1467 = vpack.c.b16 %v1187, %v1186
      %v1468 = vpack.c.b16 %v1189, %v1188
      %v1469 = vpack.c.b16 %v1191, %v1190
      %v1470 = vpack.c.b16 %v1193, %v1192
      %v1471 = vpack.c.b16 %v1195, %v1194
      %v1472 = vpack.c.b16 %v1197, %v1196
      %v1473 = vpack.c.b16 %v1199, %v1198
      %v1474 = vpack.c.b16 %v1201, %v1200
      %v1475 = vpack.c.b16 %v1203, %v1202
      %v1476 = vpack.c.b16 %v1205, %v1204
      %v1477 = vpack.c.b16 %v1207, %v1206
      %v1478 = vpack.c.b16 %v1209, %v1208
      %v1479 = vpack.c.b16 %v1211, %v1210
      %v1480 = vpack.c.b16 %v1213, %v1212
      %v1481 = vpack.c.b16 %v1215, %v1214
      %v1482 = vpack.c.b16 %v1217, %v1216
      %v1483 = vpack.c.b16 %v1219, %v1218
      %v1484 = vpack.c.b16 %v1221, %v1220
      %v1485 = vpack.c.b16 %v1223, %v1222
      %v1486 = vpack.c.b16 %v1225, %v1224
      %v1487 = vpack.c.b16 %v1227, %v1226
      %v1488 = vpack.c.b16 %v1229, %v1228
      %v1489 = vpack.c.b16 %v1231, %v1230
      %v1490 = vpack.c.b16 %v1233, %v1232
      %v1491 = vpack.c.b16 %v1235, %v1234
      %v1492 = vpack.c.b16 %v1237, %v1236
      %v1493 = vpack.c.b16 %v1239, %v1238
      %v1494 = vpack.c.b16 %v1241, %v1240
      %v1495 = vpack.c.b16 %v1243, %v1242
      %v1496 = vpack.c.b16 %v1245, %v1244
      %v1497 = vpack.c.b16 %v1247, %v1246
      %v1498 = vpack.c.b16 %v1249, %v1248
      %v1499 = vpack.c.b16 %v1251, %v1250
      %v1500 = vpack.c.b16 %v1253, %v1252
      %v1501 = vpack.c.b16 %v1255, %v1254
      %v1502 = vpack.c.b16 %v1257, %v1256
      %v1503 = vpack.c.b16 %v1259, %v1258
      %v1504 = vpack.c.b16 %v1261, %v1260
      %v1505 = vpack.c.b16 %v1263, %v1262
      %v1506 = vpack.c.b16 %v1265, %v1264
      %v1507 = vpack.c.b16 %v1267, %v1266
      %v1508 = vpack.c.b16 %v1269, %v1268
      %v1509 = vpack.c.b16 %v1271, %v1270
      %v1510 = vpack.c.b16 %v1273, %v1272
      %v1511 = vpack.c.b16 %v1275, %v1274
      %v1512 = vpack.c.b16 %v1277, %v1276
      %v1513 = vpack.c.b16 %v1279, %v1278
      %v1514 = vpack.c.b16 %v1281, %v1280
      %v1515 = vpack.c.b16 %v1283, %v1282
      %v1516 = vpack.c.b16 %v1285, %v1284
      %v1517 = vpack.c.b16 %v1287, %v1286
      %v1518 = vpack.c.b16 %v1289, %v1288
      %v1519 = vpack.c.b16 %v1291, %v1290
      %v1520 = vpack.c.b16 %v1293, %v1292
      %v1521 = vpack.c.b16 %v1295, %v1294
      %v1522 = vpack.c.b16 %v1297, %v1296
      %v1523 = vpack.c.b16 %v1299, %v1298
      %v1524 = vpack.c.b16 %v1301, %v1300
      %v1525 = vpack.c.b16 %v1303, %v1302
      %v1526 = vpack.c.b16 %v1305, %v1304
      %v1527 = vpack.c.b16 %v1307, %v1306
      %v1528 = vpack.c.b16 %v1309, %v1308
      %v1529 = vpack.c.b16 %v1311, %v1310
      %v1530 = vpack.c.b16 %v1313, %v1312
      %v1531 = vpack.c.b16 %v1315, %v1314
      %v1532 = vpack.c.b16 %v1317, %v1316
      %v1533 = vpack.c.b16 %v1319, %v1318
      %v1534 = vpack.c.b16 %v1321, %v1320
      %v1535 = vpack.c.b16 %v1323, %v1322
      %v1536 = vpack.c.b16 %v1325, %v1324
      %v1537 = vpack.c.b16 %v1327, %v1326
      %v1538 = vpack.c.b16 %v1329, %v1328
      %v1539 = vpack.c.b16 %v1331, %v1330
      %v1540 = vpack.c.b16 %v1333, %v1332
      %v1541 = vpack.c.b16 %v1335, %v1334
      %v1542 = vpack.c.b16 %v1337, %v1336
      %v1543 = vpack.c.b16 %v1339, %v1338
      %v1544 = vpack.c.b16 %v1341, %v1340
      %v1545 = vpack.c.b16 %v1343, %v1342
      %v1546 = vpack.c.b16 %v1345, %v1344
      %v1547 = vpack.c.b16 %v1347, %v1346
      %v1548 = vpack.c.b16 %v1349, %v1348
      %v1549 = vpack.c.b16 %v1351, %v1350
      %v1550 = vpack.c.b16 %v1353, %v1352
      %v1551 = vpack.c.b16 %v1355, %v1354
      %v1552 = vpack.c.b16 %v1356, %v1356
      %v1555 = vunpack.c.l.b16 %v566
      %v1556 = vunpack.c.l.b16 %v567
      %v1557 = vpack.c.b16 %v1556, %v1555
      %vm1559 = vcmask 130048
      %v1561 = vsel %vm1559, %v1357, 0
      %v1564 = vsel %vm1559, %v1358, 0
      %v1567 = vsel %vm1559, %v1359, 0
      %v1570 = vsel %vm1559, %v1360, 0
      %v1573 = vsel %vm1559, %v1361, 0
      %v1576 = vsel %vm1559, %v1362, 0
      %v1579 = vsel %vm1559, %v1363, 0
      %v1582 = vsel %vm1559, %v1364, 0
      %v1585 = vsel %vm1559, %v1365, 0
      %v1588 = vsel %vm1559, %v1366, 0
      %v1591 = vsel %vm1559, %v1367, 0
      %v1594 = vsel %vm1559, %v1368, 0
      %v1597 = vsel %vm1559, %v1369, 0
      %v1600 = vsel %vm1559, %v1370, 0
      %v1603 = vsel %vm1559, %v1371, 0
      %v1606 = vsel %vm1559, %v1372, 0
      %v1609 = vsel %vm1559, %v1373, 0
      %v1612 = vsel %vm1559, %v1374, 0
      %v1615 = vsel %vm1559, %v1375, 0
      %v1618 = vsel %vm1559, %v1376, 0
      %v1621 = vsel %vm1559, %v1377, 0
      %v1624 = vsel %vm1559, %v1378, 0
      %v1627 = vsel %vm1559, %v1379, 0
      %v1630 = vsel %vm1559, %v1380, 0
      %v1633 = vsel %vm1559, %v1381, 0
      %v1636 = vsel %vm1559, %v1382, 0
      %v1639 = vsel %vm1559, %v1383, 0
      %v1642 = vsel %vm1559, %v1384, 0
      %v1645 = vsel %vm1559, %v1385, 0
      %v1648 = vsel %vm1559, %v1386, 0
      %v1651 = vsel %vm1559, %v1387, 0
      %v1654 = vsel %vm1559, %v1388, 0
      %v1657 = vsel %vm1559, %v1389, 0
      %v1660 = vsel %vm1559, %v1390, 0
      %v1663 = vsel %vm1559, %v1391, 0
      %v1666 = vsel %vm1559, %v1392, 0
      %v1669 = vsel %vm1559, %v1393, 0
      %v1672 = vsel %vm1559, %v1394, 0
      %v1675 = vsel %vm1559, %v1395, 0
      %v1678 = vsel %vm1559, %v1396, 0
      %v1681 = vsel %vm1559, %v1397, 0
      %v1684 = vsel %vm1559, %v1398, 0
      %v1687 = vsel %vm1559, %v1399, 0
      %v1690 = vsel %vm1559, %v1400, 0
      %v1693 = vsel %vm1559, %v1401, 0
      %v1696 = vsel %vm1559, %v1402, 0
      %v1699 = vsel %vm1559, %v1403, 0
      %v1702 = vsel %vm1559, %v1404, 0
      %v1705 = vsel %vm1559, %v1405, 0
      %v1708 = vsel %vm1559, %v1406, 0
      %v1711 = vsel %vm1559, %v1407, 0
      %v1714 = vsel %vm1559, %v1408, 0
      %v1717 = vsel %vm1559, %v1409, 0
      %v1720 = vsel %vm1559, %v1410, 0
      %v1723 = vsel %vm1559, %v1411, 0
      %v1726 = vsel %vm1559, %v1412, 0
      %v1729 = vsel %vm1559, %v1413, 0
      %v1732 = vsel %vm1559, %v1414, 0
      %v1735 = vsel %vm1559, %v1415, 0
      %v1738 = vsel %vm1559, %v1416, 0
      %v1741 = vsel %vm1559, %v1417, 0
      %v1744 = vsel %vm1559, %v1418, 0
      %v1747 = vsel %vm1559, %v1419, 0
      %v1750 = vsel %vm1559, %v1420, 0
      %v1753 = vsel %vm1559, %v1421, 0
      %v1756 = vsel %vm1559, %v1422, 0
      %v1759 = vsel %vm1559, %v1423, 0
      %v1762 = vsel %vm1559, %v1424, 0
      %v1765 = vsel %vm1559, %v1425, 0
      %v1768 = vsel %vm1559, %v1426, 0
      %v1771 = vsel %vm1559, %v1427, 0
      %v1774 = vsel %vm1559, %v1428, 0
      %v1777 = vsel %vm1559, %v1429, 0
      %v1780 = vsel %vm1559, %v1430, 0
      %v1783 = vsel %vm1559, %v1431, 0
      %v1786 = vsel %vm1559, %v1432, 0
      %v1789 = vsel %vm1559, %v1433, 0
      %v1792 = vsel %vm1559, %v1434, 0
      %v1795 = vsel %vm1559, %v1435, 0
      %v1798 = vsel %vm1559, %v1436, 0
      %v1801 = vsel %vm1559, %v1437, 0
      %v1804 = vsel %vm1559, %v1438, 0
      %v1807 = vsel %vm1559, %v1439, 0
      %v1810 = vsel %vm1559, %v1440, 0
      %v1813 = vsel %vm1559, %v1441, 0
      %v1816 = vsel %vm1559, %v1442, 0
      %v1819 = vsel %vm1559, %v1443, 0
      %v1822 = vsel %vm1559, %v1444, 0
      %v1825 = vsel %vm1559, %v1445, 0
      %v1828 = vsel %vm1559, %v1446, 0
      %v1831 = vsel %vm1559, %v1447, 0
      %v1834 = vsel %vm1559, %v1448, 0
      %v1837 = vsel %vm1559, %v1449, 0
      %v1840 = vsel %vm1559, %v1450, 0
      %v1843 = vsel %vm1559, %v1451, 0
      %v1846 = vsel %vm1559, %v1452, 0
      %v1849 = vsel %vm1559, %v1453, 0
      %v1852 = vsel %vm1559, %v1454, 0
      %v1855 = vsel %vm1559, %v1455, 0
      %v1858 = vsel %vm1559, %v1456, 0
      %v1861 = vsel %vm1559, %v1457, 0
      %v1864 = vsel %vm1559, %v1458, 0
      %v1867 = vsel %vm1559, %v1459, 0
      %v1870 = vsel %vm1559, %v1460, 0
      %v1873 = vsel %vm1559, %v1461, 0
      %v1876 = vsel %vm1559, %v1462, 0
      %v1879 = vsel %vm1559, %v1463, 0
      %v1882 = vsel %vm1559, %v1464, 0
      %v1885 = vsel %vm1559, %v1465, 0
      %v1888 = vsel %vm1559, %v1466, 0
      %v1891 = vsel %vm1559, %v1467, 0
      %v1894 = vsel %vm1559, %v1468, 0
      %v1897 = vsel %vm1559, %v1469, 0
      %v1900 = vsel %vm1559, %v1470, 0
      %v1903 = vsel %vm1559, %v1471, 0
      %v1906 = vsel %vm1559, %v1472, 0
      %v1909 = vsel %vm1559, %v1473, 0
      %v1912 = vsel %vm1559, %v1474, 0
      %v1915 = vsel %vm1559, %v1475, 0
      %v1918 = vsel %vm1559, %v1476, 0
      %v1921 = vsel %vm1559, %v1477, 0
      %v1924 = vsel %vm1559, %v1478, 0
      %v1927 = vsel %vm1559, %v1479, 0
      %v1930 = vsel %vm1559, %v1480, 0
      %v1933 = vsel %vm1559, %v1481, 0
      %v1936 = vsel %vm1559, %v1482, 0
      %v1939 = vsel %vm1559, %v1483, 0
      %v1942 = vsel %vm1559, %v1484, 0
      %v1945 = vsel %vm1559, %v1485, 0
      %v1948 = vsel %vm1559, %v1486, 0
      %v1951 = vsel %vm1559, %v1487, 0
      %v1954 = vsel %vm1559, %v1488, 0
      %v1957 = vsel %vm1559, %v1489, 0
      %v1960 = vsel %vm1559, %v1490, 0
      %v1963 = vsel %vm1559, %v1491, 0
      %v1966 = vsel %vm1559, %v1492, 0
      %v1969 = vsel %vm1559, %v1493, 0
      %v1972 = vsel %vm1559, %v1494, 0
      %v1975 = vsel %vm1559, %v1495, 0
      %v1978 = vsel %vm1559, %v1496, 0
      %v1981 = vsel %vm1559, %v1497, 0
      %v1984 = vsel %vm1559, %v1498, 0
      %v1987 = vsel %vm1559, %v1499, 0
      %v1990 = vsel %vm1559, %v1500, 0
      %v1993 = vsel %vm1559, %v1501, 0
      %v1996 = vsel %vm1559, %v1502, 0
      %v1999 = vsel %vm1559, %v1503, 0
      %v2002 = vsel %vm1559, %v1504, 0
      %v2005 = vsel %vm1559, %v1505, 0
      %v2008 = vsel %vm1559, %v1506, 0
      %v2011 = vsel %vm1559, %v1507, 0
      %v2014 = vsel %vm1559, %v1508, 0
      %v2017 = vsel %vm1559, %v1509, 0
      %v2020 = vsel %vm1559, %v1510, 0
      %v2023 = vsel %vm1559, %v1511, 0
      %v2026 = vsel %vm1559, %v1512, 0
      %v2029 = vsel %vm1559, %v1513, 0
      %v2032 = vsel %vm1559, %v1514, 0
      %v2035 = vsel %vm1559, %v1515, 0
      %v2038 = vsel %vm1559, %v1516, 0
      %v2041 = vsel %vm1559, %v1517, 0
      %v2044 = vsel %vm1559, %v1518, 0
      %v2047 = vsel %vm1559, %v1519, 0
      %v2050 = vsel %vm1559, %v1520, 0
      %v2053 = vsel %vm1559, %v1521, 0
      %v2056 = vsel %vm1559, %v1522, 0
      %v2059 = vsel %vm1559, %v1523, 0
      %v2062 = vsel %vm1559, %v1524, 0
      %v2065 = vsel %vm1559, %v1525, 0
      %v2068 = vsel %vm1559, %v1526, 0
      %v2071 = vsel %vm1559, %v1527, 0
      %v2074 = vsel %vm1559, %v1528, 0
      %v2077 = vsel %vm1559, %v1529, 0
      %v2080 = vsel %vm1559, %v1530, 0
      %v2083 = vsel %vm1559, %v1531, 0
      %v2086 = vsel %vm1559, %v1532, 0
      %v2089 = vsel %vm1559, %v1533, 0
      %v2092 = vsel %vm1559, %v1534, 0
      %v2095 = vsel %vm1559, %v1535, 0
      %v2098 = vsel %vm1559, %v1536, 0
      %v2101 = vsel %vm1559, %v1537, 0
      %v2104 = vsel %vm1559, %v1538, 0
      %v2107 = vsel %vm1559, %v1539, 0
      %v2110 = vsel %vm1559, %v1540, 0
      %v2113 = vsel %vm1559, %v1541, 0
      %v2116 = vsel %vm1559, %v1542, 0
      %v2119 = vsel %vm1559, %v1543, 0
      %v2122 = vsel %vm1559, %v1544, 0
      %v2125 = vsel %vm1559, %v1545, 0
      %v2128 = vsel %vm1559, %v1546, 0
      %v2131 = vsel %vm1559, %v1547, 0
      %v2134 = vsel %vm1559, %v1548, 0
      %v2137 = vsel %vm1559, %v1549, 0
      %v2140 = vsel %vm1559, %v1550, 0
      %v2143 = vsel %vm1559, %v1551, 0
      %v2146 = vsel %vm1559, %v1552, 0
      %2148 = vmatprep.subr.bf16.mxu0 0
      %2149 = vmatpush1.bf16.msra.mxu0 %v1557
      %2150 = vmatprep.subr.bf16.mxu0 0
      %2151 = vmatpush1.bf16.msra.mxu0 0
      %2152 = vmatprep.subr.bf16.mxu0 0
      %2153 = vmatpush1.bf16.msra.mxu0 0
      %2154 = vmatprep.subr.bf16.mxu0 0
      %2155 = vmatpush1.bf16.msra.mxu0 0
      %2156 = vmatprep.subr.bf16.mxu0 0
      %2157 = vmatpush1.bf16.msra.mxu0 0
      %2158 = vmatprep.subr.bf16.mxu0 0
      %2159 = vmatpush1.bf16.msra.mxu0 0
      %2160 = vmatprep.subr.bf16.mxu0 0
      %2161 = vmatpush1.bf16.msra.mxu0 0
      %2162 = vmatprep.subr.bf16.mxu0 0
      %2163 = vmatpush1.bf16.msra.mxu0 0
      %2164 = vmatprep.subr.bf16.mxu0 0
      %2165 = vmatpush1.bf16.msra.mxu0 0
      %2166 = vmatprep.subr.bf16.mxu0 0
      %2167 = vmatpush1.bf16.msra.mxu0 0
      %2168 = vmatprep.subr.bf16.mxu0 0
      %2169 = vmatpush1.bf16.msra.mxu0 0
      %2170 = vmatprep.subr.bf16.mxu0 0
      %2171 = vmatpush1.bf16.msra.mxu0 0
      %2172 = vmatprep.subr.bf16.mxu0 0
      %2173 = vmatpush1.bf16.msra.mxu0 0
      %2174 = vmatprep.subr.bf16.mxu0 0
      %2175 = vmatpush1.bf16.msra.mxu0 0
      %2176 = vmatprep.subr.bf16.mxu0 0
      %2177 = vmatpush1.bf16.msra.mxu0 0
      %2178 = vmatprep.subr.bf16.mxu0 0
      %2179 = vmatpush1.bf16.msra.mxu0 0
      %2180 = vmatprep.mubr.bf16.mxu0 0
      %2181 = vmatmul.mubr.bf16.gmra.mrb[0].mxu0 %v1561
      %v2182 = vpop.f32.mrb[0].mxu0
      %v2183 = vadd.f32 %v573, %v2182
      %v2184 = vpop.f32.mrb[0].mxu0
      %v2185 = vpop.f32.mrb[0].mxu0
      %v2186 = vadd.f32 %v573, %v2185
      %v2187 = vpop.f32.mrb[0].mxu0
      %2188 = vmatprep.mubr.bf16.mxu0 0
      %2189 = vmatmul.mubr.bf16.gmra.mrb[0].mxu0 %v1564
      %v2190 = vpop.f32.mrb[0].mxu0
      %v2191 = vadd.f32 %v573, %v2190
      %v2192 = vpop.f32.mrb[0].mxu0
      %v2193 = vpop.f32.mrb[0].mxu0
      %v2194 = vadd.f32 %v573, %v2193
      %v2195 = vpop.f32.mrb[0].mxu0
      %2196 = vmatprep.mubr.bf16.mxu0 0
      %2197 = vmatmul.mubr.bf16.gmra.mrb[0].mxu0 %v1567
      %v2198 = vpop.f32.mrb[0].mxu0
      %v2199 = vadd.f32 %v573, %v2198
      %v2200 = vpop.f32.mrb[0].mxu0
      %v2201 = vpop.f32.mrb[0].mxu0
      %v2202 = vadd.f32 %v573, %v2201
      %v2203 = vpop.f32.mrb[0].mxu0
      %2204 = vmatprep.mubr.bf16.mxu0 0
      %2205 = vmatmul.mubr.bf16.gmra.mrb[0].mxu0 %v1570
      %v2206 = vpop.f32.mrb[0].mxu0
      %v2207 = vadd.f32 %v573, %v2206
      %v2208 = vpop.f32.mrb[0].mxu0
      %v2209 = vpop.f32.mrb[0].mxu0
      %v2210 = vadd.f32 %v573, %v2209
      %v2211 = vpop.f32.mrb[0].mxu0
      %2212 = vmatprep.mubr.bf16.mxu0 0
      %2213 = vmatmul.mubr.bf16.gmra.mrb[0].mxu0 %v1573
      %v2214 = vpop.f32.mrb[0].mxu0
      %v2215 = vadd.f32 %v573, %v2214
      %v2216 = vpop.f32.mrb[0].mxu0
      %v2217 = vpop.f32.mrb[0].mxu0
      %v2218 = vadd.f32 %v573, %v2217
      %v2219 = vpop.f32.mrb[0].mxu0
      %2220 = vmatprep.mubr.bf16.mxu0 0
      %2221 = vmatmul.mubr.bf16.gmra.mrb[0].mxu0 %v1576
      %v2222 = vpop.f32.mrb[0].mxu0
      %v2223 = vadd.f32 %v573, %v2222
      %v2224 = vpop.f32.mrb[0].mxu0
      %v2225 = vpop.f32.mrb[0].mxu0
      %v2226 = vadd.f32 %v573, %v2225
      %v2227 = vpop.f32.mrb[0].mxu0
      %2228 = vmatprep.mubr.bf16.mxu0 0
      %2229 = vmatmul.mubr.bf16.gmra.mrb[0].mxu0 %v1579
      %v2230 = vpop.f32.mrb[0].mxu0
      %v2231 = vadd.f32 %v573, %v2230
      %v2232 = vpop.f32.mrb[0].mxu0
      %v2233 = vpop.f32.mrb[0].mxu0
      %v2234 = vadd.f32 %v573, %v2233
      %v2235 = vpop.f32.mrb[0].mxu0
      %2236 = vmatprep.mubr.bf16.mxu0 0
      %2237 = vmatmul.mubr.bf16.gmra.mrb[0].mxu0 %v1582
      %v2238 = vpop.f32.mrb[0].mxu0
      %v2239 = vadd.f32 %v573, %v2238
      %v2240 = vpop.f32.mrb[0].mxu0
      %v2241 = vpop.f32.mrb[0].mxu0
      %v2242 = vadd.f32 %v573, %v2241
      %v2243 = vpop.f32.mrb[0].mxu0
      %2244 = vmatprep.mubr.bf16.mxu0 0
      %2245 = vmatmul.mubr.bf16.gmra.mrb[0].mxu0 %v1585
      %v2246 = vpop.f32.mrb[0].mxu0
      %v2247 = vadd.f32 %v573, %v2246
      %v2248 = vpop.f32.mrb[0].mxu0
      %v2249 = vpop.f32.mrb[0].mxu0
      %v2250 = vadd.f32 %v573, %v2249
      %v2251 = vpop.f32.mrb[0].mxu0
      %2252 = vmatprep.mubr.bf16.mxu0 0
      %2253 = vmatmul.mubr.bf16.gmra.mrb[0].mxu0 %v1588
      %v2254 = vpop.f32.mrb[0].mxu0
      %v2255 = vadd.f32 %v573, %v2254
      %v2256 = vpop.f32.mrb[0].mxu0
      %v2257 = vpop.f32.mrb[0].mxu0
      %v2258 = vadd.f32 %v573, %v2257
      %v2259 = vpop.f32.mrb[0].mxu0
      %2260 = vmatprep.mubr.bf16.mxu0 0
      %2261 = vmatmul.mubr.bf16.gmra.mrb[0].mxu0 %v1591
      %v2262 = vpop.f32.mrb[0].mxu0
      %v2263 = vadd.f32 %v573, %v2262
      %v2264 = vpop.f32.mrb[0].mxu0
      %v2265 = vpop.f32.mrb[0].mxu0
      %v2266 = vadd.f32 %v573, %v2265
      %v2267 = vpop.f32.mrb[0].mxu0
      %2268 = vmatprep.mubr.bf16.mxu0 0
      %2269 = vmatmul.mubr.bf16.gmra.mrb[0].mxu0 %v1594
      %v2270 = vpop.f32.mrb[0].mxu0
      %v2271 = vadd.f32 %v573, %v2270
      %v2272 = vpop.f32.mrb[0].mxu0
      %v2273 = vpop.f32.mrb[0].mxu0
      %v2274 = vadd.f32 %v573, %v2273
      %v2275 = vpop.f32.mrb[0].mxu0
      %2276 = vmatprep.mubr.bf16.mxu0 0
      %2277 = vmatmul.mubr.bf16.gmra.mrb[0].mxu0 %v1597
      %v2278 = vpop.f32.mrb[0].mxu0
      %v2279 = vadd.f32 %v573, %v2278
      %v2280 = vpop.f32.mrb[0].mxu0
      %v2281 = vpop.f32.mrb[0].mxu0
      %v2282 = vadd.f32 %v573, %v2281
      %v2283 = vpop.f32.mrb[0].mxu0
      %2284 = vmatprep.mubr.bf16.mxu0 0
      %2285 = vmatmul.mubr.bf16.gmra.mrb[0].mxu0 %v1600
      %v2286 = vpop.f32.mrb[0].mxu0
      %v2287 = vadd.f32 %v573, %v2286
      %v2288 = vpop.f32.mrb[0].mxu0
      %v2289 = vpop.f32.mrb[0].mxu0
      %v2290 = vadd.f32 %v573, %v2289
      %v2291 = vpop.f32.mrb[0].mxu0
      %2292 = vmatprep.mubr.bf16.mxu0 0
      %2293 = vmatmul.mubr.bf16.gmra.mrb[0].mxu0 %v1603
      %v2294 = vpop.f32.mrb[0].mxu0
      %v2295 = vadd.f32 %v573, %v2294
      %v2296 = vpop.f32.mrb[0].mxu0
      %v2297 = vpop.f32.mrb[0].mxu0
      %v2298 = vadd.f32 %v573, %v2297
      %v2299 = vpop.f32.mrb[0].mxu0
      %2300 = vmatprep.mubr.bf16.mxu0 0
      %2301 = vmatmul.mubr.bf16.gmra.mrb[0].mxu0 %v1606
      %v2302 = vpop.f32.mrb[0].mxu0
      %v2303 = vadd.f32 %v573, %v2302
      %v2304 = vpop.f32.mrb[0].mxu0
      %v2305 = vpop.f32.mrb[0].mxu0
      %v2306 = vadd.f32 %v573, %v2305
      %v2307 = vpop.f32.mrb[0].mxu0
      %2308 = vmatprep.mubr.bf16.mxu0 0
      %2309 = vmatmul.mubr.bf16.gmra.mrb[0].mxu0 %v1609
      %v2310 = vpop.f32.mrb[0].mxu0
      %v2311 = vadd.f32 %v573, %v2310
      %v2312 = vpop.f32.mrb[0].mxu0
      %v2313 = vpop.f32.mrb[0].mxu0
      %v2314 = vadd.f32 %v573, %v2313
      %v2315 = vpop.f32.mrb[0].mxu0
      %2316 = vmatprep.mubr.bf16.mxu0 0
      %2317 = vmatmul.mubr.bf16.gmra.mrb[0].mxu0 %v1612
      %v2318 = vpop.f32.mrb[0].mxu0
      %v2319 = vadd.f32 %v573, %v2318
      %v2320 = vpop.f32.mrb[0].mxu0
      %v2321 = vpop.f32.mrb[0].mxu0
      %v2322 = vadd.f32 %v573, %v2321
      %v2323 = vpop.f32.mrb[0].mxu0
      %2324 = vmatprep.mubr.bf16.mxu0 0
      %2325 = vmatmul.mubr.bf16.gmra.mrb[0].mxu0 %v1615
      %v2326 = vpop.f32.mrb[0].mxu0
      %v2327 = vadd.f32 %v573, %v2326
      %v2328 = vpop.f32.mrb[0].mxu0
      %v2329 = vpop.f32.mrb[0].mxu0
      %v2330 = vadd.f32 %v573, %v2329
      %v2331 = vpop.f32.mrb[0].mxu0
      %2332 = vmatprep.mubr.bf16.mxu0 0
      %2333 = vmatmul.mubr.bf16.gmra.mrb[0].mxu0 %v1618
      %v2334 = vpop.f32.mrb[0].mxu0
      %v2335 = vadd.f32 %v573, %v2334
      %v2336 = vpop.f32.mrb[0].mxu0
      %v2337 = vpop.f32.mrb[0].mxu0
      %v2338 = vadd.f32 %v573, %v2337
      %v2339 = vpop.f32.mrb[0].mxu0
      %2340 = vmatprep.mubr.bf16.mxu0 0
      %2341 = vmatmul.mubr.bf16.gmra.mrb[0].mxu0 %v1621
      %v2342 = vpop.f32.mrb[0].mxu0
      %v2343 = vadd.f32 %v573, %v2342
      %v2344 = vpop.f32.mrb[0].mxu0
      %v2345 = vpop.f32.mrb[0].mxu0
      %v2346 = vadd.f32 %v573, %v2345
      %v2347 = vpop.f32.mrb[0].mxu0
      %2348 = vmatprep.mubr.bf16.mxu0 0
      %2349 = vmatmul.mubr.bf16.gmra.mrb[0].mxu0 %v1624
      %v2350 = vpop.f32.mrb[0].mxu0
      %v2351 = vadd.f32 %v573, %v2350
      %v2352 = vpop.f32.mrb[0].mxu0
      %v2353 = vpop.f32.mrb[0].mxu0
      %v2354 = vadd.f32 %v573, %v2353
      %v2355 = vpop.f32.mrb[0].mxu0
      %2356 = vmatprep.mubr.bf16.mxu0 0
      %2357 = vmatmul.mubr.bf16.gmra.mrb[0].mxu0 %v1627
      %v2358 = vpop.f32.mrb[0].mxu0
      %v2359 = vadd.f32 %v573, %v2358
      %v2360 = vpop.f32.mrb[0].mxu0
      %v2361 = vpop.f32.mrb[0].mxu0
      %v2362 = vadd.f32 %v573, %v2361
      %v2363 = vpop.f32.mrb[0].mxu0
      %2364 = vmatprep.mubr.bf16.mxu0 0
      %2365 = vmatmul.mubr.bf16.gmra.mrb[0].mxu0 %v1630
      %v2366 = vpop.f32.mrb[0].mxu0
      %v2367 = vadd.f32 %v573, %v2366
      %v2368 = vpop.f32.mrb[0].mxu0
      %v2369 = vpop.f32.mrb[0].mxu0
      %v2370 = vadd.f32 %v573, %v2369
      %v2371 = vpop.f32.mrb[0].mxu0
      %2372 = vmatprep.mubr.bf16.mxu0 0
      %2373 = vmatmul.mubr.bf16.gmra.mrb[0].mxu0 %v1633
      %v2374 = vpop.f32.mrb[0].mxu0
      %v2375 = vadd.f32 %v573, %v2374
      %v2376 = vpop.f32.mrb[0].mxu0
      %v2377 = vpop.f32.mrb[0].mxu0
      %v2378 = vadd.f32 %v573, %v2377
      %v2379 = vpop.f32.mrb[0].mxu0
      %2380 = vmatprep.mubr.bf16.mxu0 0
      %2381 = vmatmul.mubr.bf16.gmra.mrb[0].mxu0 %v1636
      %v2382 = vpop.f32.mrb[0].mxu0
      %v2383 = vadd.f32 %v573, %v2382
      %v2384 = vpop.f32.mrb[0].mxu0
      %v2385 = vpop.f32.mrb[0].mxu0
      %v2386 = vadd.f32 %v573, %v2385
      %v2387 = vpop.f32.mrb[0].mxu0
      %2388 = vmatprep.mubr.bf16.mxu0 0
      %2389 = vmatmul.mubr.bf16.gmra.mrb[0].mxu0 %v1639
      %v2390 = vpop.f32.mrb[0].mxu0
      %v2391 = vadd.f32 %v573, %v2390
      %v2392 = vpop.f32.mrb[0].mxu0
      %v2393 = vpop.f32.mrb[0].mxu0
      %v2394 = vadd.f32 %v573, %v2393
      %v2395 = vpop.f32.mrb[0].mxu0
      %2396 = vmatprep.mubr.bf16.mxu0 0
      %2397 = vmatmul.mubr.bf16.gmra.mrb[0].mxu0 %v1642
      %v2398 = vpop.f32.mrb[0].mxu0
      %v2399 = vadd.f32 %v573, %v2398
      %v2400 = vpop.f32.mrb[0].mxu0
      %v2401 = vpop.f32.mrb[0].mxu0
      %v2402 = vadd.f32 %v573, %v2401
      %v2403 = vpop.f32.mrb[0].mxu0
      %2404 = vmatprep.mubr.bf16.mxu0 0
      %2405 = vmatmul.mubr.bf16.gmra.mrb[0].mxu0 %v1645
      %v2406 = vpop.f32.mrb[0].mxu0
      %v2407 = vadd.f32 %v573, %v2406
      %v2408 = vpop.f32.mrb[0].mxu0
      %v2409 = vpop.f32.mrb[0].mxu0
      %v2410 = vadd.f32 %v573, %v2409
      %v2411 = vpop.f32.mrb[0].mxu0
      %2412 = vmatprep.mubr.bf16.mxu0 0
      %2413 = vmatmul.mubr.bf16.gmra.mrb[0].mxu0 %v1648
      %v2414 = vpop.f32.mrb[0].mxu0
      %v2415 = vadd.f32 %v573, %v2414
      %v2416 = vpop.f32.mrb[0].mxu0
      %v2417 = vpop.f32.mrb[0].mxu0
      %v2418 = vadd.f32 %v573, %v2417
      %v2419 = vpop.f32.mrb[0].mxu0
      %2420 = vmatprep.mubr.bf16.mxu0 0
      %2421 = vmatmul.mubr.bf16.gmra.mrb[0].mxu0 %v1651
      %v2422 = vpop.f32.mrb[0].mxu0
      %v2423 = vadd.f32 %v573, %v2422
      %v2424 = vpop.f32.mrb[0].mxu0
      %v2425 = vpop.f32.mrb[0].mxu0
      %v2426 = vadd.f32 %v573, %v2425
      %v2427 = vpop.f32.mrb[0].mxu0
      %2428 = vmatprep.mubr.bf16.mxu0 0
      %2429 = vmatmul.mubr.bf16.gmra.mrb[0].mxu0 %v1654
      %v2430 = vpop.f32.mrb[0].mxu0
      %v2431 = vadd.f32 %v573, %v2430
      %v2432 = vpop.f32.mrb[0].mxu0
      %v2433 = vpop.f32.mrb[0].mxu0
      %v2434 = vadd.f32 %v573, %v2433
      %v2435 = vpop.f32.mrb[0].mxu0
      %2436 = vmatprep.mubr.bf16.mxu0 0
      %2437 = vmatmul.mubr.bf16.gmra.mrb[0].mxu0 %v1657
      %v2438 = vpop.f32.mrb[0].mxu0
      %v2439 = vadd.f32 %v573, %v2438
      %v2440 = vpop.f32.mrb[0].mxu0
      %v2441 = vpop.f32.mrb[0].mxu0
      %v2442 = vadd.f32 %v573, %v2441
      %v2443 = vpop.f32.mrb[0].mxu0
      %2444 = vmatprep.mubr.bf16.mxu0 0
      %2445 = vmatmul.mubr.bf16.gmra.mrb[0].mxu0 %v1660
      %v2446 = vpop.f32.mrb[0].mxu0
      %v2447 = vadd.f32 %v573, %v2446
      %v2448 = vpop.f32.mrb[0].mxu0
      %v2449 = vpop.f32.mrb[0].mxu0
      %v2450 = vadd.f32 %v573, %v2449
      %v2451 = vpop.f32.mrb[0].mxu0
      %2452 = vmatprep.mubr.bf16.mxu0 0
      %2453 = vmatmul.mubr.bf16.gmra.mrb[0].mxu0 %v1663
      %v2454 = vpop.f32.mrb[0].mxu0
      %v2455 = vadd.f32 %v573, %v2454
      %v2456 = vpop.f32.mrb[0].mxu0
      %v2457 = vpop.f32.mrb[0].mxu0
      %v2458 = vadd.f32 %v573, %v2457
      %v2459 = vpop.f32.mrb[0].mxu0
      %2460 = vmatprep.mubr.bf16.mxu0 0
      %2461 = vmatmul.mubr.bf16.gmra.mrb[0].mxu0 %v1666
      %v2462 = vpop.f32.mrb[0].mxu0
      %v2463 = vadd.f32 %v573, %v2462
      %v2464 = vpop.f32.mrb[0].mxu0
      %v2465 = vpop.f32.mrb[0].mxu0
      %v2466 = vadd.f32 %v573, %v2465
      %v2467 = vpop.f32.mrb[0].mxu0
      %2468 = vmatprep.mubr.bf16.mxu0 0
      %2469 = vmatmul.mubr.bf16.gmra.mrb[0].mxu0 %v1669
      %v2470 = vpop.f32.mrb[0].mxu0
      %v2471 = vadd.f32 %v573, %v2470
      %v2472 = vpop.f32.mrb[0].mxu0
      %v2473 = vpop.f32.mrb[0].mxu0
      %v2474 = vadd.f32 %v573, %v2473
      %v2475 = vpop.f32.mrb[0].mxu0
      %2476 = vmatprep.mubr.bf16.mxu0 0
      %2477 = vmatmul.mubr.bf16.gmra.mrb[0].mxu0 %v1672
      %v2478 = vpop.f32.mrb[0].mxu0
      %v2479 = vadd.f32 %v573, %v2478
      %v2480 = vpop.f32.mrb[0].mxu0
      %v2481 = vpop.f32.mrb[0].mxu0
      %v2482 = vadd.f32 %v573, %v2481
      %v2483 = vpop.f32.mrb[0].mxu0
      %2484 = vmatprep.mubr.bf16.mxu0 0
      %2485 = vmatmul.mubr.bf16.gmra.mrb[0].mxu0 %v1675
      %v2486 = vpop.f32.mrb[0].mxu0
      %v2487 = vadd.f32 %v573, %v2486
      %v2488 = vpop.f32.mrb[0].mxu0
      %v2489 = vpop.f32.mrb[0].mxu0
      %v2490 = vadd.f32 %v573, %v2489
      %v2491 = vpop.f32.mrb[0].mxu0
      %2492 = vmatprep.mubr.bf16.mxu0 0
      %2493 = vmatmul.mubr.bf16.gmra.mrb[0].mxu0 %v1678
      %v2494 = vpop.f32.mrb[0].mxu0
      %v2495 = vadd.f32 %v573, %v2494
      %v2496 = vpop.f32.mrb[0].mxu0
      %v2497 = vpop.f32.mrb[0].mxu0
      %v2498 = vadd.f32 %v573, %v2497
      %v2499 = vpop.f32.mrb[0].mxu0
      %2500 = vmatprep.mubr.bf16.mxu0 0
      %2501 = vmatmul.mubr.bf16.gmra.mrb[0].mxu0 %v1681
      %v2502 = vpop.f32.mrb[0].mxu0
      %v2503 = vadd.f32 %v573, %v2502
      %v2504 = vpop.f32.mrb[0].mxu0
      %v2505 = vpop.f32.mrb[0].mxu0
      %v2506 = vadd.f32 %v573, %v2505
      %v2507 = vpop.f32.mrb[0].mxu0
      %2508 = vmatprep.mubr.bf16.mxu0 0
      %2509 = vmatmul.mubr.bf16.gmra.mrb[0].mxu0 %v1684
      %v2510 = vpop.f32.mrb[0].mxu0
      %v2511 = vadd.f32 %v573, %v2510
      %v2512 = vpop.f32.mrb[0].mxu0
      %v2513 = vpop.f32.mrb[0].mxu0
      %v2514 = vadd.f32 %v573, %v2513
      %v2515 = vpop.f32.mrb[0].mxu0
      %2516 = vmatprep.mubr.bf16.mxu0 0
      %2517 = vmatmul.mubr.bf16.gmra.mrb[0].mxu0 %v1687
      %v2518 = vpop.f32.mrb[0].mxu0
      %v2519 = vadd.f32 %v573, %v2518
      %v2520 = vpop.f32.mrb[0].mxu0
      %v2521 = vpop.f32.mrb[0].mxu0
      %v2522 = vadd.f32 %v573, %v2521
      %v2523 = vpop.f32.mrb[0].mxu0
      %2524 = vmatprep.mubr.bf16.mxu0 0
      %2525 = vmatmul.mubr.bf16.gmra.mrb[0].mxu0 %v1690
      %v2526 = vpop.f32.mrb[0].mxu0
      %v2527 = vadd.f32 %v573, %v2526
      %v2528 = vpop.f32.mrb[0].mxu0
      %v2529 = vpop.f32.mrb[0].mxu0
      %v2530 = vadd.f32 %v573, %v2529
      %v2531 = vpop.f32.mrb[0].mxu0
      %2532 = vmatprep.mubr.bf16.mxu0 0
      %2533 = vmatmul.mubr.bf16.gmra.mrb[0].mxu0 %v1693
      %v2534 = vpop.f32.mrb[0].mxu0
      %v2535 = vadd.f32 %v573, %v2534
      %v2536 = vpop.f32.mrb[0].mxu0
      %v2537 = vpop.f32.mrb[0].mxu0
      %v2538 = vadd.f32 %v573, %v2537
      %v2539 = vpop.f32.mrb[0].mxu0
      %2540 = vmatprep.mubr.bf16.mxu0 0
      %2541 = vmatmul.mubr.bf16.gmra.mrb[0].mxu0 %v1696
      %v2542 = vpop.f32.mrb[0].mxu0
      %v2543 = vadd.f32 %v573, %v2542
      %v2544 = vpop.f32.mrb[0].mxu0
      %v2545 = vpop.f32.mrb[0].mxu0
      %v2546 = vadd.f32 %v573, %v2545
      %v2547 = vpop.f32.mrb[0].mxu0
      %2548 = vmatprep.mubr.bf16.mxu0 0
      %2549 = vmatmul.mubr.bf16.gmra.mrb[0].mxu0 %v1699
      %v2550 = vpop.f32.mrb[0].mxu0
      %v2551 = vadd.f32 %v573, %v2550
      %v2552 = vpop.f32.mrb[0].mxu0
      %v2553 = vpop.f32.mrb[0].mxu0
      %v2554 = vadd.f32 %v573, %v2553
      %v2555 = vpop.f32.mrb[0].mxu0
      %2556 = vmatprep.mubr.bf16.mxu0 0
      %2557 = vmatmul.mubr.bf16.gmra.mrb[0].mxu0 %v1702
      %v2558 = vpop.f32.mrb[0].mxu0
      %v2559 = vadd.f32 %v573, %v2558
      %v2560 = vpop.f32.mrb[0].mxu0
      %v2561 = vpop.f32.mrb[0].mxu0
      %v2562 = vadd.f32 %v573, %v2561
      %v2563 = vpop.f32.mrb[0].mxu0
      %2564 = vmatprep.mubr.bf16.mxu0 0
      %2565 = vmatmul.mubr.bf16.gmra.mrb[0].mxu0 %v1705
      %v2566 = vpop.f32.mrb[0].mxu0
      %v2567 = vadd.f32 %v573, %v2566
      %v2568 = vpop.f32.mrb[0].mxu0
      %v2569 = vpop.f32.mrb[0].mxu0
      %v2570 = vadd.f32 %v573, %v2569
      %v2571 = vpop.f32.mrb[0].mxu0
      %2572 = vmatprep.mubr.bf16.mxu0 0
      %2573 = vmatmul.mubr.bf16.gmra.mrb[0].mxu0 %v1708
      %v2574 = vpop.f32.mrb[0].mxu0
      %v2575 = vadd.f32 %v573, %v2574
      %v2576 = vpop.f32.mrb[0].mxu0
      %v2577 = vpop.f32.mrb[0].mxu0
      %v2578 = vadd.f32 %v573, %v2577
      %v2579 = vpop.f32.mrb[0].mxu0
      %2580 = vmatprep.mubr.bf16.mxu0 0
      %2581 = vmatmul.mubr.bf16.gmra.mrb[0].mxu0 %v1711
      %v2582 = vpop.f32.mrb[0].mxu0
      %v2583 = vadd.f32 %v573, %v2582
      %v2584 = vpop.f32.mrb[0].mxu0
      %v2585 = vpop.f32.mrb[0].mxu0
      %v2586 = vadd.f32 %v573, %v2585
      %v2587 = vpop.f32.mrb[0].mxu0
      %2588 = vmatprep.mubr.bf16.mxu0 0
      %2589 = vmatmul.mubr.bf16.gmra.mrb[0].mxu0 %v1714
      %v2590 = vpop.f32.mrb[0].mxu0
      %v2591 = vadd.f32 %v573, %v2590
      %v2592 = vpop.f32.mrb[0].mxu0
      %v2593 = vpop.f32.mrb[0].mxu0
      %v2594 = vadd.f32 %v573, %v2593
      %v2595 = vpop.f32.mrb[0].mxu0
      %2596 = vmatprep.mubr.bf16.mxu0 0
      %2597 = vmatmul.mubr.bf16.gmra.mrb[0].mxu0 %v1717
      %v2598 = vpop.f32.mrb[0].mxu0
      %v2599 = vadd.f32 %v573, %v2598
      %v2600 = vpop.f32.mrb[0].mxu0
      %v2601 = vpop.f32.mrb[0].mxu0
      %v2602 = vadd.f32 %v573, %v2601
      %v2603 = vpop.f32.mrb[0].mxu0
      %2604 = vmatprep.mubr.bf16.mxu0 0
      %2605 = vmatmul.mubr.bf16.gmra.mrb[0].mxu0 %v1720
      %v2606 = vpop.f32.mrb[0].mxu0
      %v2607 = vadd.f32 %v573, %v2606
      %v2608 = vpop.f32.mrb[0].mxu0
      %v2609 = vpop.f32.mrb[0].mxu0
      %v2610 = vadd.f32 %v573, %v2609
      %v2611 = vpop.f32.mrb[0].mxu0
      %2612 = vmatprep.mubr.bf16.mxu0 0
      %2613 = vmatmul.mubr.bf16.gmra.mrb[0].mxu0 %v1723
      %v2614 = vpop.f32.mrb[0].mxu0
      %v2615 = vadd.f32 %v573, %v2614
      %v2616 = vpop.f32.mrb[0].mxu0
      %v2617 = vpop.f32.mrb[0].mxu0
      %v2618 = vadd.f32 %v573, %v2617
      %v2619 = vpop.f32.mrb[0].mxu0
      %2620 = vmatprep.mubr.bf16.mxu0 0
      %2621 = vmatmul.mubr.bf16.gmra.mrb[0].mxu0 %v1726
      %v2622 = vpop.f32.mrb[0].mxu0
      %v2623 = vadd.f32 %v573, %v2622
      %v2624 = vpop.f32.mrb[0].mxu0
      %v2625 = vpop.f32.mrb[0].mxu0
      %v2626 = vadd.f32 %v573, %v2625
      %v2627 = vpop.f32.mrb[0].mxu0
      %2628 = vmatprep.mubr.bf16.mxu0 0
      %2629 = vmatmul.mubr.bf16.gmra.mrb[0].mxu0 %v1729
      %v2630 = vpop.f32.mrb[0].mxu0
      %v2631 = vadd.f32 %v573, %v2630
      %v2632 = vpop.f32.mrb[0].mxu0
      %v2633 = vpop.f32.mrb[0].mxu0
      %v2634 = vadd.f32 %v573, %v2633
      %v2635 = vpop.f32.mrb[0].mxu0
      %2636 = vmatprep.mubr.bf16.mxu0 0
      %2637 = vmatmul.mubr.bf16.gmra.mrb[0].mxu0 %v1732
      %v2638 = vpop.f32.mrb[0].mxu0
      %v2639 = vadd.f32 %v573, %v2638
      %v2640 = vpop.f32.mrb[0].mxu0
      %v2641 = vpop.f32.mrb[0].mxu0
      %v2642 = vadd.f32 %v573, %v2641
      %v2643 = vpop.f32.mrb[0].mxu0
      %2644 = vmatprep.mubr.bf16.mxu0 0
      %2645 = vmatmul.mubr.bf16.gmra.mrb[0].mxu0 %v1735
      %v2646 = vpop.f32.mrb[0].mxu0
      %v2647 = vadd.f32 %v573, %v2646
      %v2648 = vpop.f32.mrb[0].mxu0
      %v2649 = vpop.f32.mrb[0].mxu0
      %v2650 = vadd.f32 %v573, %v2649
      %v2651 = vpop.f32.mrb[0].mxu0
      %2652 = vmatprep.mubr.bf16.mxu0 0
      %2653 = vmatmul.mubr.bf16.gmra.mrb[0].mxu0 %v1738
      %v2654 = vpop.f32.mrb[0].mxu0
      %v2655 = vadd.f32 %v573, %v2654
      %v2656 = vpop.f32.mrb[0].mxu0
      %v2657 = vpop.f32.mrb[0].mxu0
      %v2658 = vadd.f32 %v573, %v2657
      %v2659 = vpop.f32.mrb[0].mxu0
      %2660 = vmatprep.mubr.bf16.mxu0 0
      %2661 = vmatmul.mubr.bf16.gmra.mrb[0].mxu0 %v1741
      %v2662 = vpop.f32.mrb[0].mxu0
      %v2663 = vadd.f32 %v573, %v2662
      %v2664 = vpop.f32.mrb[0].mxu0
      %v2665 = vpop.f32.mrb[0].mxu0
      %v2666 = vadd.f32 %v573, %v2665
      %v2667 = vpop.f32.mrb[0].mxu0
      %2668 = vmatprep.mubr.bf16.mxu0 0
      %2669 = vmatmul.mubr.bf16.gmra.mrb[0].mxu0 %v1744
      %v2670 = vpop.f32.mrb[0].mxu0
      %v2671 = vadd.f32 %v573, %v2670
      %v2672 = vpop.f32.mrb[0].mxu0
      %v2673 = vpop.f32.mrb[0].mxu0
      %v2674 = vadd.f32 %v573, %v2673
      %v2675 = vpop.f32.mrb[0].mxu0
      %2676 = vmatprep.mubr.bf16.mxu0 0
      %2677 = vmatmul.mubr.bf16.gmra.mrb[0].mxu0 %v1747
      %v2678 = vpop.f32.mrb[0].mxu0
      %v2679 = vadd.f32 %v573, %v2678
      %v2680 = vpop.f32.mrb[0].mxu0
      %v2681 = vpop.f32.mrb[0].mxu0
      %v2682 = vadd.f32 %v573, %v2681
      %v2683 = vpop.f32.mrb[0].mxu0
      %2684 = vmatprep.mubr.bf16.mxu0 0
      %2685 = vmatmul.mubr.bf16.gmra.mrb[0].mxu0 %v1750
      %v2686 = vpop.f32.mrb[0].mxu0
      %v2687 = vadd.f32 %v573, %v2686
      %v2688 = vpop.f32.mrb[0].mxu0
      %v2689 = vpop.f32.mrb[0].mxu0
      %v2690 = vadd.f32 %v573, %v2689
      %v2691 = vpop.f32.mrb[0].mxu0
      %2692 = vmatprep.mubr.bf16.mxu0 0
      %2693 = vmatmul.mubr.bf16.gmra.mrb[0].mxu0 %v1753
      %v2694 = vpop.f32.mrb[0].mxu0
      %v2695 = vadd.f32 %v573, %v2694
      %v2696 = vpop.f32.mrb[0].mxu0
      %v2697 = vpop.f32.mrb[0].mxu0
      %v2698 = vadd.f32 %v573, %v2697
      %v2699 = vpop.f32.mrb[0].mxu0
      %2700 = vmatprep.mubr.bf16.mxu0 0
      %2701 = vmatmul.mubr.bf16.gmra.mrb[0].mxu0 %v1756
      %v2702 = vpop.f32.mrb[0].mxu0
      %v2703 = vadd.f32 %v573, %v2702
      %v2704 = vpop.f32.mrb[0].mxu0
      %v2705 = vpop.f32.mrb[0].mxu0
      %v2706 = vadd.f32 %v573, %v2705
      %v2707 = vpop.f32.mrb[0].mxu0
      %2708 = vmatprep.mubr.bf16.mxu0 0
      %2709 = vmatmul.mubr.bf16.gmra.mrb[0].mxu0 %v1759
      %v2710 = vpop.f32.mrb[0].mxu0
      %v2711 = vadd.f32 %v573, %v2710
      %v2712 = vpop.f32.mrb[0].mxu0
      %v2713 = vpop.f32.mrb[0].mxu0
      %v2714 = vadd.f32 %v573, %v2713
      %v2715 = vpop.f32.mrb[0].mxu0
      %2716 = vmatprep.mubr.bf16.mxu0 0
      %2717 = vmatmul.mubr.bf16.gmra.mrb[0].mxu0 %v1762
      %v2718 = vpop.f32.mrb[0].mxu0
      %v2719 = vadd.f32 %v573, %v2718
      %v2720 = vpop.f32.mrb[0].mxu0
      %v2721 = vpop.f32.mrb[0].mxu0
      %v2722 = vadd.f32 %v573, %v2721
      %v2723 = vpop.f32.mrb[0].mxu0
      %2724 = vmatprep.mubr.bf16.mxu0 0
      %2725 = vmatmul.mubr.bf16.gmra.mrb[0].mxu0 %v1765
      %v2726 = vpop.f32.mrb[0].mxu0
      %v2727 = vadd.f32 %v573, %v2726
      %v2728 = vpop.f32.mrb[0].mxu0
      %v2729 = vpop.f32.mrb[0].mxu0
      %v2730 = vadd.f32 %v573, %v2729
      %v2731 = vpop.f32.mrb[0].mxu0
      %2732 = vmatprep.mubr.bf16.mxu0 0
      %2733 = vmatmul.mubr.bf16.gmra.mrb[0].mxu0 %v1768
      %v2734 = vpop.f32.mrb[0].mxu0
      %v2735 = vadd.f32 %v573, %v2734
      %v2736 = vpop.f32.mrb[0].mxu0
      %v2737 = vpop.f32.mrb[0].mxu0
      %v2738 = vadd.f32 %v573, %v2737
      %v2739 = vpop.f32.mrb[0].mxu0
      %2740 = vmatprep.mubr.bf16.mxu0 0
      %2741 = vmatmul.mubr.bf16.gmra.mrb[0].mxu0 %v1771
      %v2742 = vpop.f32.mrb[0].mxu0
      %v2743 = vadd.f32 %v573, %v2742
      %v2744 = vpop.f32.mrb[0].mxu0
      %v2745 = vpop.f32.mrb[0].mxu0
      %v2746 = vadd.f32 %v573, %v2745
      %v2747 = vpop.f32.mrb[0].mxu0
      %2748 = vmatprep.mubr.bf16.mxu0 0
      %2749 = vmatmul.mubr.bf16.gmra.mrb[0].mxu0 %v1774
      %v2750 = vpop.f32.mrb[0].mxu0
      %v2751 = vadd.f32 %v573, %v2750
      %v2752 = vpop.f32.mrb[0].mxu0
      %v2753 = vpop.f32.mrb[0].mxu0
      %v2754 = vadd.f32 %v573, %v2753
      %v2755 = vpop.f32.mrb[0].mxu0
      %2756 = vmatprep.mubr.bf16.mxu0 0
      %2757 = vmatmul.mubr.bf16.gmra.mrb[0].mxu0 %v1777
      %v2758 = vpop.f32.mrb[0].mxu0
      %v2759 = vadd.f32 %v573, %v2758
      %v2760 = vpop.f32.mrb[0].mxu0
      %v2761 = vpop.f32.mrb[0].mxu0
      %v2762 = vadd.f32 %v573, %v2761
      %v2763 = vpop.f32.mrb[0].mxu0
      %2764 = vmatprep.mubr.bf16.mxu0 0
      %2765 = vmatmul.mubr.bf16.gmra.mrb[0].mxu0 %v1780
      %v2766 = vpop.f32.mrb[0].mxu0
      %v2767 = vadd.f32 %v573, %v2766
      %v2768 = vpop.f32.mrb[0].mxu0
      %v2769 = vpop.f32.mrb[0].mxu0
      %v2770 = vadd.f32 %v573, %v2769
      %v2771 = vpop.f32.mrb[0].mxu0
      %2772 = vmatprep.mubr.bf16.mxu0 0
      %2773 = vmatmul.mubr.bf16.gmra.mrb[0].mxu0 %v1783
      %v2774 = vpop.f32.mrb[0].mxu0
      %v2775 = vadd.f32 %v573, %v2774
      %v2776 = vpop.f32.mrb[0].mxu0
      %v2777 = vpop.f32.mrb[0].mxu0
      %v2778 = vadd.f32 %v573, %v2777
      %v2779 = vpop.f32.mrb[0].mxu0
      %2780 = vmatprep.mubr.bf16.mxu0 0
      %2781 = vmatmul.mubr.bf16.gmra.mrb[0].mxu0 %v1786
      %v2782 = vpop.f32.mrb[0].mxu0
      %v2783 = vadd.f32 %v573, %v2782
      %v2784 = vpop.f32.mrb[0].mxu0
      %v2785 = vpop.f32.mrb[0].mxu0
      %v2786 = vadd.f32 %v573, %v2785
      %v2787 = vpop.f32.mrb[0].mxu0
      %2788 = vmatprep.mubr.bf16.mxu0 0
      %2789 = vmatmul.mubr.bf16.gmra.mrb[0].mxu0 %v1789
      %v2790 = vpop.f32.mrb[0].mxu0
      %v2791 = vadd.f32 %v573, %v2790
      %v2792 = vpop.f32.mrb[0].mxu0
      %v2793 = vpop.f32.mrb[0].mxu0
      %v2794 = vadd.f32 %v573, %v2793
      %v2795 = vpop.f32.mrb[0].mxu0
      %2796 = vmatprep.mubr.bf16.mxu0 0
      %2797 = vmatmul.mubr.bf16.gmra.mrb[0].mxu0 %v1792
      %v2798 = vpop.f32.mrb[0].mxu0
      %v2799 = vadd.f32 %v573, %v2798
      %v2800 = vpop.f32.mrb[0].mxu0
      %v2801 = vpop.f32.mrb[0].mxu0
      %v2802 = vadd.f32 %v573, %v2801
      %v2803 = vpop.f32.mrb[0].mxu0
      %2804 = vmatprep.mubr.bf16.mxu0 0
      %2805 = vmatmul.mubr.bf16.gmra.mrb[0].mxu0 %v1795
      %v2806 = vpop.f32.mrb[0].mxu0
      %v2807 = vadd.f32 %v573, %v2806
      %v2808 = vpop.f32.mrb[0].mxu0
      %v2809 = vpop.f32.mrb[0].mxu0
      %v2810 = vadd.f32 %v573, %v2809
      %v2811 = vpop.f32.mrb[0].mxu0
      %2812 = vmatprep.mubr.bf16.mxu0 0
      %2813 = vmatmul.mubr.bf16.gmra.mrb[0].mxu0 %v1798
      %v2814 = vpop.f32.mrb[0].mxu0
      %v2815 = vadd.f32 %v573, %v2814
      %v2816 = vpop.f32.mrb[0].mxu0
      %v2817 = vpop.f32.mrb[0].mxu0
      %v2818 = vadd.f32 %v573, %v2817
      %v2819 = vpop.f32.mrb[0].mxu0
      %2820 = vmatprep.mubr.bf16.mxu0 0
      %2821 = vmatmul.mubr.bf16.gmra.mrb[0].mxu0 %v1801
      %v2822 = vpop.f32.mrb[0].mxu0
      %v2823 = vadd.f32 %v573, %v2822
      %v2824 = vpop.f32.mrb[0].mxu0
      %v2825 = vpop.f32.mrb[0].mxu0
      %v2826 = vadd.f32 %v573, %v2825
      %v2827 = vpop.f32.mrb[0].mxu0
      %2828 = vmatprep.mubr.bf16.mxu0 0
      %2829 = vmatmul.mubr.bf16.gmra.mrb[0].mxu0 %v1804
      %v2830 = vpop.f32.mrb[0].mxu0
      %v2831 = vadd.f32 %v573, %v2830
      %v2832 = vpop.f32.mrb[0].mxu0
      %v2833 = vpop.f32.mrb[0].mxu0
      %v2834 = vadd.f32 %v573, %v2833
      %v2835 = vpop.f32.mrb[0].mxu0
      %2836 = vmatprep.mubr.bf16.mxu0 0
      %2837 = vmatmul.mubr.bf16.gmra.mrb[0].mxu0 %v1807
      %v2838 = vpop.f32.mrb[0].mxu0
      %v2839 = vadd.f32 %v573, %v2838
      %v2840 = vpop.f32.mrb[0].mxu0
      %v2841 = vpop.f32.mrb[0].mxu0
      %v2842 = vadd.f32 %v573, %v2841
      %v2843 = vpop.f32.mrb[0].mxu0
      %2844 = vmatprep.mubr.bf16.mxu0 0
      %2845 = vmatmul.mubr.bf16.gmra.mrb[0].mxu0 %v1810
      %v2846 = vpop.f32.mrb[0].mxu0
      %v2847 = vadd.f32 %v573, %v2846
      %v2848 = vpop.f32.mrb[0].mxu0
      %v2849 = vpop.f32.mrb[0].mxu0
      %v2850 = vadd.f32 %v573, %v2849
      %v2851 = vpop.f32.mrb[0].mxu0
      %2852 = vmatprep.mubr.bf16.mxu0 0
      %2853 = vmatmul.mubr.bf16.gmra.mrb[0].mxu0 %v1813
      %v2854 = vpop.f32.mrb[0].mxu0
      %v2855 = vadd.f32 %v573, %v2854
      %v2856 = vpop.f32.mrb[0].mxu0
      %v2857 = vpop.f32.mrb[0].mxu0
      %v2858 = vadd.f32 %v573, %v2857
      %v2859 = vpop.f32.mrb[0].mxu0
      %2860 = vmatprep.mubr.bf16.mxu0 0
      %2861 = vmatmul.mubr.bf16.gmra.mrb[0].mxu0 %v1816
      %v2862 = vpop.f32.mrb[0].mxu0
      %v2863 = vadd.f32 %v573, %v2862
      %v2864 = vpop.f32.mrb[0].mxu0
      %v2865 = vpop.f32.mrb[0].mxu0
      %v2866 = vadd.f32 %v573, %v2865
      %v2867 = vpop.f32.mrb[0].mxu0
      %2868 = vmatprep.mubr.bf16.mxu0 0
      %2869 = vmatmul.mubr.bf16.gmra.mrb[0].mxu0 %v1819
      %v2870 = vpop.f32.mrb[0].mxu0
      %v2871 = vadd.f32 %v573, %v2870
      %v2872 = vpop.f32.mrb[0].mxu0
      %v2873 = vpop.f32.mrb[0].mxu0
      %v2874 = vadd.f32 %v573, %v2873
      %v2875 = vpop.f32.mrb[0].mxu0
      %2876 = vmatprep.mubr.bf16.mxu0 0
      %2877 = vmatmul.mubr.bf16.gmra.mrb[0].mxu0 %v1822
      %v2878 = vpop.f32.mrb[0].mxu0
      %v2879 = vadd.f32 %v573, %v2878
      %v2880 = vpop.f32.mrb[0].mxu0
      %v2881 = vpop.f32.mrb[0].mxu0
      %v2882 = vadd.f32 %v573, %v2881
      %v2883 = vpop.f32.mrb[0].mxu0
      %2884 = vmatprep.mubr.bf16.mxu0 0
      %2885 = vmatmul.mubr.bf16.gmra.mrb[0].mxu0 %v1825
      %v2886 = vpop.f32.mrb[0].mxu0
      %v2887 = vadd.f32 %v573, %v2886
      %v2888 = vpop.f32.mrb[0].mxu0
      %v2889 = vpop.f32.mrb[0].mxu0
      %v2890 = vadd.f32 %v573, %v2889
      %v2891 = vpop.f32.mrb[0].mxu0
      %2892 = vmatprep.mubr.bf16.mxu0 0
      %2893 = vmatmul.mubr.bf16.gmra.mrb[0].mxu0 %v1828
      %v2894 = vpop.f32.mrb[0].mxu0
      %v2895 = vadd.f32 %v573, %v2894
      %v2896 = vpop.f32.mrb[0].mxu0
      %v2897 = vpop.f32.mrb[0].mxu0
      %v2898 = vadd.f32 %v573, %v2897
      %v2899 = vpop.f32.mrb[0].mxu0
      %2900 = vmatprep.mubr.bf16.mxu0 0
      %2901 = vmatmul.mubr.bf16.gmra.mrb[0].mxu0 %v1831
      %v2902 = vpop.f32.mrb[0].mxu0
      %v2903 = vadd.f32 %v573, %v2902
      %v2904 = vpop.f32.mrb[0].mxu0
      %v2905 = vpop.f32.mrb[0].mxu0
      %v2906 = vadd.f32 %v573, %v2905
      %v2907 = vpop.f32.mrb[0].mxu0
      %2908 = vmatprep.mubr.bf16.mxu0 0
      %2909 = vmatmul.mubr.bf16.gmra.mrb[0].mxu0 %v1834
      %v2910 = vpop.f32.mrb[0].mxu0
      %v2911 = vadd.f32 %v573, %v2910
      %v2912 = vpop.f32.mrb[0].mxu0
      %v2913 = vpop.f32.mrb[0].mxu0
      %v2914 = vadd.f32 %v573, %v2913
      %v2915 = vpop.f32.mrb[0].mxu0
      %2916 = vmatprep.mubr.bf16.mxu0 0
      %2917 = vmatmul.mubr.bf16.gmra.mrb[0].mxu0 %v1837
      %v2918 = vpop.f32.mrb[0].mxu0
      %v2919 = vadd.f32 %v573, %v2918
      %v2920 = vpop.f32.mrb[0].mxu0
      %v2921 = vpop.f32.mrb[0].mxu0
      %v2922 = vadd.f32 %v573, %v2921
      %v2923 = vpop.f32.mrb[0].mxu0
      %2924 = vmatprep.mubr.bf16.mxu0 0
      %2925 = vmatmul.mubr.bf16.gmra.mrb[0].mxu0 %v1840
      %v2926 = vpop.f32.mrb[0].mxu0
      %v2927 = vadd.f32 %v573, %v2926
      %v2928 = vpop.f32.mrb[0].mxu0
      %v2929 = vpop.f32.mrb[0].mxu0
      %v2930 = vadd.f32 %v573, %v2929
      %v2931 = vpop.f32.mrb[0].mxu0
      %2932 = vmatprep.mubr.bf16.mxu0 0
      %2933 = vmatmul.mubr.bf16.gmra.mrb[0].mxu0 %v1843
      %v2934 = vpop.f32.mrb[0].mxu0
      %v2935 = vadd.f32 %v573, %v2934
      %v2936 = vpop.f32.mrb[0].mxu0
      %v2937 = vpop.f32.mrb[0].mxu0
      %v2938 = vadd.f32 %v573, %v2937
      %v2939 = vpop.f32.mrb[0].mxu0
      %2940 = vmatprep.mubr.bf16.mxu0 0
      %2941 = vmatmul.mubr.bf16.gmra.mrb[0].mxu0 %v1846
      %v2942 = vpop.f32.mrb[0].mxu0
      %v2943 = vadd.f32 %v573, %v2942
      %v2944 = vpop.f32.mrb[0].mxu0
      %v2945 = vpop.f32.mrb[0].mxu0
      %v2946 = vadd.f32 %v573, %v2945
      %v2947 = vpop.f32.mrb[0].mxu0
      %2948 = vmatprep.mubr.bf16.mxu0 0
      %2949 = vmatmul.mubr.bf16.gmra.mrb[0].mxu0 %v1849
      %v2950 = vpop.f32.mrb[0].mxu0
      %v2951 = vadd.f32 %v573, %v2950
      %v2952 = vpop.f32.mrb[0].mxu0
      %v2953 = vpop.f32.mrb[0].mxu0
      %v2954 = vadd.f32 %v573, %v2953
      %v2955 = vpop.f32.mrb[0].mxu0
      %2956 = vmatprep.mubr.bf16.mxu0 0
      %2957 = vmatmul.mubr.bf16.gmra.mrb[0].mxu0 %v1852
      %v2958 = vpop.f32.mrb[0].mxu0
      %v2959 = vadd.f32 %v573, %v2958
      %v2960 = vpop.f32.mrb[0].mxu0
      %v2961 = vpop.f32.mrb[0].mxu0
      %v2962 = vadd.f32 %v573, %v2961
      %v2963 = vpop.f32.mrb[0].mxu0
      %2964 = vmatprep.mubr.bf16.mxu0 0
      %2965 = vmatmul.mubr.bf16.gmra.mrb[0].mxu0 %v1855
      %v2966 = vpop.f32.mrb[0].mxu0
      %v2967 = vadd.f32 %v573, %v2966
      %v2968 = vpop.f32.mrb[0].mxu0
      %v2969 = vpop.f32.mrb[0].mxu0
      %v2970 = vadd.f32 %v573, %v2969
      %v2971 = vpop.f32.mrb[0].mxu0
      %2972 = vmatprep.mubr.bf16.mxu0 0
      %2973 = vmatmul.mubr.bf16.gmra.mrb[0].mxu0 %v1858
      %v2974 = vpop.f32.mrb[0].mxu0
      %v2975 = vadd.f32 %v573, %v2974
      %v2976 = vpop.f32.mrb[0].mxu0
      %v2977 = vpop.f32.mrb[0].mxu0
      %v2978 = vadd.f32 %v573, %v2977
      %v2979 = vpop.f32.mrb[0].mxu0
      %2980 = vmatprep.mubr.bf16.mxu0 0
      %2981 = vmatmul.mubr.bf16.gmra.mrb[0].mxu0 %v1861
      %v2982 = vpop.f32.mrb[0].mxu0
      %v2983 = vadd.f32 %v573, %v2982
      %v2984 = vpop.f32.mrb[0].mxu0
      %v2985 = vpop.f32.mrb[0].mxu0
      %v2986 = vadd.f32 %v573, %v2985
      %v2987 = vpop.f32.mrb[0].mxu0
      %2988 = vmatprep.mubr.bf16.mxu0 0
      %2989 = vmatmul.mubr.bf16.gmra.mrb[0].mxu0 %v1864
      %v2990 = vpop.f32.mrb[0].mxu0
      %v2991 = vadd.f32 %v573, %v2990
      %v2992 = vpop.f32.mrb[0].mxu0
      %v2993 = vpop.f32.mrb[0].mxu0
      %v2994 = vadd.f32 %v573, %v2993
      %v2995 = vpop.f32.mrb[0].mxu0
      %2996 = vmatprep.mubr.bf16.mxu0 0
      %2997 = vmatmul.mubr.bf16.gmra.mrb[0].mxu0 %v1867
      %v2998 = vpop.f32.mrb[0].mxu0
      %v2999 = vadd.f32 %v573, %v2998
      %v3000 = vpop.f32.mrb[0].mxu0
      %v3001 = vpop.f32.mrb[0].mxu0
      %v3002 = vadd.f32 %v573, %v3001
      %v3003 = vpop.f32.mrb[0].mxu0
      %3004 = vmatprep.mubr.bf16.mxu0 0
      %3005 = vmatmul.mubr.bf16.gmra.mrb[0].mxu0 %v1870
      %v3006 = vpop.f32.mrb[0].mxu0
      %v3007 = vadd.f32 %v573, %v3006
      %v3008 = vpop.f32.mrb[0].mxu0
      %v3009 = vpop.f32.mrb[0].mxu0
      %v3010 = vadd.f32 %v573, %v3009
      %v3011 = vpop.f32.mrb[0].mxu0
      %3012 = vmatprep.mubr.bf16.mxu0 0
      %3013 = vmatmul.mubr.bf16.gmra.mrb[0].mxu0 %v1873
      %v3014 = vpop.f32.mrb[0].mxu0
      %v3015 = vadd.f32 %v573, %v3014
      %v3016 = vpop.f32.mrb[0].mxu0
      %v3017 = vpop.f32.mrb[0].mxu0
      %v3018 = vadd.f32 %v573, %v3017
      %v3019 = vpop.f32.mrb[0].mxu0
      %3020 = vmatprep.mubr.bf16.mxu0 0
      %3021 = vmatmul.mubr.bf16.gmra.mrb[0].mxu0 %v1876
      %v3022 = vpop.f32.mrb[0].mxu0
      %v3023 = vadd.f32 %v573, %v3022
      %v3024 = vpop.f32.mrb[0].mxu0
      %v3025 = vpop.f32.mrb[0].mxu0
      %v3026 = vadd.f32 %v573, %v3025
      %v3027 = vpop.f32.mrb[0].mxu0
      %3028 = vmatprep.mubr.bf16.mxu0 0
      %3029 = vmatmul.mubr.bf16.gmra.mrb[0].mxu0 %v1879
      %v3030 = vpop.f32.mrb[0].mxu0
      %v3031 = vadd.f32 %v573, %v3030
      %v3032 = vpop.f32.mrb[0].mxu0
      %v3033 = vpop.f32.mrb[0].mxu0
      %v3034 = vadd.f32 %v573, %v3033
      %v3035 = vpop.f32.mrb[0].mxu0
      %3036 = vmatprep.mubr.bf16.mxu0 0
      %3037 = vmatmul.mubr.bf16.gmra.mrb[0].mxu0 %v1882
      %v3038 = vpop.f32.mrb[0].mxu0
      %v3039 = vadd.f32 %v573, %v3038
      %v3040 = vpop.f32.mrb[0].mxu0
      %v3041 = vpop.f32.mrb[0].mxu0
      %v3042 = vadd.f32 %v573, %v3041
      %v3043 = vpop.f32.mrb[0].mxu0
      %3044 = vmatprep.mubr.bf16.mxu0 0
      %3045 = vmatmul.mubr.bf16.gmra.mrb[0].mxu0 %v1885
      %v3046 = vpop.f32.mrb[0].mxu0
      %v3047 = vadd.f32 %v573, %v3046
      %v3048 = vpop.f32.mrb[0].mxu0
      %v3049 = vpop.f32.mrb[0].mxu0
      %v3050 = vadd.f32 %v573, %v3049
      %v3051 = vpop.f32.mrb[0].mxu0
      %3052 = vmatprep.mubr.bf16.mxu0 0
      %3053 = vmatmul.mubr.bf16.gmra.mrb[0].mxu0 %v1888
      %v3054 = vpop.f32.mrb[0].mxu0
      %v3055 = vadd.f32 %v573, %v3054
      %v3056 = vpop.f32.mrb[0].mxu0
      %v3057 = vpop.f32.mrb[0].mxu0
      %v3058 = vadd.f32 %v573, %v3057
      %v3059 = vpop.f32.mrb[0].mxu0
      %3060 = vmatprep.mubr.bf16.mxu0 0
      %3061 = vmatmul.mubr.bf16.gmra.mrb[0].mxu0 %v1891
      %v3062 = vpop.f32.mrb[0].mxu0
      %v3063 = vadd.f32 %v573, %v3062
      %v3064 = vpop.f32.mrb[0].mxu0
      %v3065 = vpop.f32.mrb[0].mxu0
      %v3066 = vadd.f32 %v573, %v3065
      %v3067 = vpop.f32.mrb[0].mxu0
      %3068 = vmatprep.mubr.bf16.mxu0 0
      %3069 = vmatmul.mubr.bf16.gmra.mrb[0].mxu0 %v1894
      %v3070 = vpop.f32.mrb[0].mxu0
      %v3071 = vadd.f32 %v573, %v3070
      %v3072 = vpop.f32.mrb[0].mxu0
      %v3073 = vpop.f32.mrb[0].mxu0
      %v3074 = vadd.f32 %v573, %v3073
      %v3075 = vpop.f32.mrb[0].mxu0
      %3076 = vmatprep.mubr.bf16.mxu0 0
      %3077 = vmatmul.mubr.bf16.gmra.mrb[0].mxu0 %v1897
      %v3078 = vpop.f32.mrb[0].mxu0
      %v3079 = vadd.f32 %v573, %v3078
      %v3080 = vpop.f32.mrb[0].mxu0
      %v3081 = vpop.f32.mrb[0].mxu0
      %v3082 = vadd.f32 %v573, %v3081
      %v3083 = vpop.f32.mrb[0].mxu0
      %3084 = vmatprep.mubr.bf16.mxu0 0
      %3085 = vmatmul.mubr.bf16.gmra.mrb[0].mxu0 %v1900
      %v3086 = vpop.f32.mrb[0].mxu0
      %v3087 = vadd.f32 %v573, %v3086
      %v3088 = vpop.f32.mrb[0].mxu0
      %v3089 = vpop.f32.mrb[0].mxu0
      %v3090 = vadd.f32 %v573, %v3089
      %v3091 = vpop.f32.mrb[0].mxu0
      %3092 = vmatprep.mubr.bf16.mxu0 0
      %3093 = vmatmul.mubr.bf16.gmra.mrb[0].mxu0 %v1903
      %v3094 = vpop.f32.mrb[0].mxu0
      %v3095 = vadd.f32 %v573, %v3094
      %v3096 = vpop.f32.mrb[0].mxu0
      %v3097 = vpop.f32.mrb[0].mxu0
      %v3098 = vadd.f32 %v573, %v3097
      %v3099 = vpop.f32.mrb[0].mxu0
      %3100 = vmatprep.mubr.bf16.mxu0 0
      %3101 = vmatmul.mubr.bf16.gmra.mrb[0].mxu0 %v1906
      %v3102 = vpop.f32.mrb[0].mxu0
      %v3103 = vadd.f32 %v573, %v3102
      %v3104 = vpop.f32.mrb[0].mxu0
      %v3105 = vpop.f32.mrb[0].mxu0
      %v3106 = vadd.f32 %v573, %v3105
      %v3107 = vpop.f32.mrb[0].mxu0
      %3108 = vmatprep.mubr.bf16.mxu0 0
      %3109 = vmatmul.mubr.bf16.gmra.mrb[0].mxu0 %v1909
      %v3110 = vpop.f32.mrb[0].mxu0
      %v3111 = vadd.f32 %v573, %v3110
      %v3112 = vpop.f32.mrb[0].mxu0
      %v3113 = vpop.f32.mrb[0].mxu0
      %v3114 = vadd.f32 %v573, %v3113
      %v3115 = vpop.f32.mrb[0].mxu0
      %3116 = vmatprep.mubr.bf16.mxu0 0
      %3117 = vmatmul.mubr.bf16.gmra.mrb[0].mxu0 %v1912
      %v3118 = vpop.f32.mrb[0].mxu0
      %v3119 = vadd.f32 %v573, %v3118
      %v3120 = vpop.f32.mrb[0].mxu0
      %v3121 = vpop.f32.mrb[0].mxu0
      %v3122 = vadd.f32 %v573, %v3121
      %v3123 = vpop.f32.mrb[0].mxu0
      %3124 = vmatprep.mubr.bf16.mxu0 0
      %3125 = vmatmul.mubr.bf16.gmra.mrb[0].mxu0 %v1915
      %v3126 = vpop.f32.mrb[0].mxu0
      %v3127 = vadd.f32 %v573, %v3126
      %v3128 = vpop.f32.mrb[0].mxu0
      %v3129 = vpop.f32.mrb[0].mxu0
      %v3130 = vadd.f32 %v573, %v3129
      %v3131 = vpop.f32.mrb[0].mxu0
      %3132 = vmatprep.mubr.bf16.mxu0 0
      %3133 = vmatmul.mubr.bf16.gmra.mrb[0].mxu0 %v1918
      %v3134 = vpop.f32.mrb[0].mxu0
      %v3135 = vadd.f32 %v573, %v3134
      %v3136 = vpop.f32.mrb[0].mxu0
      %v3137 = vpop.f32.mrb[0].mxu0
      %v3138 = vadd.f32 %v573, %v3137
      %v3139 = vpop.f32.mrb[0].mxu0
      %3140 = vmatprep.mubr.bf16.mxu0 0
      %3141 = vmatmul.mubr.bf16.gmra.mrb[0].mxu0 %v1921
      %v3142 = vpop.f32.mrb[0].mxu0
      %v3143 = vadd.f32 %v573, %v3142
      %v3144 = vpop.f32.mrb[0].mxu0
      %v3145 = vpop.f32.mrb[0].mxu0
      %v3146 = vadd.f32 %v573, %v3145
      %v3147 = vpop.f32.mrb[0].mxu0
      %3148 = vmatprep.mubr.bf16.mxu0 0
      %3149 = vmatmul.mubr.bf16.gmra.mrb[0].mxu0 %v1924
      %v3150 = vpop.f32.mrb[0].mxu0
      %v3151 = vadd.f32 %v573, %v3150
      %v3152 = vpop.f32.mrb[0].mxu0
      %v3153 = vpop.f32.mrb[0].mxu0
      %v3154 = vadd.f32 %v573, %v3153
      %v3155 = vpop.f32.mrb[0].mxu0
      %3156 = vmatprep.mubr.bf16.mxu0 0
      %3157 = vmatmul.mubr.bf16.gmra.mrb[0].mxu0 %v1927
      %v3158 = vpop.f32.mrb[0].mxu0
      %v3159 = vadd.f32 %v573, %v3158
      %v3160 = vpop.f32.mrb[0].mxu0
      %v3161 = vpop.f32.mrb[0].mxu0
      %v3162 = vadd.f32 %v573, %v3161
      %v3163 = vpop.f32.mrb[0].mxu0
      %3164 = vmatprep.mubr.bf16.mxu0 0
      %3165 = vmatmul.mubr.bf16.gmra.mrb[0].mxu0 %v1930
      %v3166 = vpop.f32.mrb[0].mxu0
      %v3167 = vadd.f32 %v573, %v3166
      %v3168 = vpop.f32.mrb[0].mxu0
      %v3169 = vpop.f32.mrb[0].mxu0
      %v3170 = vadd.f32 %v573, %v3169
      %v3171 = vpop.f32.mrb[0].mxu0
      %3172 = vmatprep.mubr.bf16.mxu0 0
      %3173 = vmatmul.mubr.bf16.gmra.mrb[0].mxu0 %v1933
      %v3174 = vpop.f32.mrb[0].mxu0
      %v3175 = vadd.f32 %v573, %v3174
      %v3176 = vpop.f32.mrb[0].mxu0
      %v3177 = vpop.f32.mrb[0].mxu0
      %v3178 = vadd.f32 %v573, %v3177
      %v3179 = vpop.f32.mrb[0].mxu0
      %3180 = vmatprep.mubr.bf16.mxu0 0
      %3181 = vmatmul.mubr.bf16.gmra.mrb[0].mxu0 %v1936
      %v3182 = vpop.f32.mrb[0].mxu0
      %v3183 = vadd.f32 %v573, %v3182
      %v3184 = vpop.f32.mrb[0].mxu0
      %v3185 = vpop.f32.mrb[0].mxu0
      %v3186 = vadd.f32 %v573, %v3185
      %v3187 = vpop.f32.mrb[0].mxu0
      %3188 = vmatprep.mubr.bf16.mxu0 0
      %3189 = vmatmul.mubr.bf16.gmra.mrb[0].mxu0 %v1939
      %v3190 = vpop.f32.mrb[0].mxu0
      %v3191 = vadd.f32 %v573, %v3190
      %v3192 = vpop.f32.mrb[0].mxu0
      %v3193 = vpop.f32.mrb[0].mxu0
      %v3194 = vadd.f32 %v573, %v3193
      %v3195 = vpop.f32.mrb[0].mxu0
      %3196 = vmatprep.mubr.bf16.mxu0 0
      %3197 = vmatmul.mubr.bf16.gmra.mrb[0].mxu0 %v1942
      %v3198 = vpop.f32.mrb[0].mxu0
      %v3199 = vadd.f32 %v573, %v3198
      %v3200 = vpop.f32.mrb[0].mxu0
      %v3201 = vpop.f32.mrb[0].mxu0
      %v3202 = vadd.f32 %v573, %v3201
      %v3203 = vpop.f32.mrb[0].mxu0
      %3204 = vmatprep.mubr.bf16.mxu0 0
      %3205 = vmatmul.mubr.bf16.gmra.mrb[0].mxu0 %v1945
      %v3206 = vpop.f32.mrb[0].mxu0
      %v3207 = vadd.f32 %v573, %v3206
      %v3208 = vpop.f32.mrb[0].mxu0
      %v3209 = vpop.f32.mrb[0].mxu0
      %v3210 = vadd.f32 %v573, %v3209
      %v3211 = vpop.f32.mrb[0].mxu0
      %3212 = vmatprep.mubr.bf16.mxu0 0
      %3213 = vmatmul.mubr.bf16.gmra.mrb[0].mxu0 %v1948
      %v3214 = vpop.f32.mrb[0].mxu0
      %v3215 = vadd.f32 %v573, %v3214
      %v3216 = vpop.f32.mrb[0].mxu0
      %v3217 = vpop.f32.mrb[0].mxu0
      %v3218 = vadd.f32 %v573, %v3217
      %v3219 = vpop.f32.mrb[0].mxu0
      %3220 = vmatprep.mubr.bf16.mxu0 0
      %3221 = vmatmul.mubr.bf16.gmra.mrb[0].mxu0 %v1951
      %v3222 = vpop.f32.mrb[0].mxu0
      %v3223 = vadd.f32 %v573, %v3222
      %v3224 = vpop.f32.mrb[0].mxu0
      %v3225 = vpop.f32.mrb[0].mxu0
      %v3226 = vadd.f32 %v573, %v3225
      %v3227 = vpop.f32.mrb[0].mxu0
      %3228 = vmatprep.mubr.bf16.mxu0 0
      %3229 = vmatmul.mubr.bf16.gmra.mrb[0].mxu0 %v1954
      %v3230 = vpop.f32.mrb[0].mxu0
      %v3231 = vadd.f32 %v573, %v3230
      %v3232 = vpop.f32.mrb[0].mxu0
      %v3233 = vpop.f32.mrb[0].mxu0
      %v3234 = vadd.f32 %v573, %v3233
      %v3235 = vpop.f32.mrb[0].mxu0
      %3236 = vmatprep.mubr.bf16.mxu0 0
      %3237 = vmatmul.mubr.bf16.gmra.mrb[0].mxu0 %v1957
      %v3238 = vpop.f32.mrb[0].mxu0
      %v3239 = vadd.f32 %v573, %v3238
      %v3240 = vpop.f32.mrb[0].mxu0
      %v3241 = vpop.f32.mrb[0].mxu0
      %v3242 = vadd.f32 %v573, %v3241
      %v3243 = vpop.f32.mrb[0].mxu0
      %3244 = vmatprep.mubr.bf16.mxu0 0
      %3245 = vmatmul.mubr.bf16.gmra.mrb[0].mxu0 %v1960
      %v3246 = vpop.f32.mrb[0].mxu0
      %v3247 = vadd.f32 %v573, %v3246
      %v3248 = vpop.f32.mrb[0].mxu0
      %v3249 = vpop.f32.mrb[0].mxu0
      %v3250 = vadd.f32 %v573, %v3249
      %v3251 = vpop.f32.mrb[0].mxu0
      %3252 = vmatprep.mubr.bf16.mxu0 0
      %3253 = vmatmul.mubr.bf16.gmra.mrb[0].mxu0 %v1963
      %v3254 = vpop.f32.mrb[0].mxu0
      %v3255 = vadd.f32 %v573, %v3254
      %v3256 = vpop.f32.mrb[0].mxu0
      %v3257 = vpop.f32.mrb[0].mxu0
      %v3258 = vadd.f32 %v573, %v3257
      %v3259 = vpop.f32.mrb[0].mxu0
      %3260 = vmatprep.mubr.bf16.mxu0 0
      %3261 = vmatmul.mubr.bf16.gmra.mrb[0].mxu0 %v1966
      %v3262 = vpop.f32.mrb[0].mxu0
      %v3263 = vadd.f32 %v573, %v3262
      %v3264 = vpop.f32.mrb[0].mxu0
      %v3265 = vpop.f32.mrb[0].mxu0
      %v3266 = vadd.f32 %v573, %v3265
      %v3267 = vpop.f32.mrb[0].mxu0
      %3268 = vmatprep.mubr.bf16.mxu0 0
      %3269 = vmatmul.mubr.bf16.gmra.mrb[0].mxu0 %v1969
      %v3270 = vpop.f32.mrb[0].mxu0
      %v3271 = vadd.f32 %v573, %v3270
      %v3272 = vpop.f32.mrb[0].mxu0
      %v3273 = vpop.f32.mrb[0].mxu0
      %v3274 = vadd.f32 %v573, %v3273
      %v3275 = vpop.f32.mrb[0].mxu0
      %3276 = vmatprep.mubr.bf16.mxu0 0
      %3277 = vmatmul.mubr.bf16.gmra.mrb[0].mxu0 %v1972
      %v3278 = vpop.f32.mrb[0].mxu0
      %v3279 = vadd.f32 %v573, %v3278
      %v3280 = vpop.f32.mrb[0].mxu0
      %v3281 = vpop.f32.mrb[0].mxu0
      %v3282 = vadd.f32 %v573, %v3281
      %v3283 = vpop.f32.mrb[0].mxu0
      %3284 = vmatprep.mubr.bf16.mxu0 0
      %3285 = vmatmul.mubr.bf16.gmra.mrb[0].mxu0 %v1975
      %v3286 = vpop.f32.mrb[0].mxu0
      %v3287 = vadd.f32 %v573, %v3286
      %v3288 = vpop.f32.mrb[0].mxu0
      %v3289 = vpop.f32.mrb[0].mxu0
      %v3290 = vadd.f32 %v573, %v3289
      %v3291 = vpop.f32.mrb[0].mxu0
      %3292 = vmatprep.mubr.bf16.mxu0 0
      %3293 = vmatmul.mubr.bf16.gmra.mrb[0].mxu0 %v1978
      %v3294 = vpop.f32.mrb[0].mxu0
      %v3295 = vadd.f32 %v573, %v3294
      %v3296 = vpop.f32.mrb[0].mxu0
      %v3297 = vpop.f32.mrb[0].mxu0
      %v3298 = vadd.f32 %v573, %v3297
      %v3299 = vpop.f32.mrb[0].mxu0
      %3300 = vmatprep.mubr.bf16.mxu0 0
      %3301 = vmatmul.mubr.bf16.gmra.mrb[0].mxu0 %v1981
      %v3302 = vpop.f32.mrb[0].mxu0
      %v3303 = vadd.f32 %v573, %v3302
      %v3304 = vpop.f32.mrb[0].mxu0
      %v3305 = vpop.f32.mrb[0].mxu0
      %v3306 = vadd.f32 %v573, %v3305
      %v3307 = vpop.f32.mrb[0].mxu0
      %3308 = vmatprep.mubr.bf16.mxu0 0
      %3309 = vmatmul.mubr.bf16.gmra.mrb[0].mxu0 %v1984
      %v3310 = vpop.f32.mrb[0].mxu0
      %v3311 = vadd.f32 %v573, %v3310
      %v3312 = vpop.f32.mrb[0].mxu0
      %v3313 = vpop.f32.mrb[0].mxu0
      %v3314 = vadd.f32 %v573, %v3313
      %v3315 = vpop.f32.mrb[0].mxu0
      %3316 = vmatprep.mubr.bf16.mxu0 0
      %3317 = vmatmul.mubr.bf16.gmra.mrb[0].mxu0 %v1987
      %v3318 = vpop.f32.mrb[0].mxu0
      %v3319 = vadd.f32 %v573, %v3318
      %v3320 = vpop.f32.mrb[0].mxu0
      %v3321 = vpop.f32.mrb[0].mxu0
      %v3322 = vadd.f32 %v573, %v3321
      %v3323 = vpop.f32.mrb[0].mxu0
      %3324 = vmatprep.mubr.bf16.mxu0 0
      %3325 = vmatmul.mubr.bf16.gmra.mrb[0].mxu0 %v1990
      %v3326 = vpop.f32.mrb[0].mxu0
      %v3327 = vadd.f32 %v573, %v3326
      %v3328 = vpop.f32.mrb[0].mxu0
      %v3329 = vpop.f32.mrb[0].mxu0
      %v3330 = vadd.f32 %v573, %v3329
      %v3331 = vpop.f32.mrb[0].mxu0
      %3332 = vmatprep.mubr.bf16.mxu0 0
      %3333 = vmatmul.mubr.bf16.gmra.mrb[0].mxu0 %v1993
      %v3334 = vpop.f32.mrb[0].mxu0
      %v3335 = vadd.f32 %v573, %v3334
      %v3336 = vpop.f32.mrb[0].mxu0
      %v3337 = vpop.f32.mrb[0].mxu0
      %v3338 = vadd.f32 %v573, %v3337
      %v3339 = vpop.f32.mrb[0].mxu0
      %3340 = vmatprep.mubr.bf16.mxu0 0
      %3341 = vmatmul.mubr.bf16.gmra.mrb[0].mxu0 %v1996
      %v3342 = vpop.f32.mrb[0].mxu0
      %v3343 = vadd.f32 %v573, %v3342
      %v3344 = vpop.f32.mrb[0].mxu0
      %v3345 = vpop.f32.mrb[0].mxu0
      %v3346 = vadd.f32 %v573, %v3345
      %v3347 = vpop.f32.mrb[0].mxu0
      %3348 = vmatprep.mubr.bf16.mxu0 0
      %3349 = vmatmul.mubr.bf16.gmra.mrb[0].mxu0 %v1999
      %v3350 = vpop.f32.mrb[0].mxu0
      %v3351 = vadd.f32 %v573, %v3350
      %v3352 = vpop.f32.mrb[0].mxu0
      %v3353 = vpop.f32.mrb[0].mxu0
      %v3354 = vadd.f32 %v573, %v3353
      %v3355 = vpop.f32.mrb[0].mxu0
      %3356 = vmatprep.mubr.bf16.mxu0 0
      %3357 = vmatmul.mubr.bf16.gmra.mrb[0].mxu0 %v2002
      %v3358 = vpop.f32.mrb[0].mxu0
      %v3359 = vadd.f32 %v573, %v3358
      %v3360 = vpop.f32.mrb[0].mxu0
      %v3361 = vpop.f32.mrb[0].mxu0
      %v3362 = vadd.f32 %v573, %v3361
      %v3363 = vpop.f32.mrb[0].mxu0
      %3364 = vmatprep.mubr.bf16.mxu0 0
      %3365 = vmatmul.mubr.bf16.gmra.mrb[0].mxu0 %v2005
      %v3366 = vpop.f32.mrb[0].mxu0
      %v3367 = vadd.f32 %v573, %v3366
      %v3368 = vpop.f32.mrb[0].mxu0
      %v3369 = vpop.f32.mrb[0].mxu0
      %v3370 = vadd.f32 %v573, %v3369
      %v3371 = vpop.f32.mrb[0].mxu0
      %3372 = vmatprep.mubr.bf16.mxu0 0
      %3373 = vmatmul.mubr.bf16.gmra.mrb[0].mxu0 %v2008
      %v3374 = vpop.f32.mrb[0].mxu0
      %v3375 = vadd.f32 %v573, %v3374
      %v3376 = vpop.f32.mrb[0].mxu0
      %v3377 = vpop.f32.mrb[0].mxu0
      %v3378 = vadd.f32 %v573, %v3377
      %v3379 = vpop.f32.mrb[0].mxu0
      %3380 = vmatprep.mubr.bf16.mxu0 0
      %3381 = vmatmul.mubr.bf16.gmra.mrb[0].mxu0 %v2011
      %v3382 = vpop.f32.mrb[0].mxu0
      %v3383 = vadd.f32 %v573, %v3382
      %v3384 = vpop.f32.mrb[0].mxu0
      %v3385 = vpop.f32.mrb[0].mxu0
      %v3386 = vadd.f32 %v573, %v3385
      %v3387 = vpop.f32.mrb[0].mxu0
      %3388 = vmatprep.mubr.bf16.mxu0 0
      %3389 = vmatmul.mubr.bf16.gmra.mrb[0].mxu0 %v2014
      %v3390 = vpop.f32.mrb[0].mxu0
      %v3391 = vadd.f32 %v573, %v3390
      %v3392 = vpop.f32.mrb[0].mxu0
      %v3393 = vpop.f32.mrb[0].mxu0
      %v3394 = vadd.f32 %v573, %v3393
      %v3395 = vpop.f32.mrb[0].mxu0
      %3396 = vmatprep.mubr.bf16.mxu0 0
      %3397 = vmatmul.mubr.bf16.gmra.mrb[0].mxu0 %v2017
      %v3398 = vpop.f32.mrb[0].mxu0
      %v3399 = vadd.f32 %v573, %v3398
      %v3400 = vpop.f32.mrb[0].mxu0
      %v3401 = vpop.f32.mrb[0].mxu0
      %v3402 = vadd.f32 %v573, %v3401
      %v3403 = vpop.f32.mrb[0].mxu0
      %3404 = vmatprep.mubr.bf16.mxu0 0
      %3405 = vmatmul.mubr.bf16.gmra.mrb[0].mxu0 %v2020
      %v3406 = vpop.f32.mrb[0].mxu0
      %v3407 = vadd.f32 %v573, %v3406
      %v3408 = vpop.f32.mrb[0].mxu0
      %v3409 = vpop.f32.mrb[0].mxu0
      %v3410 = vadd.f32 %v573, %v3409
      %v3411 = vpop.f32.mrb[0].mxu0
      %3412 = vmatprep.mubr.bf16.mxu0 0
      %3413 = vmatmul.mubr.bf16.gmra.mrb[0].mxu0 %v2023
      %v3414 = vpop.f32.mrb[0].mxu0
      %v3415 = vadd.f32 %v573, %v3414
      %v3416 = vpop.f32.mrb[0].mxu0
      %v3417 = vpop.f32.mrb[0].mxu0
      %v3418 = vadd.f32 %v573, %v3417
      %v3419 = vpop.f32.mrb[0].mxu0
      %3420 = vmatprep.mubr.bf16.mxu0 0
      %3421 = vmatmul.mubr.bf16.gmra.mrb[0].mxu0 %v2026
      %v3422 = vpop.f32.mrb[0].mxu0
      %v3423 = vadd.f32 %v573, %v3422
      %v3424 = vpop.f32.mrb[0].mxu0
      %v3425 = vpop.f32.mrb[0].mxu0
      %v3426 = vadd.f32 %v573, %v3425
      %v3427 = vpop.f32.mrb[0].mxu0
      %3428 = vmatprep.mubr.bf16.mxu0 0
      %3429 = vmatmul.mubr.bf16.gmra.mrb[0].mxu0 %v2029
      %v3430 = vpop.f32.mrb[0].mxu0
      %v3431 = vadd.f32 %v573, %v3430
      %v3432 = vpop.f32.mrb[0].mxu0
      %v3433 = vpop.f32.mrb[0].mxu0
      %v3434 = vadd.f32 %v573, %v3433
      %v3435 = vpop.f32.mrb[0].mxu0
      %3436 = vmatprep.mubr.bf16.mxu0 0
      %3437 = vmatmul.mubr.bf16.gmra.mrb[0].mxu0 %v2032
      %v3438 = vpop.f32.mrb[0].mxu0
      %v3439 = vadd.f32 %v573, %v3438
      %v3440 = vpop.f32.mrb[0].mxu0
      %v3441 = vpop.f32.mrb[0].mxu0
      %v3442 = vadd.f32 %v573, %v3441
      %v3443 = vpop.f32.mrb[0].mxu0
      %3444 = vmatprep.mubr.bf16.mxu0 0
      %3445 = vmatmul.mubr.bf16.gmra.mrb[0].mxu0 %v2035
      %v3446 = vpop.f32.mrb[0].mxu0
      %v3447 = vadd.f32 %v573, %v3446
      %v3448 = vpop.f32.mrb[0].mxu0
      %v3449 = vpop.f32.mrb[0].mxu0
      %v3450 = vadd.f32 %v573, %v3449
      %v3451 = vpop.f32.mrb[0].mxu0
      %3452 = vmatprep.mubr.bf16.mxu0 0
      %3453 = vmatmul.mubr.bf16.gmra.mrb[0].mxu0 %v2038
      %v3454 = vpop.f32.mrb[0].mxu0
      %v3455 = vadd.f32 %v573, %v3454
      %v3456 = vpop.f32.mrb[0].mxu0
      %v3457 = vpop.f32.mrb[0].mxu0
      %v3458 = vadd.f32 %v573, %v3457
      %v3459 = vpop.f32.mrb[0].mxu0
      %3460 = vmatprep.mubr.bf16.mxu0 0
      %3461 = vmatmul.mubr.bf16.gmra.mrb[0].mxu0 %v2041
      %v3462 = vpop.f32.mrb[0].mxu0
      %v3463 = vadd.f32 %v573, %v3462
      %v3464 = vpop.f32.mrb[0].mxu0
      %v3465 = vpop.f32.mrb[0].mxu0
      %v3466 = vadd.f32 %v573, %v3465
      %v3467 = vpop.f32.mrb[0].mxu0
      %3468 = vmatprep.mubr.bf16.mxu0 0
      %3469 = vmatmul.mubr.bf16.gmra.mrb[0].mxu0 %v2044
      %v3470 = vpop.f32.mrb[0].mxu0
      %v3471 = vadd.f32 %v573, %v3470
      %v3472 = vpop.f32.mrb[0].mxu0
      %v3473 = vpop.f32.mrb[0].mxu0
      %v3474 = vadd.f32 %v573, %v3473
      %v3475 = vpop.f32.mrb[0].mxu0
      %3476 = vmatprep.mubr.bf16.mxu0 0
      %3477 = vmatmul.mubr.bf16.gmra.mrb[0].mxu0 %v2047
      %v3478 = vpop.f32.mrb[0].mxu0
      %v3479 = vadd.f32 %v573, %v3478
      %v3480 = vpop.f32.mrb[0].mxu0
      %v3481 = vpop.f32.mrb[0].mxu0
      %v3482 = vadd.f32 %v573, %v3481
      %v3483 = vpop.f32.mrb[0].mxu0
      %3484 = vmatprep.mubr.bf16.mxu0 0
      %3485 = vmatmul.mubr.bf16.gmra.mrb[0].mxu0 %v2050
      %v3486 = vpop.f32.mrb[0].mxu0
      %v3487 = vadd.f32 %v573, %v3486
      %v3488 = vpop.f32.mrb[0].mxu0
      %v3489 = vpop.f32.mrb[0].mxu0
      %v3490 = vadd.f32 %v573, %v3489
      %v3491 = vpop.f32.mrb[0].mxu0
      %3492 = vmatprep.mubr.bf16.mxu0 0
      %3493 = vmatmul.mubr.bf16.gmra.mrb[0].mxu0 %v2053
      %v3494 = vpop.f32.mrb[0].mxu0
      %v3495 = vadd.f32 %v573, %v3494
      %v3496 = vpop.f32.mrb[0].mxu0
      %v3497 = vpop.f32.mrb[0].mxu0
      %v3498 = vadd.f32 %v573, %v3497
      %v3499 = vpop.f32.mrb[0].mxu0
      %3500 = vmatprep.mubr.bf16.mxu0 0
      %3501 = vmatmul.mubr.bf16.gmra.mrb[0].mxu0 %v2056
      %v3502 = vpop.f32.mrb[0].mxu0
      %v3503 = vadd.f32 %v573, %v3502
      %v3504 = vpop.f32.mrb[0].mxu0
      %v3505 = vpop.f32.mrb[0].mxu0
      %v3506 = vadd.f32 %v573, %v3505
      %v3507 = vpop.f32.mrb[0].mxu0
      %3508 = vmatprep.mubr.bf16.mxu0 0
      %3509 = vmatmul.mubr.bf16.gmra.mrb[0].mxu0 %v2059
      %v3510 = vpop.f32.mrb[0].mxu0
      %v3511 = vadd.f32 %v573, %v3510
      %v3512 = vpop.f32.mrb[0].mxu0
      %v3513 = vpop.f32.mrb[0].mxu0
      %v3514 = vadd.f32 %v573, %v3513
      %v3515 = vpop.f32.mrb[0].mxu0
      %3516 = vmatprep.mubr.bf16.mxu0 0
      %3517 = vmatmul.mubr.bf16.gmra.mrb[0].mxu0 %v2062
      %v3518 = vpop.f32.mrb[0].mxu0
      %v3519 = vadd.f32 %v573, %v3518
      %v3520 = vpop.f32.mrb[0].mxu0
      %v3521 = vpop.f32.mrb[0].mxu0
      %v3522 = vadd.f32 %v573, %v3521
      %v3523 = vpop.f32.mrb[0].mxu0
      %3524 = vmatprep.mubr.bf16.mxu0 0
      %3525 = vmatmul.mubr.bf16.gmra.mrb[0].mxu0 %v2065
      %v3526 = vpop.f32.mrb[0].mxu0
      %v3527 = vadd.f32 %v573, %v3526
      %v3528 = vpop.f32.mrb[0].mxu0
      %v3529 = vpop.f32.mrb[0].mxu0
      %v3530 = vadd.f32 %v573, %v3529
      %v3531 = vpop.f32.mrb[0].mxu0
      %3532 = vmatprep.mubr.bf16.mxu0 0
      %3533 = vmatmul.mubr.bf16.gmra.mrb[0].mxu0 %v2068
      %v3534 = vpop.f32.mrb[0].mxu0
      %v3535 = vadd.f32 %v573, %v3534
      %v3536 = vpop.f32.mrb[0].mxu0
      %v3537 = vpop.f32.mrb[0].mxu0
      %v3538 = vadd.f32 %v573, %v3537
      %v3539 = vpop.f32.mrb[0].mxu0
      %3540 = vmatprep.mubr.bf16.mxu0 0
      %3541 = vmatmul.mubr.bf16.gmra.mrb[0].mxu0 %v2071
      %v3542 = vpop.f32.mrb[0].mxu0
      %v3543 = vadd.f32 %v573, %v3542
      %v3544 = vpop.f32.mrb[0].mxu0
      %v3545 = vpop.f32.mrb[0].mxu0
      %v3546 = vadd.f32 %v573, %v3545
      %v3547 = vpop.f32.mrb[0].mxu0
      %3548 = vmatprep.mubr.bf16.mxu0 0
      %3549 = vmatmul.mubr.bf16.gmra.mrb[0].mxu0 %v2074
      %v3550 = vpop.f32.mrb[0].mxu0
      %v3551 = vadd.f32 %v573, %v3550
      %v3552 = vpop.f32.mrb[0].mxu0
      %v3553 = vpop.f32.mrb[0].mxu0
      %v3554 = vadd.f32 %v573, %v3553
      %v3555 = vpop.f32.mrb[0].mxu0
      %3556 = vmatprep.mubr.bf16.mxu0 0
      %3557 = vmatmul.mubr.bf16.gmra.mrb[0].mxu0 %v2077
      %v3558 = vpop.f32.mrb[0].mxu0
      %v3559 = vadd.f32 %v573, %v3558
      %v3560 = vpop.f32.mrb[0].mxu0
      %v3561 = vpop.f32.mrb[0].mxu0
      %v3562 = vadd.f32 %v573, %v3561
      %v3563 = vpop.f32.mrb[0].mxu0
      %3564 = vmatprep.mubr.bf16.mxu0 0
      %3565 = vmatmul.mubr.bf16.gmra.mrb[0].mxu0 %v2080
      %v3566 = vpop.f32.mrb[0].mxu0
      %v3567 = vadd.f32 %v573, %v3566
      %v3568 = vpop.f32.mrb[0].mxu0
      %v3569 = vpop.f32.mrb[0].mxu0
      %v3570 = vadd.f32 %v573, %v3569
      %v3571 = vpop.f32.mrb[0].mxu0
      %3572 = vmatprep.mubr.bf16.mxu0 0
      %3573 = vmatmul.mubr.bf16.gmra.mrb[0].mxu0 %v2083
      %v3574 = vpop.f32.mrb[0].mxu0
      %v3575 = vadd.f32 %v573, %v3574
      %v3576 = vpop.f32.mrb[0].mxu0
      %v3577 = vpop.f32.mrb[0].mxu0
      %v3578 = vadd.f32 %v573, %v3577
      %v3579 = vpop.f32.mrb[0].mxu0
      %3580 = vmatprep.mubr.bf16.mxu0 0
      %3581 = vmatmul.mubr.bf16.gmra.mrb[0].mxu0 %v2086
      %v3582 = vpop.f32.mrb[0].mxu0
      %v3583 = vadd.f32 %v573, %v3582
      %v3584 = vpop.f32.mrb[0].mxu0
      %v3585 = vpop.f32.mrb[0].mxu0
      %v3586 = vadd.f32 %v573, %v3585
      %v3587 = vpop.f32.mrb[0].mxu0
      %3588 = vmatprep.mubr.bf16.mxu0 0
      %3589 = vmatmul.mubr.bf16.gmra.mrb[0].mxu0 %v2089
      %v3590 = vpop.f32.mrb[0].mxu0
      %v3591 = vadd.f32 %v573, %v3590
      %v3592 = vpop.f32.mrb[0].mxu0
      %v3593 = vpop.f32.mrb[0].mxu0
      %v3594 = vadd.f32 %v573, %v3593
      %v3595 = vpop.f32.mrb[0].mxu0
      %3596 = vmatprep.mubr.bf16.mxu0 0
      %3597 = vmatmul.mubr.bf16.gmra.mrb[0].mxu0 %v2092
      %v3598 = vpop.f32.mrb[0].mxu0
      %v3599 = vadd.f32 %v573, %v3598
      %v3600 = vpop.f32.mrb[0].mxu0
      %v3601 = vpop.f32.mrb[0].mxu0
      %v3602 = vadd.f32 %v573, %v3601
      %v3603 = vpop.f32.mrb[0].mxu0
      %3604 = vmatprep.mubr.bf16.mxu0 0
      %3605 = vmatmul.mubr.bf16.gmra.mrb[0].mxu0 %v2095
      %v3606 = vpop.f32.mrb[0].mxu0
      %v3607 = vadd.f32 %v573, %v3606
      %v3608 = vpop.f32.mrb[0].mxu0
      %v3609 = vpop.f32.mrb[0].mxu0
      %v3610 = vadd.f32 %v573, %v3609
      %v3611 = vpop.f32.mrb[0].mxu0
      %3612 = vmatprep.mubr.bf16.mxu0 0
      %3613 = vmatmul.mubr.bf16.gmra.mrb[0].mxu0 %v2098
      %v3614 = vpop.f32.mrb[0].mxu0
      %v3615 = vadd.f32 %v573, %v3614
      %v3616 = vpop.f32.mrb[0].mxu0
      %v3617 = vpop.f32.mrb[0].mxu0
      %v3618 = vadd.f32 %v573, %v3617
      %v3619 = vpop.f32.mrb[0].mxu0
      %3620 = vmatprep.mubr.bf16.mxu0 0
      %3621 = vmatmul.mubr.bf16.gmra.mrb[0].mxu0 %v2101
      %v3622 = vpop.f32.mrb[0].mxu0
      %v3623 = vadd.f32 %v573, %v3622
      %v3624 = vpop.f32.mrb[0].mxu0
      %v3625 = vpop.f32.mrb[0].mxu0
      %v3626 = vadd.f32 %v573, %v3625
      %v3627 = vpop.f32.mrb[0].mxu0
      %3628 = vmatprep.mubr.bf16.mxu0 0
      %3629 = vmatmul.mubr.bf16.gmra.mrb[0].mxu0 %v2104
      %v3630 = vpop.f32.mrb[0].mxu0
      %v3631 = vadd.f32 %v573, %v3630
      %v3632 = vpop.f32.mrb[0].mxu0
      %v3633 = vpop.f32.mrb[0].mxu0
      %v3634 = vadd.f32 %v573, %v3633
      %v3635 = vpop.f32.mrb[0].mxu0
      %3636 = vmatprep.mubr.bf16.mxu0 0
      %3637 = vmatmul.mubr.bf16.gmra.mrb[0].mxu0 %v2107
      %v3638 = vpop.f32.mrb[0].mxu0
      %v3639 = vadd.f32 %v573, %v3638
      %v3640 = vpop.f32.mrb[0].mxu0
      %v3641 = vpop.f32.mrb[0].mxu0
      %v3642 = vadd.f32 %v573, %v3641
      %v3643 = vpop.f32.mrb[0].mxu0
      %3644 = vmatprep.mubr.bf16.mxu0 0
      %3645 = vmatmul.mubr.bf16.gmra.mrb[0].mxu0 %v2110
      %v3646 = vpop.f32.mrb[0].mxu0
      %v3647 = vadd.f32 %v573, %v3646
      %v3648 = vpop.f32.mrb[0].mxu0
      %v3649 = vpop.f32.mrb[0].mxu0
      %v3650 = vadd.f32 %v573, %v3649
      %v3651 = vpop.f32.mrb[0].mxu0
      %3652 = vmatprep.mubr.bf16.mxu0 0
      %3653 = vmatmul.mubr.bf16.gmra.mrb[0].mxu0 %v2113
      %v3654 = vpop.f32.mrb[0].mxu0
      %v3655 = vadd.f32 %v573, %v3654
      %v3656 = vpop.f32.mrb[0].mxu0
      %v3657 = vpop.f32.mrb[0].mxu0
      %v3658 = vadd.f32 %v573, %v3657
      %v3659 = vpop.f32.mrb[0].mxu0
      %3660 = vmatprep.mubr.bf16.mxu0 0
      %3661 = vmatmul.mubr.bf16.gmra.mrb[0].mxu0 %v2116
      %v3662 = vpop.f32.mrb[0].mxu0
      %v3663 = vadd.f32 %v573, %v3662
      %v3664 = vpop.f32.mrb[0].mxu0
      %v3665 = vpop.f32.mrb[0].mxu0
      %v3666 = vadd.f32 %v573, %v3665
      %v3667 = vpop.f32.mrb[0].mxu0
      %3668 = vmatprep.mubr.bf16.mxu0 0
      %3669 = vmatmul.mubr.bf16.gmra.mrb[0].mxu0 %v2119
      %v3670 = vpop.f32.mrb[0].mxu0
      %v3671 = vadd.f32 %v573, %v3670
      %v3672 = vpop.f32.mrb[0].mxu0
      %v3673 = vpop.f32.mrb[0].mxu0
      %v3674 = vadd.f32 %v573, %v3673
      %v3675 = vpop.f32.mrb[0].mxu0
      %3676 = vmatprep.mubr.bf16.mxu0 0
      %3677 = vmatmul.mubr.bf16.gmra.mrb[0].mxu0 %v2122
      %v3678 = vpop.f32.mrb[0].mxu0
      %v3679 = vadd.f32 %v573, %v3678
      %v3680 = vpop.f32.mrb[0].mxu0
      %v3681 = vpop.f32.mrb[0].mxu0
      %v3682 = vadd.f32 %v573, %v3681
      %v3683 = vpop.f32.mrb[0].mxu0
      %3684 = vmatprep.mubr.bf16.mxu0 0
      %3685 = vmatmul.mubr.bf16.gmra.mrb[0].mxu0 %v2125
      %v3686 = vpop.f32.mrb[0].mxu0
      %v3687 = vadd.f32 %v573, %v3686
      %v3688 = vpop.f32.mrb[0].mxu0
      %v3689 = vpop.f32.mrb[0].mxu0
      %v3690 = vadd.f32 %v573, %v3689
      %v3691 = vpop.f32.mrb[0].mxu0
      %3692 = vmatprep.mubr.bf16.mxu0 0
      %3693 = vmatmul.mubr.bf16.gmra.mrb[0].mxu0 %v2128
      %v3694 = vpop.f32.mrb[0].mxu0
      %v3695 = vadd.f32 %v573, %v3694
      %v3696 = vpop.f32.mrb[0].mxu0
      %v3697 = vpop.f32.mrb[0].mxu0
      %v3698 = vadd.f32 %v573, %v3697
      %v3699 = vpop.f32.mrb[0].mxu0
      %3700 = vmatprep.mubr.bf16.mxu0 0
      %3701 = vmatmul.mubr.bf16.gmra.mrb[0].mxu0 %v2131
      %v3702 = vpop.f32.mrb[0].mxu0
      %v3703 = vadd.f32 %v573, %v3702
      %v3704 = vpop.f32.mrb[0].mxu0
      %v3705 = vpop.f32.mrb[0].mxu0
      %v3706 = vadd.f32 %v573, %v3705
      %v3707 = vpop.f32.mrb[0].mxu0
      %3708 = vmatprep.mubr.bf16.mxu0 0
      %3709 = vmatmul.mubr.bf16.gmra.mrb[0].mxu0 %v2134
      %v3710 = vpop.f32.mrb[0].mxu0
      %v3711 = vadd.f32 %v573, %v3710
      %v3712 = vpop.f32.mrb[0].mxu0
      %v3713 = vpop.f32.mrb[0].mxu0
      %v3714 = vadd.f32 %v573, %v3713
      %v3715 = vpop.f32.mrb[0].mxu0
      %3716 = vmatprep.mubr.bf16.mxu0 0
      %3717 = vmatmul.mubr.bf16.gmra.mrb[0].mxu0 %v2137
      %v3718 = vpop.f32.mrb[0].mxu0
      %v3719 = vadd.f32 %v573, %v3718
      %v3720 = vpop.f32.mrb[0].mxu0
      %v3721 = vpop.f32.mrb[0].mxu0
      %v3722 = vadd.f32 %v573, %v3721
      %v3723 = vpop.f32.mrb[0].mxu0
      %3724 = vmatprep.mubr.bf16.mxu0 0
      %3725 = vmatmul.mubr.bf16.gmra.mrb[0].mxu0 %v2140
      %v3726 = vpop.f32.mrb[0].mxu0
      %v3727 = vadd.f32 %v573, %v3726
      %v3728 = vpop.f32.mrb[0].mxu0
      %v3729 = vpop.f32.mrb[0].mxu0
      %v3730 = vadd.f32 %v573, %v3729
      %v3731 = vpop.f32.mrb[0].mxu0
      %3732 = vmatprep.mubr.bf16.mxu0 0
      %3733 = vmatmul.mubr.bf16.gmra.mrb[0].mxu0 %v2143
      %v3734 = vpop.f32.mrb[0].mxu0
      %v3735 = vadd.f32 %v573, %v3734
      %v3736 = vpop.f32.mrb[0].mxu0
      %v3737 = vpop.f32.mrb[0].mxu0
      %v3738 = vadd.f32 %v573, %v3737
      %v3739 = vpop.f32.mrb[0].mxu0
      %3740 = vmatprep.mubr.bf16.mxu0 0
      %3741 = vmatmul.mubr.bf16.gmra.mrb[0].mxu0 %v2146
      %v3742 = vpop.f32.mrb[0].mxu0
      %v3743 = vadd.f32 %v573, %v3742
      %v3744 = vpop.f32.mrb[0].mxu0
      %v3745 = vpop.f32.mrb[0].mxu0
      %v3746 = vpop.f32.mrb[0].mxu0
      %3747 = vdwg.mxu0
      %vm3748 = vcmp.ge.f32.partialorder %v2183, 0.0
      %vm3749 = vcmp.ge.f32.partialorder %v2186, 0.0
      %vm3750 = vcmp.ge.f32.partialorder %v2191, 0.0
      %vm3751 = vcmp.ge.f32.partialorder %v2194, 0.0
      %vm3752 = vcmp.ge.f32.partialorder %v2199, 0.0
      %vm3753 = vcmp.ge.f32.partialorder %v2202, 0.0
      %vm3754 = vcmp.ge.f32.partialorder %v2207, 0.0
      %vm3755 = vcmp.ge.f32.partialorder %v2210, 0.0
      %vm3756 = vcmp.ge.f32.partialorder %v2215, 0.0
      %vm3757 = vcmp.ge.f32.partialorder %v2218, 0.0
      %vm3758 = vcmp.ge.f32.partialorder %v2223, 0.0
      %vm3759 = vcmp.ge.f32.partialorder %v2226, 0.0
      %vm3760 = vcmp.ge.f32.partialorder %v2231, 0.0
      %vm3761 = vcmp.ge.f32.partialorder %v2234, 0.0
      %vm3762 = vcmp.ge.f32.partialorder %v2239, 0.0
      %vm3763 = vcmp.ge.f32.partialorder %v2242, 0.0
      %vm3764 = vcmp.ge.f32.partialorder %v2247, 0.0
      %vm3765 = vcmp.ge.f32.partialorder %v2250, 0.0
      %vm3766 = vcmp.ge.f32.partialorder %v2255, 0.0
      %vm3767 = vcmp.ge.f32.partialorder %v2258, 0.0
      %vm3768 = vcmp.ge.f32.partialorder %v2263, 0.0
      %vm3769 = vcmp.ge.f32.partialorder %v2266, 0.0
      %vm3770 = vcmp.ge.f32.partialorder %v2271, 0.0
      %vm3771 = vcmp.ge.f32.partialorder %v2274, 0.0
      %vm3772 = vcmp.ge.f32.partialorder %v2279, 0.0
      %vm3773 = vcmp.ge.f32.partialorder %v2282, 0.0
      %vm3774 = vcmp.ge.f32.partialorder %v2287, 0.0
      %vm3775 = vcmp.ge.f32.partialorder %v2290, 0.0
      %vm3776 = vcmp.ge.f32.partialorder %v2295, 0.0
      %vm3777 = vcmp.ge.f32.partialorder %v2298, 0.0
      %vm3778 = vcmp.ge.f32.partialorder %v2303, 0.0
      %vm3779 = vcmp.ge.f32.partialorder %v2306, 0.0
      %vm3780 = vcmp.ge.f32.partialorder %v2311, 0.0
      %vm3781 = vcmp.ge.f32.partialorder %v2314, 0.0
      %vm3782 = vcmp.ge.f32.partialorder %v2319, 0.0
      %vm3783 = vcmp.ge.f32.partialorder %v2322, 0.0
      %vm3784 = vcmp.ge.f32.partialorder %v2327, 0.0
      %vm3785 = vcmp.ge.f32.partialorder %v2330, 0.0
      %vm3786 = vcmp.ge.f32.partialorder %v2335, 0.0
      %vm3787 = vcmp.ge.f32.partialorder %v2338, 0.0
      %vm3788 = vcmp.ge.f32.partialorder %v2343, 0.0
      %vm3789 = vcmp.ge.f32.partialorder %v2346, 0.0
      %vm3790 = vcmp.ge.f32.partialorder %v2351, 0.0
      %vm3791 = vcmp.ge.f32.partialorder %v2354, 0.0
      %vm3792 = vcmp.ge.f32.partialorder %v2359, 0.0
      %vm3793 = vcmp.ge.f32.partialorder %v2362, 0.0
      %vm3794 = vcmp.ge.f32.partialorder %v2367, 0.0
      %vm3795 = vcmp.ge.f32.partialorder %v2370, 0.0
      %vm3796 = vcmp.ge.f32.partialorder %v2375, 0.0
      %vm3797 = vcmp.ge.f32.partialorder %v2378, 0.0
      %vm3798 = vcmp.ge.f32.partialorder %v2383, 0.0
      %vm3799 = vcmp.ge.f32.partialorder %v2386, 0.0
      %vm3800 = vcmp.ge.f32.partialorder %v2391, 0.0
      %vm3801 = vcmp.ge.f32.partialorder %v2394, 0.0
      %vm3802 = vcmp.ge.f32.partialorder %v2399, 0.0
      %vm3803 = vcmp.ge.f32.partialorder %v2402, 0.0
      %vm3804 = vcmp.ge.f32.partialorder %v2407, 0.0
      %vm3805 = vcmp.ge.f32.partialorder %v2410, 0.0
      %vm3806 = vcmp.ge.f32.partialorder %v2415, 0.0
      %vm3807 = vcmp.ge.f32.partialorder %v2418, 0.0
      %vm3808 = vcmp.ge.f32.partialorder %v2423, 0.0
      %vm3809 = vcmp.ge.f32.partialorder %v2426, 0.0
      %vm3810 = vcmp.ge.f32.partialorder %v2431, 0.0
      %vm3811 = vcmp.ge.f32.partialorder %v2434, 0.0
      %vm3812 = vcmp.ge.f32.partialorder %v2439, 0.0
      %vm3813 = vcmp.ge.f32.partialorder %v2442, 0.0
      %vm3814 = vcmp.ge.f32.partialorder %v2447, 0.0
      %vm3815 = vcmp.ge.f32.partialorder %v2450, 0.0
      %vm3816 = vcmp.ge.f32.partialorder %v2455, 0.0
      %vm3817 = vcmp.ge.f32.partialorder %v2458, 0.0
      %vm3818 = vcmp.ge.f32.partialorder %v2463, 0.0
      %vm3819 = vcmp.ge.f32.partialorder %v2466, 0.0
      %vm3820 = vcmp.ge.f32.partialorder %v2471, 0.0
      %vm3821 = vcmp.ge.f32.partialorder %v2474, 0.0
      %vm3822 = vcmp.ge.f32.partialorder %v2479, 0.0
      %vm3823 = vcmp.ge.f32.partialorder %v2482, 0.0
      %vm3824 = vcmp.ge.f32.partialorder %v2487, 0.0
      %vm3825 = vcmp.ge.f32.partialorder %v2490, 0.0
      %vm3826 = vcmp.ge.f32.partialorder %v2495, 0.0
      %vm3827 = vcmp.ge.f32.partialorder %v2498, 0.0
      %vm3828 = vcmp.ge.f32.partialorder %v2503, 0.0
      %vm3829 = vcmp.ge.f32.partialorder %v2506, 0.0
      %vm3830 = vcmp.ge.f32.partialorder %v2511, 0.0
      %vm3831 = vcmp.ge.f32.partialorder %v2514, 0.0
      %vm3832 = vcmp.ge.f32.partialorder %v2519, 0.0
      %vm3833 = vcmp.ge.f32.partialorder %v2522, 0.0
      %vm3834 = vcmp.ge.f32.partialorder %v2527, 0.0
      %vm3835 = vcmp.ge.f32.partialorder %v2530, 0.0
      %vm3836 = vcmp.ge.f32.partialorder %v2535, 0.0
      %vm3837 = vcmp.ge.f32.partialorder %v2538, 0.0
      %vm3838 = vcmp.ge.f32.partialorder %v2543, 0.0
      %vm3839 = vcmp.ge.f32.partialorder %v2546, 0.0
      %vm3840 = vcmp.ge.f32.partialorder %v2551, 0.0
      %vm3841 = vcmp.ge.f32.partialorder %v2554, 0.0
      %vm3842 = vcmp.ge.f32.partialorder %v2559, 0.0
      %vm3843 = vcmp.ge.f32.partialorder %v2562, 0.0
      %vm3844 = vcmp.ge.f32.partialorder %v2567, 0.0
      %vm3845 = vcmp.ge.f32.partialorder %v2570, 0.0
      %vm3846 = vcmp.ge.f32.partialorder %v2575, 0.0
      %vm3847 = vcmp.ge.f32.partialorder %v2578, 0.0
      %vm3848 = vcmp.ge.f32.partialorder %v2583, 0.0
      %vm3849 = vcmp.ge.f32.partialorder %v2586, 0.0
      %vm3850 = vcmp.ge.f32.partialorder %v2591, 0.0
      %vm3851 = vcmp.ge.f32.partialorder %v2594, 0.0
      %vm3852 = vcmp.ge.f32.partialorder %v2599, 0.0
      %vm3853 = vcmp.ge.f32.partialorder %v2602, 0.0
      %vm3854 = vcmp.ge.f32.partialorder %v2607, 0.0
      %vm3855 = vcmp.ge.f32.partialorder %v2610, 0.0
      %vm3856 = vcmp.ge.f32.partialorder %v2615, 0.0
      %vm3857 = vcmp.ge.f32.partialorder %v2618, 0.0
      %vm3858 = vcmp.ge.f32.partialorder %v2623, 0.0
      %vm3859 = vcmp.ge.f32.partialorder %v2626, 0.0
      %vm3860 = vcmp.ge.f32.partialorder %v2631, 0.0
      %vm3861 = vcmp.ge.f32.partialorder %v2634, 0.0
      %vm3862 = vcmp.ge.f32.partialorder %v2639, 0.0
      %vm3863 = vcmp.ge.f32.partialorder %v2642, 0.0
      %vm3864 = vcmp.ge.f32.partialorder %v2647, 0.0
      %vm3865 = vcmp.ge.f32.partialorder %v2650, 0.0
      %vm3866 = vcmp.ge.f32.partialorder %v2655, 0.0
      %vm3867 = vcmp.ge.f32.partialorder %v2658, 0.0
      %vm3868 = vcmp.ge.f32.partialorder %v2663, 0.0
      %vm3869 = vcmp.ge.f32.partialorder %v2666, 0.0
      %vm3870 = vcmp.ge.f32.partialorder %v2671, 0.0
      %vm3871 = vcmp.ge.f32.partialorder %v2674, 0.0
      %vm3872 = vcmp.ge.f32.partialorder %v2679, 0.0
      %vm3873 = vcmp.ge.f32.partialorder %v2682, 0.0
      %vm3874 = vcmp.ge.f32.partialorder %v2687, 0.0
      %vm3875 = vcmp.ge.f32.partialorder %v2690, 0.0
      %vm3876 = vcmp.ge.f32.partialorder %v2695, 0.0
      %vm3877 = vcmp.ge.f32.partialorder %v2698, 0.0
      %vm3878 = vcmp.ge.f32.partialorder %v2703, 0.0
      %vm3879 = vcmp.ge.f32.partialorder %v2706, 0.0
      %vm3880 = vcmp.ge.f32.partialorder %v2711, 0.0
      %vm3881 = vcmp.ge.f32.partialorder %v2714, 0.0
      %vm3882 = vcmp.ge.f32.partialorder %v2719, 0.0
      %vm3883 = vcmp.ge.f32.partialorder %v2722, 0.0
      %vm3884 = vcmp.ge.f32.partialorder %v2727, 0.0
      %vm3885 = vcmp.ge.f32.partialorder %v2730, 0.0
      %vm3886 = vcmp.ge.f32.partialorder %v2735, 0.0
      %vm3887 = vcmp.ge.f32.partialorder %v2738, 0.0
      %vm3888 = vcmp.ge.f32.partialorder %v2743, 0.0
      %vm3889 = vcmp.ge.f32.partialorder %v2746, 0.0
      %vm3890 = vcmp.ge.f32.partialorder %v2751, 0.0
      %vm3891 = vcmp.ge.f32.partialorder %v2754, 0.0
      %vm3892 = vcmp.ge.f32.partialorder %v2759, 0.0
      %vm3893 = vcmp.ge.f32.partialorder %v2762, 0.0
      %vm3894 = vcmp.ge.f32.partialorder %v2767, 0.0
      %vm3895 = vcmp.ge.f32.partialorder %v2770, 0.0
      %vm3896 = vcmp.ge.f32.partialorder %v2775, 0.0
      %vm3897 = vcmp.ge.f32.partialorder %v2778, 0.0
      %vm3898 = vcmp.ge.f32.partialorder %v2783, 0.0
      %vm3899 = vcmp.ge.f32.partialorder %v2786, 0.0
      %vm3900 = vcmp.ge.f32.partialorder %v2791, 0.0
      %vm3901 = vcmp.ge.f32.partialorder %v2794, 0.0
      %vm3902 = vcmp.ge.f32.partialorder %v2799, 0.0
      %vm3903 = vcmp.ge.f32.partialorder %v2802, 0.0
      %vm3904 = vcmp.ge.f32.partialorder %v2807, 0.0
      %vm3905 = vcmp.ge.f32.partialorder %v2810, 0.0
      %vm3906 = vcmp.ge.f32.partialorder %v2815, 0.0
      %vm3907 = vcmp.ge.f32.partialorder %v2818, 0.0
      %vm3908 = vcmp.ge.f32.partialorder %v2823, 0.0
      %vm3909 = vcmp.ge.f32.partialorder %v2826, 0.0
      %vm3910 = vcmp.ge.f32.partialorder %v2831, 0.0
      %vm3911 = vcmp.ge.f32.partialorder %v2834, 0.0
      %vm3912 = vcmp.ge.f32.partialorder %v2839, 0.0
      %vm3913 = vcmp.ge.f32.partialorder %v2842, 0.0
      %vm3914 = vcmp.ge.f32.partialorder %v2847, 0.0
      %vm3915 = vcmp.ge.f32.partialorder %v2850, 0.0
      %vm3916 = vcmp.ge.f32.partialorder %v2855, 0.0
      %vm3917 = vcmp.ge.f32.partialorder %v2858, 0.0
      %vm3918 = vcmp.ge.f32.partialorder %v2863, 0.0
      %vm3919 = vcmp.ge.f32.partialorder %v2866, 0.0
      %vm3920 = vcmp.ge.f32.partialorder %v2871, 0.0
      %vm3921 = vcmp.ge.f32.partialorder %v2874, 0.0
      %vm3922 = vcmp.ge.f32.partialorder %v2879, 0.0
      %vm3923 = vcmp.ge.f32.partialorder %v2882, 0.0
      %vm3924 = vcmp.ge.f32.partialorder %v2887, 0.0
      %vm3925 = vcmp.ge.f32.partialorder %v2890, 0.0
      %vm3926 = vcmp.ge.f32.partialorder %v2895, 0.0
      %vm3927 = vcmp.ge.f32.partialorder %v2898, 0.0
      %vm3928 = vcmp.ge.f32.partialorder %v2903, 0.0
      %vm3929 = vcmp.ge.f32.partialorder %v2906, 0.0
      %vm3930 = vcmp.ge.f32.partialorder %v2911, 0.0
      %vm3931 = vcmp.ge.f32.partialorder %v2914, 0.0
      %vm3932 = vcmp.ge.f32.partialorder %v2919, 0.0
      %vm3933 = vcmp.ge.f32.partialorder %v2922, 0.0
      %vm3934 = vcmp.ge.f32.partialorder %v2927, 0.0
      %vm3935 = vcmp.ge.f32.partialorder %v2930, 0.0
      %vm3936 = vcmp.ge.f32.partialorder %v2935, 0.0
      %vm3937 = vcmp.ge.f32.partialorder %v2938, 0.0
      %vm3938 = vcmp.ge.f32.partialorder %v2943, 0.0
      %vm3939 = vcmp.ge.f32.partialorder %v2946, 0.0
      %vm3940 = vcmp.ge.f32.partialorder %v2951, 0.0
      %vm3941 = vcmp.ge.f32.partialorder %v2954, 0.0
      %vm3942 = vcmp.ge.f32.partialorder %v2959, 0.0
      %vm3943 = vcmp.ge.f32.partialorder %v2962, 0.0
      %vm3944 = vcmp.ge.f32.partialorder %v2967, 0.0
      %vm3945 = vcmp.ge.f32.partialorder %v2970, 0.0
      %vm3946 = vcmp.ge.f32.partialorder %v2975, 0.0
      %vm3947 = vcmp.ge.f32.partialorder %v2978, 0.0
      %vm3948 = vcmp.ge.f32.partialorder %v2983, 0.0
      %vm3949 = vcmp.ge.f32.partialorder %v2986, 0.0
      %vm3950 = vcmp.ge.f32.partialorder %v2991, 0.0
      %vm3951 = vcmp.ge.f32.partialorder %v2994, 0.0
      %vm3952 = vcmp.ge.f32.partialorder %v2999, 0.0
      %vm3953 = vcmp.ge.f32.partialorder %v3002, 0.0
      %vm3954 = vcmp.ge.f32.partialorder %v3007, 0.0
      %vm3955 = vcmp.ge.f32.partialorder %v3010, 0.0
      %vm3956 = vcmp.ge.f32.partialorder %v3015, 0.0
      %vm3957 = vcmp.ge.f32.partialorder %v3018, 0.0
      %vm3958 = vcmp.ge.f32.partialorder %v3023, 0.0
      %vm3959 = vcmp.ge.f32.partialorder %v3026, 0.0
      %vm3960 = vcmp.ge.f32.partialorder %v3031, 0.0
      %vm3961 = vcmp.ge.f32.partialorder %v3034, 0.0
      %vm3962 = vcmp.ge.f32.partialorder %v3039, 0.0
      %vm3963 = vcmp.ge.f32.partialorder %v3042, 0.0
      %vm3964 = vcmp.ge.f32.partialorder %v3047, 0.0
      %vm3965 = vcmp.ge.f32.partialorder %v3050, 0.0
      %vm3966 = vcmp.ge.f32.partialorder %v3055, 0.0
      %vm3967 = vcmp.ge.f32.partialorder %v3058, 0.0
      %vm3968 = vcmp.ge.f32.partialorder %v3063, 0.0
      %vm3969 = vcmp.ge.f32.partialorder %v3066, 0.0
      %vm3970 = vcmp.ge.f32.partialorder %v3071, 0.0
      %vm3971 = vcmp.ge.f32.partialorder %v3074, 0.0
      %vm3972 = vcmp.ge.f32.partialorder %v3079, 0.0
      %vm3973 = vcmp.ge.f32.partialorder %v3082, 0.0
      %vm3974 = vcmp.ge.f32.partialorder %v3087, 0.0
      %vm3975 = vcmp.ge.f32.partialorder %v3090, 0.0
      %vm3976 = vcmp.ge.f32.partialorder %v3095, 0.0
      %vm3977 = vcmp.ge.f32.partialorder %v3098, 0.0
      %vm3978 = vcmp.ge.f32.partialorder %v3103, 0.0
      %vm3979 = vcmp.ge.f32.partialorder %v3106, 0.0
      %vm3980 = vcmp.ge.f32.partialorder %v3111, 0.0
      %vm3981 = vcmp.ge.f32.partialorder %v3114, 0.0
      %vm3982 = vcmp.ge.f32.partialorder %v3119, 0.0
      %vm3983 = vcmp.ge.f32.partialorder %v3122, 0.0
      %vm3984 = vcmp.ge.f32.partialorder %v3127, 0.0
      %vm3985 = vcmp.ge.f32.partialorder %v3130, 0.0
      %vm3986 = vcmp.ge.f32.partialorder %v3135, 0.0
      %vm3987 = vcmp.ge.f32.partialorder %v3138, 0.0
      %vm3988 = vcmp.ge.f32.partialorder %v3143, 0.0
      %vm3989 = vcmp.ge.f32.partialorder %v3146, 0.0
      %vm3990 = vcmp.ge.f32.partialorder %v3151, 0.0
      %vm3991 = vcmp.ge.f32.partialorder %v3154, 0.0
      %vm3992 = vcmp.ge.f32.partialorder %v3159, 0.0
      %vm3993 = vcmp.ge.f32.partialorder %v3162, 0.0
      %vm3994 = vcmp.ge.f32.partialorder %v3167, 0.0
      %vm3995 = vcmp.ge.f32.partialorder %v3170, 0.0
      %vm3996 = vcmp.ge.f32.partialorder %v3175, 0.0
      %vm3997 = vcmp.ge.f32.partialorder %v3178, 0.0
      %vm3998 = vcmp.ge.f32.partialorder %v3183, 0.0
      %vm3999 = vcmp.ge.f32.partialorder %v3186, 0.0
      %vm4000 = vcmp.ge.f32.partialorder %v3191, 0.0
      %vm4001 = vcmp.ge.f32.partialorder %v3194, 0.0
      %vm4002 = vcmp.ge.f32.partialorder %v3199, 0.0
      %vm4003 = vcmp.ge.f32.partialorder %v3202, 0.0
      %vm4004 = vcmp.ge.f32.partialorder %v3207, 0.0
      %vm4005 = vcmp.ge.f32.partialorder %v3210, 0.0
      %vm4006 = vcmp.ge.f32.partialorder %v3215, 0.0
      %vm4007 = vcmp.ge.f32.partialorder %v3218, 0.0
      %vm4008 = vcmp.ge.f32.partialorder %v3223, 0.0
      %vm4009 = vcmp.ge.f32.partialorder %v3226, 0.0
      %vm4010 = vcmp.ge.f32.partialorder %v3231, 0.0
      %vm4011 = vcmp.ge.f32.partialorder %v3234, 0.0
      %vm4012 = vcmp.ge.f32.partialorder %v3239, 0.0
      %vm4013 = vcmp.ge.f32.partialorder %v3242, 0.0
      %vm4014 = vcmp.ge.f32.partialorder %v3247, 0.0
      %vm4015 = vcmp.ge.f32.partialorder %v3250, 0.0
      %vm4016 = vcmp.ge.f32.partialorder %v3255, 0.0
      %vm4017 = vcmp.ge.f32.partialorder %v3258, 0.0
      %vm4018 = vcmp.ge.f32.partialorder %v3263, 0.0
      %vm4019 = vcmp.ge.f32.partialorder %v3266, 0.0
      %vm4020 = vcmp.ge.f32.partialorder %v3271, 0.0
      %vm4021 = vcmp.ge.f32.partialorder %v3274, 0.0
      %vm4022 = vcmp.ge.f32.partialorder %v3279, 0.0
      %vm4023 = vcmp.ge.f32.partialorder %v3282, 0.0
      %vm4024 = vcmp.ge.f32.partialorder %v3287, 0.0
      %vm4025 = vcmp.ge.f32.partialorder %v3290, 0.0
      %vm4026 = vcmp.ge.f32.partialorder %v3295, 0.0
      %vm4027 = vcmp.ge.f32.partialorder %v3298, 0.0
      %vm4028 = vcmp.ge.f32.partialorder %v3303, 0.0
      %vm4029 = vcmp.ge.f32.partialorder %v3306, 0.0
      %vm4030 = vcmp.ge.f32.partialorder %v3311, 0.0
      %vm4031 = vcmp.ge.f32.partialorder %v3314, 0.0
      %vm4032 = vcmp.ge.f32.partialorder %v3319, 0.0
      %vm4033 = vcmp.ge.f32.partialorder %v3322, 0.0
      %vm4034 = vcmp.ge.f32.partialorder %v3327, 0.0
      %vm4035 = vcmp.ge.f32.partialorder %v3330, 0.0
      %vm4036 = vcmp.ge.f32.partialorder %v3335, 0.0
      %vm4037 = vcmp.ge.f32.partialorder %v3338, 0.0
      %vm4038 = vcmp.ge.f32.partialorder %v3343, 0.0
      %vm4039 = vcmp.ge.f32.partialorder %v3346, 0.0
      %vm4040 = vcmp.ge.f32.partialorder %v3351, 0.0
      %vm4041 = vcmp.ge.f32.partialorder %v3354, 0.0
      %vm4042 = vcmp.ge.f32.partialorder %v3359, 0.0
      %vm4043 = vcmp.ge.f32.partialorder %v3362, 0.0
      %vm4044 = vcmp.ge.f32.partialorder %v3367, 0.0
      %vm4045 = vcmp.ge.f32.partialorder %v3370, 0.0
      %vm4046 = vcmp.ge.f32.partialorder %v3375, 0.0
      %vm4047 = vcmp.ge.f32.partialorder %v3378, 0.0
      %vm4048 = vcmp.ge.f32.partialorder %v3383, 0.0
      %vm4049 = vcmp.ge.f32.partialorder %v3386, 0.0
      %vm4050 = vcmp.ge.f32.partialorder %v3391, 0.0
      %vm4051 = vcmp.ge.f32.partialorder %v3394, 0.0
      %vm4052 = vcmp.ge.f32.partialorder %v3399, 0.0
      %vm4053 = vcmp.ge.f32.partialorder %v3402, 0.0
      %vm4054 = vcmp.ge.f32.partialorder %v3407, 0.0
      %vm4055 = vcmp.ge.f32.partialorder %v3410, 0.0
      %vm4056 = vcmp.ge.f32.partialorder %v3415, 0.0
      %vm4057 = vcmp.ge.f32.partialorder %v3418, 0.0
      %vm4058 = vcmp.ge.f32.partialorder %v3423, 0.0
      %vm4059 = vcmp.ge.f32.partialorder %v3426, 0.0
      %vm4060 = vcmp.ge.f32.partialorder %v3431, 0.0
      %vm4061 = vcmp.ge.f32.partialorder %v3434, 0.0
      %vm4062 = vcmp.ge.f32.partialorder %v3439, 0.0
      %vm4063 = vcmp.ge.f32.partialorder %v3442, 0.0
      %vm4064 = vcmp.ge.f32.partialorder %v3447, 0.0
      %vm4065 = vcmp.ge.f32.partialorder %v3450, 0.0
      %vm4066 = vcmp.ge.f32.partialorder %v3455, 0.0
      %vm4067 = vcmp.ge.f32.partialorder %v3458, 0.0
      %vm4068 = vcmp.ge.f32.partialorder %v3463, 0.0
      %vm4069 = vcmp.ge.f32.partialorder %v3466, 0.0
      %vm4070 = vcmp.ge.f32.partialorder %v3471, 0.0
      %vm4071 = vcmp.ge.f32.partialorder %v3474, 0.0
      %vm4072 = vcmp.ge.f32.partialorder %v3479, 0.0
      %vm4073 = vcmp.ge.f32.partialorder %v3482, 0.0
      %vm4074 = vcmp.ge.f32.partialorder %v3487, 0.0
      %vm4075 = vcmp.ge.f32.partialorder %v3490, 0.0
      %vm4076 = vcmp.ge.f32.partialorder %v3495, 0.0
      %vm4077 = vcmp.ge.f32.partialorder %v3498, 0.0
      %vm4078 = vcmp.ge.f32.partialorder %v3503, 0.0
      %vm4079 = vcmp.ge.f32.partialorder %v3506, 0.0
      %vm4080 = vcmp.ge.f32.partialorder %v3511, 0.0
      %vm4081 = vcmp.ge.f32.partialorder %v3514, 0.0
      %vm4082 = vcmp.ge.f32.partialorder %v3519, 0.0
      %vm4083 = vcmp.ge.f32.partialorder %v3522, 0.0
      %vm4084 = vcmp.ge.f32.partialorder %v3527, 0.0
      %vm4085 = vcmp.ge.f32.partialorder %v3530, 0.0
      %vm4086 = vcmp.ge.f32.partialorder %v3535, 0.0
      %vm4087 = vcmp.ge.f32.partialorder %v3538, 0.0
      %vm4088 = vcmp.ge.f32.partialorder %v3543, 0.0
      %vm4089 = vcmp.ge.f32.partialorder %v3546, 0.0
      %vm4090 = vcmp.ge.f32.partialorder %v3551, 0.0
      %vm4091 = vcmp.ge.f32.partialorder %v3554, 0.0
      %vm4092 = vcmp.ge.f32.partialorder %v3559, 0.0
      %vm4093 = vcmp.ge.f32.partialorder %v3562, 0.0
      %vm4094 = vcmp.ge.f32.partialorder %v3567, 0.0
      %vm4095 = vcmp.ge.f32.partialorder %v3570, 0.0
      %vm4096 = vcmp.ge.f32.partialorder %v3575, 0.0
      %vm4097 = vcmp.ge.f32.partialorder %v3578, 0.0
      %vm4098 = vcmp.ge.f32.partialorder %v3583, 0.0
      %vm4099 = vcmp.ge.f32.partialorder %v3586, 0.0
      %vm4100 = vcmp.ge.f32.partialorder %v3591, 0.0
      %vm4101 = vcmp.ge.f32.partialorder %v3594, 0.0
      %vm4102 = vcmp.ge.f32.partialorder %v3599, 0.0
      %vm4103 = vcmp.ge.f32.partialorder %v3602, 0.0
      %vm4104 = vcmp.ge.f32.partialorder %v3607, 0.0
      %vm4105 = vcmp.ge.f32.partialorder %v3610, 0.0
      %vm4106 = vcmp.ge.f32.partialorder %v3615, 0.0
      %vm4107 = vcmp.ge.f32.partialorder %v3618, 0.0
      %vm4108 = vcmp.ge.f32.partialorder %v3623, 0.0
      %vm4109 = vcmp.ge.f32.partialorder %v3626, 0.0
      %vm4110 = vcmp.ge.f32.partialorder %v3631, 0.0
      %vm4111 = vcmp.ge.f32.partialorder %v3634, 0.0
      %vm4112 = vcmp.ge.f32.partialorder %v3639, 0.0
      %vm4113 = vcmp.ge.f32.partialorder %v3642, 0.0
      %vm4114 = vcmp.ge.f32.partialorder %v3647, 0.0
      %vm4115 = vcmp.ge.f32.partialorder %v3650, 0.0
      %vm4116 = vcmp.ge.f32.partialorder %v3655, 0.0
      %vm4117 = vcmp.ge.f32.partialorder %v3658, 0.0
      %vm4118 = vcmp.ge.f32.partialorder %v3663, 0.0
      %vm4119 = vcmp.ge.f32.partialorder %v3666, 0.0
      %vm4120 = vcmp.ge.f32.partialorder %v3671, 0.0
      %vm4121 = vcmp.ge.f32.partialorder %v3674, 0.0
      %vm4122 = vcmp.ge.f32.partialorder %v3679, 0.0
      %vm4123 = vcmp.ge.f32.partialorder %v3682, 0.0
      %vm4124 = vcmp.ge.f32.partialorder %v3687, 0.0
      %vm4125 = vcmp.ge.f32.partialorder %v3690, 0.0
      %vm4126 = vcmp.ge.f32.partialorder %v3695, 0.0
      %vm4127 = vcmp.ge.f32.partialorder %v3698, 0.0
      %vm4128 = vcmp.ge.f32.partialorder %v3703, 0.0
      %vm4129 = vcmp.ge.f32.partialorder %v3706, 0.0
      %vm4130 = vcmp.ge.f32.partialorder %v3711, 0.0
      %vm4131 = vcmp.ge.f32.partialorder %v3714, 0.0
      %vm4132 = vcmp.ge.f32.partialorder %v3719, 0.0
      %vm4133 = vcmp.ge.f32.partialorder %v3722, 0.0
      %vm4134 = vcmp.ge.f32.partialorder %v3727, 0.0
      %vm4135 = vcmp.ge.f32.partialorder %v3730, 0.0
      %vm4136 = vcmp.ge.f32.partialorder %v3735, 0.0
      %vm4137 = vcmp.ge.f32.partialorder %v3738, 0.0
      %vm4138 = vcmp.ge.f32.partialorder %v3743, 0.0
      %v4139 = vmul.f32 %v2183, 0.2
      %v4140 = vmul.f32 %v2186, 0.2
      %v4141 = vmul.f32 %v2191, 0.2
      %v4142 = vmul.f32 %v2194, 0.2
      %v4143 = vmul.f32 %v2199, 0.2
      %v4144 = vmul.f32 %v2202, 0.2
      %v4145 = vmul.f32 %v2207, 0.2
      %v4146 = vmul.f32 %v2210, 0.2
      %v4147 = vmul.f32 %v2215, 0.2
      %v4148 = vmul.f32 %v2218, 0.2
      %v4149 = vmul.f32 %v2223, 0.2
      %v4150 = vmul.f32 %v2226, 0.2
      %v4151 = vmul.f32 %v2231, 0.2
      %v4152 = vmul.f32 %v2234, 0.2
      %v4153 = vmul.f32 %v2239, 0.2
      %v4154 = vmul.f32 %v2242, 0.2
      %v4155 = vmul.f32 %v2247, 0.2
      %v4156 = vmul.f32 %v2250, 0.2
      %v4157 = vmul.f32 %v2255, 0.2
      %v4158 = vmul.f32 %v2258, 0.2
      %v4159 = vmul.f32 %v2263, 0.2
      %v4160 = vmul.f32 %v2266, 0.2
      %v4161 = vmul.f32 %v2271, 0.2
      %v4162 = vmul.f32 %v2274, 0.2
      %v4163 = vmul.f32 %v2279, 0.2
      %v4164 = vmul.f32 %v2282, 0.2
      %v4165 = vmul.f32 %v2287, 0.2
      %v4166 = vmul.f32 %v2290, 0.2
      %v4167 = vmul.f32 %v2295, 0.2
      %v4168 = vmul.f32 %v2298, 0.2
      %v4169 = vmul.f32 %v2303, 0.2
      %v4170 = vmul.f32 %v2306, 0.2
      %v4171 = vmul.f32 %v2311, 0.2
      %v4172 = vmul.f32 %v2314, 0.2
      %v4173 = vmul.f32 %v2319, 0.2
      %v4174 = vmul.f32 %v2322, 0.2
      %v4175 = vmul.f32 %v2327, 0.2
      %v4176 = vmul.f32 %v2330, 0.2
      %v4177 = vmul.f32 %v2335, 0.2
      %v4178 = vmul.f32 %v2338, 0.2
      %v4179 = vmul.f32 %v2343, 0.2
      %v4180 = vmul.f32 %v2346, 0.2
      %v4181 = vmul.f32 %v2351, 0.2
      %v4182 = vmul.f32 %v2354, 0.2
      %v4183 = vmul.f32 %v2359, 0.2
      %v4184 = vmul.f32 %v2362, 0.2
      %v4185 = vmul.f32 %v2367, 0.2
      %v4186 = vmul.f32 %v2370, 0.2
      %v4187 = vmul.f32 %v2375, 0.2
      %v4188 = vmul.f32 %v2378, 0.2
      %v4189 = vmul.f32 %v2383, 0.2
      %v4190 = vmul.f32 %v2386, 0.2
      %v4191 = vmul.f32 %v2391, 0.2
      %v4192 = vmul.f32 %v2394, 0.2
      %v4193 = vmul.f32 %v2399, 0.2
      %v4194 = vmul.f32 %v2402, 0.2
      %v4195 = vmul.f32 %v2407, 0.2
      %v4196 = vmul.f32 %v2410, 0.2
      %v4197 = vmul.f32 %v2415, 0.2
      %v4198 = vmul.f32 %v2418, 0.2
      %v4199 = vmul.f32 %v2423, 0.2
      %v4200 = vmul.f32 %v2426, 0.2
      %v4201 = vmul.f32 %v2431, 0.2
      %v4202 = vmul.f32 %v2434, 0.2
      %v4203 = vmul.f32 %v2439, 0.2
      %v4204 = vmul.f32 %v2442, 0.2
      %v4205 = vmul.f32 %v2447, 0.2
      %v4206 = vmul.f32 %v2450, 0.2
      %v4207 = vmul.f32 %v2455, 0.2
      %v4208 = vmul.f32 %v2458, 0.2
      %v4209 = vmul.f32 %v2463, 0.2
      %v4210 = vmul.f32 %v2466, 0.2
      %v4211 = vmul.f32 %v2471, 0.2
      %v4212 = vmul.f32 %v2474, 0.2
      %v4213 = vmul.f32 %v2479, 0.2
      %v4214 = vmul.f32 %v2482, 0.2
      %v4215 = vmul.f32 %v2487, 0.2
      %v4216 = vmul.f32 %v2490, 0.2
      %v4217 = vmul.f32 %v2495, 0.2
      %v4218 = vmul.f32 %v2498, 0.2
      %v4219 = vmul.f32 %v2503, 0.2
      %v4220 = vmul.f32 %v2506, 0.2
      %v4221 = vmul.f32 %v2511, 0.2
      %v4222 = vmul.f32 %v2514, 0.2
      %v4223 = vmul.f32 %v2519, 0.2
      %v4224 = vmul.f32 %v2522, 0.2
      %v4225 = vmul.f32 %v2527, 0.2
      %v4226 = vmul.f32 %v2530, 0.2
      %v4227 = vmul.f32 %v2535, 0.2
      %v4228 = vmul.f32 %v2538, 0.2
      %v4229 = vmul.f32 %v2543, 0.2
      %v4230 = vmul.f32 %v2546, 0.2
      %v4231 = vmul.f32 %v2551, 0.2
      %v4232 = vmul.f32 %v2554, 0.2
      %v4233 = vmul.f32 %v2559, 0.2
      %v4234 = vmul.f32 %v2562, 0.2
      %v4235 = vmul.f32 %v2567, 0.2
      %v4236 = vmul.f32 %v2570, 0.2
      %v4237 = vmul.f32 %v2575, 0.2
      %v4238 = vmul.f32 %v2578, 0.2
      %v4239 = vmul.f32 %v2583, 0.2
      %v4240 = vmul.f32 %v2586, 0.2
      %v4241 = vmul.f32 %v2591, 0.2
      %v4242 = vmul.f32 %v2594, 0.2
      %v4243 = vmul.f32 %v2599, 0.2
      %v4244 = vmul.f32 %v2602, 0.2
      %v4245 = vmul.f32 %v2607, 0.2
      %v4246 = vmul.f32 %v2610, 0.2
      %v4247 = vmul.f32 %v2615, 0.2
      %v4248 = vmul.f32 %v2618, 0.2
      %v4249 = vmul.f32 %v2623, 0.2
      %v4250 = vmul.f32 %v2626, 0.2
      %v4251 = vmul.f32 %v2631, 0.2
      %v4252 = vmul.f32 %v2634, 0.2
      %v4253 = vmul.f32 %v2639, 0.2
      %v4254 = vmul.f32 %v2642, 0.2
      %v4255 = vmul.f32 %v2647, 0.2
      %v4256 = vmul.f32 %v2650, 0.2
      %v4257 = vmul.f32 %v2655, 0.2
      %v4258 = vmul.f32 %v2658, 0.2
      %v4259 = vmul.f32 %v2663, 0.2
      %v4260 = vmul.f32 %v2666, 0.2
      %v4261 = vmul.f32 %v2671, 0.2
      %v4262 = vmul.f32 %v2674, 0.2
      %v4263 = vmul.f32 %v2679, 0.2
      %v4264 = vmul.f32 %v2682, 0.2
      %v4265 = vmul.f32 %v2687, 0.2
      %v4266 = vmul.f32 %v2690, 0.2
      %v4267 = vmul.f32 %v2695, 0.2
      %v4268 = vmul.f32 %v2698, 0.2
      %v4269 = vmul.f32 %v2703, 0.2
      %v4270 = vmul.f32 %v2706, 0.2
      %v4271 = vmul.f32 %v2711, 0.2
      %v4272 = vmul.f32 %v2714, 0.2
      %v4273 = vmul.f32 %v2719, 0.2
      %v4274 = vmul.f32 %v2722, 0.2
      %v4275 = vmul.f32 %v2727, 0.2
      %v4276 = vmul.f32 %v2730, 0.2
      %v4277 = vmul.f32 %v2735, 0.2
      %v4278 = vmul.f32 %v2738, 0.2
      %v4279 = vmul.f32 %v2743, 0.2
      %v4280 = vmul.f32 %v2746, 0.2
      %v4281 = vmul.f32 %v2751, 0.2
      %v4282 = vmul.f32 %v2754, 0.2
      %v4283 = vmul.f32 %v2759, 0.2
      %v4284 = vmul.f32 %v2762, 0.2
      %v4285 = vmul.f32 %v2767, 0.2
      %v4286 = vmul.f32 %v2770, 0.2
      %v4287 = vmul.f32 %v2775, 0.2
      %v4288 = vmul.f32 %v2778, 0.2
      %v4289 = vmul.f32 %v2783, 0.2
      %v4290 = vmul.f32 %v2786, 0.2
      %v4291 = vmul.f32 %v2791, 0.2
      %v4292 = vmul.f32 %v2794, 0.2
      %v4293 = vmul.f32 %v2799, 0.2
      %v4294 = vmul.f32 %v2802, 0.2
      %v4295 = vmul.f32 %v2807, 0.2
      %v4296 = vmul.f32 %v2810, 0.2
      %v4297 = vmul.f32 %v2815, 0.2
      %v4298 = vmul.f32 %v2818, 0.2
      %v4299 = vmul.f32 %v2823, 0.2
      %v4300 = vmul.f32 %v2826, 0.2
      %v4301 = vmul.f32 %v2831, 0.2
      %v4302 = vmul.f32 %v2834, 0.2
      %v4303 = vmul.f32 %v2839, 0.2
      %v4304 = vmul.f32 %v2842, 0.2
      %v4305 = vmul.f32 %v2847, 0.2
      %v4306 = vmul.f32 %v2850, 0.2
      %v4307 = vmul.f32 %v2855, 0.2
      %v4308 = vmul.f32 %v2858, 0.2
      %v4309 = vmul.f32 %v2863, 0.2
      %v4310 = vmul.f32 %v2866, 0.2
      %v4311 = vmul.f32 %v2871, 0.2
      %v4312 = vmul.f32 %v2874, 0.2
      %v4313 = vmul.f32 %v2879, 0.2
      %v4314 = vmul.f32 %v2882, 0.2
      %v4315 = vmul.f32 %v2887, 0.2
      %v4316 = vmul.f32 %v2890, 0.2
      %v4317 = vmul.f32 %v2895, 0.2
      %v4318 = vmul.f32 %v2898, 0.2
      %v4319 = vmul.f32 %v2903, 0.2
      %v4320 = vmul.f32 %v2906, 0.2
      %v4321 = vmul.f32 %v2911, 0.2
      %v4322 = vmul.f32 %v2914, 0.2
      %v4323 = vmul.f32 %v2919, 0.2
      %v4324 = vmul.f32 %v2922, 0.2
      %v4325 = vmul.f32 %v2927, 0.2
      %v4326 = vmul.f32 %v2930, 0.2
      %v4327 = vmul.f32 %v2935, 0.2
      %v4328 = vmul.f32 %v2938, 0.2
      %v4329 = vmul.f32 %v2943, 0.2
      %v4330 = vmul.f32 %v2946, 0.2
      %v4331 = vmul.f32 %v2951, 0.2
      %v4332 = vmul.f32 %v2954, 0.2
      %v4333 = vmul.f32 %v2959, 0.2
      %v4334 = vmul.f32 %v2962, 0.2
      %v4335 = vmul.f32 %v2967, 0.2
      %v4336 = vmul.f32 %v2970, 0.2
      %v4337 = vmul.f32 %v2975, 0.2
      %v4338 = vmul.f32 %v2978, 0.2
      %v4339 = vmul.f32 %v2983, 0.2
      %v4340 = vmul.f32 %v2986, 0.2
      %v4341 = vmul.f32 %v2991, 0.2
      %v4342 = vmul.f32 %v2994, 0.2
      %v4343 = vmul.f32 %v2999, 0.2
      %v4344 = vmul.f32 %v3002, 0.2
      %v4345 = vmul.f32 %v3007, 0.2
      %v4346 = vmul.f32 %v3010, 0.2
      %v4347 = vmul.f32 %v3015, 0.2
      %v4348 = vmul.f32 %v3018, 0.2
      %v4349 = vmul.f32 %v3023, 0.2
      %v4350 = vmul.f32 %v3026, 0.2
      %v4351 = vmul.f32 %v3031, 0.2
      %v4352 = vmul.f32 %v3034, 0.2
      %v4353 = vmul.f32 %v3039, 0.2
      %v4354 = vmul.f32 %v3042, 0.2
      %v4355 = vmul.f32 %v3047, 0.2
      %v4356 = vmul.f32 %v3050, 0.2
      %v4357 = vmul.f32 %v3055, 0.2
      %v4358 = vmul.f32 %v3058, 0.2
      %v4359 = vmul.f32 %v3063, 0.2
      %v4360 = vmul.f32 %v3066, 0.2
      %v4361 = vmul.f32 %v3071, 0.2
      %v4362 = vmul.f32 %v3074, 0.2
      %v4363 = vmul.f32 %v3079, 0.2
      %v4364 = vmul.f32 %v3082, 0.2
      %v4365 = vmul.f32 %v3087, 0.2
      %v4366 = vmul.f32 %v3090, 0.2
      %v4367 = vmul.f32 %v3095, 0.2
      %v4368 = vmul.f32 %v3098, 0.2
      %v4369 = vmul.f32 %v3103, 0.2
      %v4370 = vmul.f32 %v3106, 0.2
      %v4371 = vmul.f32 %v3111, 0.2
      %v4372 = vmul.f32 %v3114, 0.2
      %v4373 = vmul.f32 %v3119, 0.2
      %v4374 = vmul.f32 %v3122, 0.2
      %v4375 = vmul.f32 %v3127, 0.2
      %v4376 = vmul.f32 %v3130, 0.2
      %v4377 = vmul.f32 %v3135, 0.2
      %v4378 = vmul.f32 %v3138, 0.2
      %v4379 = vmul.f32 %v3143, 0.2
      %v4380 = vmul.f32 %v3146, 0.2
      %v4381 = vmul.f32 %v3151, 0.2
      %v4382 = vmul.f32 %v3154, 0.2
      %v4383 = vmul.f32 %v3159, 0.2
      %v4384 = vmul.f32 %v3162, 0.2
      %v4385 = vmul.f32 %v3167, 0.2
      %v4386 = vmul.f32 %v3170, 0.2
      %v4387 = vmul.f32 %v3175, 0.2
      %v4388 = vmul.f32 %v3178, 0.2
      %v4389 = vmul.f32 %v3183, 0.2
      %v4390 = vmul.f32 %v3186, 0.2
      %v4391 = vmul.f32 %v3191, 0.2
      %v4392 = vmul.f32 %v3194, 0.2
      %v4393 = vmul.f32 %v3199, 0.2
      %v4394 = vmul.f32 %v3202, 0.2
      %v4395 = vmul.f32 %v3207, 0.2
      %v4396 = vmul.f32 %v3210, 0.2
      %v4397 = vmul.f32 %v3215, 0.2
      %v4398 = vmul.f32 %v3218, 0.2
      %v4399 = vmul.f32 %v3223, 0.2
      %v4400 = vmul.f32 %v3226, 0.2
      %v4401 = vmul.f32 %v3231, 0.2
      %v4402 = vmul.f32 %v3234, 0.2
      %v4403 = vmul.f32 %v3239, 0.2
      %v4404 = vmul.f32 %v3242, 0.2
      %v4405 = vmul.f32 %v3247, 0.2
      %v4406 = vmul.f32 %v3250, 0.2
      %v4407 = vmul.f32 %v3255, 0.2
      %v4408 = vmul.f32 %v3258, 0.2
      %v4409 = vmul.f32 %v3263, 0.2
      %v4410 = vmul.f32 %v3266, 0.2
      %v4411 = vmul.f32 %v3271, 0.2
      %v4412 = vmul.f32 %v3274, 0.2
      %v4413 = vmul.f32 %v3279, 0.2
      %v4414 = vmul.f32 %v3282, 0.2
      %v4415 = vmul.f32 %v3287, 0.2
      %v4416 = vmul.f32 %v3290, 0.2
      %v4417 = vmul.f32 %v3295, 0.2
      %v4418 = vmul.f32 %v3298, 0.2
      %v4419 = vmul.f32 %v3303, 0.2
      %v4420 = vmul.f32 %v3306, 0.2
      %v4421 = vmul.f32 %v3311, 0.2
      %v4422 = vmul.f32 %v3314, 0.2
      %v4423 = vmul.f32 %v3319, 0.2
      %v4424 = vmul.f32 %v3322, 0.2
      %v4425 = vmul.f32 %v3327, 0.2
      %v4426 = vmul.f32 %v3330, 0.2
      %v4427 = vmul.f32 %v3335, 0.2
      %v4428 = vmul.f32 %v3338, 0.2
      %v4429 = vmul.f32 %v3343, 0.2
      %v4430 = vmul.f32 %v3346, 0.2
      %v4431 = vmul.f32 %v3351, 0.2
      %v4432 = vmul.f32 %v3354, 0.2
      %v4433 = vmul.f32 %v3359, 0.2
      %v4434 = vmul.f32 %v3362, 0.2
      %v4435 = vmul.f32 %v3367, 0.2
      %v4436 = vmul.f32 %v3370, 0.2
      %v4437 = vmul.f32 %v3375, 0.2
      %v4438 = vmul.f32 %v3378, 0.2
      %v4439 = vmul.f32 %v3383, 0.2
      %v4440 = vmul.f32 %v3386, 0.2
      %v4441 = vmul.f32 %v3391, 0.2
      %v4442 = vmul.f32 %v3394, 0.2
      %v4443 = vmul.f32 %v3399, 0.2
      %v4444 = vmul.f32 %v3402, 0.2
      %v4445 = vmul.f32 %v3407, 0.2
      %v4446 = vmul.f32 %v3410, 0.2
      %v4447 = vmul.f32 %v3415, 0.2
      %v4448 = vmul.f32 %v3418, 0.2
      %v4449 = vmul.f32 %v3423, 0.2
      %v4450 = vmul.f32 %v3426, 0.2
      %v4451 = vmul.f32 %v3431, 0.2
      %v4452 = vmul.f32 %v3434, 0.2
      %v4453 = vmul.f32 %v3439, 0.2
      %v4454 = vmul.f32 %v3442, 0.2
      %v4455 = vmul.f32 %v3447, 0.2
      %v4456 = vmul.f32 %v3450, 0.2
      %v4457 = vmul.f32 %v3455, 0.2
      %v4458 = vmul.f32 %v3458, 0.2
      %v4459 = vmul.f32 %v3463, 0.2
      %v4460 = vmul.f32 %v3466, 0.2
      %v4461 = vmul.f32 %v3471, 0.2
      %v4462 = vmul.f32 %v3474, 0.2
      %v4463 = vmul.f32 %v3479, 0.2
      %v4464 = vmul.f32 %v3482, 0.2
      %v4465 = vmul.f32 %v3487, 0.2
      %v4466 = vmul.f32 %v3490, 0.2
      %v4467 = vmul.f32 %v3495, 0.2
      %v4468 = vmul.f32 %v3498, 0.2
      %v4469 = vmul.f32 %v3503, 0.2
      %v4470 = vmul.f32 %v3506, 0.2
      %v4471 = vmul.f32 %v3511, 0.2
      %v4472 = vmul.f32 %v3514, 0.2
      %v4473 = vmul.f32 %v3519, 0.2
      %v4474 = vmul.f32 %v3522, 0.2
      %v4475 = vmul.f32 %v3527, 0.2
      %v4476 = vmul.f32 %v3530, 0.2
      %v4477 = vmul.f32 %v3535, 0.2
      %v4478 = vmul.f32 %v3538, 0.2
      %v4479 = vmul.f32 %v3543, 0.2
      %v4480 = vmul.f32 %v3546, 0.2
      %v4481 = vmul.f32 %v3551, 0.2
      %v4482 = vmul.f32 %v3554, 0.2
      %v4483 = vmul.f32 %v3559, 0.2
      %v4484 = vmul.f32 %v3562, 0.2
      %v4485 = vmul.f32 %v3567, 0.2
      %v4486 = vmul.f32 %v3570, 0.2
      %v4487 = vmul.f32 %v3575, 0.2
      %v4488 = vmul.f32 %v3578, 0.2
      %v4489 = vmul.f32 %v3583, 0.2
      %v4490 = vmul.f32 %v3586, 0.2
      %v4491 = vmul.f32 %v3591, 0.2
      %v4492 = vmul.f32 %v3594, 0.2
      %v4493 = vmul.f32 %v3599, 0.2
      %v4494 = vmul.f32 %v3602, 0.2
      %v4495 = vmul.f32 %v3607, 0.2
      %v4496 = vmul.f32 %v3610, 0.2
      %v4497 = vmul.f32 %v3615, 0.2
      %v4498 = vmul.f32 %v3618, 0.2
      %v4499 = vmul.f32 %v3623, 0.2
      %v4500 = vmul.f32 %v3626, 0.2
      %v4501 = vmul.f32 %v3631, 0.2
      %v4502 = vmul.f32 %v3634, 0.2
      %v4503 = vmul.f32 %v3639, 0.2
      %v4504 = vmul.f32 %v3642, 0.2
      %v4505 = vmul.f32 %v3647, 0.2
      %v4506 = vmul.f32 %v3650, 0.2
      %v4507 = vmul.f32 %v3655, 0.2
      %v4508 = vmul.f32 %v3658, 0.2
      %v4509 = vmul.f32 %v3663, 0.2
      %v4510 = vmul.f32 %v3666, 0.2
      %v4511 = vmul.f32 %v3671, 0.2
      %v4512 = vmul.f32 %v3674, 0.2
      %v4513 = vmul.f32 %v3679, 0.2
      %v4514 = vmul.f32 %v3682, 0.2
      %v4515 = vmul.f32 %v3687, 0.2
      %v4516 = vmul.f32 %v3690, 0.2
      %v4517 = vmul.f32 %v3695, 0.2
      %v4518 = vmul.f32 %v3698, 0.2
      %v4519 = vmul.f32 %v3703, 0.2
      %v4520 = vmul.f32 %v3706, 0.2
      %v4521 = vmul.f32 %v3711, 0.2
      %v4522 = vmul.f32 %v3714, 0.2
      %v4523 = vmul.f32 %v3719, 0.2
      %v4524 = vmul.f32 %v3722, 0.2
      %v4525 = vmul.f32 %v3727, 0.2
      %v4526 = vmul.f32 %v3730, 0.2
      %v4527 = vmul.f32 %v3735, 0.2
      %v4528 = vmul.f32 %v3738, 0.2
      %v4529 = vmul.f32 %v3743, 0.2
      %v4530 = vsel %vm3748, %v2183, %v4139
      %v4531 = vsel %vm3749, %v2186, %v4140
      %v4532 = vsel %vm3750, %v2191, %v4141
      %v4533 = vsel %vm3751, %v2194, %v4142
      %v4534 = vsel %vm3752, %v2199, %v4143
      %v4535 = vsel %vm3753, %v2202, %v4144
      %v4536 = vsel %vm3754, %v2207, %v4145
      %v4537 = vsel %vm3755, %v2210, %v4146
      %v4538 = vsel %vm3756, %v2215, %v4147
      %v4539 = vsel %vm3757, %v2218, %v4148
      %v4540 = vsel %vm3758, %v2223, %v4149
      %v4541 = vsel %vm3759, %v2226, %v4150
      %v4542 = vsel %vm3760, %v2231, %v4151
      %v4543 = vsel %vm3761, %v2234, %v4152
      %v4544 = vsel %vm3762, %v2239, %v4153
      %v4545 = vsel %vm3763, %v2242, %v4154
      %v4546 = vsel %vm3764, %v2247, %v4155
      %v4547 = vsel %vm3765, %v2250, %v4156
      %v4548 = vsel %vm3766, %v2255, %v4157
      %v4549 = vsel %vm3767, %v2258, %v4158
      %v4550 = vsel %vm3768, %v2263, %v4159
      %v4551 = vsel %vm3769, %v2266, %v4160
      %v4552 = vsel %vm3770, %v2271, %v4161
      %v4553 = vsel %vm3771, %v2274, %v4162
      %v4554 = vsel %vm3772, %v2279, %v4163
      %v4555 = vsel %vm3773, %v2282, %v4164
      %v4556 = vsel %vm3774, %v2287, %v4165
      %v4557 = vsel %vm3775, %v2290, %v4166
      %v4558 = vsel %vm3776, %v2295, %v4167
      %v4559 = vsel %vm3777, %v2298, %v4168
      %v4560 = vsel %vm3778, %v2303, %v4169
      %v4561 = vsel %vm3779, %v2306, %v4170
      %v4562 = vsel %vm3780, %v2311, %v4171
      %v4563 = vsel %vm3781, %v2314, %v4172
      %v4564 = vsel %vm3782, %v2319, %v4173
      %v4565 = vsel %vm3783, %v2322, %v4174
      %v4566 = vsel %vm3784, %v2327, %v4175
      %v4567 = vsel %vm3785, %v2330, %v4176
      %v4568 = vsel %vm3786, %v2335, %v4177
      %v4569 = vsel %vm3787, %v2338, %v4178
      %v4570 = vsel %vm3788, %v2343, %v4179
      %v4571 = vsel %vm3789, %v2346, %v4180
      %v4572 = vsel %vm3790, %v2351, %v4181
      %v4573 = vsel %vm3791, %v2354, %v4182
      %v4574 = vsel %vm3792, %v2359, %v4183
      %v4575 = vsel %vm3793, %v2362, %v4184
      %v4576 = vsel %vm3794, %v2367, %v4185
      %v4577 = vsel %vm3795, %v2370, %v4186
      %v4578 = vsel %vm3796, %v2375, %v4187
      %v4579 = vsel %vm3797, %v2378, %v4188
      %v4580 = vsel %vm3798, %v2383, %v4189
      %v4581 = vsel %vm3799, %v2386, %v4190
      %v4582 = vsel %vm3800, %v2391, %v4191
      %v4583 = vsel %vm3801, %v2394, %v4192
      %v4584 = vsel %vm3802, %v2399, %v4193
      %v4585 = vsel %vm3803, %v2402, %v4194
      %v4586 = vsel %vm3804, %v2407, %v4195
      %v4587 = vsel %vm3805, %v2410, %v4196
      %v4588 = vsel %vm3806, %v2415, %v4197
      %v4589 = vsel %vm3807, %v2418, %v4198
      %v4590 = vsel %vm3808, %v2423, %v4199
      %v4591 = vsel %vm3809, %v2426, %v4200
      %v4592 = vsel %vm3810, %v2431, %v4201
      %v4593 = vsel %vm3811, %v2434, %v4202
      %v4594 = vsel %vm3812, %v2439, %v4203
      %v4595 = vsel %vm3813, %v2442, %v4204
      %v4596 = vsel %vm3814, %v2447, %v4205
      %v4597 = vsel %vm3815, %v2450, %v4206
      %v4598 = vsel %vm3816, %v2455, %v4207
      %v4599 = vsel %vm3817, %v2458, %v4208
      %v4600 = vsel %vm3818, %v2463, %v4209
      %v4601 = vsel %vm3819, %v2466, %v4210
      %v4602 = vsel %vm3820, %v2471, %v4211
      %v4603 = vsel %vm3821, %v2474, %v4212
      %v4604 = vsel %vm3822, %v2479, %v4213
      %v4605 = vsel %vm3823, %v2482, %v4214
      %v4606 = vsel %vm3824, %v2487, %v4215
      %v4607 = vsel %vm3825, %v2490, %v4216
      %v4608 = vsel %vm3826, %v2495, %v4217
      %v4609 = vsel %vm3827, %v2498, %v4218
      %v4610 = vsel %vm3828, %v2503, %v4219
      %v4611 = vsel %vm3829, %v2506, %v4220
      %v4612 = vsel %vm3830, %v2511, %v4221
      %v4613 = vsel %vm3831, %v2514, %v4222
      %v4614 = vsel %vm3832, %v2519, %v4223
      %v4615 = vsel %vm3833, %v2522, %v4224
      %v4616 = vsel %vm3834, %v2527, %v4225
      %v4617 = vsel %vm3835, %v2530, %v4226
      %v4618 = vsel %vm3836, %v2535, %v4227
      %v4619 = vsel %vm3837, %v2538, %v4228
      %v4620 = vsel %vm3838, %v2543, %v4229
      %v4621 = vsel %vm3839, %v2546, %v4230
      %v4622 = vsel %vm3840, %v2551, %v4231
      %v4623 = vsel %vm3841, %v2554, %v4232
      %v4624 = vsel %vm3842, %v2559, %v4233
      %v4625 = vsel %vm3843, %v2562, %v4234
      %v4626 = vsel %vm3844, %v2567, %v4235
      %v4627 = vsel %vm3845, %v2570, %v4236
      %v4628 = vsel %vm3846, %v2575, %v4237
      %v4629 = vsel %vm3847, %v2578, %v4238
      %v4630 = vsel %vm3848, %v2583, %v4239
      %v4631 = vsel %vm3849, %v2586, %v4240
      %v4632 = vsel %vm3850, %v2591, %v4241
      %v4633 = vsel %vm3851, %v2594, %v4242
      %v4634 = vsel %vm3852, %v2599, %v4243
      %v4635 = vsel %vm3853, %v2602, %v4244
      %v4636 = vsel %vm3854, %v2607, %v4245
      %v4637 = vsel %vm3855, %v2610, %v4246
      %v4638 = vsel %vm3856, %v2615, %v4247
      %v4639 = vsel %vm3857, %v2618, %v4248
      %v4640 = vsel %vm3858, %v2623, %v4249
      %v4641 = vsel %vm3859, %v2626, %v4250
      %v4642 = vsel %vm3860, %v2631, %v4251
      %v4643 = vsel %vm3861, %v2634, %v4252
      %v4644 = vsel %vm3862, %v2639, %v4253
      %v4645 = vsel %vm3863, %v2642, %v4254
      %v4646 = vsel %vm3864, %v2647, %v4255
      %v4647 = vsel %vm3865, %v2650, %v4256
      %v4648 = vsel %vm3866, %v2655, %v4257
      %v4649 = vsel %vm3867, %v2658, %v4258
      %v4650 = vsel %vm3868, %v2663, %v4259
      %v4651 = vsel %vm3869, %v2666, %v4260
      %v4652 = vsel %vm3870, %v2671, %v4261
      %v4653 = vsel %vm3871, %v2674, %v4262
      %v4654 = vsel %vm3872, %v2679, %v4263
      %v4655 = vsel %vm3873, %v2682, %v4264
      %v4656 = vsel %vm3874, %v2687, %v4265
      %v4657 = vsel %vm3875, %v2690, %v4266
      %v4658 = vsel %vm3876, %v2695, %v4267
      %v4659 = vsel %vm3877, %v2698, %v4268
      %v4660 = vsel %vm3878, %v2703, %v4269
      %v4661 = vsel %vm3879, %v2706, %v4270
      %v4662 = vsel %vm3880, %v2711, %v4271
      %v4663 = vsel %vm3881, %v2714, %v4272
      %v4664 = vsel %vm3882, %v2719, %v4273
      %v4665 = vsel %vm3883, %v2722, %v4274
      %v4666 = vsel %vm3884, %v2727, %v4275
      %v4667 = vsel %vm3885, %v2730, %v4276
      %v4668 = vsel %vm3886, %v2735, %v4277
      %v4669 = vsel %vm3887, %v2738, %v4278
      %v4670 = vsel %vm3888, %v2743, %v4279
      %v4671 = vsel %vm3889, %v2746, %v4280
      %v4672 = vsel %vm3890, %v2751, %v4281
      %v4673 = vsel %vm3891, %v2754, %v4282
      %v4674 = vsel %vm3892, %v2759, %v4283
      %v4675 = vsel %vm3893, %v2762, %v4284
      %v4676 = vsel %vm3894, %v2767, %v4285
      %v4677 = vsel %vm3895, %v2770, %v4286
      %v4678 = vsel %vm3896, %v2775, %v4287
      %v4679 = vsel %vm3897, %v2778, %v4288
      %v4680 = vsel %vm3898, %v2783, %v4289
      %v4681 = vsel %vm3899, %v2786, %v4290
      %v4682 = vsel %vm3900, %v2791, %v4291
      %v4683 = vsel %vm3901, %v2794, %v4292
      %v4684 = vsel %vm3902, %v2799, %v4293
      %v4685 = vsel %vm3903, %v2802, %v4294
      %v4686 = vsel %vm3904, %v2807, %v4295
      %v4687 = vsel %vm3905, %v2810, %v4296
      %v4688 = vsel %vm3906, %v2815, %v4297
      %v4689 = vsel %vm3907, %v2818, %v4298
      %v4690 = vsel %vm3908, %v2823, %v4299
      %v4691 = vsel %vm3909, %v2826, %v4300
      %v4692 = vsel %vm3910, %v2831, %v4301
      %v4693 = vsel %vm3911, %v2834, %v4302
      %v4694 = vsel %vm3912, %v2839, %v4303
      %v4695 = vsel %vm3913, %v2842, %v4304
      %v4696 = vsel %vm3914, %v2847, %v4305
      %v4697 = vsel %vm3915, %v2850, %v4306
      %v4698 = vsel %vm3916, %v2855, %v4307
      %v4699 = vsel %vm3917, %v2858, %v4308
      %v4700 = vsel %vm3918, %v2863, %v4309
      %v4701 = vsel %vm3919, %v2866, %v4310
      %v4702 = vsel %vm3920, %v2871, %v4311
      %v4703 = vsel %vm3921, %v2874, %v4312
      %v4704 = vsel %vm3922, %v2879, %v4313
      %v4705 = vsel %vm3923, %v2882, %v4314
      %v4706 = vsel %vm3924, %v2887, %v4315
      %v4707 = vsel %vm3925, %v2890, %v4316
      %v4708 = vsel %vm3926, %v2895, %v4317
      %v4709 = vsel %vm3927, %v2898, %v4318
      %v4710 = vsel %vm3928, %v2903, %v4319
      %v4711 = vsel %vm3929, %v2906, %v4320
      %v4712 = vsel %vm3930, %v2911, %v4321
      %v4713 = vsel %vm3931, %v2914, %v4322
      %v4714 = vsel %vm3932, %v2919, %v4323
      %v4715 = vsel %vm3933, %v2922, %v4324
      %v4716 = vsel %vm3934, %v2927, %v4325
      %v4717 = vsel %vm3935, %v2930, %v4326
      %v4718 = vsel %vm3936, %v2935, %v4327
      %v4719 = vsel %vm3937, %v2938, %v4328
      %v4720 = vsel %vm3938, %v2943, %v4329
      %v4721 = vsel %vm3939, %v2946, %v4330
      %v4722 = vsel %vm3940, %v2951, %v4331
      %v4723 = vsel %vm3941, %v2954, %v4332
      %v4724 = vsel %vm3942, %v2959, %v4333
      %v4725 = vsel %vm3943, %v2962, %v4334
      %v4726 = vsel %vm3944, %v2967, %v4335
      %v4727 = vsel %vm3945, %v2970, %v4336
      %v4728 = vsel %vm3946, %v2975, %v4337
      %v4729 = vsel %vm3947, %v2978, %v4338
      %v4730 = vsel %vm3948, %v2983, %v4339
      %v4731 = vsel %vm3949, %v2986, %v4340
      %v4732 = vsel %vm3950, %v2991, %v4341
      %v4733 = vsel %vm3951, %v2994, %v4342
      %v4734 = vsel %vm3952, %v2999, %v4343
      %v4735 = vsel %vm3953, %v3002, %v4344
      %v4736 = vsel %vm3954, %v3007, %v4345
      %v4737 = vsel %vm3955, %v3010, %v4346
      %v4738 = vsel %vm3956, %v3015, %v4347
      %v4739 = vsel %vm3957, %v3018, %v4348
      %v4740 = vsel %vm3958, %v3023, %v4349
      %v4741 = vsel %vm3959, %v3026, %v4350
      %v4742 = vsel %vm3960, %v3031, %v4351
      %v4743 = vsel %vm3961, %v3034, %v4352
      %v4744 = vsel %vm3962, %v3039, %v4353
      %v4745 = vsel %vm3963, %v3042, %v4354
      %v4746 = vsel %vm3964, %v3047, %v4355
      %v4747 = vsel %vm3965, %v3050, %v4356
      %v4748 = vsel %vm3966, %v3055, %v4357
      %v4749 = vsel %vm3967, %v3058, %v4358
      %v4750 = vsel %vm3968, %v3063, %v4359
      %v4751 = vsel %vm3969, %v3066, %v4360
      %v4752 = vsel %vm3970, %v3071, %v4361
      %v4753 = vsel %vm3971, %v3074, %v4362
      %v4754 = vsel %vm3972, %v3079, %v4363
      %v4755 = vsel %vm3973, %v3082, %v4364
      %v4756 = vsel %vm3974, %v3087, %v4365
      %v4757 = vsel %vm3975, %v3090, %v4366
      %v4758 = vsel %vm3976, %v3095, %v4367
      %v4759 = vsel %vm3977, %v3098, %v4368
      %v4760 = vsel %vm3978, %v3103, %v4369
      %v4761 = vsel %vm3979, %v3106, %v4370
      %v4762 = vsel %vm3980, %v3111, %v4371
      %v4763 = vsel %vm3981, %v3114, %v4372
      %v4764 = vsel %vm3982, %v3119, %v4373
      %v4765 = vsel %vm3983, %v3122, %v4374
      %v4766 = vsel %vm3984, %v3127, %v4375
      %v4767 = vsel %vm3985, %v3130, %v4376
      %v4768 = vsel %vm3986, %v3135, %v4377
      %v4769 = vsel %vm3987, %v3138, %v4378
      %v4770 = vsel %vm3988, %v3143, %v4379
      %v4771 = vsel %vm3989, %v3146, %v4380
      %v4772 = vsel %vm3990, %v3151, %v4381
      %v4773 = vsel %vm3991, %v3154, %v4382
      %v4774 = vsel %vm3992, %v3159, %v4383
      %v4775 = vsel %vm3993, %v3162, %v4384
      %v4776 = vsel %vm3994, %v3167, %v4385
      %v4777 = vsel %vm3995, %v3170, %v4386
      %v4778 = vsel %vm3996, %v3175, %v4387
      %v4779 = vsel %vm3997, %v3178, %v4388
      %v4780 = vsel %vm3998, %v3183, %v4389
      %v4781 = vsel %vm3999, %v3186, %v4390
      %v4782 = vsel %vm4000, %v3191, %v4391
      %v4783 = vsel %vm4001, %v3194, %v4392
      %v4784 = vsel %vm4002, %v3199, %v4393
      %v4785 = vsel %vm4003, %v3202, %v4394
      %v4786 = vsel %vm4004, %v3207, %v4395
      %v4787 = vsel %vm4005, %v3210, %v4396
      %v4788 = vsel %vm4006, %v3215, %v4397
      %v4789 = vsel %vm4007, %v3218, %v4398
      %v4790 = vsel %vm4008, %v3223, %v4399
      %v4791 = vsel %vm4009, %v3226, %v4400
      %v4792 = vsel %vm4010, %v3231, %v4401
      %v4793 = vsel %vm4011, %v3234, %v4402
      %v4794 = vsel %vm4012, %v3239, %v4403
      %v4795 = vsel %vm4013, %v3242, %v4404
      %v4796 = vsel %vm4014, %v3247, %v4405
      %v4797 = vsel %vm4015, %v3250, %v4406
      %v4798 = vsel %vm4016, %v3255, %v4407
      %v4799 = vsel %vm4017, %v3258, %v4408
      %v4800 = vsel %vm4018, %v3263, %v4409
      %v4801 = vsel %vm4019, %v3266, %v4410
      %v4802 = vsel %vm4020, %v3271, %v4411
      %v4803 = vsel %vm4021, %v3274, %v4412
      %v4804 = vsel %vm4022, %v3279, %v4413
      %v4805 = vsel %vm4023, %v3282, %v4414
      %v4806 = vsel %vm4024, %v3287, %v4415
      %v4807 = vsel %vm4025, %v3290, %v4416
      %v4808 = vsel %vm4026, %v3295, %v4417
      %v4809 = vsel %vm4027, %v3298, %v4418
      %v4810 = vsel %vm4028, %v3303, %v4419
      %v4811 = vsel %vm4029, %v3306, %v4420
      %v4812 = vsel %vm4030, %v3311, %v4421
      %v4813 = vsel %vm4031, %v3314, %v4422
      %v4814 = vsel %vm4032, %v3319, %v4423
      %v4815 = vsel %vm4033, %v3322, %v4424
      %v4816 = vsel %vm4034, %v3327, %v4425
      %v4817 = vsel %vm4035, %v3330, %v4426
      %v4818 = vsel %vm4036, %v3335, %v4427
      %v4819 = vsel %vm4037, %v3338, %v4428
      %v4820 = vsel %vm4038, %v3343, %v4429
      %v4821 = vsel %vm4039, %v3346, %v4430
      %v4822 = vsel %vm4040, %v3351, %v4431
      %v4823 = vsel %vm4041, %v3354, %v4432
      %v4824 = vsel %vm4042, %v3359, %v4433
      %v4825 = vsel %vm4043, %v3362, %v4434
      %v4826 = vsel %vm4044, %v3367, %v4435
      %v4827 = vsel %vm4045, %v3370, %v4436
      %v4828 = vsel %vm4046, %v3375, %v4437
      %v4829 = vsel %vm4047, %v3378, %v4438
      %v4830 = vsel %vm4048, %v3383, %v4439
      %v4831 = vsel %vm4049, %v3386, %v4440
      %v4832 = vsel %vm4050, %v3391, %v4441
      %v4833 = vsel %vm4051, %v3394, %v4442
      %v4834 = vsel %vm4052, %v3399, %v4443
      %v4835 = vsel %vm4053, %v3402, %v4444
      %v4836 = vsel %vm4054, %v3407, %v4445
      %v4837 = vsel %vm4055, %v3410, %v4446
      %v4838 = vsel %vm4056, %v3415, %v4447
      %v4839 = vsel %vm4057, %v3418, %v4448
      %v4840 = vsel %vm4058, %v3423, %v4449
      %v4841 = vsel %vm4059, %v3426, %v4450
      %v4842 = vsel %vm4060, %v3431, %v4451
      %v4843 = vsel %vm4061, %v3434, %v4452
      %v4844 = vsel %vm4062, %v3439, %v4453
      %v4845 = vsel %vm4063, %v3442, %v4454
      %v4846 = vsel %vm4064, %v3447, %v4455
      %v4847 = vsel %vm4065, %v3450, %v4456
      %v4848 = vsel %vm4066, %v3455, %v4457
      %v4849 = vsel %vm4067, %v3458, %v4458
      %v4850 = vsel %vm4068, %v3463, %v4459
      %v4851 = vsel %vm4069, %v3466, %v4460
      %v4852 = vsel %vm4070, %v3471, %v4461
      %v4853 = vsel %vm4071, %v3474, %v4462
      %v4854 = vsel %vm4072, %v3479, %v4463
      %v4855 = vsel %vm4073, %v3482, %v4464
      %v4856 = vsel %vm4074, %v3487, %v4465
      %v4857 = vsel %vm4075, %v3490, %v4466
      %v4858 = vsel %vm4076, %v3495, %v4467
      %v4859 = vsel %vm4077, %v3498, %v4468
      %v4860 = vsel %vm4078, %v3503, %v4469
      %v4861 = vsel %vm4079, %v3506, %v4470
      %v4862 = vsel %vm4080, %v3511, %v4471
      %v4863 = vsel %vm4081, %v3514, %v4472
      %v4864 = vsel %vm4082, %v3519, %v4473
      %v4865 = vsel %vm4083, %v3522, %v4474
      %v4866 = vsel %vm4084, %v3527, %v4475
      %v4867 = vsel %vm4085, %v3530, %v4476
      %v4868 = vsel %vm4086, %v3535, %v4477
      %v4869 = vsel %vm4087, %v3538, %v4478
      %v4870 = vsel %vm4088, %v3543, %v4479
      %v4871 = vsel %vm4089, %v3546, %v4480
      %v4872 = vsel %vm4090, %v3551, %v4481
      %v4873 = vsel %vm4091, %v3554, %v4482
      %v4874 = vsel %vm4092, %v3559, %v4483
      %v4875 = vsel %vm4093, %v3562, %v4484
      %v4876 = vsel %vm4094, %v3567, %v4485
      %v4877 = vsel %vm4095, %v3570, %v4486
      %v4878 = vsel %vm4096, %v3575, %v4487
      %v4879 = vsel %vm4097, %v3578, %v4488
      %v4880 = vsel %vm4098, %v3583, %v4489
      %v4881 = vsel %vm4099, %v3586, %v4490
      %v4882 = vsel %vm4100, %v3591, %v4491
      %v4883 = vsel %vm4101, %v3594, %v4492
      %v4884 = vsel %vm4102, %v3599, %v4493
      %v4885 = vsel %vm4103, %v3602, %v4494
      %v4886 = vsel %vm4104, %v3607, %v4495
      %v4887 = vsel %vm4105, %v3610, %v4496
      %v4888 = vsel %vm4106, %v3615, %v4497
      %v4889 = vsel %vm4107, %v3618, %v4498
      %v4890 = vsel %vm4108, %v3623, %v4499
      %v4891 = vsel %vm4109, %v3626, %v4500
      %v4892 = vsel %vm4110, %v3631, %v4501
      %v4893 = vsel %vm4111, %v3634, %v4502
      %v4894 = vsel %vm4112, %v3639, %v4503
      %v4895 = vsel %vm4113, %v3642, %v4504
      %v4896 = vsel %vm4114, %v3647, %v4505
      %v4897 = vsel %vm4115, %v3650, %v4506
      %v4898 = vsel %vm4116, %v3655, %v4507
      %v4899 = vsel %vm4117, %v3658, %v4508
      %v4900 = vsel %vm4118, %v3663, %v4509
      %v4901 = vsel %vm4119, %v3666, %v4510
      %v4902 = vsel %vm4120, %v3671, %v4511
      %v4903 = vsel %vm4121, %v3674, %v4512
      %v4904 = vsel %vm4122, %v3679, %v4513
      %v4905 = vsel %vm4123, %v3682, %v4514
      %v4906 = vsel %vm4124, %v3687, %v4515
      %v4907 = vsel %vm4125, %v3690, %v4516
      %v4908 = vsel %vm4126, %v3695, %v4517
      %v4909 = vsel %vm4127, %v3698, %v4518
      %v4910 = vsel %vm4128, %v3703, %v4519
      %v4911 = vsel %vm4129, %v3706, %v4520
      %v4912 = vsel %vm4130, %v3711, %v4521
      %v4913 = vsel %vm4131, %v3714, %v4522
      %v4914 = vsel %vm4132, %v3719, %v4523
      %v4915 = vsel %vm4133, %v3722, %v4524
      %v4916 = vsel %vm4134, %v3727, %v4525
      %v4917 = vsel %vm4135, %v3730, %v4526
      %v4918 = vsel %vm4136, %v3735, %v4527
      %v4919 = vsel %vm4137, %v3738, %v4528
      %v4920 = vsel %vm4138, %v3743, %v4529
      %4921 = vst.msk [vmem:[%s172] sm:$0xff] %vm1559, %v4530
      %4922 = vst.msk [vmem:[%s172 + $0x8] sm:$0xff] %vm1559, %v4531
      %4923 = vst.msk [vmem:[%s172 + $0x10] sm:$0xff] %vm1559, %v4532
      %4924 = vst.msk [vmem:[%s172 + $0x18] sm:$0xff] %vm1559, %v4533
      %4925 = vst.msk [vmem:[%s172 + $0x20] sm:$0xff] %vm1559, %v4534
      %4926 = vst.msk [vmem:[%s172 + $0x28] sm:$0xff] %vm1559, %v4535
      %4927 = vst.msk [vmem:[%s172 + $0x30] sm:$0xff] %vm1559, %v4536
      %4928 = vst.msk [vmem:[%s172 + $0x38] sm:$0xff] %vm1559, %v4537
      %4929 = vst.msk [vmem:[%s172 + $0x40] sm:$0xff] %vm1559, %v4538
      %4930 = vst.msk [vmem:[%s172 + $0x48] sm:$0xff] %vm1559, %v4539
      %4931 = vst.msk [vmem:[%s172 + $0x50] sm:$0xff] %vm1559, %v4540
      %4932 = vst.msk [vmem:[%s172 + $0x58] sm:$0xff] %vm1559, %v4541
      %4933 = vst.msk [vmem:[%s172 + $0x60] sm:$0xff] %vm1559, %v4542
      %4934 = vst.msk [vmem:[%s172 + $0x68] sm:$0xff] %vm1559, %v4543
      %4935 = vst.msk [vmem:[%s172 + $0x70] sm:$0xff] %vm1559, %v4544
      %4936 = vst.msk [vmem:[%s172 + $0x78] sm:$0xff] %vm1559, %v4545
      %4937 = vst.msk [vmem:[%s172 + $0x80] sm:$0xff] %vm1559, %v4546
      %4938 = vst.msk [vmem:[%s172 + $0x88] sm:$0xff] %vm1559, %v4547
      %4939 = vst.msk [vmem:[%s172 + $0x90] sm:$0xff] %vm1559, %v4548
      %4940 = vst.msk [vmem:[%s172 + $0x98] sm:$0xff] %vm1559, %v4549
      %4941 = vst.msk [vmem:[%s172 + $0xa0] sm:$0xff] %vm1559, %v4550
      %4942 = vst.msk [vmem:[%s172 + $0xa8] sm:$0xff] %vm1559, %v4551
      %4943 = vst.msk [vmem:[%s172 + $0xb0] sm:$0xff] %vm1559, %v4552
      %4944 = vst.msk [vmem:[%s172 + $0xb8] sm:$0xff] %vm1559, %v4553
      %4945 = vst.msk [vmem:[%s172 + $0xc0] sm:$0xff] %vm1559, %v4554
      %4946 = vst.msk [vmem:[%s172 + $0xc8] sm:$0xff] %vm1559, %v4555
      %4947 = vst.msk [vmem:[%s172 + $0xd0] sm:$0xff] %vm1559, %v4556
      %4948 = vst.msk [vmem:[%s172 + $0xd8] sm:$0xff] %vm1559, %v4557
      %4949 = vst.msk [vmem:[%s172 + $0xe0] sm:$0xff] %vm1559, %v4558
      %4950 = vst.msk [vmem:[%s172 + $0xe8] sm:$0xff] %vm1559, %v4559
      %4951 = vst.msk [vmem:[%s172 + $0xf0] sm:$0xff] %vm1559, %v4560
      %4952 = vst.msk [vmem:[%s172 + $0xf8] sm:$0xff] %vm1559, %v4561
      %4953 = vst.msk [vmem:[%s172 + $0x100] sm:$0xff] %vm1559, %v4562
      %4954 = vst.msk [vmem:[%s172 + $0x108] sm:$0xff] %vm1559, %v4563
      %4955 = vst.msk [vmem:[%s172 + $0x110] sm:$0xff] %vm1559, %v4564
      %4956 = vst.msk [vmem:[%s172 + $0x118] sm:$0xff] %vm1559, %v4565
      %4957 = vst.msk [vmem:[%s172 + $0x120] sm:$0xff] %vm1559, %v4566
      %4958 = vst.msk [vmem:[%s172 + $0x128] sm:$0xff] %vm1559, %v4567
      %4959 = vst.msk [vmem:[%s172 + $0x130] sm:$0xff] %vm1559, %v4568
      %4960 = vst.msk [vmem:[%s172 + $0x138] sm:$0xff] %vm1559, %v4569
      %4961 = vst.msk [vmem:[%s172 + $0x140] sm:$0xff] %vm1559, %v4570
      %4962 = vst.msk [vmem:[%s172 + $0x148] sm:$0xff] %vm1559, %v4571
      %4963 = vst.msk [vmem:[%s172 + $0x150] sm:$0xff] %vm1559, %v4572
      %4964 = vst.msk [vmem:[%s172 + $0x158] sm:$0xff] %vm1559, %v4573
      %4965 = vst.msk [vmem:[%s172 + $0x160] sm:$0xff] %vm1559, %v4574
      %4966 = vst.msk [vmem:[%s172 + $0x168] sm:$0xff] %vm1559, %v4575
      %4967 = vst.msk [vmem:[%s172 + $0x170] sm:$0xff] %vm1559, %v4576
      %4968 = vst.msk [vmem:[%s172 + $0x178] sm:$0xff] %vm1559, %v4577
      %4969 = vst.msk [vmem:[%s172 + $0x180] sm:$0xff] %vm1559, %v4578
      %4970 = vst.msk [vmem:[%s172 + $0x188] sm:$0xff] %vm1559, %v4579
      %4971 = vst.msk [vmem:[%s172 + $0x190] sm:$0xff] %vm1559, %v4580
      %4972 = vst.msk [vmem:[%s172 + $0x198] sm:$0xff] %vm1559, %v4581
      %4973 = vst.msk [vmem:[%s172 + $0x1a0] sm:$0xff] %vm1559, %v4582
      %4974 = vst.msk [vmem:[%s172 + $0x1a8] sm:$0xff] %vm1559, %v4583
      %4975 = vst.msk [vmem:[%s172 + $0x1b0] sm:$0xff] %vm1559, %v4584
      %4976 = vst.msk [vmem:[%s172 + $0x1b8] sm:$0xff] %vm1559, %v4585
      %4977 = vst.msk [vmem:[%s172 + $0x1c0] sm:$0xff] %vm1559, %v4586
      %4978 = vst.msk [vmem:[%s172 + $0x1c8] sm:$0xff] %vm1559, %v4587
      %4979 = vst.msk [vmem:[%s172 + $0x1d0] sm:$0xff] %vm1559, %v4588
      %4980 = vst.msk [vmem:[%s172 + $0x1d8] sm:$0xff] %vm1559, %v4589
      %4981 = vst.msk [vmem:[%s172 + $0x1e0] sm:$0xff] %vm1559, %v4590
      %4982 = vst.msk [vmem:[%s172 + $0x1e8] sm:$0xff] %vm1559, %v4591
      %4983 = vst.msk [vmem:[%s172 + $0x1f0] sm:$0xff] %vm1559, %v4592
      %4984 = vst.msk [vmem:[%s172 + $0x1f8] sm:$0xff] %vm1559, %v4593
      %4985 = vst.msk [vmem:[%s172 + $0x200] sm:$0xff] %vm1559, %v4594
      %4986 = vst.msk [vmem:[%s172 + $0x208] sm:$0xff] %vm1559, %v4595
      %4987 = vst.msk [vmem:[%s172 + $0x210] sm:$0xff] %vm1559, %v4596
      %4988 = vst.msk [vmem:[%s172 + $0x218] sm:$0xff] %vm1559, %v4597
      %4989 = vst.msk [vmem:[%s172 + $0x220] sm:$0xff] %vm1559, %v4598
      %4990 = vst.msk [vmem:[%s172 + $0x228] sm:$0xff] %vm1559, %v4599
      %4991 = vst.msk [vmem:[%s172 + $0x230] sm:$0xff] %vm1559, %v4600
      %4992 = vst.msk [vmem:[%s172 + $0x238] sm:$0xff] %vm1559, %v4601
      %4993 = vst.msk [vmem:[%s172 + $0x240] sm:$0xff] %vm1559, %v4602
      %4994 = vst.msk [vmem:[%s172 + $0x248] sm:$0xff] %vm1559, %v4603
      %4995 = vst.msk [vmem:[%s172 + $0x250] sm:$0xff] %vm1559, %v4604
      %4996 = vst.msk [vmem:[%s172 + $0x258] sm:$0xff] %vm1559, %v4605
      %4997 = vst.msk [vmem:[%s172 + $0x260] sm:$0xff] %vm1559, %v4606
      %4998 = vst.msk [vmem:[%s172 + $0x268] sm:$0xff] %vm1559, %v4607
      %4999 = vst.msk [vmem:[%s172 + $0x270] sm:$0xff] %vm1559, %v4608
      %5000 = vst.msk [vmem:[%s172 + $0x278] sm:$0xff] %vm1559, %v4609
      %5001 = vst.msk [vmem:[%s172 + $0x280] sm:$0xff] %vm1559, %v4610
      %5002 = vst.msk [vmem:[%s172 + $0x288] sm:$0xff] %vm1559, %v4611
      %5003 = vst.msk [vmem:[%s172 + $0x290] sm:$0xff] %vm1559, %v4612
      %5004 = vst.msk [vmem:[%s172 + $0x298] sm:$0xff] %vm1559, %v4613
      %5005 = vst.msk [vmem:[%s172 + $0x2a0] sm:$0xff] %vm1559, %v4614
      %5006 = vst.msk [vmem:[%s172 + $0x2a8] sm:$0xff] %vm1559, %v4615
      %5007 = vst.msk [vmem:[%s172 + $0x2b0] sm:$0xff] %vm1559, %v4616
      %5008 = vst.msk [vmem:[%s172 + $0x2b8] sm:$0xff] %vm1559, %v4617
      %5009 = vst.msk [vmem:[%s172 + $0x2c0] sm:$0xff] %vm1559, %v4618
      %5010 = vst.msk [vmem:[%s172 + $0x2c8] sm:$0xff] %vm1559, %v4619
      %5011 = vst.msk [vmem:[%s172 + $0x2d0] sm:$0xff] %vm1559, %v4620
      %5012 = vst.msk [vmem:[%s172 + $0x2d8] sm:$0xff] %vm1559, %v4621
      %5013 = vst.msk [vmem:[%s172 + $0x2e0] sm:$0xff] %vm1559, %v4622
      %5014 = vst.msk [vmem:[%s172 + $0x2e8] sm:$0xff] %vm1559, %v4623
      %5015 = vst.msk [vmem:[%s172 + $0x2f0] sm:$0xff] %vm1559, %v4624
      %5016 = vst.msk [vmem:[%s172 + $0x2f8] sm:$0xff] %vm1559, %v4625
      %5017 = vst.msk [vmem:[%s172 + $0x300] sm:$0xff] %vm1559, %v4626
      %5018 = vst.msk [vmem:[%s172 + $0x308] sm:$0xff] %vm1559, %v4627
      %5019 = vst.msk [vmem:[%s172 + $0x310] sm:$0xff] %vm1559, %v4628
      %5020 = vst.msk [vmem:[%s172 + $0x318] sm:$0xff] %vm1559, %v4629
      %5021 = vst.msk [vmem:[%s172 + $0x320] sm:$0xff] %vm1559, %v4630
      %5022 = vst.msk [vmem:[%s172 + $0x328] sm:$0xff] %vm1559, %v4631
      %5023 = vst.msk [vmem:[%s172 + $0x330] sm:$0xff] %vm1559, %v4632
      %5024 = vst.msk [vmem:[%s172 + $0x338] sm:$0xff] %vm1559, %v4633
      %5025 = vst.msk [vmem:[%s172 + $0x340] sm:$0xff] %vm1559, %v4634
      %5026 = vst.msk [vmem:[%s172 + $0x348] sm:$0xff] %vm1559, %v4635
      %5027 = vst.msk [vmem:[%s172 + $0x350] sm:$0xff] %vm1559, %v4636
      %5028 = vst.msk [vmem:[%s172 + $0x358] sm:$0xff] %vm1559, %v4637
      %5029 = vst.msk [vmem:[%s172 + $0x360] sm:$0xff] %vm1559, %v4638
      %5030 = vst.msk [vmem:[%s172 + $0x368] sm:$0xff] %vm1559, %v4639
      %5031 = vst.msk [vmem:[%s172 + $0x370] sm:$0xff] %vm1559, %v4640
      %5032 = vst.msk [vmem:[%s172 + $0x378] sm:$0xff] %vm1559, %v4641
      %5033 = vst.msk [vmem:[%s172 + $0x380] sm:$0xff] %vm1559, %v4642
      %5034 = vst.msk [vmem:[%s172 + $0x388] sm:$0xff] %vm1559, %v4643
      %5035 = vst.msk [vmem:[%s172 + $0x390] sm:$0xff] %vm1559, %v4644
      %5036 = vst.msk [vmem:[%s172 + $0x398] sm:$0xff] %vm1559, %v4645
      %5037 = vst.msk [vmem:[%s172 + $0x3a0] sm:$0xff] %vm1559, %v4646
      %5038 = vst.msk [vmem:[%s172 + $0x3a8] sm:$0xff] %vm1559, %v4647
      %5039 = vst.msk [vmem:[%s172 + $0x3b0] sm:$0xff] %vm1559, %v4648
      %5040 = vst.msk [vmem:[%s172 + $0x3b8] sm:$0xff] %vm1559, %v4649
      %5041 = vst.msk [vmem:[%s172 + $0x3c0] sm:$0xff] %vm1559, %v4650
      %5042 = vst.msk [vmem:[%s172 + $0x3c8] sm:$0xff] %vm1559, %v4651
      %5043 = vst.msk [vmem:[%s172 + $0x3d0] sm:$0xff] %vm1559, %v4652
      %5044 = vst.msk [vmem:[%s172 + $0x3d8] sm:$0xff] %vm1559, %v4653
      %5045 = vst.msk [vmem:[%s172 + $0x3e0] sm:$0xff] %vm1559, %v4654
      %5046 = vst.msk [vmem:[%s172 + $0x3e8] sm:$0xff] %vm1559, %v4655
      %5047 = vst.msk [vmem:[%s172 + $0x3f0] sm:$0xff] %vm1559, %v4656
      %5048 = vst.msk [vmem:[%s172 + $0x3f8] sm:$0xff] %vm1559, %v4657
      %5049 = vst.msk [vmem:[%s172 + $0x400] sm:$0xff] %vm1559, %v4658
      %5050 = vst.msk [vmem:[%s172 + $0x408] sm:$0xff] %vm1559, %v4659
      %5051 = vst.msk [vmem:[%s172 + $0x410] sm:$0xff] %vm1559, %v4660
      %5052 = vst.msk [vmem:[%s172 + $0x418] sm:$0xff] %vm1559, %v4661
      %5053 = vst.msk [vmem:[%s172 + $0x420] sm:$0xff] %vm1559, %v4662
      %5054 = vst.msk [vmem:[%s172 + $0x428] sm:$0xff] %vm1559, %v4663
      %5055 = vst.msk [vmem:[%s172 + $0x430] sm:$0xff] %vm1559, %v4664
      %5056 = vst.msk [vmem:[%s172 + $0x438] sm:$0xff] %vm1559, %v4665
      %5057 = vst.msk [vmem:[%s172 + $0x440] sm:$0xff] %vm1559, %v4666
      %5058 = vst.msk [vmem:[%s172 + $0x448] sm:$0xff] %vm1559, %v4667
      %5059 = vst.msk [vmem:[%s172 + $0x450] sm:$0xff] %vm1559, %v4668
      %5060 = vst.msk [vmem:[%s172 + $0x458] sm:$0xff] %vm1559, %v4669
      %5061 = vst.msk [vmem:[%s172 + $0x460] sm:$0xff] %vm1559, %v4670
      %5062 = vst.msk [vmem:[%s172 + $0x468] sm:$0xff] %vm1559, %v4671
      %5063 = vst.msk [vmem:[%s172 + $0x470] sm:$0xff] %vm1559, %v4672
      %5064 = vst.msk [vmem:[%s172 + $0x478] sm:$0xff] %vm1559, %v4673
      %5065 = vst.msk [vmem:[%s172 + $0x480] sm:$0xff] %vm1559, %v4674
      %5066 = vst.msk [vmem:[%s172 + $0x488] sm:$0xff] %vm1559, %v4675
      %5067 = vst.msk [vmem:[%s172 + $0x490] sm:$0xff] %vm1559, %v4676
      %5068 = vst.msk [vmem:[%s172 + $0x498] sm:$0xff] %vm1559, %v4677
      %5069 = vst.msk [vmem:[%s172 + $0x4a0] sm:$0xff] %vm1559, %v4678
      %5070 = vst.msk [vmem:[%s172 + $0x4a8] sm:$0xff] %vm1559, %v4679
      %5071 = vst.msk [vmem:[%s172 + $0x4b0] sm:$0xff] %vm1559, %v4680
      %5072 = vst.msk [vmem:[%s172 + $0x4b8] sm:$0xff] %vm1559, %v4681
      %5073 = vst.msk [vmem:[%s172 + $0x4c0] sm:$0xff] %vm1559, %v4682
      %5074 = vst.msk [vmem:[%s172 + $0x4c8] sm:$0xff] %vm1559, %v4683
      %5075 = vst.msk [vmem:[%s172 + $0x4d0] sm:$0xff] %vm1559, %v4684
      %5076 = vst.msk [vmem:[%s172 + $0x4d8] sm:$0xff] %vm1559, %v4685
      %5077 = vst.msk [vmem:[%s172 + $0x4e0] sm:$0xff] %vm1559, %v4686
      %5078 = vst.msk [vmem:[%s172 + $0x4e8] sm:$0xff] %vm1559, %v4687
      %5079 = vst.msk [vmem:[%s172 + $0x4f0] sm:$0xff] %vm1559, %v4688
      %5080 = vst.msk [vmem:[%s172 + $0x4f8] sm:$0xff] %vm1559, %v4689
      %5081 = vst.msk [vmem:[%s172 + $0x500] sm:$0xff] %vm1559, %v4690
      %5082 = vst.msk [vmem:[%s172 + $0x508] sm:$0xff] %vm1559, %v4691
      %5083 = vst.msk [vmem:[%s172 + $0x510] sm:$0xff] %vm1559, %v4692
      %5084 = vst.msk [vmem:[%s172 + $0x518] sm:$0xff] %vm1559, %v4693
      %5085 = vst.msk [vmem:[%s172 + $0x520] sm:$0xff] %vm1559, %v4694
      %5086 = vst.msk [vmem:[%s172 + $0x528] sm:$0xff] %vm1559, %v4695
      %5087 = vst.msk [vmem:[%s172 + $0x530] sm:$0xff] %vm1559, %v4696
      %5088 = vst.msk [vmem:[%s172 + $0x538] sm:$0xff] %vm1559, %v4697
      %5089 = vst.msk [vmem:[%s172 + $0x540] sm:$0xff] %vm1559, %v4698
      %5090 = vst.msk [vmem:[%s172 + $0x548] sm:$0xff] %vm1559, %v4699
      %5091 = vst.msk [vmem:[%s172 + $0x550] sm:$0xff] %vm1559, %v4700
      %5092 = vst.msk [vmem:[%s172 + $0x558] sm:$0xff] %vm1559, %v4701
      %5093 = vst.msk [vmem:[%s172 + $0x560] sm:$0xff] %vm1559, %v4702
      %5094 = vst.msk [vmem:[%s172 + $0x568] sm:$0xff] %vm1559, %v4703
      %5095 = vst.msk [vmem:[%s172 + $0x570] sm:$0xff] %vm1559, %v4704
      %5096 = vst.msk [vmem:[%s172 + $0x578] sm:$0xff] %vm1559, %v4705
      %5097 = vst.msk [vmem:[%s172 + $0x580] sm:$0xff] %vm1559, %v4706
      %5098 = vst.msk [vmem:[%s172 + $0x588] sm:$0xff] %vm1559, %v4707
      %5099 = vst.msk [vmem:[%s172 + $0x590] sm:$0xff] %vm1559, %v4708
      %5100 = vst.msk [vmem:[%s172 + $0x598] sm:$0xff] %vm1559, %v4709
      %5101 = vst.msk [vmem:[%s172 + $0x5a0] sm:$0xff] %vm1559, %v4710
      %5102 = vst.msk [vmem:[%s172 + $0x5a8] sm:$0xff] %vm1559, %v4711
      %5103 = vst.msk [vmem:[%s172 + $0x5b0] sm:$0xff] %vm1559, %v4712
      %5104 = vst.msk [vmem:[%s172 + $0x5b8] sm:$0xff] %vm1559, %v4713
      %5105 = vst.msk [vmem:[%s172 + $0x5c0] sm:$0xff] %vm1559, %v4714
      %5106 = vst.msk [vmem:[%s172 + $0x5c8] sm:$0xff] %vm1559, %v4715
      %5107 = vst.msk [vmem:[%s172 + $0x5d0] sm:$0xff] %vm1559, %v4716
      %5108 = vst.msk [vmem:[%s172 + $0x5d8] sm:$0xff] %vm1559, %v4717
      %5109 = vst.msk [vmem:[%s172 + $0x5e0] sm:$0xff] %vm1559, %v4718
      %5110 = vst.msk [vmem:[%s172 + $0x5e8] sm:$0xff] %vm1559, %v4719
      %5111 = vst.msk [vmem:[%s172 + $0x5f0] sm:$0xff] %vm1559, %v4720
      %5112 = vst.msk [vmem:[%s172 + $0x5f8] sm:$0xff] %vm1559, %v4721
      %5113 = vst.msk [vmem:[%s172 + $0x600] sm:$0xff] %vm1559, %v4722
      %5114 = vst.msk [vmem:[%s172 + $0x608] sm:$0xff] %vm1559, %v4723
      %5115 = vst.msk [vmem:[%s172 + $0x610] sm:$0xff] %vm1559, %v4724
      %5116 = vst.msk [vmem:[%s172 + $0x618] sm:$0xff] %vm1559, %v4725
      %5117 = vst.msk [vmem:[%s172 + $0x620] sm:$0xff] %vm1559, %v4726
      %5118 = vst.msk [vmem:[%s172 + $0x628] sm:$0xff] %vm1559, %v4727
      %5119 = vst.msk [vmem:[%s172 + $0x630] sm:$0xff] %vm1559, %v4728
      %5120 = vst.msk [vmem:[%s172 + $0x638] sm:$0xff] %vm1559, %v4729
      %5121 = vst.msk [vmem:[%s172 + $0x640] sm:$0xff] %vm1559, %v4730
      %5122 = vst.msk [vmem:[%s172 + $0x648] sm:$0xff] %vm1559, %v4731
      %5123 = vst.msk [vmem:[%s172 + $0x650] sm:$0xff] %vm1559, %v4732
      %5124 = vst.msk [vmem:[%s172 + $0x658] sm:$0xff] %vm1559, %v4733
      %5125 = vst.msk [vmem:[%s172 + $0x660] sm:$0xff] %vm1559, %v4734
      %5126 = vst.msk [vmem:[%s172 + $0x668] sm:$0xff] %vm1559, %v4735
      %5127 = vst.msk [vmem:[%s172 + $0x670] sm:$0xff] %vm1559, %v4736
      %5128 = vst.msk [vmem:[%s172 + $0x678] sm:$0xff] %vm1559, %v4737
      %5129 = vst.msk [vmem:[%s172 + $0x680] sm:$0xff] %vm1559, %v4738
      %5130 = vst.msk [vmem:[%s172 + $0x688] sm:$0xff] %vm1559, %v4739
      %5131 = vst.msk [vmem:[%s172 + $0x690] sm:$0xff] %vm1559, %v4740
      %5132 = vst.msk [vmem:[%s172 + $0x698] sm:$0xff] %vm1559, %v4741
      %5133 = vst.msk [vmem:[%s172 + $0x6a0] sm:$0xff] %vm1559, %v4742
      %5134 = vst.msk [vmem:[%s172 + $0x6a8] sm:$0xff] %vm1559, %v4743
      %5135 = vst.msk [vmem:[%s172 + $0x6b0] sm:$0xff] %vm1559, %v4744
      %5136 = vst.msk [vmem:[%s172 + $0x6b8] sm:$0xff] %vm1559, %v4745
      %5137 = vst.msk [vmem:[%s172 + $0x6c0] sm:$0xff] %vm1559, %v4746
      %5138 = vst.msk [vmem:[%s172 + $0x6c8] sm:$0xff] %vm1559, %v4747
      %5139 = vst.msk [vmem:[%s172 + $0x6d0] sm:$0xff] %vm1559, %v4748
      %5140 = vst.msk [vmem:[%s172 + $0x6d8] sm:$0xff] %vm1559, %v4749
      %5141 = vst.msk [vmem:[%s172 + $0x6e0] sm:$0xff] %vm1559, %v4750
      %5142 = vst.msk [vmem:[%s172 + $0x6e8] sm:$0xff] %vm1559, %v4751
      %5143 = vst.msk [vmem:[%s172 + $0x6f0] sm:$0xff] %vm1559, %v4752
      %5144 = vst.msk [vmem:[%s172 + $0x6f8] sm:$0xff] %vm1559, %v4753
      %5145 = vst.msk [vmem:[%s172 + $0x700] sm:$0xff] %vm1559, %v4754
      %5146 = vst.msk [vmem:[%s172 + $0x708] sm:$0xff] %vm1559, %v4755
      %5147 = vst.msk [vmem:[%s172 + $0x710] sm:$0xff] %vm1559, %v4756
      %5148 = vst.msk [vmem:[%s172 + $0x718] sm:$0xff] %vm1559, %v4757
      %5149 = vst.msk [vmem:[%s172 + $0x720] sm:$0xff] %vm1559, %v4758
      %5150 = vst.msk [vmem:[%s172 + $0x728] sm:$0xff] %vm1559, %v4759
      %5151 = vst.msk [vmem:[%s172 + $0x730] sm:$0xff] %vm1559, %v4760
      %5152 = vst.msk [vmem:[%s172 + $0x738] sm:$0xff] %vm1559, %v4761
      %5153 = vst.msk [vmem:[%s172 + $0x740] sm:$0xff] %vm1559, %v4762
      %5154 = vst.msk [vmem:[%s172 + $0x748] sm:$0xff] %vm1559, %v4763
      %5155 = vst.msk [vmem:[%s172 + $0x750] sm:$0xff] %vm1559, %v4764
      %5156 = vst.msk [vmem:[%s172 + $0x758] sm:$0xff] %vm1559, %v4765
      %5157 = vst.msk [vmem:[%s172 + $0x760] sm:$0xff] %vm1559, %v4766
      %5158 = vst.msk [vmem:[%s172 + $0x768] sm:$0xff] %vm1559, %v4767
      %5159 = vst.msk [vmem:[%s172 + $0x770] sm:$0xff] %vm1559, %v4768
      %5160 = vst.msk [vmem:[%s172 + $0x778] sm:$0xff] %vm1559, %v4769
      %5161 = vst.msk [vmem:[%s172 + $0x780] sm:$0xff] %vm1559, %v4770
      %5162 = vst.msk [vmem:[%s172 + $0x788] sm:$0xff] %vm1559, %v4771
      %5163 = vst.msk [vmem:[%s172 + $0x790] sm:$0xff] %vm1559, %v4772
      %5164 = vst.msk [vmem:[%s172 + $0x798] sm:$0xff] %vm1559, %v4773
      %5165 = vst.msk [vmem:[%s172 + $0x7a0] sm:$0xff] %vm1559, %v4774
      %5166 = vst.msk [vmem:[%s172 + $0x7a8] sm:$0xff] %vm1559, %v4775
      %5167 = vst.msk [vmem:[%s172 + $0x7b0] sm:$0xff] %vm1559, %v4776
      %5168 = vst.msk [vmem:[%s172 + $0x7b8] sm:$0xff] %vm1559, %v4777
      %5169 = vst.msk [vmem:[%s172 + $0x7c0] sm:$0xff] %vm1559, %v4778
      %5170 = vst.msk [vmem:[%s172 + $0x7c8] sm:$0xff] %vm1559, %v4779
      %5171 = vst.msk [vmem:[%s172 + $0x7d0] sm:$0xff] %vm1559, %v4780
      %5172 = vst.msk [vmem:[%s172 + $0x7d8] sm:$0xff] %vm1559, %v4781
      %5173 = vst.msk [vmem:[%s172 + $0x7e0] sm:$0xff] %vm1559, %v4782
      %5174 = vst.msk [vmem:[%s172 + $0x7e8] sm:$0xff] %vm1559, %v4783
      %5175 = vst.msk [vmem:[%s172 + $0x7f0] sm:$0xff] %vm1559, %v4784
      %5176 = vst.msk [vmem:[%s172 + $0x7f8] sm:$0xff] %vm1559, %v4785
      %5177 = vst.msk [vmem:[%s172 + $0x800] sm:$0xff] %vm1559, %v4786
      %5178 = vst.msk [vmem:[%s172 + $0x808] sm:$0xff] %vm1559, %v4787
      %5179 = vst.msk [vmem:[%s172 + $0x810] sm:$0xff] %vm1559, %v4788
      %5180 = vst.msk [vmem:[%s172 + $0x818] sm:$0xff] %vm1559, %v4789
      %5181 = vst.msk [vmem:[%s172 + $0x820] sm:$0xff] %vm1559, %v4790
      %5182 = vst.msk [vmem:[%s172 + $0x828] sm:$0xff] %vm1559, %v4791
      %5183 = vst.msk [vmem:[%s172 + $0x830] sm:$0xff] %vm1559, %v4792
      %5184 = vst.msk [vmem:[%s172 + $0x838] sm:$0xff] %vm1559, %v4793
      %5185 = vst.msk [vmem:[%s172 + $0x840] sm:$0xff] %vm1559, %v4794
      %5186 = vst.msk [vmem:[%s172 + $0x848] sm:$0xff] %vm1559, %v4795
      %5187 = vst.msk [vmem:[%s172 + $0x850] sm:$0xff] %vm1559, %v4796
      %5188 = vst.msk [vmem:[%s172 + $0x858] sm:$0xff] %vm1559, %v4797
      %5189 = vst.msk [vmem:[%s172 + $0x860] sm:$0xff] %vm1559, %v4798
      %5190 = vst.msk [vmem:[%s172 + $0x868] sm:$0xff] %vm1559, %v4799
      %5191 = vst.msk [vmem:[%s172 + $0x870] sm:$0xff] %vm1559, %v4800
      %5192 = vst.msk [vmem:[%s172 + $0x878] sm:$0xff] %vm1559, %v4801
      %5193 = vst.msk [vmem:[%s172 + $0x880] sm:$0xff] %vm1559, %v4802
      %5194 = vst.msk [vmem:[%s172 + $0x888] sm:$0xff] %vm1559, %v4803
      %5195 = vst.msk [vmem:[%s172 + $0x890] sm:$0xff] %vm1559, %v4804
      %5196 = vst.msk [vmem:[%s172 + $0x898] sm:$0xff] %vm1559, %v4805
      %5197 = vst.msk [vmem:[%s172 + $0x8a0] sm:$0xff] %vm1559, %v4806
      %5198 = vst.msk [vmem:[%s172 + $0x8a8] sm:$0xff] %vm1559, %v4807
      %5199 = vst.msk [vmem:[%s172 + $0x8b0] sm:$0xff] %vm1559, %v4808
      %5200 = vst.msk [vmem:[%s172 + $0x8b8] sm:$0xff] %vm1559, %v4809
      %5201 = vst.msk [vmem:[%s172 + $0x8c0] sm:$0xff] %vm1559, %v4810
      %5202 = vst.msk [vmem:[%s172 + $0x8c8] sm:$0xff] %vm1559, %v4811
      %5203 = vst.msk [vmem:[%s172 + $0x8d0] sm:$0xff] %vm1559, %v4812
      %5204 = vst.msk [vmem:[%s172 + $0x8d8] sm:$0xff] %vm1559, %v4813
      %5205 = vst.msk [vmem:[%s172 + $0x8e0] sm:$0xff] %vm1559, %v4814
      %5206 = vst.msk [vmem:[%s172 + $0x8e8] sm:$0xff] %vm1559, %v4815
      %5207 = vst.msk [vmem:[%s172 + $0x8f0] sm:$0xff] %vm1559, %v4816
      %5208 = vst.msk [vmem:[%s172 + $0x8f8] sm:$0xff] %vm1559, %v4817
      %5209 = vst.msk [vmem:[%s172 + $0x900] sm:$0xff] %vm1559, %v4818
      %5210 = vst.msk [vmem:[%s172 + $0x908] sm:$0xff] %vm1559, %v4819
      %5211 = vst.msk [vmem:[%s172 + $0x910] sm:$0xff] %vm1559, %v4820
      %5212 = vst.msk [vmem:[%s172 + $0x918] sm:$0xff] %vm1559, %v4821
      %5213 = vst.msk [vmem:[%s172 + $0x920] sm:$0xff] %vm1559, %v4822
      %5214 = vst.msk [vmem:[%s172 + $0x928] sm:$0xff] %vm1559, %v4823
      %5215 = vst.msk [vmem:[%s172 + $0x930] sm:$0xff] %vm1559, %v4824
      %5216 = vst.msk [vmem:[%s172 + $0x938] sm:$0xff] %vm1559, %v4825
      %5217 = vst.msk [vmem:[%s172 + $0x940] sm:$0xff] %vm1559, %v4826
      %5218 = vst.msk [vmem:[%s172 + $0x948] sm:$0xff] %vm1559, %v4827
      %5219 = vst.msk [vmem:[%s172 + $0x950] sm:$0xff] %vm1559, %v4828
      %5220 = vst.msk [vmem:[%s172 + $0x958] sm:$0xff] %vm1559, %v4829
      %5221 = vst.msk [vmem:[%s172 + $0x960] sm:$0xff] %vm1559, %v4830
      %5222 = vst.msk [vmem:[%s172 + $0x968] sm:$0xff] %vm1559, %v4831
      %5223 = vst.msk [vmem:[%s172 + $0x970] sm:$0xff] %vm1559, %v4832
      %5224 = vst.msk [vmem:[%s172 + $0x978] sm:$0xff] %vm1559, %v4833
      %5225 = vst.msk [vmem:[%s172 + $0x980] sm:$0xff] %vm1559, %v4834
      %5226 = vst.msk [vmem:[%s172 + $0x988] sm:$0xff] %vm1559, %v4835
      %5227 = vst.msk [vmem:[%s172 + $0x990] sm:$0xff] %vm1559, %v4836
      %5228 = vst.msk [vmem:[%s172 + $0x998] sm:$0xff] %vm1559, %v4837
      %5229 = vst.msk [vmem:[%s172 + $0x9a0] sm:$0xff] %vm1559, %v4838
      %5230 = vst.msk [vmem:[%s172 + $0x9a8] sm:$0xff] %vm1559, %v4839
      %5231 = vst.msk [vmem:[%s172 + $0x9b0] sm:$0xff] %vm1559, %v4840
      %5232 = vst.msk [vmem:[%s172 + $0x9b8] sm:$0xff] %vm1559, %v4841
      %5233 = vst.msk [vmem:[%s172 + $0x9c0] sm:$0xff] %vm1559, %v4842
      %5234 = vst.msk [vmem:[%s172 + $0x9c8] sm:$0xff] %vm1559, %v4843
      %5235 = vst.msk [vmem:[%s172 + $0x9d0] sm:$0xff] %vm1559, %v4844
      %5236 = vst.msk [vmem:[%s172 + $0x9d8] sm:$0xff] %vm1559, %v4845
      %5237 = vst.msk [vmem:[%s172 + $0x9e0] sm:$0xff] %vm1559, %v4846
      %5238 = vst.msk [vmem:[%s172 + $0x9e8] sm:$0xff] %vm1559, %v4847
      %5239 = vst.msk [vmem:[%s172 + $0x9f0] sm:$0xff] %vm1559, %v4848
      %5240 = vst.msk [vmem:[%s172 + $0x9f8] sm:$0xff] %vm1559, %v4849
      %5241 = vst.msk [vmem:[%s172 + $0xa00] sm:$0xff] %vm1559, %v4850
      %5242 = vst.msk [vmem:[%s172 + $0xa08] sm:$0xff] %vm1559, %v4851
      %5243 = vst.msk [vmem:[%s172 + $0xa10] sm:$0xff] %vm1559, %v4852
      %5244 = vst.msk [vmem:[%s172 + $0xa18] sm:$0xff] %vm1559, %v4853
      %5245 = vst.msk [vmem:[%s172 + $0xa20] sm:$0xff] %vm1559, %v4854
      %5246 = vst.msk [vmem:[%s172 + $0xa28] sm:$0xff] %vm1559, %v4855
      %5247 = vst.msk [vmem:[%s172 + $0xa30] sm:$0xff] %vm1559, %v4856
      %5248 = vst.msk [vmem:[%s172 + $0xa38] sm:$0xff] %vm1559, %v4857
      %5249 = vst.msk [vmem:[%s172 + $0xa40] sm:$0xff] %vm1559, %v4858
      %5250 = vst.msk [vmem:[%s172 + $0xa48] sm:$0xff] %vm1559, %v4859
      %5251 = vst.msk [vmem:[%s172 + $0xa50] sm:$0xff] %vm1559, %v4860
      %5252 = vst.msk [vmem:[%s172 + $0xa58] sm:$0xff] %vm1559, %v4861
      %5253 = vst.msk [vmem:[%s172 + $0xa60] sm:$0xff] %vm1559, %v4862
      %5254 = vst.msk [vmem:[%s172 + $0xa68] sm:$0xff] %vm1559, %v4863
      %5255 = vst.msk [vmem:[%s172 + $0xa70] sm:$0xff] %vm1559, %v4864
      %5256 = vst.msk [vmem:[%s172 + $0xa78] sm:$0xff] %vm1559, %v4865
      %5257 = vst.msk [vmem:[%s172 + $0xa80] sm:$0xff] %vm1559, %v4866
      %5258 = vst.msk [vmem:[%s172 + $0xa88] sm:$0xff] %vm1559, %v4867
      %5259 = vst.msk [vmem:[%s172 + $0xa90] sm:$0xff] %vm1559, %v4868
      %5260 = vst.msk [vmem:[%s172 + $0xa98] sm:$0xff] %vm1559, %v4869
      %5261 = vst.msk [vmem:[%s172 + $0xaa0] sm:$0xff] %vm1559, %v4870
      %5262 = vst.msk [vmem:[%s172 + $0xaa8] sm:$0xff] %vm1559, %v4871
      %5263 = vst.msk [vmem:[%s172 + $0xab0] sm:$0xff] %vm1559, %v4872
      %5264 = vst.msk [vmem:[%s172 + $0xab8] sm:$0xff] %vm1559, %v4873
      %5265 = vst.msk [vmem:[%s172 + $0xac0] sm:$0xff] %vm1559, %v4874
      %5266 = vst.msk [vmem:[%s172 + $0xac8] sm:$0xff] %vm1559, %v4875
      %5267 = vst.msk [vmem:[%s172 + $0xad0] sm:$0xff] %vm1559, %v4876
      %5268 = vst.msk [vmem:[%s172 + $0xad8] sm:$0xff] %vm1559, %v4877
      %5269 = vst.msk [vmem:[%s172 + $0xae0] sm:$0xff] %vm1559, %v4878
      %5270 = vst.msk [vmem:[%s172 + $0xae8] sm:$0xff] %vm1559, %v4879
      %5271 = vst.msk [vmem:[%s172 + $0xaf0] sm:$0xff] %vm1559, %v4880
      %5272 = vst.msk [vmem:[%s172 + $0xaf8] sm:$0xff] %vm1559, %v4881
      %5273 = vst.msk [vmem:[%s172 + $0xb00] sm:$0xff] %vm1559, %v4882
      %5274 = vst.msk [vmem:[%s172 + $0xb08] sm:$0xff] %vm1559, %v4883
      %5275 = vst.msk [vmem:[%s172 + $0xb10] sm:$0xff] %vm1559, %v4884
      %5276 = vst.msk [vmem:[%s172 + $0xb18] sm:$0xff] %vm1559, %v4885
      %5277 = vst.msk [vmem:[%s172 + $0xb20] sm:$0xff] %vm1559, %v4886
      %5278 = vst.msk [vmem:[%s172 + $0xb28] sm:$0xff] %vm1559, %v4887
      %5279 = vst.msk [vmem:[%s172 + $0xb30] sm:$0xff] %vm1559, %v4888
      %5280 = vst.msk [vmem:[%s172 + $0xb38] sm:$0xff] %vm1559, %v4889
      %5281 = vst.msk [vmem:[%s172 + $0xb40] sm:$0xff] %vm1559, %v4890
      %5282 = vst.msk [vmem:[%s172 + $0xb48] sm:$0xff] %vm1559, %v4891
      %5283 = vst.msk [vmem:[%s172 + $0xb50] sm:$0xff] %vm1559, %v4892
      %5284 = vst.msk [vmem:[%s172 + $0xb58] sm:$0xff] %vm1559, %v4893
      %5285 = vst.msk [vmem:[%s172 + $0xb60] sm:$0xff] %vm1559, %v4894
      %5286 = vst.msk [vmem:[%s172 + $0xb68] sm:$0xff] %vm1559, %v4895
      %5287 = vst.msk [vmem:[%s172 + $0xb70] sm:$0xff] %vm1559, %v4896
      %5288 = vst.msk [vmem:[%s172 + $0xb78] sm:$0xff] %vm1559, %v4897
      %5289 = vst.msk [vmem:[%s172 + $0xb80] sm:$0xff] %vm1559, %v4898
      %5290 = vst.msk [vmem:[%s172 + $0xb88] sm:$0xff] %vm1559, %v4899
      %5291 = vst.msk [vmem:[%s172 + $0xb90] sm:$0xff] %vm1559, %v4900
      %5292 = vst.msk [vmem:[%s172 + $0xb98] sm:$0xff] %vm1559, %v4901
      %5293 = vst.msk [vmem:[%s172 + $0xba0] sm:$0xff] %vm1559, %v4902
      %5294 = vst.msk [vmem:[%s172 + $0xba8] sm:$0xff] %vm1559, %v4903
      %5295 = vst.msk [vmem:[%s172 + $0xbb0] sm:$0xff] %vm1559, %v4904
      %5296 = vst.msk [vmem:[%s172 + $0xbb8] sm:$0xff] %vm1559, %v4905
      %5297 = vst.msk [vmem:[%s172 + $0xbc0] sm:$0xff] %vm1559, %v4906
      %5298 = vst.msk [vmem:[%s172 + $0xbc8] sm:$0xff] %vm1559, %v4907
      %5299 = vst.msk [vmem:[%s172 + $0xbd0] sm:$0xff] %vm1559, %v4908
      %5300 = vst.msk [vmem:[%s172 + $0xbd8] sm:$0xff] %vm1559, %v4909
      %5301 = vst.msk [vmem:[%s172 + $0xbe0] sm:$0xff] %vm1559, %v4910
      %5302 = vst.msk [vmem:[%s172 + $0xbe8] sm:$0xff] %vm1559, %v4911
      %5303 = vst.msk [vmem:[%s172 + $0xbf0] sm:$0xff] %vm1559, %v4912
      %5304 = vst.msk [vmem:[%s172 + $0xbf8] sm:$0xff] %vm1559, %v4913
      %5305 = vst.msk [vmem:[%s172 + $0xc00] sm:$0xff] %vm1559, %v4914
      %5306 = vst.msk [vmem:[%s172 + $0xc08] sm:$0xff] %vm1559, %v4915
      %5307 = vst.msk [vmem:[%s172 + $0xc10] sm:$0xff] %vm1559, %v4916
      %5308 = vst.msk [vmem:[%s172 + $0xc18] sm:$0xff] %vm1559, %v4917
      %5309 = vst.msk [vmem:[%s172 + $0xc20] sm:$0xff] %vm1559, %v4918
      %5310 = vst.msk [vmem:[%s172 + $0xc28] sm:$0xff] %vm1559, %v4919
      %5311 = vst.msk [vmem:[%s172 + $0xc30] sm:$0xff] %vm1559, %v4920
      %s5312 = smul.u32 391, %s14
      %p5313 = scmp.lt.s32.totalorder %s5312, 1172
      %s5314 = scalar_select %p5313, %s5312, 1172
      %s5315 = smul.addr %s5314, 8
      %s5316 = scalar_lea.vmem %s3, %s5315
      // Predicated region
      $region33: #{discriminator_forward.4} parent=31 // pred_check
        %p5317 = pneg %p100
      $region34: #{discriminator_forward.4} parent=31 // pred_check_branch
        %5319 = sbr.rel (%p5317) target = $region36
      $region35: #{discriminator_forward.4} parent=31 // pred_region
        %s5320 = smul.u32 391, %s14
      $region36: #{discriminator_forward.4} parent=31 // pred_fallthru
        _
    $region32: #{discriminator_forward.4} parent=5 // pred_fallthru
      _
    %p5321 = scmp.le.s32.totalorder 2, %s9
    // Predicated region
    $region37: #{discriminator_forward.4} parent=5 // pred_check
      %p5322 = pneg %p5321
    $region38: #{discriminator_forward.4} parent=5 // pred_check_branch
      %5324 = sbr.rel (%p5322) target = $region40
    $region39: #{discriminator_forward.4} parent=5 // pred_region
      %s5325 = ssub.s32 %s9, 2
      // Predicated region
      $region41: #{discriminator_forward.4} parent=39 // pred_check
        %p5326 = pneg %p106
      $region42: #{discriminator_forward.4} parent=39 // pred_check_branch
        %5328 = sbr.rel (%p5326) target = $region44
      $region43: #{discriminator_forward.4} parent=39 // pred_region
        %s5329 = smul.u32 391, %s15
        %p5330 = scmp.lt.s32.totalorder %s5329, 1172
        %s5331 = scalar_select %p5330, %s5329, 1172
        %s5332 = smul.addr %s5331, 8
        %s5333 = scalar_lea.vmem %s3, %s5332
      $region44: #{discriminator_forward.4} parent=39 // pred_fallthru
        _
    $region40: #{discriminator_forward.4} parent=5 // pred_fallthru
      _
  $region6: #{discriminator_forward.4} parent=0 // loop_footer
    %s13 = sadd.s32 1, %s9
  $region7: #{discriminator_forward.4} parent=0 // loop_footer_branch
    %8 = sbr.rel target = $region3
  $region8: #{discriminator_forward.4} parent=0 // loop_exit
    _

// kernel: discriminator_forward.5
$region0: #{discriminator_forward.5}
  #allocation0 [shape = 'u32[]', space=smem, size = 0x4, offset = 0x4, fixed_abs, tag = 'smem constant byte address 0x4 - core index']
  #allocation1 [shape = 'u32[144,128]{1,0:T(1,128)}', space=vmem, size = 0x12000, scoped, tag = 'internal scratch']
  %s0 = inlined_call_operand.vmem [shape: bf16[2200,256], index: 0, kind: input, shape index: {}]
  %s1 = inlined_call_operand.vmem [shape: bf16[256,32], index: 1, kind: input, shape index: {}]
  %s2 = inlined_call_operand.vmem [shape: f32[1,32], index: 2, kind: input, shape index: {}]
  %s3 = inlined_call_operand.vmem [shape: f32[2200,32], index: 3, kind: output, shape index: {}]
  %s4 = sld [smem:[#allocation0]]
  $region22: #{discriminator_forward.5} parent=0
    _
  %s6 = ssub.s32 1, %s4
  %s7 = scalar_select 0, %s6, %s4
  // Predicated region
  $region2: #{discriminator_forward.5} parent=0 // pred_check
    _
  $region3: #{discriminator_forward.5} parent=0 // pred_check_branch
    %9 = sbr.rel (0) target = $region5
  $region4: #{discriminator_forward.5} parent=0 // pred_region
    _
  $region5: #{discriminator_forward.5} parent=0 // pred_fallthru
    _
  // Predicated region
  $region6: #{discriminator_forward.5} parent=0 // pred_check
    _
  $region7: #{discriminator_forward.5} parent=0 // pred_check_branch
    %11 = sbr.rel (0) target = $region9
  $region8: #{discriminator_forward.5} parent=0 // pred_region
    _
  $region9: #{discriminator_forward.5} parent=0 // pred_fallthru
    _
  // Predicated region
  $region10: #{discriminator_forward.5} parent=0 // pred_check
    _
  $region11: #{discriminator_forward.5} parent=0 // pred_check_branch
    %13 = sbr.rel (0) target = $region13
  $region12: #{discriminator_forward.5} parent=0 // pred_region
    _
  $region13: #{discriminator_forward.5} parent=0 // pred_fallthru
    _
  %v15 = vld [vmem:[%s0] sm:$0xff]
  %v16 = vld [vmem:[%s0 + $0x8] sm:$0xff]
  %v17 = vld [vmem:[%s0 + $0x10] sm:$0xff]
  %v18 = vld [vmem:[%s0 + $0x18] sm:$0xff]
  %v19 = vld [vmem:[%s0 + $0x20] sm:$0xff]
  %v20 = vld [vmem:[%s0 + $0x28] sm:$0xff]
  %v21 = vld [vmem:[%s0 + $0x30] sm:$0xff]
  %v22 = vld [vmem:[%s0 + $0x38] sm:$0xff]
  %v23 = vld [vmem:[%s0 + $0x40] sm:$0xff]
  %v24 = vld [vmem:[%s0 + $0x48] sm:$0xff]
  %v25 = vld [vmem:[%s0 + $0x50] sm:$0xff]
  %v26 = vld [vmem:[%s0 + $0x58] sm:$0xff]
  %v27 = vld [vmem:[%s0 + $0x60] sm:$0xff]
  %v28 = vld [vmem:[%s0 + $0x68] sm:$0xff]
  %v29 = vld [vmem:[%s0 + $0x70] sm:$0xff]
  %v30 = vld [vmem:[%s0 + $0x78] sm:$0xff]
  %v31 = vld [vmem:[%s0 + $0x80] sm:$0xff]
  %v32 = vld [vmem:[%s0 + $0x88] sm:$0xff]
  %v33 = vld [vmem:[%s0 + $0x90] sm:$0xff]
  %v34 = vld [vmem:[%s0 + $0x98] sm:$0xff]
  %v35 = vld [vmem:[%s0 + $0xa0] sm:$0xff]
  %v36 = vld [vmem:[%s0 + $0xa8] sm:$0xff]
  %v37 = vld [vmem:[%s0 + $0xb0] sm:$0xff]
  %v38 = vld [vmem:[%s0 + $0xb8] sm:$0xff]
  %v39 = vld [vmem:[%s0 + $0xc0] sm:$0xff]
  %v40 = vld [vmem:[%s0 + $0xc8] sm:$0xff]
  %v41 = vld [vmem:[%s0 + $0xd0] sm:$0xff]
  %v42 = vld [vmem:[%s0 + $0xd8] sm:$0xff]
  %v43 = vld [vmem:[%s0 + $0xe0] sm:$0xff]
  %v44 = vld [vmem:[%s0 + $0xe8] sm:$0xff]
  %v45 = vld [vmem:[%s0 + $0xf0] sm:$0xff]
  %v46 = vld [vmem:[%s0 + $0xf8] sm:$0xff]
  %v47 = vld [vmem:[%s0 + $0x100] sm:$0xff]
  %v48 = vld [vmem:[%s0 + $0x108] sm:$0xff]
  %v49 = vld [vmem:[%s0 + $0x110] sm:$0xff]
  %v50 = vld [vmem:[%s0 + $0x118] sm:$0xff]
  %v51 = vld [vmem:[%s0 + $0x120] sm:$0xff]
  %v52 = vld [vmem:[%s0 + $0x128] sm:$0xff]
  %v53 = vld [vmem:[%s0 + $0x130] sm:$0xff]
  %v54 = vld [vmem:[%s0 + $0x138] sm:$0xff]
  %v55 = vld [vmem:[%s0 + $0x140] sm:$0xff]
  %v56 = vld [vmem:[%s0 + $0x148] sm:$0xff]
  %v57 = vld [vmem:[%s0 + $0x150] sm:$0xff]
  %v58 = vld [vmem:[%s0 + $0x158] sm:$0xff]
  %v59 = vld [vmem:[%s0 + $0x160] sm:$0xff]
  %v60 = vld [vmem:[%s0 + $0x168] sm:$0xff]
  %v61 = vld [vmem:[%s0 + $0x170] sm:$0xff]
  %v62 = vld [vmem:[%s0 + $0x178] sm:$0xff]
  %v63 = vld [vmem:[%s0 + $0x180] sm:$0xff]
  %v64 = vld [vmem:[%s0 + $0x188] sm:$0xff]
  %v65 = vld [vmem:[%s0 + $0x190] sm:$0xff]
  %v66 = vld [vmem:[%s0 + $0x198] sm:$0xff]
  %v67 = vld [vmem:[%s0 + $0x1a0] sm:$0xff]
  %v68 = vld [vmem:[%s0 + $0x1a8] sm:$0xff]
  %v69 = vld [vmem:[%s0 + $0x1b0] sm:$0xff]
  %v70 = vld [vmem:[%s0 + $0x1b8] sm:$0xff]
  %v71 = vld [vmem:[%s0 + $0x1c0] sm:$0xff]
  %v72 = vld [vmem:[%s0 + $0x1c8] sm:$0xff]
  %v73 = vld [vmem:[%s0 + $0x1d0] sm:$0xff]
  %v74 = vld [vmem:[%s0 + $0x1d8] sm:$0xff]
  %v75 = vld [vmem:[%s0 + $0x1e0] sm:$0xff]
  %v76 = vld [vmem:[%s0 + $0x1e8] sm:$0xff]
  %v77 = vld [vmem:[%s0 + $0x1f0] sm:$0xff]
  %v78 = vld [vmem:[%s0 + $0x1f8] sm:$0xff]
  %v79 = vld [vmem:[%s0 + $0x200] sm:$0xff]
  %v80 = vld [vmem:[%s0 + $0x208] sm:$0xff]
  %v81 = vld [vmem:[%s0 + $0x210] sm:$0xff]
  %v82 = vld [vmem:[%s0 + $0x218] sm:$0xff]
  %v83 = vld [vmem:[%s0 + $0x220] sm:$0xff]
  %v84 = vld [vmem:[%s0 + $0x228] sm:$0xff]
  %v85 = vld [vmem:[%s0 + $0x230] sm:$0xff]
  %v86 = vld [vmem:[%s0 + $0x238] sm:$0xff]
  %v87 = vld [vmem:[%s0 + $0x240] sm:$0xff]
  %v88 = vld [vmem:[%s0 + $0x248] sm:$0xff]
  %v89 = vld [vmem:[%s0 + $0x250] sm:$0xff]
  %v90 = vld [vmem:[%s0 + $0x258] sm:$0xff]
  %v91 = vld [vmem:[%s0 + $0x260] sm:$0xff]
  %v92 = vld [vmem:[%s0 + $0x268] sm:$0xff]
  %v93 = vld [vmem:[%s0 + $0x270] sm:$0xff]
  %v94 = vld [vmem:[%s0 + $0x278] sm:$0xff]
  %v95 = vld [vmem:[%s0 + $0x280] sm:$0xff]
  %v96 = vld [vmem:[%s0 + $0x288] sm:$0xff]
  %v97 = vld [vmem:[%s0 + $0x290] sm:$0xff]
  %v98 = vld [vmem:[%s0 + $0x298] sm:$0xff]
  %v99 = vld [vmem:[%s0 + $0x2a0] sm:$0xff]
  %v100 = vld [vmem:[%s0 + $0x2a8] sm:$0xff]
  %v101 = vld [vmem:[%s0 + $0x2b0] sm:$0xff]
  %v102 = vld [vmem:[%s0 + $0x2b8] sm:$0xff]
  %v103 = vld [vmem:[%s0 + $0x2c0] sm:$0xff]
  %v104 = vld [vmem:[%s0 + $0x2c8] sm:$0xff]
  %v105 = vld [vmem:[%s0 + $0x2d0] sm:$0xff]
  %v106 = vld [vmem:[%s0 + $0x2d8] sm:$0xff]
  %v107 = vld [vmem:[%s0 + $0x2e0] sm:$0xff]
  %v108 = vld [vmem:[%s0 + $0x2e8] sm:$0xff]
  %v109 = vld [vmem:[%s0 + $0x2f0] sm:$0xff]
  %v110 = vld [vmem:[%s0 + $0x2f8] sm:$0xff]
  %v111 = vld [vmem:[%s0 + $0x300] sm:$0xff]
  %v112 = vld [vmem:[%s0 + $0x308] sm:$0xff]
  %v113 = vld [vmem:[%s0 + $0x310] sm:$0xff]
  %v114 = vld [vmem:[%s0 + $0x318] sm:$0xff]
  %v115 = vld [vmem:[%s0 + $0x320] sm:$0xff]
  %v116 = vld [vmem:[%s0 + $0x328] sm:$0xff]
  %v117 = vld [vmem:[%s0 + $0x330] sm:$0xff]
  %v118 = vld [vmem:[%s0 + $0x338] sm:$0xff]
  %v119 = vld [vmem:[%s0 + $0x340] sm:$0xff]
  %v120 = vld [vmem:[%s0 + $0x348] sm:$0xff]
  %v121 = vld [vmem:[%s0 + $0x350] sm:$0xff]
  %v122 = vld [vmem:[%s0 + $0x358] sm:$0xff]
  %v123 = vld [vmem:[%s0 + $0x360] sm:$0xff]
  %v124 = vld [vmem:[%s0 + $0x368] sm:$0xff]
  %v125 = vld [vmem:[%s0 + $0x370] sm:$0xff]
  %v126 = vld [vmem:[%s0 + $0x378] sm:$0xff]
  %v127 = vld [vmem:[%s0 + $0x380] sm:$0xff]
  %v128 = vld [vmem:[%s0 + $0x388] sm:$0xff]
  %v129 = vld [vmem:[%s0 + $0x390] sm:$0xff]
  %v130 = vld [vmem:[%s0 + $0x398] sm:$0xff]
  %v131 = vld [vmem:[%s0 + $0x3a0] sm:$0xff]
  %v132 = vld [vmem:[%s0 + $0x3a8] sm:$0xff]
  %v133 = vld [vmem:[%s0 + $0x3b0] sm:$0xff]
  %v134 = vld [vmem:[%s0 + $0x3b8] sm:$0xff]
  %v135 = vld [vmem:[%s0 + $0x3c0] sm:$0xff]
  %v136 = vld [vmem:[%s0 + $0x3c8] sm:$0xff]
  %v137 = vld [vmem:[%s0 + $0x3d0] sm:$0xff]
  %v138 = vld [vmem:[%s0 + $0x3d8] sm:$0xff]
  %v139 = vld [vmem:[%s0 + $0x3e0] sm:$0xff]
  %v140 = vld [vmem:[%s0 + $0x3e8] sm:$0xff]
  %v141 = vld [vmem:[%s0 + $0x3f0] sm:$0xff]
  %v142 = vld [vmem:[%s0 + $0x3f8] sm:$0xff]
  %v143 = vld [vmem:[%s0 + $0x400] sm:$0xff]
  %v144 = vld [vmem:[%s0 + $0x408] sm:$0xff]
  %v145 = vld [vmem:[%s0 + $0x410] sm:$0xff]
  %v146 = vld [vmem:[%s0 + $0x418] sm:$0xff]
  %v147 = vld [vmem:[%s0 + $0x420] sm:$0xff]
  %v148 = vld [vmem:[%s0 + $0x428] sm:$0xff]
  %v149 = vld [vmem:[%s0 + $0x430] sm:$0xff]
  %v150 = vld [vmem:[%s0 + $0x438] sm:$0xff]
  %v151 = vld [vmem:[%s0 + $0x440] sm:$0xff]
  %v152 = vld [vmem:[%s0 + $0x448] sm:$0xff]
  %v153 = vld [vmem:[%s0 + $0x450] sm:$0xff]
  %v154 = vld [vmem:[%s0 + $0x458] sm:$0xff]
  %v155 = vld [vmem:[%s0 + $0x460] sm:$0xff]
  %v156 = vld [vmem:[%s0 + $0x468] sm:$0xff]
  %v157 = vld [vmem:[%s0 + $0x470] sm:$0xff]
  %v158 = vld [vmem:[%s0 + $0x478] sm:$0xff]
  %v159 = vld [vmem:[%s0 + $0x480] sm:$0xff]
  %v160 = vld [vmem:[%s0 + $0x488] sm:$0xff]
  %v161 = vld [vmem:[%s0 + $0x490] sm:$0xff]
  %v162 = vld [vmem:[%s0 + $0x498] sm:$0xff]
  %v163 = vld [vmem:[%s0 + $0x4a0] sm:$0xff]
  %v164 = vld [vmem:[%s0 + $0x4a8] sm:$0xff]
  %v165 = vld [vmem:[%s0 + $0x4b0] sm:$0xff]
  %v166 = vld [vmem:[%s0 + $0x4b8] sm:$0xff]
  %v167 = vld [vmem:[%s0 + $0x4c0] sm:$0xff]
  %v168 = vld [vmem:[%s0 + $0x4c8] sm:$0xff]
  %v169 = vld [vmem:[%s0 + $0x4d0] sm:$0xff]
  %v170 = vld [vmem:[%s0 + $0x4d8] sm:$0xff]
  %v171 = vld [vmem:[%s0 + $0x4e0] sm:$0xff]
  %v172 = vld [vmem:[%s0 + $0x4e8] sm:$0xff]
  %v173 = vld [vmem:[%s0 + $0x4f0] sm:$0xff]
  %v174 = vld [vmem:[%s0 + $0x4f8] sm:$0xff]
  %v175 = vld [vmem:[%s0 + $0x500] sm:$0xff]
  %v176 = vld [vmem:[%s0 + $0x508] sm:$0xff]
  %v177 = vld [vmem:[%s0 + $0x510] sm:$0xff]
  %v178 = vld [vmem:[%s0 + $0x518] sm:$0xff]
  %v179 = vld [vmem:[%s0 + $0x520] sm:$0xff]
  %v180 = vld [vmem:[%s0 + $0x528] sm:$0xff]
  %v181 = vld [vmem:[%s0 + $0x530] sm:$0xff]
  %v182 = vld [vmem:[%s0 + $0x538] sm:$0xff]
  %v183 = vld [vmem:[%s0 + $0x540] sm:$0xff]
  %v184 = vld [vmem:[%s0 + $0x548] sm:$0xff]
  %v185 = vld [vmem:[%s0 + $0x550] sm:$0xff]
  %v186 = vld [vmem:[%s0 + $0x558] sm:$0xff]
  %v187 = vld [vmem:[%s0 + $0x560] sm:$0xff]
  %v188 = vld [vmem:[%s0 + $0x568] sm:$0xff]
  %v189 = vld [vmem:[%s0 + $0x570] sm:$0xff]
  %v190 = vld [vmem:[%s0 + $0x578] sm:$0xff]
  %v191 = vld [vmem:[%s0 + $0x580] sm:$0xff]
  %v192 = vld [vmem:[%s0 + $0x588] sm:$0xff]
  %v193 = vld [vmem:[%s0 + $0x590] sm:$0xff]
  %v194 = vld [vmem:[%s0 + $0x598] sm:$0xff]
  %v195 = vld [vmem:[%s0 + $0x5a0] sm:$0xff]
  %v196 = vld [vmem:[%s0 + $0x5a8] sm:$0xff]
  %v197 = vld [vmem:[%s0 + $0x5b0] sm:$0xff]
  %v198 = vld [vmem:[%s0 + $0x5b8] sm:$0xff]
  %v199 = vld [vmem:[%s0 + $0x5c0] sm:$0xff]
  %v200 = vld [vmem:[%s0 + $0x5c8] sm:$0xff]
  %v201 = vld [vmem:[%s0 + $0x5d0] sm:$0xff]
  %v202 = vld [vmem:[%s0 + $0x5d8] sm:$0xff]
  %v203 = vld [vmem:[%s0 + $0x5e0] sm:$0xff]
  %v204 = vld [vmem:[%s0 + $0x5e8] sm:$0xff]
  %v205 = vld [vmem:[%s0 + $0x5f0] sm:$0xff]
  %v206 = vld [vmem:[%s0 + $0x5f8] sm:$0xff]
  %v207 = vld [vmem:[%s0 + $0x600] sm:$0xff]
  %v208 = vld [vmem:[%s0 + $0x608] sm:$0xff]
  %v209 = vld [vmem:[%s0 + $0x610] sm:$0xff]
  %v210 = vld [vmem:[%s0 + $0x618] sm:$0xff]
  %v211 = vld [vmem:[%s0 + $0x620] sm:$0xff]
  %v212 = vld [vmem:[%s0 + $0x628] sm:$0xff]
  %v213 = vld [vmem:[%s0 + $0x630] sm:$0xff]
  %v214 = vld [vmem:[%s0 + $0x638] sm:$0xff]
  %v215 = vld [vmem:[%s0 + $0x640] sm:$0xff]
  %v216 = vld [vmem:[%s0 + $0x648] sm:$0xff]
  %v217 = vld [vmem:[%s0 + $0x650] sm:$0xff]
  %v218 = vld [vmem:[%s0 + $0x658] sm:$0xff]
  %v219 = vld [vmem:[%s0 + $0x660] sm:$0xff]
  %v220 = vld [vmem:[%s0 + $0x668] sm:$0xff]
  %v221 = vld [vmem:[%s0 + $0x670] sm:$0xff]
  %v222 = vld [vmem:[%s0 + $0x678] sm:$0xff]
  %v223 = vld [vmem:[%s0 + $0x680] sm:$0xff]
  %v224 = vld [vmem:[%s0 + $0x688] sm:$0xff]
  %v225 = vld [vmem:[%s0 + $0x690] sm:$0xff]
  %v226 = vld [vmem:[%s0 + $0x698] sm:$0xff]
  %v227 = vld [vmem:[%s0 + $0x6a0] sm:$0xff]
  %v228 = vld [vmem:[%s0 + $0x6a8] sm:$0xff]
  %v229 = vld [vmem:[%s0 + $0x6b0] sm:$0xff]
  %v230 = vld [vmem:[%s0 + $0x6b8] sm:$0xff]
  %v231 = vld [vmem:[%s0 + $0x6c0] sm:$0xff]
  %v232 = vld [vmem:[%s0 + $0x6c8] sm:$0xff]
  %v233 = vld [vmem:[%s0 + $0x6d0] sm:$0xff]
  %v234 = vld [vmem:[%s0 + $0x6d8] sm:$0xff]
  %v235 = vld [vmem:[%s0 + $0x6e0] sm:$0xff]
  %v236 = vld [vmem:[%s0 + $0x6e8] sm:$0xff]
  %v237 = vld [vmem:[%s0 + $0x6f0] sm:$0xff]
  %v238 = vld [vmem:[%s0 + $0x6f8] sm:$0xff]
  %v239 = vld [vmem:[%s0 + $0x700] sm:$0xff]
  %v240 = vld [vmem:[%s0 + $0x708] sm:$0xff]
  %v241 = vld [vmem:[%s0 + $0x710] sm:$0xff]
  %v242 = vld [vmem:[%s0 + $0x718] sm:$0xff]
  %v243 = vld [vmem:[%s0 + $0x720] sm:$0xff]
  %v244 = vld [vmem:[%s0 + $0x728] sm:$0xff]
  %v245 = vld [vmem:[%s0 + $0x730] sm:$0xff]
  %v246 = vld [vmem:[%s0 + $0x738] sm:$0xff]
  %v247 = vld [vmem:[%s0 + $0x740] sm:$0xff]
  %v248 = vld [vmem:[%s0 + $0x748] sm:$0xff]
  %v249 = vld [vmem:[%s0 + $0x750] sm:$0xff]
  %v250 = vld [vmem:[%s0 + $0x758] sm:$0xff]
  %v251 = vld [vmem:[%s0 + $0x760] sm:$0xff]
  %v252 = vld [vmem:[%s0 + $0x768] sm:$0xff]
  %v253 = vld [vmem:[%s0 + $0x770] sm:$0xff]
  %v254 = vld [vmem:[%s0 + $0x778] sm:$0xff]
  %v255 = vld [vmem:[%s0 + $0x780] sm:$0xff]
  %v256 = vld [vmem:[%s0 + $0x788] sm:$0xff]
  %v257 = vld [vmem:[%s0 + $0x790] sm:$0xff]
  %v258 = vld [vmem:[%s0 + $0x798] sm:$0xff]
  %v259 = vld [vmem:[%s0 + $0x7a0] sm:$0xff]
  %v260 = vld [vmem:[%s0 + $0x7a8] sm:$0xff]
  %v261 = vld [vmem:[%s0 + $0x7b0] sm:$0xff]
  %v262 = vld [vmem:[%s0 + $0x7b8] sm:$0xff]
  %v263 = vld [vmem:[%s0 + $0x7c0] sm:$0xff]
  %v264 = vld [vmem:[%s0 + $0x7c8] sm:$0xff]
  %v265 = vld [vmem:[%s0 + $0x7d0] sm:$0xff]
  %v266 = vld [vmem:[%s0 + $0x7d8] sm:$0xff]
  %v267 = vld [vmem:[%s0 + $0x7e0] sm:$0xff]
  %v268 = vld [vmem:[%s0 + $0x7e8] sm:$0xff]
  %v269 = vld [vmem:[%s0 + $0x7f0] sm:$0xff]
  %v270 = vld [vmem:[%s0 + $0x7f8] sm:$0xff]
  %v271 = vld [vmem:[%s0 + $0x800] sm:$0xff]
  %v272 = vld [vmem:[%s0 + $0x808] sm:$0xff]
  %v273 = vld [vmem:[%s0 + $0x810] sm:$0xff]
  %v274 = vld [vmem:[%s0 + $0x818] sm:$0xff]
  %v275 = vld [vmem:[%s0 + $0x820] sm:$0xff]
  %v276 = vld [vmem:[%s0 + $0x828] sm:$0xff]
  %v277 = vld [vmem:[%s0 + $0x830] sm:$0xff]
  %v278 = vld [vmem:[%s0 + $0x838] sm:$0xff]
  %v279 = vld [vmem:[%s0 + $0x840] sm:$0xff]
  %v280 = vld [vmem:[%s0 + $0x848] sm:$0xff]
  %v281 = vld [vmem:[%s0 + $0x850] sm:$0xff]
  %v282 = vld [vmem:[%s0 + $0x858] sm:$0xff]
  %v283 = vld [vmem:[%s0 + $0x860] sm:$0xff]
  %v284 = vld [vmem:[%s0 + $0x868] sm:$0xff]
  %v285 = vld [vmem:[%s0 + $0x870] sm:$0xff]
  %v286 = vld [vmem:[%s0 + $0x878] sm:$0xff]
  %v287 = vld [vmem:[%s0 + $0x880] sm:$0xff]
  %v288 = vld [vmem:[%s0 + $0x888] sm:$0xff]
  %v289 = vld [vmem:[%s0 + $0x890] sm:$0xff]
  %v290 = vld [vmem:[%s1] sm:$0xf]
  %v291 = vld [vmem:[%s1 + $0x4] sm:$0xf]
  %v292 = vld [vmem:[%s1 + $0x8] sm:$0xf]
  %v293 = vld [vmem:[%s1 + $0xc] sm:$0xf]
  %v294 = vld [vmem:[%s1 + $0x10] sm:$0xf]
  %v295 = vld [vmem:[%s1 + $0x14] sm:$0xf]
  %v296 = vld [vmem:[%s1 + $0x18] sm:$0xf]
  %v297 = vld [vmem:[%s1 + $0x1c] sm:$0xf]
  %v298 = vld [vmem:[%s1 + $0x20] sm:$0xf]
  %v299 = vld [vmem:[%s1 + $0x24] sm:$0xf]
  %v300 = vld [vmem:[%s1 + $0x28] sm:$0xf]
  %v301 = vld [vmem:[%s1 + $0x2c] sm:$0xf]
  %v302 = vld [vmem:[%s1 + $0x30] sm:$0xf]
  %v303 = vld [vmem:[%s1 + $0x34] sm:$0xf]
  %v304 = vld [vmem:[%s1 + $0x38] sm:$0xf]
  %v305 = vld [vmem:[%s1 + $0x3c] sm:$0xf]
  %v306 = vld [vmem:[%s1 + $0x40] sm:$0xf]
  %v307 = vld [vmem:[%s1 + $0x44] sm:$0xf]
  %v308 = vld [vmem:[%s1 + $0x48] sm:$0xf]
  %v309 = vld [vmem:[%s1 + $0x4c] sm:$0xf]
  %v310 = vld [vmem:[%s1 + $0x50] sm:$0xf]
  %v311 = vld [vmem:[%s1 + $0x54] sm:$0xf]
  %v312 = vld [vmem:[%s1 + $0x58] sm:$0xf]
  %v313 = vld [vmem:[%s1 + $0x5c] sm:$0xf]
  %v314 = vld [vmem:[%s1 + $0x60] sm:$0xf]
  %v315 = vld [vmem:[%s1 + $0x64] sm:$0xf]
  %v316 = vld [vmem:[%s1 + $0x68] sm:$0xf]
  %v317 = vld [vmem:[%s1 + $0x6c] sm:$0xf]
  %v318 = vld [vmem:[%s1 + $0x70] sm:$0xf]
  %v319 = vld [vmem:[%s1 + $0x74] sm:$0xf]
  %v320 = vld [vmem:[%s1 + $0x78] sm:$0xf]
  %v321 = vld [vmem:[%s1 + $0x7c] sm:$0xf]
  %v322 = vld [vmem:[%s2] sm:$0x1]
  %v324 = vlaneseq
  %v325 = vshrl.u32 %v324, 7
  %v326 = vsub.s32 0, %v325
  %v327 = vrot.slane %v322, %v326
  %v604 = vunpack.c.l.b16 %v15
  %v605 = vunpack.c.h.b16 %v15
  %v606 = vunpack.c.l.b16 %v16
  %v607 = vunpack.c.h.b16 %v16
  %v608 = vunpack.c.l.b16 %v17
  %v609 = vunpack.c.h.b16 %v17
  %v610 = vunpack.c.l.b16 %v18
  %v611 = vunpack.c.h.b16 %v18
  %v612 = vunpack.c.l.b16 %v19
  %v613 = vunpack.c.h.b16 %v19
  %v614 = vunpack.c.l.b16 %v20
  %v615 = vunpack.c.h.b16 %v20
  %v616 = vunpack.c.l.b16 %v21
  %v617 = vunpack.c.h.b16 %v21
  %v618 = vunpack.c.l.b16 %v22
  %v619 = vunpack.c.h.b16 %v22
  %v620 = vunpack.c.l.b16 %v23
  %v621 = vunpack.c.h.b16 %v23
  %v622 = vunpack.c.l.b16 %v24
  %v623 = vunpack.c.h.b16 %v24
  %v624 = vunpack.c.l.b16 %v25
  %v625 = vunpack.c.h.b16 %v25
  %v626 = vunpack.c.l.b16 %v26
  %v627 = vunpack.c.h.b16 %v26
  %v628 = vunpack.c.l.b16 %v27
  %v629 = vunpack.c.h.b16 %v27
  %v630 = vunpack.c.l.b16 %v28
  %v631 = vunpack.c.h.b16 %v28
  %v632 = vunpack.c.l.b16 %v29
  %v633 = vunpack.c.h.b16 %v29
  %v634 = vunpack.c.l.b16 %v30
  %v635 = vunpack.c.h.b16 %v30
  %v636 = vunpack.c.l.b16 %v31
  %v637 = vunpack.c.h.b16 %v31
  %v638 = vunpack.c.l.b16 %v32
  %v639 = vunpack.c.h.b16 %v32
  %v640 = vunpack.c.l.b16 %v33
  %v641 = vunpack.c.h.b16 %v33
  %v642 = vunpack.c.l.b16 %v34
  %v643 = vunpack.c.h.b16 %v34
  %v644 = vunpack.c.l.b16 %v35
  %v645 = vunpack.c.h.b16 %v35
  %v646 = vunpack.c.l.b16 %v36
  %v647 = vunpack.c.h.b16 %v36
  %v648 = vunpack.c.l.b16 %v37
  %v649 = vunpack.c.h.b16 %v37
  %v650 = vunpack.c.l.b16 %v38
  %v651 = vunpack.c.h.b16 %v38
  %v652 = vunpack.c.l.b16 %v39
  %v653 = vunpack.c.h.b16 %v39
  %v654 = vunpack.c.l.b16 %v40
  %v655 = vunpack.c.h.b16 %v40
  %v656 = vunpack.c.l.b16 %v41
  %v657 = vunpack.c.h.b16 %v41
  %v658 = vunpack.c.l.b16 %v42
  %v659 = vunpack.c.h.b16 %v42
  %v660 = vunpack.c.l.b16 %v43
  %v661 = vunpack.c.h.b16 %v43
  %v662 = vunpack.c.l.b16 %v44
  %v663 = vunpack.c.h.b16 %v44
  %v664 = vunpack.c.l.b16 %v45
  %v665 = vunpack.c.h.b16 %v45
  %v666 = vunpack.c.l.b16 %v46
  %v667 = vunpack.c.h.b16 %v46
  %v668 = vunpack.c.l.b16 %v47
  %v669 = vunpack.c.h.b16 %v47
  %v670 = vunpack.c.l.b16 %v48
  %v671 = vunpack.c.h.b16 %v48
  %v672 = vunpack.c.l.b16 %v49
  %v673 = vunpack.c.h.b16 %v49
  %v674 = vunpack.c.l.b16 %v50
  %v675 = vunpack.c.h.b16 %v50
  %v676 = vunpack.c.l.b16 %v51
  %v677 = vunpack.c.h.b16 %v51
  %v678 = vunpack.c.l.b16 %v52
  %v679 = vunpack.c.h.b16 %v52
  %v680 = vunpack.c.l.b16 %v53
  %v681 = vunpack.c.h.b16 %v53
  %v682 = vunpack.c.l.b16 %v54
  %v683 = vunpack.c.h.b16 %v54
  %v684 = vunpack.c.l.b16 %v55
  %v685 = vunpack.c.h.b16 %v55
  %v686 = vunpack.c.l.b16 %v56
  %v687 = vunpack.c.h.b16 %v56
  %v688 = vunpack.c.l.b16 %v57
  %v689 = vunpack.c.h.b16 %v57
  %v690 = vunpack.c.l.b16 %v58
  %v691 = vunpack.c.h.b16 %v58
  %v692 = vunpack.c.l.b16 %v59
  %v693 = vunpack.c.h.b16 %v59
  %v694 = vunpack.c.l.b16 %v60
  %v695 = vunpack.c.h.b16 %v60
  %v696 = vunpack.c.l.b16 %v61
  %v697 = vunpack.c.h.b16 %v61
  %v698 = vunpack.c.l.b16 %v62
  %v699 = vunpack.c.h.b16 %v62
  %v700 = vunpack.c.l.b16 %v63
  %v701 = vunpack.c.h.b16 %v63
  %v702 = vunpack.c.l.b16 %v64
  %v703 = vunpack.c.h.b16 %v64
  %v704 = vunpack.c.l.b16 %v65
  %v705 = vunpack.c.h.b16 %v65
  %v706 = vunpack.c.l.b16 %v66
  %v707 = vunpack.c.h.b16 %v66
  %v708 = vunpack.c.l.b16 %v67
  %v709 = vunpack.c.h.b16 %v67
  %v710 = vunpack.c.l.b16 %v68
  %v711 = vunpack.c.h.b16 %v68
  %v712 = vunpack.c.l.b16 %v69
  %v713 = vunpack.c.h.b16 %v69
  %v714 = vunpack.c.l.b16 %v70
  %v715 = vunpack.c.h.b16 %v70
  %v716 = vunpack.c.l.b16 %v71
  %v717 = vunpack.c.h.b16 %v71
  %v718 = vunpack.c.l.b16 %v72
  %v719 = vunpack.c.h.b16 %v72
  %v720 = vunpack.c.l.b16 %v73
  %v721 = vunpack.c.h.b16 %v73
  %v722 = vunpack.c.l.b16 %v74
  %v723 = vunpack.c.h.b16 %v74
  %v724 = vunpack.c.l.b16 %v75
  %v725 = vunpack.c.h.b16 %v75
  %v726 = vunpack.c.l.b16 %v76
  %v727 = vunpack.c.h.b16 %v76
  %v728 = vunpack.c.l.b16 %v77
  %v729 = vunpack.c.h.b16 %v77
  %v730 = vunpack.c.l.b16 %v78
  %v731 = vunpack.c.h.b16 %v78
  %v732 = vunpack.c.l.b16 %v79
  %v733 = vunpack.c.h.b16 %v79
  %v734 = vunpack.c.l.b16 %v80
  %v735 = vunpack.c.h.b16 %v80
  %v736 = vunpack.c.l.b16 %v81
  %v737 = vunpack.c.h.b16 %v81
  %v738 = vunpack.c.l.b16 %v82
  %v739 = vunpack.c.h.b16 %v82
  %v740 = vunpack.c.l.b16 %v83
  %v741 = vunpack.c.h.b16 %v83
  %v742 = vunpack.c.l.b16 %v84
  %v743 = vunpack.c.h.b16 %v84
  %v744 = vunpack.c.l.b16 %v85
  %v745 = vunpack.c.h.b16 %v85
  %v746 = vunpack.c.l.b16 %v86
  %v747 = vunpack.c.h.b16 %v86
  %v748 = vunpack.c.l.b16 %v87
  %v749 = vunpack.c.h.b16 %v87
  %v750 = vunpack.c.l.b16 %v88
  %v751 = vunpack.c.h.b16 %v88
  %v752 = vunpack.c.l.b16 %v89
  %v753 = vunpack.c.h.b16 %v89
  %v754 = vunpack.c.l.b16 %v90
  %v755 = vunpack.c.h.b16 %v90
  %v756 = vunpack.c.l.b16 %v91
  %v757 = vunpack.c.h.b16 %v91
  %v758 = vunpack.c.l.b16 %v92
  %v759 = vunpack.c.h.b16 %v92
  %v760 = vunpack.c.l.b16 %v93
  %v761 = vunpack.c.h.b16 %v93
  %v762 = vunpack.c.l.b16 %v94
  %v763 = vunpack.c.h.b16 %v94
  %v764 = vunpack.c.l.b16 %v95
  %v765 = vunpack.c.h.b16 %v95
  %v766 = vunpack.c.l.b16 %v96
  %v767 = vunpack.c.h.b16 %v96
  %v768 = vunpack.c.l.b16 %v97
  %v769 = vunpack.c.h.b16 %v97
  %v770 = vunpack.c.l.b16 %v98
  %v771 = vunpack.c.h.b16 %v98
  %v772 = vunpack.c.l.b16 %v99
  %v773 = vunpack.c.h.b16 %v99
  %v774 = vunpack.c.l.b16 %v100
  %v775 = vunpack.c.h.b16 %v100
  %v776 = vunpack.c.l.b16 %v101
  %v777 = vunpack.c.h.b16 %v101
  %v778 = vunpack.c.l.b16 %v102
  %v779 = vunpack.c.h.b16 %v102
  %v780 = vunpack.c.l.b16 %v103
  %v781 = vunpack.c.h.b16 %v103
  %v782 = vunpack.c.l.b16 %v104
  %v783 = vunpack.c.h.b16 %v104
  %v784 = vunpack.c.l.b16 %v105
  %v785 = vunpack.c.h.b16 %v105
  %v786 = vunpack.c.l.b16 %v106
  %v787 = vunpack.c.h.b16 %v106
  %v788 = vunpack.c.l.b16 %v107
  %v789 = vunpack.c.h.b16 %v107
  %v790 = vunpack.c.l.b16 %v108
  %v791 = vunpack.c.h.b16 %v108
  %v792 = vunpack.c.l.b16 %v109
  %v793 = vunpack.c.h.b16 %v109
  %v794 = vunpack.c.l.b16 %v110
  %v795 = vunpack.c.h.b16 %v110
  %v796 = vunpack.c.l.b16 %v111
  %v797 = vunpack.c.h.b16 %v111
  %v798 = vunpack.c.l.b16 %v112
  %v799 = vunpack.c.h.b16 %v112
  %v800 = vunpack.c.l.b16 %v113
  %v801 = vunpack.c.h.b16 %v113
  %v802 = vunpack.c.l.b16 %v114
  %v803 = vunpack.c.h.b16 %v114
  %v804 = vunpack.c.l.b16 %v115
  %v805 = vunpack.c.h.b16 %v115
  %v806 = vunpack.c.l.b16 %v116
  %v807 = vunpack.c.h.b16 %v116
  %v808 = vunpack.c.l.b16 %v117
  %v809 = vunpack.c.h.b16 %v117
  %v810 = vunpack.c.l.b16 %v118
  %v811 = vunpack.c.h.b16 %v118
  %v812 = vunpack.c.l.b16 %v119
  %v813 = vunpack.c.h.b16 %v119
  %v814 = vunpack.c.l.b16 %v120
  %v815 = vunpack.c.h.b16 %v120
  %v816 = vunpack.c.l.b16 %v121
  %v817 = vunpack.c.h.b16 %v121
  %v818 = vunpack.c.l.b16 %v122
  %v819 = vunpack.c.h.b16 %v122
  %v820 = vunpack.c.l.b16 %v123
  %v821 = vunpack.c.h.b16 %v123
  %v822 = vunpack.c.l.b16 %v124
  %v823 = vunpack.c.h.b16 %v124
  %v824 = vunpack.c.l.b16 %v125
  %v825 = vunpack.c.h.b16 %v125
  %v826 = vunpack.c.l.b16 %v126
  %v827 = vunpack.c.h.b16 %v126
  %v828 = vunpack.c.l.b16 %v127
  %v829 = vunpack.c.h.b16 %v127
  %v830 = vunpack.c.l.b16 %v128
  %v831 = vunpack.c.h.b16 %v128
  %v832 = vunpack.c.l.b16 %v129
  %v833 = vunpack.c.h.b16 %v129
  %v834 = vunpack.c.l.b16 %v130
  %v835 = vunpack.c.h.b16 %v130
  %v836 = vunpack.c.l.b16 %v131
  %v837 = vunpack.c.h.b16 %v131
  %v838 = vunpack.c.l.b16 %v132
  %v839 = vunpack.c.h.b16 %v132
  %v840 = vunpack.c.l.b16 %v133
  %v841 = vunpack.c.h.b16 %v133
  %v842 = vunpack.c.l.b16 %v134
  %v843 = vunpack.c.h.b16 %v134
  %v844 = vunpack.c.l.b16 %v135
  %v845 = vunpack.c.h.b16 %v135
  %v846 = vunpack.c.l.b16 %v136
  %v847 = vunpack.c.h.b16 %v136
  %v848 = vunpack.c.l.b16 %v137
  %v849 = vunpack.c.h.b16 %v137
  %v850 = vunpack.c.l.b16 %v138
  %v851 = vunpack.c.h.b16 %v138
  %v852 = vunpack.c.l.b16 %v139
  %v853 = vunpack.c.h.b16 %v139
  %v854 = vunpack.c.l.b16 %v140
  %v855 = vunpack.c.h.b16 %v140
  %v856 = vunpack.c.l.b16 %v141
  %v857 = vunpack.c.h.b16 %v141
  %v858 = vunpack.c.l.b16 %v142
  %v859 = vunpack.c.h.b16 %v142
  %v860 = vunpack.c.l.b16 %v143
  %v861 = vunpack.c.h.b16 %v143
  %v862 = vunpack.c.l.b16 %v144
  %v863 = vunpack.c.h.b16 %v144
  %v864 = vunpack.c.l.b16 %v145
  %v865 = vunpack.c.h.b16 %v145
  %v866 = vunpack.c.l.b16 %v146
  %v867 = vunpack.c.h.b16 %v146
  %v868 = vunpack.c.l.b16 %v147
  %v869 = vunpack.c.h.b16 %v147
  %v870 = vunpack.c.l.b16 %v148
  %v871 = vunpack.c.h.b16 %v148
  %v872 = vunpack.c.l.b16 %v149
  %v873 = vunpack.c.h.b16 %v149
  %v874 = vunpack.c.l.b16 %v150
  %v875 = vunpack.c.h.b16 %v150
  %v876 = vunpack.c.l.b16 %v151
  %v877 = vunpack.c.h.b16 %v151
  %v878 = vunpack.c.l.b16 %v152
  %v879 = vunpack.c.h.b16 %v152
  %v880 = vunpack.c.l.b16 %v153
  %v881 = vunpack.c.h.b16 %v153
  %v882 = vunpack.c.l.b16 %v154
  %v883 = vunpack.c.h.b16 %v154
  %v884 = vunpack.c.l.b16 %v155
  %v885 = vunpack.c.h.b16 %v155
  %v886 = vunpack.c.l.b16 %v156
  %v887 = vunpack.c.h.b16 %v156
  %v888 = vunpack.c.l.b16 %v157
  %v889 = vunpack.c.h.b16 %v157
  %v890 = vunpack.c.l.b16 %v158
  %v891 = vunpack.c.h.b16 %v158
  %v892 = vunpack.c.l.b16 %v159
  %v893 = vunpack.c.h.b16 %v159
  %v894 = vunpack.c.l.b16 %v160
  %v895 = vunpack.c.h.b16 %v160
  %v896 = vunpack.c.l.b16 %v161
  %v897 = vunpack.c.h.b16 %v161
  %v898 = vunpack.c.l.b16 %v162
  %v899 = vunpack.c.h.b16 %v162
  %v900 = vunpack.c.l.b16 %v163
  %v901 = vunpack.c.h.b16 %v163
  %v902 = vunpack.c.l.b16 %v164
  %v903 = vunpack.c.h.b16 %v164
  %v904 = vunpack.c.l.b16 %v165
  %v905 = vunpack.c.h.b16 %v165
  %v906 = vunpack.c.l.b16 %v166
  %v907 = vunpack.c.h.b16 %v166
  %v908 = vunpack.c.l.b16 %v167
  %v909 = vunpack.c.h.b16 %v167
  %v910 = vunpack.c.l.b16 %v168
  %v911 = vunpack.c.h.b16 %v168
  %v912 = vunpack.c.l.b16 %v169
  %v913 = vunpack.c.h.b16 %v169
  %v914 = vunpack.c.l.b16 %v170
  %v915 = vunpack.c.h.b16 %v170
  %v916 = vunpack.c.l.b16 %v171
  %v917 = vunpack.c.h.b16 %v171
  %v918 = vunpack.c.l.b16 %v172
  %v919 = vunpack.c.h.b16 %v172
  %v920 = vunpack.c.l.b16 %v173
  %v921 = vunpack.c.h.b16 %v173
  %v922 = vunpack.c.l.b16 %v174
  %v923 = vunpack.c.h.b16 %v174
  %v924 = vunpack.c.l.b16 %v175
  %v925 = vunpack.c.h.b16 %v175
  %v926 = vunpack.c.l.b16 %v176
  %v927 = vunpack.c.h.b16 %v176
  %v928 = vunpack.c.l.b16 %v177
  %v929 = vunpack.c.h.b16 %v177
  %v930 = vunpack.c.l.b16 %v178
  %v931 = vunpack.c.h.b16 %v178
  %v932 = vunpack.c.l.b16 %v179
  %v933 = vunpack.c.h.b16 %v179
  %v934 = vunpack.c.l.b16 %v180
  %v935 = vunpack.c.h.b16 %v180
  %v936 = vunpack.c.l.b16 %v181
  %v937 = vunpack.c.h.b16 %v181
  %v938 = vunpack.c.l.b16 %v182
  %v939 = vunpack.c.h.b16 %v182
  %v940 = vunpack.c.l.b16 %v183
  %v941 = vunpack.c.h.b16 %v183
  %v942 = vunpack.c.l.b16 %v184
  %v943 = vunpack.c.h.b16 %v184
  %v944 = vunpack.c.l.b16 %v185
  %v945 = vunpack.c.h.b16 %v185
  %v946 = vunpack.c.l.b16 %v186
  %v947 = vunpack.c.h.b16 %v186
  %v948 = vunpack.c.l.b16 %v187
  %v949 = vunpack.c.h.b16 %v187
  %v950 = vunpack.c.l.b16 %v188
  %v951 = vunpack.c.h.b16 %v188
  %v952 = vunpack.c.l.b16 %v189
  %v953 = vunpack.c.h.b16 %v189
  %v954 = vunpack.c.l.b16 %v190
  %v955 = vunpack.c.h.b16 %v190
  %v956 = vunpack.c.l.b16 %v191
  %v957 = vunpack.c.h.b16 %v191
  %v958 = vunpack.c.l.b16 %v192
  %v959 = vunpack.c.h.b16 %v192
  %v960 = vunpack.c.l.b16 %v193
  %v961 = vunpack.c.h.b16 %v193
  %v962 = vunpack.c.l.b16 %v194
  %v963 = vunpack.c.h.b16 %v194
  %v964 = vunpack.c.l.b16 %v195
  %v965 = vunpack.c.h.b16 %v195
  %v966 = vunpack.c.l.b16 %v196
  %v967 = vunpack.c.h.b16 %v196
  %v968 = vunpack.c.l.b16 %v197
  %v969 = vunpack.c.h.b16 %v197
  %v970 = vunpack.c.l.b16 %v198
  %v971 = vunpack.c.h.b16 %v198
  %v972 = vunpack.c.l.b16 %v199
  %v973 = vunpack.c.h.b16 %v199
  %v974 = vunpack.c.l.b16 %v200
  %v975 = vunpack.c.h.b16 %v200
  %v976 = vunpack.c.l.b16 %v201
  %v977 = vunpack.c.h.b16 %v201
  %v978 = vunpack.c.l.b16 %v202
  %v979 = vunpack.c.h.b16 %v202
  %v980 = vunpack.c.l.b16 %v203
  %v981 = vunpack.c.h.b16 %v203
  %v982 = vunpack.c.l.b16 %v204
  %v983 = vunpack.c.h.b16 %v204
  %v984 = vunpack.c.l.b16 %v205
  %v985 = vunpack.c.h.b16 %v205
  %v986 = vunpack.c.l.b16 %v206
  %v987 = vunpack.c.h.b16 %v206
  %v988 = vunpack.c.l.b16 %v207
  %v989 = vunpack.c.h.b16 %v207
  %v990 = vunpack.c.l.b16 %v208
  %v991 = vunpack.c.h.b16 %v208
  %v992 = vunpack.c.l.b16 %v209
  %v993 = vunpack.c.h.b16 %v209
  %v994 = vunpack.c.l.b16 %v210
  %v995 = vunpack.c.h.b16 %v210
  %v996 = vunpack.c.l.b16 %v211
  %v997 = vunpack.c.h.b16 %v211
  %v998 = vunpack.c.l.b16 %v212
  %v999 = vunpack.c.h.b16 %v212
  %v1000 = vunpack.c.l.b16 %v213
  %v1001 = vunpack.c.h.b16 %v213
  %v1002 = vunpack.c.l.b16 %v214
  %v1003 = vunpack.c.h.b16 %v214
  %v1004 = vunpack.c.l.b16 %v215
  %v1005 = vunpack.c.h.b16 %v215
  %v1006 = vunpack.c.l.b16 %v216
  %v1007 = vunpack.c.h.b16 %v216
  %v1008 = vunpack.c.l.b16 %v217
  %v1009 = vunpack.c.h.b16 %v217
  %v1010 = vunpack.c.l.b16 %v218
  %v1011 = vunpack.c.h.b16 %v218
  %v1012 = vunpack.c.l.b16 %v219
  %v1013 = vunpack.c.h.b16 %v219
  %v1014 = vunpack.c.l.b16 %v220
  %v1015 = vunpack.c.h.b16 %v220
  %v1016 = vunpack.c.l.b16 %v221
  %v1017 = vunpack.c.h.b16 %v221
  %v1018 = vunpack.c.l.b16 %v222
  %v1019 = vunpack.c.h.b16 %v222
  %v1020 = vunpack.c.l.b16 %v223
  %v1021 = vunpack.c.h.b16 %v223
  %v1022 = vunpack.c.l.b16 %v224
  %v1023 = vunpack.c.h.b16 %v224
  %v1024 = vunpack.c.l.b16 %v225
  %v1025 = vunpack.c.h.b16 %v225
  %v1026 = vunpack.c.l.b16 %v226
  %v1027 = vunpack.c.h.b16 %v226
  %v1028 = vunpack.c.l.b16 %v227
  %v1029 = vunpack.c.h.b16 %v227
  %v1030 = vunpack.c.l.b16 %v228
  %v1031 = vunpack.c.h.b16 %v228
  %v1032 = vunpack.c.l.b16 %v229
  %v1033 = vunpack.c.h.b16 %v229
  %v1034 = vunpack.c.l.b16 %v230
  %v1035 = vunpack.c.h.b16 %v230
  %v1036 = vunpack.c.l.b16 %v231
  %v1037 = vunpack.c.h.b16 %v231
  %v1038 = vunpack.c.l.b16 %v232
  %v1039 = vunpack.c.h.b16 %v232
  %v1040 = vunpack.c.l.b16 %v233
  %v1041 = vunpack.c.h.b16 %v233
  %v1042 = vunpack.c.l.b16 %v234
  %v1043 = vunpack.c.h.b16 %v234
  %v1044 = vunpack.c.l.b16 %v235
  %v1045 = vunpack.c.h.b16 %v235
  %v1046 = vunpack.c.l.b16 %v236
  %v1047 = vunpack.c.h.b16 %v236
  %v1048 = vunpack.c.l.b16 %v237
  %v1049 = vunpack.c.h.b16 %v237
  %v1050 = vunpack.c.l.b16 %v238
  %v1051 = vunpack.c.h.b16 %v238
  %v1052 = vunpack.c.l.b16 %v239
  %v1053 = vunpack.c.h.b16 %v239
  %v1054 = vunpack.c.l.b16 %v240
  %v1055 = vunpack.c.h.b16 %v240
  %v1056 = vunpack.c.l.b16 %v241
  %v1057 = vunpack.c.h.b16 %v241
  %v1058 = vunpack.c.l.b16 %v242
  %v1059 = vunpack.c.h.b16 %v242
  %v1060 = vunpack.c.l.b16 %v243
  %v1061 = vunpack.c.h.b16 %v243
  %v1062 = vunpack.c.l.b16 %v244
  %v1063 = vunpack.c.h.b16 %v244
  %v1064 = vunpack.c.l.b16 %v245
  %v1065 = vunpack.c.h.b16 %v245
  %v1066 = vunpack.c.l.b16 %v246
  %v1067 = vunpack.c.h.b16 %v246
  %v1068 = vunpack.c.l.b16 %v247
  %v1069 = vunpack.c.h.b16 %v247
  %v1070 = vunpack.c.l.b16 %v248
  %v1071 = vunpack.c.h.b16 %v248
  %v1072 = vunpack.c.l.b16 %v249
  %v1073 = vunpack.c.h.b16 %v249
  %v1074 = vunpack.c.l.b16 %v250
  %v1075 = vunpack.c.h.b16 %v250
  %v1076 = vunpack.c.l.b16 %v251
  %v1077 = vunpack.c.h.b16 %v251
  %v1078 = vunpack.c.l.b16 %v252
  %v1079 = vunpack.c.h.b16 %v252
  %v1080 = vunpack.c.l.b16 %v253
  %v1081 = vunpack.c.h.b16 %v253
  %v1082 = vunpack.c.l.b16 %v254
  %v1083 = vunpack.c.h.b16 %v254
  %v1084 = vunpack.c.l.b16 %v255
  %v1085 = vunpack.c.h.b16 %v255
  %v1086 = vunpack.c.l.b16 %v256
  %v1087 = vunpack.c.h.b16 %v256
  %v1088 = vunpack.c.l.b16 %v257
  %v1089 = vunpack.c.h.b16 %v257
  %v1090 = vunpack.c.l.b16 %v258
  %v1091 = vunpack.c.h.b16 %v258
  %v1092 = vunpack.c.l.b16 %v259
  %v1093 = vunpack.c.h.b16 %v259
  %v1094 = vunpack.c.l.b16 %v260
  %v1095 = vunpack.c.h.b16 %v260
  %v1096 = vunpack.c.l.b16 %v261
  %v1097 = vunpack.c.h.b16 %v261
  %v1098 = vunpack.c.l.b16 %v262
  %v1099 = vunpack.c.h.b16 %v262
  %v1100 = vunpack.c.l.b16 %v263
  %v1101 = vunpack.c.h.b16 %v263
  %v1102 = vunpack.c.l.b16 %v264
  %v1103 = vunpack.c.h.b16 %v264
  %v1104 = vunpack.c.l.b16 %v265
  %v1105 = vunpack.c.h.b16 %v265
  %v1106 = vunpack.c.l.b16 %v266
  %v1107 = vunpack.c.h.b16 %v266
  %v1108 = vunpack.c.l.b16 %v267
  %v1109 = vunpack.c.h.b16 %v267
  %v1110 = vunpack.c.l.b16 %v268
  %v1111 = vunpack.c.h.b16 %v268
  %v1112 = vunpack.c.l.b16 %v269
  %v1113 = vunpack.c.h.b16 %v269
  %v1114 = vunpack.c.l.b16 %v270
  %v1115 = vunpack.c.h.b16 %v270
  %v1116 = vunpack.c.l.b16 %v271
  %v1117 = vunpack.c.h.b16 %v271
  %v1118 = vunpack.c.l.b16 %v272
  %v1119 = vunpack.c.h.b16 %v272
  %v1120 = vunpack.c.l.b16 %v273
  %v1121 = vunpack.c.h.b16 %v273
  %v1122 = vunpack.c.l.b16 %v274
  %v1123 = vunpack.c.h.b16 %v274
  %v1124 = vunpack.c.l.b16 %v275
  %v1125 = vunpack.c.h.b16 %v275
  %v1126 = vunpack.c.l.b16 %v276
  %v1127 = vunpack.c.h.b16 %v276
  %v1128 = vunpack.c.l.b16 %v277
  %v1129 = vunpack.c.h.b16 %v277
  %v1130 = vunpack.c.l.b16 %v278
  %v1131 = vunpack.c.h.b16 %v278
  %v1132 = vunpack.c.l.b16 %v279
  %v1133 = vunpack.c.h.b16 %v279
  %v1134 = vunpack.c.l.b16 %v280
  %v1135 = vunpack.c.h.b16 %v280
  %v1136 = vunpack.c.l.b16 %v281
  %v1137 = vunpack.c.h.b16 %v281
  %v1138 = vunpack.c.l.b16 %v282
  %v1139 = vunpack.c.h.b16 %v282
  %v1140 = vunpack.c.l.b16 %v283
  %v1141 = vunpack.c.h.b16 %v283
  %v1142 = vunpack.c.l.b16 %v284
  %v1143 = vunpack.c.h.b16 %v284
  %v1144 = vunpack.c.l.b16 %v285
  %v1145 = vunpack.c.h.b16 %v285
  %v1146 = vunpack.c.l.b16 %v286
  %v1147 = vunpack.c.h.b16 %v286
  %v1148 = vunpack.c.l.b16 %v287
  %v1149 = vunpack.c.h.b16 %v287
  %v1150 = vunpack.c.l.b16 %v288
  %v1151 = vunpack.c.h.b16 %v288
  %v1152 = vunpack.c.l.b16 %v289
  %v1153 = vunpack.c.h.b16 %v289
  %v1154 = vpack.c.b16 %v606, %v604
  %v1155 = vpack.c.b16 %v607, %v605
  %v1156 = vpack.c.b16 %v610, %v608
  %v1157 = vpack.c.b16 %v611, %v609
  %v1158 = vpack.c.b16 %v614, %v612
  %v1159 = vpack.c.b16 %v615, %v613
  %v1160 = vpack.c.b16 %v618, %v616
  %v1161 = vpack.c.b16 %v619, %v617
  %v1162 = vpack.c.b16 %v622, %v620
  %v1163 = vpack.c.b16 %v623, %v621
  %v1164 = vpack.c.b16 %v626, %v624
  %v1165 = vpack.c.b16 %v627, %v625
  %v1166 = vpack.c.b16 %v630, %v628
  %v1167 = vpack.c.b16 %v631, %v629
  %v1168 = vpack.c.b16 %v634, %v632
  %v1169 = vpack.c.b16 %v635, %v633
  %v1170 = vpack.c.b16 %v638, %v636
  %v1171 = vpack.c.b16 %v639, %v637
  %v1172 = vpack.c.b16 %v642, %v640
  %v1173 = vpack.c.b16 %v643, %v641
  %v1174 = vpack.c.b16 %v646, %v644
  %v1175 = vpack.c.b16 %v647, %v645
  %v1176 = vpack.c.b16 %v650, %v648
  %v1177 = vpack.c.b16 %v651, %v649
  %v1178 = vpack.c.b16 %v654, %v652
  %v1179 = vpack.c.b16 %v655, %v653
  %v1180 = vpack.c.b16 %v658, %v656
  %v1181 = vpack.c.b16 %v659, %v657
  %v1182 = vpack.c.b16 %v662, %v660
  %v1183 = vpack.c.b16 %v663, %v661
  %v1184 = vpack.c.b16 %v666, %v664
  %v1185 = vpack.c.b16 %v667, %v665
  %v1186 = vpack.c.b16 %v670, %v668
  %v1187 = vpack.c.b16 %v671, %v669
  %v1188 = vpack.c.b16 %v674, %v672
  %v1189 = vpack.c.b16 %v675, %v673
  %v1190 = vpack.c.b16 %v678, %v676
  %v1191 = vpack.c.b16 %v679, %v677
  %v1192 = vpack.c.b16 %v682, %v680
  %v1193 = vpack.c.b16 %v683, %v681
  %v1194 = vpack.c.b16 %v686, %v684
  %v1195 = vpack.c.b16 %v687, %v685
  %v1196 = vpack.c.b16 %v690, %v688
  %v1197 = vpack.c.b16 %v691, %v689
  %v1198 = vpack.c.b16 %v694, %v692
  %v1199 = vpack.c.b16 %v695, %v693
  %v1200 = vpack.c.b16 %v698, %v696
  %v1201 = vpack.c.b16 %v699, %v697
  %v1202 = vpack.c.b16 %v702, %v700
  %v1203 = vpack.c.b16 %v703, %v701
  %v1204 = vpack.c.b16 %v706, %v704
  %v1205 = vpack.c.b16 %v707, %v705
  %v1206 = vpack.c.b16 %v710, %v708
  %v1207 = vpack.c.b16 %v711, %v709
  %v1208 = vpack.c.b16 %v714, %v712
  %v1209 = vpack.c.b16 %v715, %v713
  %v1210 = vpack.c.b16 %v718, %v716
  %v1211 = vpack.c.b16 %v719, %v717
  %v1212 = vpack.c.b16 %v722, %v720
  %v1213 = vpack.c.b16 %v723, %v721
  %v1214 = vpack.c.b16 %v726, %v724
  %v1215 = vpack.c.b16 %v727, %v725
  %v1216 = vpack.c.b16 %v730, %v728
  %v1217 = vpack.c.b16 %v731, %v729
  %v1218 = vpack.c.b16 %v734, %v732
  %v1219 = vpack.c.b16 %v735, %v733
  %v1220 = vpack.c.b16 %v738, %v736
  %v1221 = vpack.c.b16 %v739, %v737
  %v1222 = vpack.c.b16 %v742, %v740
  %v1223 = vpack.c.b16 %v743, %v741
  %v1224 = vpack.c.b16 %v746, %v744
  %v1225 = vpack.c.b16 %v747, %v745
  %v1226 = vpack.c.b16 %v750, %v748
  %v1227 = vpack.c.b16 %v751, %v749
  %v1228 = vpack.c.b16 %v754, %v752
  %v1229 = vpack.c.b16 %v755, %v753
  %v1230 = vpack.c.b16 %v758, %v756
  %v1231 = vpack.c.b16 %v759, %v757
  %v1232 = vpack.c.b16 %v762, %v760
  %v1233 = vpack.c.b16 %v763, %v761
  %v1234 = vpack.c.b16 %v766, %v764
  %v1235 = vpack.c.b16 %v767, %v765
  %v1236 = vpack.c.b16 %v770, %v768
  %v1237 = vpack.c.b16 %v771, %v769
  %v1238 = vpack.c.b16 %v774, %v772
  %v1239 = vpack.c.b16 %v775, %v773
  %v1240 = vpack.c.b16 %v778, %v776
  %v1241 = vpack.c.b16 %v779, %v777
  %v1242 = vpack.c.b16 %v782, %v780
  %v1243 = vpack.c.b16 %v783, %v781
  %v1244 = vpack.c.b16 %v786, %v784
  %v1245 = vpack.c.b16 %v787, %v785
  %v1246 = vpack.c.b16 %v790, %v788
  %v1247 = vpack.c.b16 %v791, %v789
  %v1248 = vpack.c.b16 %v794, %v792
  %v1249 = vpack.c.b16 %v795, %v793
  %v1250 = vpack.c.b16 %v798, %v796
  %v1251 = vpack.c.b16 %v799, %v797
  %v1252 = vpack.c.b16 %v802, %v800
  %v1253 = vpack.c.b16 %v803, %v801
  %v1254 = vpack.c.b16 %v806, %v804
  %v1255 = vpack.c.b16 %v807, %v805
  %v1256 = vpack.c.b16 %v810, %v808
  %v1257 = vpack.c.b16 %v811, %v809
  %v1258 = vpack.c.b16 %v814, %v812
  %v1259 = vpack.c.b16 %v815, %v813
  %v1260 = vpack.c.b16 %v818, %v816
  %v1261 = vpack.c.b16 %v819, %v817
  %v1262 = vpack.c.b16 %v822, %v820
  %v1263 = vpack.c.b16 %v823, %v821
  %v1264 = vpack.c.b16 %v826, %v824
  %v1265 = vpack.c.b16 %v827, %v825
  %v1266 = vpack.c.b16 %v830, %v828
  %v1267 = vpack.c.b16 %v831, %v829
  %v1268 = vpack.c.b16 %v834, %v832
  %v1269 = vpack.c.b16 %v835, %v833
  %v1270 = vpack.c.b16 %v838, %v836
  %v1271 = vpack.c.b16 %v839, %v837
  %v1272 = vpack.c.b16 %v842, %v840
  %v1273 = vpack.c.b16 %v843, %v841
  %v1274 = vpack.c.b16 %v846, %v844
  %v1275 = vpack.c.b16 %v847, %v845
  %v1276 = vpack.c.b16 %v850, %v848
  %v1277 = vpack.c.b16 %v851, %v849
  %v1278 = vpack.c.b16 %v854, %v852
  %v1279 = vpack.c.b16 %v855, %v853
  %v1280 = vpack.c.b16 %v858, %v856
  %v1281 = vpack.c.b16 %v859, %v857
  %v1282 = vpack.c.b16 %v862, %v860
  %v1283 = vpack.c.b16 %v863, %v861
  %v1284 = vpack.c.b16 %v866, %v864
  %v1285 = vpack.c.b16 %v867, %v865
  %v1286 = vpack.c.b16 %v870, %v868
  %v1287 = vpack.c.b16 %v871, %v869
  %v1288 = vpack.c.b16 %v874, %v872
  %v1289 = vpack.c.b16 %v875, %v873
  %v1290 = vpack.c.b16 %v878, %v876
  %v1291 = vpack.c.b16 %v879, %v877
  %v1292 = vpack.c.b16 %v882, %v880
  %v1293 = vpack.c.b16 %v883, %v881
  %v1294 = vpack.c.b16 %v886, %v884
  %v1295 = vpack.c.b16 %v887, %v885
  %v1296 = vpack.c.b16 %v890, %v888
  %v1297 = vpack.c.b16 %v891, %v889
  %v1298 = vpack.c.b16 %v894, %v892
  %v1299 = vpack.c.b16 %v895, %v893
  %v1300 = vpack.c.b16 %v898, %v896
  %v1301 = vpack.c.b16 %v899, %v897
  %v1302 = vpack.c.b16 %v902, %v900
  %v1303 = vpack.c.b16 %v903, %v901
  %v1304 = vpack.c.b16 %v906, %v904
  %v1305 = vpack.c.b16 %v907, %v905
  %v1306 = vpack.c.b16 %v910, %v908
  %v1307 = vpack.c.b16 %v911, %v909
  %v1308 = vpack.c.b16 %v914, %v912
  %v1309 = vpack.c.b16 %v915, %v913
  %v1310 = vpack.c.b16 %v918, %v916
  %v1311 = vpack.c.b16 %v919, %v917
  %v1312 = vpack.c.b16 %v922, %v920
  %v1313 = vpack.c.b16 %v923, %v921
  %v1314 = vpack.c.b16 %v926, %v924
  %v1315 = vpack.c.b16 %v927, %v925
  %v1316 = vpack.c.b16 %v930, %v928
  %v1317 = vpack.c.b16 %v931, %v929
  %v1318 = vpack.c.b16 %v934, %v932
  %v1319 = vpack.c.b16 %v935, %v933
  %v1320 = vpack.c.b16 %v938, %v936
  %v1321 = vpack.c.b16 %v939, %v937
  %v1322 = vpack.c.b16 %v942, %v940
  %v1323 = vpack.c.b16 %v943, %v941
  %v1324 = vpack.c.b16 %v946, %v944
  %v1325 = vpack.c.b16 %v947, %v945
  %v1326 = vpack.c.b16 %v950, %v948
  %v1327 = vpack.c.b16 %v951, %v949
  %v1328 = vpack.c.b16 %v954, %v952
  %v1329 = vpack.c.b16 %v955, %v953
  %v1330 = vpack.c.b16 %v958, %v956
  %v1331 = vpack.c.b16 %v959, %v957
  %v1332 = vpack.c.b16 %v962, %v960
  %v1333 = vpack.c.b16 %v963, %v961
  %v1334 = vpack.c.b16 %v966, %v964
  %v1335 = vpack.c.b16 %v967, %v965
  %v1336 = vpack.c.b16 %v970, %v968
  %v1337 = vpack.c.b16 %v971, %v969
  %v1338 = vpack.c.b16 %v974, %v972
  %v1339 = vpack.c.b16 %v975, %v973
  %v1340 = vpack.c.b16 %v978, %v976
  %v1341 = vpack.c.b16 %v979, %v977
  %v1342 = vpack.c.b16 %v982, %v980
  %v1343 = vpack.c.b16 %v983, %v981
  %v1344 = vpack.c.b16 %v986, %v984
  %v1345 = vpack.c.b16 %v987, %v985
  %v1346 = vpack.c.b16 %v990, %v988
  %v1347 = vpack.c.b16 %v991, %v989
  %v1348 = vpack.c.b16 %v994, %v992
  %v1349 = vpack.c.b16 %v995, %v993
  %v1350 = vpack.c.b16 %v998, %v996
  %v1351 = vpack.c.b16 %v999, %v997
  %v1352 = vpack.c.b16 %v1002, %v1000
  %v1353 = vpack.c.b16 %v1003, %v1001
  %v1354 = vpack.c.b16 %v1006, %v1004
  %v1355 = vpack.c.b16 %v1007, %v1005
  %v1356 = vpack.c.b16 %v1010, %v1008
  %v1357 = vpack.c.b16 %v1011, %v1009
  %v1358 = vpack.c.b16 %v1014, %v1012
  %v1359 = vpack.c.b16 %v1015, %v1013
  %v1360 = vpack.c.b16 %v1018, %v1016
  %v1361 = vpack.c.b16 %v1019, %v1017
  %v1362 = vpack.c.b16 %v1022, %v1020
  %v1363 = vpack.c.b16 %v1023, %v1021
  %v1364 = vpack.c.b16 %v1026, %v1024
  %v1365 = vpack.c.b16 %v1027, %v1025
  %v1366 = vpack.c.b16 %v1030, %v1028
  %v1367 = vpack.c.b16 %v1031, %v1029
  %v1368 = vpack.c.b16 %v1034, %v1032
  %v1369 = vpack.c.b16 %v1035, %v1033
  %v1370 = vpack.c.b16 %v1038, %v1036
  %v1371 = vpack.c.b16 %v1039, %v1037
  %v1372 = vpack.c.b16 %v1042, %v1040
  %v1373 = vpack.c.b16 %v1043, %v1041
  %v1374 = vpack.c.b16 %v1046, %v1044
  %v1375 = vpack.c.b16 %v1047, %v1045
  %v1376 = vpack.c.b16 %v1050, %v1048
  %v1377 = vpack.c.b16 %v1051, %v1049
  %v1378 = vpack.c.b16 %v1054, %v1052
  %v1379 = vpack.c.b16 %v1055, %v1053
  %v1380 = vpack.c.b16 %v1058, %v1056
  %v1381 = vpack.c.b16 %v1059, %v1057
  %v1382 = vpack.c.b16 %v1062, %v1060
  %v1383 = vpack.c.b16 %v1063, %v1061
  %v1384 = vpack.c.b16 %v1066, %v1064
  %v1385 = vpack.c.b16 %v1067, %v1065
  %v1386 = vpack.c.b16 %v1070, %v1068
  %v1387 = vpack.c.b16 %v1071, %v1069
  %v1388 = vpack.c.b16 %v1074, %v1072
  %v1389 = vpack.c.b16 %v1075, %v1073
  %v1390 = vpack.c.b16 %v1078, %v1076
  %v1391 = vpack.c.b16 %v1079, %v1077
  %v1392 = vpack.c.b16 %v1082, %v1080
  %v1393 = vpack.c.b16 %v1083, %v1081
  %v1394 = vpack.c.b16 %v1086, %v1084
  %v1395 = vpack.c.b16 %v1087, %v1085
  %v1396 = vpack.c.b16 %v1090, %v1088
  %v1397 = vpack.c.b16 %v1091, %v1089
  %v1398 = vpack.c.b16 %v1094, %v1092
  %v1399 = vpack.c.b16 %v1095, %v1093
  %v1400 = vpack.c.b16 %v1098, %v1096
  %v1401 = vpack.c.b16 %v1099, %v1097
  %v1402 = vpack.c.b16 %v1102, %v1100
  %v1403 = vpack.c.b16 %v1103, %v1101
  %v1404 = vpack.c.b16 %v1106, %v1104
  %v1405 = vpack.c.b16 %v1107, %v1105
  %v1406 = vpack.c.b16 %v1110, %v1108
  %v1407 = vpack.c.b16 %v1111, %v1109
  %v1408 = vpack.c.b16 %v1114, %v1112
  %v1409 = vpack.c.b16 %v1115, %v1113
  %v1410 = vpack.c.b16 %v1118, %v1116
  %v1411 = vpack.c.b16 %v1119, %v1117
  %v1412 = vpack.c.b16 %v1122, %v1120
  %v1413 = vpack.c.b16 %v1123, %v1121
  %v1414 = vpack.c.b16 %v1126, %v1124
  %v1415 = vpack.c.b16 %v1127, %v1125
  %v1416 = vpack.c.b16 %v1130, %v1128
  %v1417 = vpack.c.b16 %v1131, %v1129
  %v1418 = vpack.c.b16 %v1134, %v1132
  %v1419 = vpack.c.b16 %v1135, %v1133
  %v1420 = vpack.c.b16 %v1138, %v1136
  %v1421 = vpack.c.b16 %v1139, %v1137
  %v1422 = vpack.c.b16 %v1142, %v1140
  %v1423 = vpack.c.b16 %v1143, %v1141
  %v1424 = vpack.c.b16 %v1146, %v1144
  %v1425 = vpack.c.b16 %v1147, %v1145
  %v1426 = vpack.c.b16 %v1150, %v1148
  %v1427 = vpack.c.b16 %v1151, %v1149
  %v1428 = vpack.c.b16 %v1152, %v1152
  %v1429 = vpack.c.b16 %v1153, %v1153
  %v1738 = vunpack.c.l.b16 %v290
  %v1739 = vunpack.c.l.b16 %v291
  %v1740 = vunpack.c.l.b16 %v292
  %v1741 = vunpack.c.l.b16 %v293
  %v1742 = vunpack.c.l.b16 %v294
  %v1743 = vunpack.c.l.b16 %v295
  %v1744 = vunpack.c.l.b16 %v296
  %v1745 = vunpack.c.l.b16 %v297
  %v1746 = vunpack.c.l.b16 %v298
  %v1747 = vunpack.c.l.b16 %v299
  %v1748 = vunpack.c.l.b16 %v300
  %v1749 = vunpack.c.l.b16 %v301
  %v1750 = vunpack.c.l.b16 %v302
  %v1751 = vunpack.c.l.b16 %v303
  %v1752 = vunpack.c.l.b16 %v304
  %v1753 = vunpack.c.l.b16 %v305
  %v1754 = vunpack.c.l.b16 %v306
  %v1755 = vunpack.c.l.b16 %v307
  %v1756 = vunpack.c.l.b16 %v308
  %v1757 = vunpack.c.l.b16 %v309
  %v1758 = vunpack.c.l.b16 %v310
  %v1759 = vunpack.c.l.b16 %v311
  %v1760 = vunpack.c.l.b16 %v312
  %v1761 = vunpack.c.l.b16 %v313
  %v1762 = vunpack.c.l.b16 %v314
  %v1763 = vunpack.c.l.b16 %v315
  %v1764 = vunpack.c.l.b16 %v316
  %v1765 = vunpack.c.l.b16 %v317
  %v1766 = vunpack.c.l.b16 %v318
  %v1767 = vunpack.c.l.b16 %v319
  %v1768 = vunpack.c.l.b16 %v320
  %v1769 = vunpack.c.l.b16 %v321
  %v1770 = vpack.c.b16 %v1739, %v1738
  %v1771 = vpack.c.b16 %v1741, %v1740
  %v1772 = vpack.c.b16 %v1743, %v1742
  %v1773 = vpack.c.b16 %v1745, %v1744
  %v1774 = vpack.c.b16 %v1747, %v1746
  %v1775 = vpack.c.b16 %v1749, %v1748
  %v1776 = vpack.c.b16 %v1751, %v1750
  %v1777 = vpack.c.b16 %v1753, %v1752
  %v1778 = vpack.c.b16 %v1755, %v1754
  %v1779 = vpack.c.b16 %v1757, %v1756
  %v1780 = vpack.c.b16 %v1759, %v1758
  %v1781 = vpack.c.b16 %v1761, %v1760
  %v1782 = vpack.c.b16 %v1763, %v1762
  %v1783 = vpack.c.b16 %v1765, %v1764
  %v1784 = vpack.c.b16 %v1767, %v1766
  %v1785 = vpack.c.b16 %v1769, %v1768
  %1802 = vmatprep.subr.bf16.mxu0 0
  %1803 = vmatpush1.bf16.msra.mxu0 %v1770
  %1804 = vmatprep.subr.bf16.mxu0 0
  %1805 = vmatpush1.bf16.msra.mxu0 %v1771
  %1806 = vmatprep.subr.bf16.mxu0 0
  %1807 = vmatpush1.bf16.msra.mxu0 %v1772
  %1808 = vmatprep.subr.bf16.mxu0 0
  %1809 = vmatpush1.bf16.msra.mxu0 %v1773
  %1810 = vmatprep.subr.bf16.mxu0 0
  %1811 = vmatpush1.bf16.msra.mxu0 %v1774
  %1812 = vmatprep.subr.bf16.mxu0 0
  %1813 = vmatpush1.bf16.msra.mxu0 %v1775
  %1814 = vmatprep.subr.bf16.mxu0 0
  %1815 = vmatpush1.bf16.msra.mxu0 %v1776
  %1816 = vmatprep.subr.bf16.mxu0 0
  %1817 = vmatpush1.bf16.msra.mxu0 %v1777
  %1818 = vmatprep.subr.bf16.mxu0 0
  %1819 = vmatpush1.bf16.msra.mxu0 %v1778
  %1820 = vmatprep.subr.bf16.mxu0 0
  %1821 = vmatpush1.bf16.msra.mxu0 %v1779
  %1822 = vmatprep.subr.bf16.mxu0 0
  %1823 = vmatpush1.bf16.msra.mxu0 %v1780
  %1824 = vmatprep.subr.bf16.mxu0 0
  %1825 = vmatpush1.bf16.msra.mxu0 %v1781
  %1826 = vmatprep.subr.bf16.mxu0 0
  %1827 = vmatpush1.bf16.msra.mxu0 %v1782
  %1828 = vmatprep.subr.bf16.mxu0 0
  %1829 = vmatpush1.bf16.msra.mxu0 %v1783
  %1830 = vmatprep.subr.bf16.mxu0 0
  %1831 = vmatpush1.bf16.msra.mxu0 %v1784
  %1832 = vmatprep.subr.bf16.mxu0 0
  %1833 = vmatpush1.bf16.msra.mxu0 %v1785
  %1834 = vmatprep.mubr.bf16.mxu0 %v1155
  %1835 = vmatmul.mubr.bf16.gmra.mrb[0].mxu0 %v1154
  %v1836 = vpop.f32.mrb[0].mxu0
  %v1837 = vadd.f32 %v327, %v1836
  %v1838 = vpop.f32.mrb[0].mxu0
  %v1839 = vpop.f32.mrb[0].mxu0
  %v1840 = vadd.f32 %v327, %v1839
  %v1841 = vpop.f32.mrb[0].mxu0
  %1842 = vmatprep.mubr.bf16.mxu0 %v1157
  %1843 = vmatmul.mubr.bf16.gmra.mrb[0].mxu0 %v1156
  %v1844 = vpop.f32.mrb[0].mxu0
  %v1845 = vadd.f32 %v327, %v1844
  %v1846 = vpop.f32.mrb[0].mxu0
  %v1847 = vpop.f32.mrb[0].mxu0
  %v1848 = vadd.f32 %v327, %v1847
  %v1849 = vpop.f32.mrb[0].mxu0
  %1850 = vmatprep.mubr.bf16.mxu0 %v1159
  %1851 = vmatmul.mubr.bf16.gmra.mrb[0].mxu0 %v1158
  %v1852 = vpop.f32.mrb[0].mxu0
  %v1853 = vadd.f32 %v327, %v1852
  %v1854 = vpop.f32.mrb[0].mxu0
  %v1855 = vpop.f32.mrb[0].mxu0
  %v1856 = vadd.f32 %v327, %v1855
  %v1857 = vpop.f32.mrb[0].mxu0
  %1858 = vmatprep.mubr.bf16.mxu0 %v1161
  %1859 = vmatmul.mubr.bf16.gmra.mrb[0].mxu0 %v1160
  %v1860 = vpop.f32.mrb[0].mxu0
  %v1861 = vadd.f32 %v327, %v1860
  %v1862 = vpop.f32.mrb[0].mxu0
  %v1863 = vpop.f32.mrb[0].mxu0
  %v1864 = vadd.f32 %v327, %v1863
  %v1865 = vpop.f32.mrb[0].mxu0
  %1866 = vmatprep.mubr.bf16.mxu0 %v1163
  %1867 = vmatmul.mubr.bf16.gmra.mrb[0].mxu0 %v1162
  %v1868 = vpop.f32.mrb[0].mxu0
  %v1869 = vadd.f32 %v327, %v1868
  %v1870 = vpop.f32.mrb[0].mxu0
  %v1871 = vpop.f32.mrb[0].mxu0
  %v1872 = vadd.f32 %v327, %v1871
  %v1873 = vpop.f32.mrb[0].mxu0
  %1874 = vmatprep.mubr.bf16.mxu0 %v1165
  %1875 = vmatmul.mubr.bf16.gmra.mrb[0].mxu0 %v1164
  %v1876 = vpop.f32.mrb[0].mxu0
  %v1877 = vadd.f32 %v327, %v1876
  %v1878 = vpop.f32.mrb[0].mxu0
  %v1879 = vpop.f32.mrb[0].mxu0
  %v1880 = vadd.f32 %v327, %v1879
  %v1881 = vpop.f32.mrb[0].mxu0
  %1882 = vmatprep.mubr.bf16.mxu0 %v1167
  %1883 = vmatmul.mubr.bf16.gmra.mrb[0].mxu0 %v1166
  %v1884 = vpop.f32.mrb[0].mxu0
  %v1885 = vadd.f32 %v327, %v1884
  %v1886 = vpop.f32.mrb[0].mxu0
  %v1887 = vpop.f32.mrb[0].mxu0
  %v1888 = vadd.f32 %v327, %v1887
  %v1889 = vpop.f32.mrb[0].mxu0
  %1890 = vmatprep.mubr.bf16.mxu0 %v1169
  %1891 = vmatmul.mubr.bf16.gmra.mrb[0].mxu0 %v1168
  %v1892 = vpop.f32.mrb[0].mxu0
  %v1893 = vadd.f32 %v327, %v1892
  %v1894 = vpop.f32.mrb[0].mxu0
  %v1895 = vpop.f32.mrb[0].mxu0
  %v1896 = vadd.f32 %v327, %v1895
  %v1897 = vpop.f32.mrb[0].mxu0
  %1898 = vmatprep.mubr.bf16.mxu0 %v1171
  %1899 = vmatmul.mubr.bf16.gmra.mrb[0].mxu0 %v1170
  %v1900 = vpop.f32.mrb[0].mxu0
  %v1901 = vadd.f32 %v327, %v1900
  %v1902 = vpop.f32.mrb[0].mxu0
  %v1903 = vpop.f32.mrb[0].mxu0
  %v1904 = vadd.f32 %v327, %v1903
  %v1905 = vpop.f32.mrb[0].mxu0
  %1906 = vmatprep.mubr.bf16.mxu0 %v1173
  %1907 = vmatmul.mubr.bf16.gmra.mrb[0].mxu0 %v1172
  %v1908 = vpop.f32.mrb[0].mxu0
  %v1909 = vadd.f32 %v327, %v1908
  %v1910 = vpop.f32.mrb[0].mxu0
  %v1911 = vpop.f32.mrb[0].mxu0
  %v1912 = vadd.f32 %v327, %v1911
  %v1913 = vpop.f32.mrb[0].mxu0
  %1914 = vmatprep.mubr.bf16.mxu0 %v1175
  %1915 = vmatmul.mubr.bf16.gmra.mrb[0].mxu0 %v1174
  %v1916 = vpop.f32.mrb[0].mxu0
  %v1917 = vadd.f32 %v327, %v1916
  %v1918 = vpop.f32.mrb[0].mxu0
  %v1919 = vpop.f32.mrb[0].mxu0
  %v1920 = vadd.f32 %v327, %v1919
  %v1921 = vpop.f32.mrb[0].mxu0
  %1922 = vmatprep.mubr.bf16.mxu0 %v1177
  %1923 = vmatmul.mubr.bf16.gmra.mrb[0].mxu0 %v1176
  %v1924 = vpop.f32.mrb[0].mxu0
  %v1925 = vadd.f32 %v327, %v1924
  %v1926 = vpop.f32.mrb[0].mxu0
  %v1927 = vpop.f32.mrb[0].mxu0
  %v1928 = vadd.f32 %v327, %v1927
  %v1929 = vpop.f32.mrb[0].mxu0
  %1930 = vmatprep.mubr.bf16.mxu0 %v1179
  %1931 = vmatmul.mubr.bf16.gmra.mrb[0].mxu0 %v1178
  %v1932 = vpop.f32.mrb[0].mxu0
  %v1933 = vadd.f32 %v327, %v1932
  %v1934 = vpop.f32.mrb[0].mxu0
  %v1935 = vpop.f32.mrb[0].mxu0
  %v1936 = vadd.f32 %v327, %v1935
  %v1937 = vpop.f32.mrb[0].mxu0
  %1938 = vmatprep.mubr.bf16.mxu0 %v1181
  %1939 = vmatmul.mubr.bf16.gmra.mrb[0].mxu0 %v1180
  %v1940 = vpop.f32.mrb[0].mxu0
  %v1941 = vadd.f32 %v327, %v1940
  %v1942 = vpop.f32.mrb[0].mxu0
  %v1943 = vpop.f32.mrb[0].mxu0
  %v1944 = vadd.f32 %v327, %v1943
  %v1945 = vpop.f32.mrb[0].mxu0
  %1946 = vmatprep.mubr.bf16.mxu0 %v1183
  %1947 = vmatmul.mubr.bf16.gmra.mrb[0].mxu0 %v1182
  %v1948 = vpop.f32.mrb[0].mxu0
  %v1949 = vadd.f32 %v327, %v1948
  %v1950 = vpop.f32.mrb[0].mxu0
  %v1951 = vpop.f32.mrb[0].mxu0
  %v1952 = vadd.f32 %v327, %v1951
  %v1953 = vpop.f32.mrb[0].mxu0
  %1954 = vmatprep.mubr.bf16.mxu0 %v1185
  %1955 = vmatmul.mubr.bf16.gmra.mrb[0].mxu0 %v1184
  %v1956 = vpop.f32.mrb[0].mxu0
  %v1957 = vadd.f32 %v327, %v1956
  %v1958 = vpop.f32.mrb[0].mxu0
  %v1959 = vpop.f32.mrb[0].mxu0
  %v1960 = vadd.f32 %v327, %v1959
  %v1961 = vpop.f32.mrb[0].mxu0
  %1962 = vmatprep.mubr.bf16.mxu0 %v1187
  %1963 = vmatmul.mubr.bf16.gmra.mrb[0].mxu0 %v1186
  %v1964 = vpop.f32.mrb[0].mxu0
  %v1965 = vadd.f32 %v327, %v1964
  %v1966 = vpop.f32.mrb[0].mxu0
  %v1967 = vpop.f32.mrb[0].mxu0
  %v1968 = vadd.f32 %v327, %v1967
  %v1969 = vpop.f32.mrb[0].mxu0
  %1970 = vmatprep.mubr.bf16.mxu0 %v1189
  %1971 = vmatmul.mubr.bf16.gmra.mrb[0].mxu0 %v1188
  %v1972 = vpop.f32.mrb[0].mxu0
  %v1973 = vadd.f32 %v327, %v1972
  %v1974 = vpop.f32.mrb[0].mxu0
  %v1975 = vpop.f32.mrb[0].mxu0
  %v1976 = vadd.f32 %v327, %v1975
  %v1977 = vpop.f32.mrb[0].mxu0
  %1978 = vmatprep.mubr.bf16.mxu0 %v1191
  %1979 = vmatmul.mubr.bf16.gmra.mrb[0].mxu0 %v1190
  %v1980 = vpop.f32.mrb[0].mxu0
  %v1981 = vadd.f32 %v327, %v1980
  %v1982 = vpop.f32.mrb[0].mxu0
  %v1983 = vpop.f32.mrb[0].mxu0
  %v1984 = vadd.f32 %v327, %v1983
  %v1985 = vpop.f32.mrb[0].mxu0
  %1986 = vmatprep.mubr.bf16.mxu0 %v1193
  %1987 = vmatmul.mubr.bf16.gmra.mrb[0].mxu0 %v1192
  %v1988 = vpop.f32.mrb[0].mxu0
  %v1989 = vadd.f32 %v327, %v1988
  %v1990 = vpop.f32.mrb[0].mxu0
  %v1991 = vpop.f32.mrb[0].mxu0
  %v1992 = vadd.f32 %v327, %v1991
  %v1993 = vpop.f32.mrb[0].mxu0
  %1994 = vmatprep.mubr.bf16.mxu0 %v1195
  %1995 = vmatmul.mubr.bf16.gmra.mrb[0].mxu0 %v1194
  %v1996 = vpop.f32.mrb[0].mxu0
  %v1997 = vadd.f32 %v327, %v1996
  %v1998 = vpop.f32.mrb[0].mxu0
  %v1999 = vpop.f32.mrb[0].mxu0
  %v2000 = vadd.f32 %v327, %v1999
  %v2001 = vpop.f32.mrb[0].mxu0
  %2002 = vmatprep.mubr.bf16.mxu0 %v1197
  %2003 = vmatmul.mubr.bf16.gmra.mrb[0].mxu0 %v1196
  %v2004 = vpop.f32.mrb[0].mxu0
  %v2005 = vadd.f32 %v327, %v2004
  %v2006 = vpop.f32.mrb[0].mxu0
  %v2007 = vpop.f32.mrb[0].mxu0
  %v2008 = vadd.f32 %v327, %v2007
  %v2009 = vpop.f32.mrb[0].mxu0
  %2010 = vmatprep.mubr.bf16.mxu0 %v1199
  %2011 = vmatmul.mubr.bf16.gmra.mrb[0].mxu0 %v1198
  %v2012 = vpop.f32.mrb[0].mxu0
  %v2013 = vadd.f32 %v327, %v2012
  %v2014 = vpop.f32.mrb[0].mxu0
  %v2015 = vpop.f32.mrb[0].mxu0
  %v2016 = vadd.f32 %v327, %v2015
  %v2017 = vpop.f32.mrb[0].mxu0
  %2018 = vmatprep.mubr.bf16.mxu0 %v1201
  %2019 = vmatmul.mubr.bf16.gmra.mrb[0].mxu0 %v1200
  %v2020 = vpop.f32.mrb[0].mxu0
  %v2021 = vadd.f32 %v327, %v2020
  %v2022 = vpop.f32.mrb[0].mxu0
  %v2023 = vpop.f32.mrb[0].mxu0
  %v2024 = vadd.f32 %v327, %v2023
  %v2025 = vpop.f32.mrb[0].mxu0
  %2026 = vmatprep.mubr.bf16.mxu0 %v1203
  %2027 = vmatmul.mubr.bf16.gmra.mrb[0].mxu0 %v1202
  %v2028 = vpop.f32.mrb[0].mxu0
  %v2029 = vadd.f32 %v327, %v2028
  %v2030 = vpop.f32.mrb[0].mxu0
  %v2031 = vpop.f32.mrb[0].mxu0
  %v2032 = vadd.f32 %v327, %v2031
  %v2033 = vpop.f32.mrb[0].mxu0
  %2034 = vmatprep.mubr.bf16.mxu0 %v1205
  %2035 = vmatmul.mubr.bf16.gmra.mrb[0].mxu0 %v1204
  %v2036 = vpop.f32.mrb[0].mxu0
  %v2037 = vadd.f32 %v327, %v2036
  %v2038 = vpop.f32.mrb[0].mxu0
  %v2039 = vpop.f32.mrb[0].mxu0
  %v2040 = vadd.f32 %v327, %v2039
  %v2041 = vpop.f32.mrb[0].mxu0
  %2042 = vmatprep.mubr.bf16.mxu0 %v1207
  %2043 = vmatmul.mubr.bf16.gmra.mrb[0].mxu0 %v1206
  %v2044 = vpop.f32.mrb[0].mxu0
  %v2045 = vadd.f32 %v327, %v2044
  %v2046 = vpop.f32.mrb[0].mxu0
  %v2047 = vpop.f32.mrb[0].mxu0
  %v2048 = vadd.f32 %v327, %v2047
  %v2049 = vpop.f32.mrb[0].mxu0
  %2050 = vmatprep.mubr.bf16.mxu0 %v1209
  %2051 = vmatmul.mubr.bf16.gmra.mrb[0].mxu0 %v1208
  %v2052 = vpop.f32.mrb[0].mxu0
  %v2053 = vadd.f32 %v327, %v2052
  %v2054 = vpop.f32.mrb[0].mxu0
  %v2055 = vpop.f32.mrb[0].mxu0
  %v2056 = vadd.f32 %v327, %v2055
  %v2057 = vpop.f32.mrb[0].mxu0
  %2058 = vmatprep.mubr.bf16.mxu0 %v1211
  %2059 = vmatmul.mubr.bf16.gmra.mrb[0].mxu0 %v1210
  %v2060 = vpop.f32.mrb[0].mxu0
  %v2061 = vadd.f32 %v327, %v2060
  %v2062 = vpop.f32.mrb[0].mxu0
  %v2063 = vpop.f32.mrb[0].mxu0
  %v2064 = vadd.f32 %v327, %v2063
  %v2065 = vpop.f32.mrb[0].mxu0
  %2066 = vmatprep.mubr.bf16.mxu0 %v1213
  %2067 = vmatmul.mubr.bf16.gmra.mrb[0].mxu0 %v1212
  %v2068 = vpop.f32.mrb[0].mxu0
  %v2069 = vadd.f32 %v327, %v2068
  %v2070 = vpop.f32.mrb[0].mxu0
  %v2071 = vpop.f32.mrb[0].mxu0
  %v2072 = vadd.f32 %v327, %v2071
  %v2073 = vpop.f32.mrb[0].mxu0
  %2074 = vmatprep.mubr.bf16.mxu0 %v1215
  %2075 = vmatmul.mubr.bf16.gmra.mrb[0].mxu0 %v1214
  %v2076 = vpop.f32.mrb[0].mxu0
  %v2077 = vadd.f32 %v327, %v2076
  %v2078 = vpop.f32.mrb[0].mxu0
  %v2079 = vpop.f32.mrb[0].mxu0
  %v2080 = vadd.f32 %v327, %v2079
  %v2081 = vpop.f32.mrb[0].mxu0
  %2082 = vmatprep.mubr.bf16.mxu0 %v1217
  %2083 = vmatmul.mubr.bf16.gmra.mrb[0].mxu0 %v1216
  %v2084 = vpop.f32.mrb[0].mxu0
  %v2085 = vadd.f32 %v327, %v2084
  %v2086 = vpop.f32.mrb[0].mxu0
  %v2087 = vpop.f32.mrb[0].mxu0
  %v2088 = vadd.f32 %v327, %v2087
  %v2089 = vpop.f32.mrb[0].mxu0
  %2090 = vmatprep.mubr.bf16.mxu0 %v1219
  %2091 = vmatmul.mubr.bf16.gmra.mrb[0].mxu0 %v1218
  %v2092 = vpop.f32.mrb[0].mxu0
  %v2093 = vadd.f32 %v327, %v2092
  %v2094 = vpop.f32.mrb[0].mxu0
  %v2095 = vpop.f32.mrb[0].mxu0
  %v2096 = vadd.f32 %v327, %v2095
  %v2097 = vpop.f32.mrb[0].mxu0
  %2098 = vmatprep.mubr.bf16.mxu0 %v1221
  %2099 = vmatmul.mubr.bf16.gmra.mrb[0].mxu0 %v1220
  %v2100 = vpop.f32.mrb[0].mxu0
  %v2101 = vadd.f32 %v327, %v2100
  %v2102 = vpop.f32.mrb[0].mxu0
  %v2103 = vpop.f32.mrb[0].mxu0
  %v2104 = vadd.f32 %v327, %v2103
  %v2105 = vpop.f32.mrb[0].mxu0
  %2106 = vmatprep.mubr.bf16.mxu0 %v1223
  %2107 = vmatmul.mubr.bf16.gmra.mrb[0].mxu0 %v1222
  %v2108 = vpop.f32.mrb[0].mxu0
  %v2109 = vadd.f32 %v327, %v2108
  %v2110 = vpop.f32.mrb[0].mxu0
  %v2111 = vpop.f32.mrb[0].mxu0
  %v2112 = vadd.f32 %v327, %v2111
  %v2113 = vpop.f32.mrb[0].mxu0
  %2114 = vmatprep.mubr.bf16.mxu0 %v1225
  %2115 = vmatmul.mubr.bf16.gmra.mrb[0].mxu0 %v1224
  %v2116 = vpop.f32.mrb[0].mxu0
  %v2117 = vadd.f32 %v327, %v2116
  %v2118 = vpop.f32.mrb[0].mxu0
  %v2119 = vpop.f32.mrb[0].mxu0
  %v2120 = vadd.f32 %v327, %v2119
  %v2121 = vpop.f32.mrb[0].mxu0
  %2122 = vmatprep.mubr.bf16.mxu0 %v1227
  %2123 = vmatmul.mubr.bf16.gmra.mrb[0].mxu0 %v1226
  %v2124 = vpop.f32.mrb[0].mxu0
  %v2125 = vadd.f32 %v327, %v2124
  %v2126 = vpop.f32.mrb[0].mxu0
  %v2127 = vpop.f32.mrb[0].mxu0
  %v2128 = vadd.f32 %v327, %v2127
  %v2129 = vpop.f32.mrb[0].mxu0
  %2130 = vmatprep.mubr.bf16.mxu0 %v1229
  %2131 = vmatmul.mubr.bf16.gmra.mrb[0].mxu0 %v1228
  %v2132 = vpop.f32.mrb[0].mxu0
  %v2133 = vadd.f32 %v327, %v2132
  %v2134 = vpop.f32.mrb[0].mxu0
  %v2135 = vpop.f32.mrb[0].mxu0
  %v2136 = vadd.f32 %v327, %v2135
  %v2137 = vpop.f32.mrb[0].mxu0
  %2138 = vmatprep.mubr.bf16.mxu0 %v1231
  %2139 = vmatmul.mubr.bf16.gmra.mrb[0].mxu0 %v1230
  %v2140 = vpop.f32.mrb[0].mxu0
  %v2141 = vadd.f32 %v327, %v2140
  %v2142 = vpop.f32.mrb[0].mxu0
  %v2143 = vpop.f32.mrb[0].mxu0
  %v2144 = vadd.f32 %v327, %v2143
  %v2145 = vpop.f32.mrb[0].mxu0
  %2146 = vmatprep.mubr.bf16.mxu0 %v1233
  %2147 = vmatmul.mubr.bf16.gmra.mrb[0].mxu0 %v1232
  %v2148 = vpop.f32.mrb[0].mxu0
  %v2149 = vadd.f32 %v327, %v2148
  %v2150 = vpop.f32.mrb[0].mxu0
  %v2151 = vpop.f32.mrb[0].mxu0
  %v2152 = vadd.f32 %v327, %v2151
  %v2153 = vpop.f32.mrb[0].mxu0
  %2154 = vmatprep.mubr.bf16.mxu0 %v1235
  %2155 = vmatmul.mubr.bf16.gmra.mrb[0].mxu0 %v1234
  %v2156 = vpop.f32.mrb[0].mxu0
  %v2157 = vadd.f32 %v327, %v2156
  %v2158 = vpop.f32.mrb[0].mxu0
  %v2159 = vpop.f32.mrb[0].mxu0
  %v2160 = vadd.f32 %v327, %v2159
  %v2161 = vpop.f32.mrb[0].mxu0
  %2162 = vmatprep.mubr.bf16.mxu0 %v1237
  %2163 = vmatmul.mubr.bf16.gmra.mrb[0].mxu0 %v1236
  %v2164 = vpop.f32.mrb[0].mxu0
  %v2165 = vadd.f32 %v327, %v2164
  %v2166 = vpop.f32.mrb[0].mxu0
  %v2167 = vpop.f32.mrb[0].mxu0
  %v2168 = vadd.f32 %v327, %v2167
  %v2169 = vpop.f32.mrb[0].mxu0
  %2170 = vmatprep.mubr.bf16.mxu0 %v1239
  %2171 = vmatmul.mubr.bf16.gmra.mrb[0].mxu0 %v1238
  %v2172 = vpop.f32.mrb[0].mxu0
  %v2173 = vadd.f32 %v327, %v2172
  %v2174 = vpop.f32.mrb[0].mxu0
  %v2175 = vpop.f32.mrb[0].mxu0
  %v2176 = vadd.f32 %v327, %v2175
  %v2177 = vpop.f32.mrb[0].mxu0
  %2178 = vmatprep.mubr.bf16.mxu0 %v1241
  %2179 = vmatmul.mubr.bf16.gmra.mrb[0].mxu0 %v1240
  %v2180 = vpop.f32.mrb[0].mxu0
  %v2181 = vadd.f32 %v327, %v2180
  %v2182 = vpop.f32.mrb[0].mxu0
  %v2183 = vpop.f32.mrb[0].mxu0
  %v2184 = vadd.f32 %v327, %v2183
  %v2185 = vpop.f32.mrb[0].mxu0
  %2186 = vmatprep.mubr.bf16.mxu0 %v1243
  %2187 = vmatmul.mubr.bf16.gmra.mrb[0].mxu0 %v1242
  %v2188 = vpop.f32.mrb[0].mxu0
  %v2189 = vadd.f32 %v327, %v2188
  %v2190 = vpop.f32.mrb[0].mxu0
  %v2191 = vpop.f32.mrb[0].mxu0
  %v2192 = vadd.f32 %v327, %v2191
  %v2193 = vpop.f32.mrb[0].mxu0
  %2194 = vmatprep.mubr.bf16.mxu0 %v1245
  %2195 = vmatmul.mubr.bf16.gmra.mrb[0].mxu0 %v1244
  %v2196 = vpop.f32.mrb[0].mxu0
  %v2197 = vadd.f32 %v327, %v2196
  %v2198 = vpop.f32.mrb[0].mxu0
  %v2199 = vpop.f32.mrb[0].mxu0
  %v2200 = vadd.f32 %v327, %v2199
  %v2201 = vpop.f32.mrb[0].mxu0
  %2202 = vmatprep.mubr.bf16.mxu0 %v1247
  %2203 = vmatmul.mubr.bf16.gmra.mrb[0].mxu0 %v1246
  %v2204 = vpop.f32.mrb[0].mxu0
  %v2205 = vadd.f32 %v327, %v2204
  %v2206 = vpop.f32.mrb[0].mxu0
  %v2207 = vpop.f32.mrb[0].mxu0
  %v2208 = vadd.f32 %v327, %v2207
  %v2209 = vpop.f32.mrb[0].mxu0
  %2210 = vmatprep.mubr.bf16.mxu0 %v1249
  %2211 = vmatmul.mubr.bf16.gmra.mrb[0].mxu0 %v1248
  %v2212 = vpop.f32.mrb[0].mxu0
  %v2213 = vadd.f32 %v327, %v2212
  %v2214 = vpop.f32.mrb[0].mxu0
  %v2215 = vpop.f32.mrb[0].mxu0
  %v2216 = vadd.f32 %v327, %v2215
  %v2217 = vpop.f32.mrb[0].mxu0
  %2218 = vmatprep.mubr.bf16.mxu0 %v1251
  %2219 = vmatmul.mubr.bf16.gmra.mrb[0].mxu0 %v1250
  %v2220 = vpop.f32.mrb[0].mxu0
  %v2221 = vadd.f32 %v327, %v2220
  %v2222 = vpop.f32.mrb[0].mxu0
  %v2223 = vpop.f32.mrb[0].mxu0
  %v2224 = vadd.f32 %v327, %v2223
  %v2225 = vpop.f32.mrb[0].mxu0
  %2226 = vmatprep.mubr.bf16.mxu0 %v1253
  %2227 = vmatmul.mubr.bf16.gmra.mrb[0].mxu0 %v1252
  %v2228 = vpop.f32.mrb[0].mxu0
  %v2229 = vadd.f32 %v327, %v2228
  %v2230 = vpop.f32.mrb[0].mxu0
  %v2231 = vpop.f32.mrb[0].mxu0
  %v2232 = vadd.f32 %v327, %v2231
  %v2233 = vpop.f32.mrb[0].mxu0
  %2234 = vmatprep.mubr.bf16.mxu0 %v1255
  %2235 = vmatmul.mubr.bf16.gmra.mrb[0].mxu0 %v1254
  %v2236 = vpop.f32.mrb[0].mxu0
  %v2237 = vadd.f32 %v327, %v2236
  %v2238 = vpop.f32.mrb[0].mxu0
  %v2239 = vpop.f32.mrb[0].mxu0
  %v2240 = vadd.f32 %v327, %v2239
  %v2241 = vpop.f32.mrb[0].mxu0
  %2242 = vmatprep.mubr.bf16.mxu0 %v1257
  %2243 = vmatmul.mubr.bf16.gmra.mrb[0].mxu0 %v1256
  %v2244 = vpop.f32.mrb[0].mxu0
  %v2245 = vadd.f32 %v327, %v2244
  %v2246 = vpop.f32.mrb[0].mxu0
  %v2247 = vpop.f32.mrb[0].mxu0
  %v2248 = vadd.f32 %v327, %v2247
  %v2249 = vpop.f32.mrb[0].mxu0
  %2250 = vmatprep.mubr.bf16.mxu0 %v1259
  %2251 = vmatmul.mubr.bf16.gmra.mrb[0].mxu0 %v1258
  %v2252 = vpop.f32.mrb[0].mxu0
  %v2253 = vadd.f32 %v327, %v2252
  %v2254 = vpop.f32.mrb[0].mxu0
  %v2255 = vpop.f32.mrb[0].mxu0
  %v2256 = vadd.f32 %v327, %v2255
  %v2257 = vpop.f32.mrb[0].mxu0
  %2258 = vmatprep.mubr.bf16.mxu0 %v1261
  %2259 = vmatmul.mubr.bf16.gmra.mrb[0].mxu0 %v1260
  %v2260 = vpop.f32.mrb[0].mxu0
  %v2261 = vadd.f32 %v327, %v2260
  %v2262 = vpop.f32.mrb[0].mxu0
  %v2263 = vpop.f32.mrb[0].mxu0
  %v2264 = vadd.f32 %v327, %v2263
  %v2265 = vpop.f32.mrb[0].mxu0
  %2266 = vmatprep.mubr.bf16.mxu0 %v1263
  %2267 = vmatmul.mubr.bf16.gmra.mrb[0].mxu0 %v1262
  %v2268 = vpop.f32.mrb[0].mxu0
  %v2269 = vadd.f32 %v327, %v2268
  %v2270 = vpop.f32.mrb[0].mxu0
  %v2271 = vpop.f32.mrb[0].mxu0
  %v2272 = vadd.f32 %v327, %v2271
  %v2273 = vpop.f32.mrb[0].mxu0
  %2274 = vmatprep.mubr.bf16.mxu0 %v1265
  %2275 = vmatmul.mubr.bf16.gmra.mrb[0].mxu0 %v1264
  %v2276 = vpop.f32.mrb[0].mxu0
  %v2277 = vadd.f32 %v327, %v2276
  %v2278 = vpop.f32.mrb[0].mxu0
  %v2279 = vpop.f32.mrb[0].mxu0
  %v2280 = vadd.f32 %v327, %v2279
  %v2281 = vpop.f32.mrb[0].mxu0
  %2282 = vmatprep.mubr.bf16.mxu0 %v1267
  %2283 = vmatmul.mubr.bf16.gmra.mrb[0].mxu0 %v1266
  %v2284 = vpop.f32.mrb[0].mxu0
  %v2285 = vadd.f32 %v327, %v2284
  %v2286 = vpop.f32.mrb[0].mxu0
  %v2287 = vpop.f32.mrb[0].mxu0
  %v2288 = vadd.f32 %v327, %v2287
  %v2289 = vpop.f32.mrb[0].mxu0
  %2290 = vmatprep.mubr.bf16.mxu0 %v1269
  %2291 = vmatmul.mubr.bf16.gmra.mrb[0].mxu0 %v1268
  %v2292 = vpop.f32.mrb[0].mxu0
  %v2293 = vadd.f32 %v327, %v2292
  %v2294 = vpop.f32.mrb[0].mxu0
  %v2295 = vpop.f32.mrb[0].mxu0
  %v2296 = vadd.f32 %v327, %v2295
  %v2297 = vpop.f32.mrb[0].mxu0
  %2298 = vmatprep.mubr.bf16.mxu0 %v1271
  %2299 = vmatmul.mubr.bf16.gmra.mrb[0].mxu0 %v1270
  %v2300 = vpop.f32.mrb[0].mxu0
  %v2301 = vadd.f32 %v327, %v2300
  %v2302 = vpop.f32.mrb[0].mxu0
  %v2303 = vpop.f32.mrb[0].mxu0
  %v2304 = vadd.f32 %v327, %v2303
  %v2305 = vpop.f32.mrb[0].mxu0
  %2306 = vmatprep.mubr.bf16.mxu0 %v1273
  %2307 = vmatmul.mubr.bf16.gmra.mrb[0].mxu0 %v1272
  %v2308 = vpop.f32.mrb[0].mxu0
  %v2309 = vadd.f32 %v327, %v2308
  %v2310 = vpop.f32.mrb[0].mxu0
  %v2311 = vpop.f32.mrb[0].mxu0
  %v2312 = vadd.f32 %v327, %v2311
  %v2313 = vpop.f32.mrb[0].mxu0
  %2314 = vmatprep.mubr.bf16.mxu0 %v1275
  %2315 = vmatmul.mubr.bf16.gmra.mrb[0].mxu0 %v1274
  %v2316 = vpop.f32.mrb[0].mxu0
  %v2317 = vadd.f32 %v327, %v2316
  %v2318 = vpop.f32.mrb[0].mxu0
  %v2319 = vpop.f32.mrb[0].mxu0
  %v2320 = vadd.f32 %v327, %v2319
  %v2321 = vpop.f32.mrb[0].mxu0
  %2322 = vmatprep.mubr.bf16.mxu0 %v1277
  %2323 = vmatmul.mubr.bf16.gmra.mrb[0].mxu0 %v1276
  %v2324 = vpop.f32.mrb[0].mxu0
  %v2325 = vadd.f32 %v327, %v2324
  %v2326 = vpop.f32.mrb[0].mxu0
  %v2327 = vpop.f32.mrb[0].mxu0
  %v2328 = vadd.f32 %v327, %v2327
  %v2329 = vpop.f32.mrb[0].mxu0
  %2330 = vmatprep.mubr.bf16.mxu0 %v1279
  %2331 = vmatmul.mubr.bf16.gmra.mrb[0].mxu0 %v1278
  %v2332 = vpop.f32.mrb[0].mxu0
  %v2333 = vadd.f32 %v327, %v2332
  %v2334 = vpop.f32.mrb[0].mxu0
  %v2335 = vpop.f32.mrb[0].mxu0
  %v2336 = vadd.f32 %v327, %v2335
  %v2337 = vpop.f32.mrb[0].mxu0
  %2338 = vmatprep.mubr.bf16.mxu0 %v1281
  %2339 = vmatmul.mubr.bf16.gmra.mrb[0].mxu0 %v1280
  %v2340 = vpop.f32.mrb[0].mxu0
  %v2341 = vadd.f32 %v327, %v2340
  %v2342 = vpop.f32.mrb[0].mxu0
  %v2343 = vpop.f32.mrb[0].mxu0
  %v2344 = vadd.f32 %v327, %v2343
  %v2345 = vpop.f32.mrb[0].mxu0
  %2346 = vmatprep.mubr.bf16.mxu0 %v1283
  %2347 = vmatmul.mubr.bf16.gmra.mrb[0].mxu0 %v1282
  %v2348 = vpop.f32.mrb[0].mxu0
  %v2349 = vadd.f32 %v327, %v2348
  %v2350 = vpop.f32.mrb[0].mxu0
  %v2351 = vpop.f32.mrb[0].mxu0
  %v2352 = vadd.f32 %v327, %v2351
  %v2353 = vpop.f32.mrb[0].mxu0
  %2354 = vmatprep.mubr.bf16.mxu0 %v1285
  %2355 = vmatmul.mubr.bf16.gmra.mrb[0].mxu0 %v1284
  %v2356 = vpop.f32.mrb[0].mxu0
  %v2357 = vadd.f32 %v327, %v2356
  %v2358 = vpop.f32.mrb[0].mxu0
  %v2359 = vpop.f32.mrb[0].mxu0
  %v2360 = vadd.f32 %v327, %v2359
  %v2361 = vpop.f32.mrb[0].mxu0
  %2362 = vmatprep.mubr.bf16.mxu0 %v1287
  %2363 = vmatmul.mubr.bf16.gmra.mrb[0].mxu0 %v1286
  %v2364 = vpop.f32.mrb[0].mxu0
  %v2365 = vadd.f32 %v327, %v2364
  %v2366 = vpop.f32.mrb[0].mxu0
  %v2367 = vpop.f32.mrb[0].mxu0
  %v2368 = vadd.f32 %v327, %v2367
  %v2369 = vpop.f32.mrb[0].mxu0
  %2370 = vmatprep.mubr.bf16.mxu0 %v1289
  %2371 = vmatmul.mubr.bf16.gmra.mrb[0].mxu0 %v1288
  %v2372 = vpop.f32.mrb[0].mxu0
  %v2373 = vadd.f32 %v327, %v2372
  %v2374 = vpop.f32.mrb[0].mxu0
  %v2375 = vpop.f32.mrb[0].mxu0
  %v2376 = vadd.f32 %v327, %v2375
  %v2377 = vpop.f32.mrb[0].mxu0
  %2378 = vmatprep.mubr.bf16.mxu0 %v1291
  %2379 = vmatmul.mubr.bf16.gmra.mrb[0].mxu0 %v1290
  %v2380 = vpop.f32.mrb[0].mxu0
  %v2381 = vadd.f32 %v327, %v2380
  %v2382 = vpop.f32.mrb[0].mxu0
  %v2383 = vpop.f32.mrb[0].mxu0
  %v2384 = vadd.f32 %v327, %v2383
  %v2385 = vpop.f32.mrb[0].mxu0
  %2386 = vmatprep.mubr.bf16.mxu0 %v1293
  %2387 = vmatmul.mubr.bf16.gmra.mrb[0].mxu0 %v1292
  %v2388 = vpop.f32.mrb[0].mxu0
  %v2389 = vadd.f32 %v327, %v2388
  %v2390 = vpop.f32.mrb[0].mxu0
  %v2391 = vpop.f32.mrb[0].mxu0
  %v2392 = vadd.f32 %v327, %v2391
  %v2393 = vpop.f32.mrb[0].mxu0
  %2394 = vmatprep.mubr.bf16.mxu0 %v1295
  %2395 = vmatmul.mubr.bf16.gmra.mrb[0].mxu0 %v1294
  %v2396 = vpop.f32.mrb[0].mxu0
  %v2397 = vadd.f32 %v327, %v2396
  %v2398 = vpop.f32.mrb[0].mxu0
  %v2399 = vpop.f32.mrb[0].mxu0
  %v2400 = vadd.f32 %v327, %v2399
  %v2401 = vpop.f32.mrb[0].mxu0
  %2402 = vmatprep.mubr.bf16.mxu0 %v1297
  %2403 = vmatmul.mubr.bf16.gmra.mrb[0].mxu0 %v1296
  %v2404 = vpop.f32.mrb[0].mxu0
  %v2405 = vadd.f32 %v327, %v2404
  %v2406 = vpop.f32.mrb[0].mxu0
  %v2407 = vpop.f32.mrb[0].mxu0
  %v2408 = vadd.f32 %v327, %v2407
  %v2409 = vpop.f32.mrb[0].mxu0
  %2410 = vmatprep.mubr.bf16.mxu0 %v1299
  %2411 = vmatmul.mubr.bf16.gmra.mrb[0].mxu0 %v1298
  %v2412 = vpop.f32.mrb[0].mxu0
  %v2413 = vadd.f32 %v327, %v2412
  %v2414 = vpop.f32.mrb[0].mxu0
  %v2415 = vpop.f32.mrb[0].mxu0
  %v2416 = vadd.f32 %v327, %v2415
  %v2417 = vpop.f32.mrb[0].mxu0
  %2418 = vmatprep.mubr.bf16.mxu0 %v1301
  %2419 = vmatmul.mubr.bf16.gmra.mrb[0].mxu0 %v1300
  %v2420 = vpop.f32.mrb[0].mxu0
  %v2421 = vadd.f32 %v327, %v2420
  %v2422 = vpop.f32.mrb[0].mxu0
  %v2423 = vpop.f32.mrb[0].mxu0
  %v2424 = vadd.f32 %v327, %v2423
  %v2425 = vpop.f32.mrb[0].mxu0
  %2426 = vmatprep.mubr.bf16.mxu0 %v1303
  %2427 = vmatmul.mubr.bf16.gmra.mrb[0].mxu0 %v1302
  %v2428 = vpop.f32.mrb[0].mxu0
  %v2429 = vadd.f32 %v327, %v2428
  %v2430 = vpop.f32.mrb[0].mxu0
  %v2431 = vpop.f32.mrb[0].mxu0
  %v2432 = vadd.f32 %v327, %v2431
  %v2433 = vpop.f32.mrb[0].mxu0
  %2434 = vmatprep.mubr.bf16.mxu0 %v1305
  %2435 = vmatmul.mubr.bf16.gmra.mrb[0].mxu0 %v1304
  %v2436 = vpop.f32.mrb[0].mxu0
  %v2437 = vadd.f32 %v327, %v2436
  %v2438 = vpop.f32.mrb[0].mxu0
  %v2439 = vpop.f32.mrb[0].mxu0
  %v2440 = vadd.f32 %v327, %v2439
  %v2441 = vpop.f32.mrb[0].mxu0
  %2442 = vmatprep.mubr.bf16.mxu0 %v1307
  %2443 = vmatmul.mubr.bf16.gmra.mrb[0].mxu0 %v1306
  %v2444 = vpop.f32.mrb[0].mxu0
  %v2445 = vadd.f32 %v327, %v2444
  %v2446 = vpop.f32.mrb[0].mxu0
  %v2447 = vpop.f32.mrb[0].mxu0
  %v2448 = vadd.f32 %v327, %v2447
  %v2449 = vpop.f32.mrb[0].mxu0
  %2450 = vmatprep.mubr.bf16.mxu0 %v1309
  %2451 = vmatmul.mubr.bf16.gmra.mrb[0].mxu0 %v1308
  %v2452 = vpop.f32.mrb[0].mxu0
  %v2453 = vadd.f32 %v327, %v2452
  %v2454 = vpop.f32.mrb[0].mxu0
  %v2455 = vpop.f32.mrb[0].mxu0
  %v2456 = vadd.f32 %v327, %v2455
  %v2457 = vpop.f32.mrb[0].mxu0
  %2458 = vmatprep.mubr.bf16.mxu0 %v1311
  %2459 = vmatmul.mubr.bf16.gmra.mrb[0].mxu0 %v1310
  %v2460 = vpop.f32.mrb[0].mxu0
  %v2461 = vadd.f32 %v327, %v2460
  %v2462 = vpop.f32.mrb[0].mxu0
  %v2463 = vpop.f32.mrb[0].mxu0
  %v2464 = vadd.f32 %v327, %v2463
  %v2465 = vpop.f32.mrb[0].mxu0
  %2466 = vmatprep.mubr.bf16.mxu0 %v1313
  %2467 = vmatmul.mubr.bf16.gmra.mrb[0].mxu0 %v1312
  %v2468 = vpop.f32.mrb[0].mxu0
  %v2469 = vadd.f32 %v327, %v2468
  %v2470 = vpop.f32.mrb[0].mxu0
  %v2471 = vpop.f32.mrb[0].mxu0
  %v2472 = vadd.f32 %v327, %v2471
  %v2473 = vpop.f32.mrb[0].mxu0
  %2474 = vmatprep.mubr.bf16.mxu0 %v1315
  %2475 = vmatmul.mubr.bf16.gmra.mrb[0].mxu0 %v1314
  %v2476 = vpop.f32.mrb[0].mxu0
  %v2477 = vadd.f32 %v327, %v2476
  %v2478 = vpop.f32.mrb[0].mxu0
  %v2479 = vpop.f32.mrb[0].mxu0
  %v2480 = vadd.f32 %v327, %v2479
  %v2481 = vpop.f32.mrb[0].mxu0
  %2482 = vmatprep.mubr.bf16.mxu0 %v1317
  %2483 = vmatmul.mubr.bf16.gmra.mrb[0].mxu0 %v1316
  %v2484 = vpop.f32.mrb[0].mxu0
  %v2485 = vadd.f32 %v327, %v2484
  %v2486 = vpop.f32.mrb[0].mxu0
  %v2487 = vpop.f32.mrb[0].mxu0
  %v2488 = vadd.f32 %v327, %v2487
  %v2489 = vpop.f32.mrb[0].mxu0
  %2490 = vmatprep.mubr.bf16.mxu0 %v1319
  %2491 = vmatmul.mubr.bf16.gmra.mrb[0].mxu0 %v1318
  %v2492 = vpop.f32.mrb[0].mxu0
  %v2493 = vadd.f32 %v327, %v2492
  %v2494 = vpop.f32.mrb[0].mxu0
  %v2495 = vpop.f32.mrb[0].mxu0
  %v2496 = vadd.f32 %v327, %v2495
  %v2497 = vpop.f32.mrb[0].mxu0
  %2498 = vmatprep.mubr.bf16.mxu0 %v1321
  %2499 = vmatmul.mubr.bf16.gmra.mrb[0].mxu0 %v1320
  %v2500 = vpop.f32.mrb[0].mxu0
  %v2501 = vadd.f32 %v327, %v2500
  %v2502 = vpop.f32.mrb[0].mxu0
  %v2503 = vpop.f32.mrb[0].mxu0
  %v2504 = vadd.f32 %v327, %v2503
  %v2505 = vpop.f32.mrb[0].mxu0
  %2506 = vmatprep.mubr.bf16.mxu0 %v1323
  %2507 = vmatmul.mubr.bf16.gmra.mrb[0].mxu0 %v1322
  %v2508 = vpop.f32.mrb[0].mxu0
  %v2509 = vadd.f32 %v327, %v2508
  %v2510 = vpop.f32.mrb[0].mxu0
  %v2511 = vpop.f32.mrb[0].mxu0
  %v2512 = vadd.f32 %v327, %v2511
  %v2513 = vpop.f32.mrb[0].mxu0
  %2514 = vmatprep.mubr.bf16.mxu0 %v1325
  %2515 = vmatmul.mubr.bf16.gmra.mrb[0].mxu0 %v1324
  %v2516 = vpop.f32.mrb[0].mxu0
  %v2517 = vadd.f32 %v327, %v2516
  %v2518 = vpop.f32.mrb[0].mxu0
  %v2519 = vpop.f32.mrb[0].mxu0
  %v2520 = vadd.f32 %v327, %v2519
  %v2521 = vpop.f32.mrb[0].mxu0
  %2522 = vmatprep.mubr.bf16.mxu0 %v1327
  %2523 = vmatmul.mubr.bf16.gmra.mrb[0].mxu0 %v1326
  %v2524 = vpop.f32.mrb[0].mxu0
  %v2525 = vadd.f32 %v327, %v2524
  %v2526 = vpop.f32.mrb[0].mxu0
  %v2527 = vpop.f32.mrb[0].mxu0
  %v2528 = vadd.f32 %v327, %v2527
  %v2529 = vpop.f32.mrb[0].mxu0
  %2530 = vmatprep.mubr.bf16.mxu0 %v1329
  %2531 = vmatmul.mubr.bf16.gmra.mrb[0].mxu0 %v1328
  %v2532 = vpop.f32.mrb[0].mxu0
  %v2533 = vadd.f32 %v327, %v2532
  %v2534 = vpop.f32.mrb[0].mxu0
  %v2535 = vpop.f32.mrb[0].mxu0
  %v2536 = vadd.f32 %v327, %v2535
  %v2537 = vpop.f32.mrb[0].mxu0
  %2538 = vmatprep.mubr.bf16.mxu0 %v1331
  %2539 = vmatmul.mubr.bf16.gmra.mrb[0].mxu0 %v1330
  %v2540 = vpop.f32.mrb[0].mxu0
  %v2541 = vadd.f32 %v327, %v2540
  %v2542 = vpop.f32.mrb[0].mxu0
  %v2543 = vpop.f32.mrb[0].mxu0
  %v2544 = vadd.f32 %v327, %v2543
  %v2545 = vpop.f32.mrb[0].mxu0
  %2546 = vmatprep.mubr.bf16.mxu0 %v1333
  %2547 = vmatmul.mubr.bf16.gmra.mrb[0].mxu0 %v1332
  %v2548 = vpop.f32.mrb[0].mxu0
  %v2549 = vadd.f32 %v327, %v2548
  %v2550 = vpop.f32.mrb[0].mxu0
  %v2551 = vpop.f32.mrb[0].mxu0
  %v2552 = vadd.f32 %v327, %v2551
  %v2553 = vpop.f32.mrb[0].mxu0
  %2554 = vmatprep.mubr.bf16.mxu0 %v1335
  %2555 = vmatmul.mubr.bf16.gmra.mrb[0].mxu0 %v1334
  %v2556 = vpop.f32.mrb[0].mxu0
  %v2557 = vadd.f32 %v327, %v2556
  %v2558 = vpop.f32.mrb[0].mxu0
  %v2559 = vpop.f32.mrb[0].mxu0
  %v2560 = vadd.f32 %v327, %v2559
  %v2561 = vpop.f32.mrb[0].mxu0
  %2562 = vmatprep.mubr.bf16.mxu0 %v1337
  %2563 = vmatmul.mubr.bf16.gmra.mrb[0].mxu0 %v1336
  %v2564 = vpop.f32.mrb[0].mxu0
  %v2565 = vadd.f32 %v327, %v2564
  %v2566 = vpop.f32.mrb[0].mxu0
  %v2567 = vpop.f32.mrb[0].mxu0
  %v2568 = vadd.f32 %v327, %v2567
  %v2569 = vpop.f32.mrb[0].mxu0
  %2570 = vmatprep.mubr.bf16.mxu0 %v1339
  %2571 = vmatmul.mubr.bf16.gmra.mrb[0].mxu0 %v1338
  %v2572 = vpop.f32.mrb[0].mxu0
  %v2573 = vadd.f32 %v327, %v2572
  %v2574 = vpop.f32.mrb[0].mxu0
  %v2575 = vpop.f32.mrb[0].mxu0
  %v2576 = vadd.f32 %v327, %v2575
  %v2577 = vpop.f32.mrb[0].mxu0
  %2578 = vmatprep.mubr.bf16.mxu0 %v1341
  %2579 = vmatmul.mubr.bf16.gmra.mrb[0].mxu0 %v1340
  %v2580 = vpop.f32.mrb[0].mxu0
  %v2581 = vadd.f32 %v327, %v2580
  %v2582 = vpop.f32.mrb[0].mxu0
  %v2583 = vpop.f32.mrb[0].mxu0
  %v2584 = vadd.f32 %v327, %v2583
  %v2585 = vpop.f32.mrb[0].mxu0
  %2586 = vmatprep.mubr.bf16.mxu0 %v1343
  %2587 = vmatmul.mubr.bf16.gmra.mrb[0].mxu0 %v1342
  %v2588 = vpop.f32.mrb[0].mxu0
  %v2589 = vadd.f32 %v327, %v2588
  %v2590 = vpop.f32.mrb[0].mxu0
  %v2591 = vpop.f32.mrb[0].mxu0
  %v2592 = vadd.f32 %v327, %v2591
  %v2593 = vpop.f32.mrb[0].mxu0
  %2594 = vmatprep.mubr.bf16.mxu0 %v1345
  %2595 = vmatmul.mubr.bf16.gmra.mrb[0].mxu0 %v1344
  %v2596 = vpop.f32.mrb[0].mxu0
  %v2597 = vadd.f32 %v327, %v2596
  %v2598 = vpop.f32.mrb[0].mxu0
  %v2599 = vpop.f32.mrb[0].mxu0
  %v2600 = vadd.f32 %v327, %v2599
  %v2601 = vpop.f32.mrb[0].mxu0
  %2602 = vmatprep.mubr.bf16.mxu0 %v1347
  %2603 = vmatmul.mubr.bf16.gmra.mrb[0].mxu0 %v1346
  %v2604 = vpop.f32.mrb[0].mxu0
  %v2605 = vadd.f32 %v327, %v2604
  %v2606 = vpop.f32.mrb[0].mxu0
  %v2607 = vpop.f32.mrb[0].mxu0
  %v2608 = vadd.f32 %v327, %v2607
  %v2609 = vpop.f32.mrb[0].mxu0
  %2610 = vmatprep.mubr.bf16.mxu0 %v1349
  %2611 = vmatmul.mubr.bf16.gmra.mrb[0].mxu0 %v1348
  %v2612 = vpop.f32.mrb[0].mxu0
  %v2613 = vadd.f32 %v327, %v2612
  %v2614 = vpop.f32.mrb[0].mxu0
  %v2615 = vpop.f32.mrb[0].mxu0
  %v2616 = vadd.f32 %v327, %v2615
  %v2617 = vpop.f32.mrb[0].mxu0
  %2618 = vmatprep.mubr.bf16.mxu0 %v1351
  %2619 = vmatmul.mubr.bf16.gmra.mrb[0].mxu0 %v1350
  %v2620 = vpop.f32.mrb[0].mxu0
  %v2621 = vadd.f32 %v327, %v2620
  %v2622 = vpop.f32.mrb[0].mxu0
  %v2623 = vpop.f32.mrb[0].mxu0
  %v2624 = vadd.f32 %v327, %v2623
  %v2625 = vpop.f32.mrb[0].mxu0
  %2626 = vmatprep.mubr.bf16.mxu0 %v1353
  %2627 = vmatmul.mubr.bf16.gmra.mrb[0].mxu0 %v1352
  %v2628 = vpop.f32.mrb[0].mxu0
  %v2629 = vadd.f32 %v327, %v2628
  %v2630 = vpop.f32.mrb[0].mxu0
  %v2631 = vpop.f32.mrb[0].mxu0
  %v2632 = vadd.f32 %v327, %v2631
  %v2633 = vpop.f32.mrb[0].mxu0
  %2634 = vmatprep.mubr.bf16.mxu0 %v1355
  %2635 = vmatmul.mubr.bf16.gmra.mrb[0].mxu0 %v1354
  %v2636 = vpop.f32.mrb[0].mxu0
  %v2637 = vadd.f32 %v327, %v2636
  %v2638 = vpop.f32.mrb[0].mxu0
  %v2639 = vpop.f32.mrb[0].mxu0
  %v2640 = vadd.f32 %v327, %v2639
  %v2641 = vpop.f32.mrb[0].mxu0
  %2642 = vmatprep.mubr.bf16.mxu0 %v1357
  %2643 = vmatmul.mubr.bf16.gmra.mrb[0].mxu0 %v1356
  %v2644 = vpop.f32.mrb[0].mxu0
  %v2645 = vadd.f32 %v327, %v2644
  %v2646 = vpop.f32.mrb[0].mxu0
  %v2647 = vpop.f32.mrb[0].mxu0
  %v2648 = vadd.f32 %v327, %v2647
  %v2649 = vpop.f32.mrb[0].mxu0
  %2650 = vmatprep.mubr.bf16.mxu0 %v1359
  %2651 = vmatmul.mubr.bf16.gmra.mrb[0].mxu0 %v1358
  %v2652 = vpop.f32.mrb[0].mxu0
  %v2653 = vadd.f32 %v327, %v2652
  %v2654 = vpop.f32.mrb[0].mxu0
  %v2655 = vpop.f32.mrb[0].mxu0
  %v2656 = vadd.f32 %v327, %v2655
  %v2657 = vpop.f32.mrb[0].mxu0
  %2658 = vmatprep.mubr.bf16.mxu0 %v1361
  %2659 = vmatmul.mubr.bf16.gmra.mrb[0].mxu0 %v1360
  %v2660 = vpop.f32.mrb[0].mxu0
  %v2661 = vadd.f32 %v327, %v2660
  %v2662 = vpop.f32.mrb[0].mxu0
  %v2663 = vpop.f32.mrb[0].mxu0
  %v2664 = vadd.f32 %v327, %v2663
  %v2665 = vpop.f32.mrb[0].mxu0
  %2666 = vmatprep.mubr.bf16.mxu0 %v1363
  %2667 = vmatmul.mubr.bf16.gmra.mrb[0].mxu0 %v1362
  %v2668 = vpop.f32.mrb[0].mxu0
  %v2669 = vadd.f32 %v327, %v2668
  %v2670 = vpop.f32.mrb[0].mxu0
  %v2671 = vpop.f32.mrb[0].mxu0
  %v2672 = vadd.f32 %v327, %v2671
  %v2673 = vpop.f32.mrb[0].mxu0
  %2674 = vmatprep.mubr.bf16.mxu0 %v1365
  %2675 = vmatmul.mubr.bf16.gmra.mrb[0].mxu0 %v1364
  %v2676 = vpop.f32.mrb[0].mxu0
  %v2677 = vadd.f32 %v327, %v2676
  %v2678 = vpop.f32.mrb[0].mxu0
  %v2679 = vpop.f32.mrb[0].mxu0
  %v2680 = vadd.f32 %v327, %v2679
  %v2681 = vpop.f32.mrb[0].mxu0
  %2682 = vmatprep.mubr.bf16.mxu0 %v1367
  %2683 = vmatmul.mubr.bf16.gmra.mrb[0].mxu0 %v1366
  %v2684 = vpop.f32.mrb[0].mxu0
  %v2685 = vadd.f32 %v327, %v2684
  %v2686 = vpop.f32.mrb[0].mxu0
  %v2687 = vpop.f32.mrb[0].mxu0
  %v2688 = vadd.f32 %v327, %v2687
  %v2689 = vpop.f32.mrb[0].mxu0
  %2690 = vmatprep.mubr.bf16.mxu0 %v1369
  %2691 = vmatmul.mubr.bf16.gmra.mrb[0].mxu0 %v1368
  %v2692 = vpop.f32.mrb[0].mxu0
  %v2693 = vadd.f32 %v327, %v2692
  %v2694 = vpop.f32.mrb[0].mxu0
  %v2695 = vpop.f32.mrb[0].mxu0
  %v2696 = vadd.f32 %v327, %v2695
  %v2697 = vpop.f32.mrb[0].mxu0
  %2698 = vmatprep.mubr.bf16.mxu0 %v1371
  %2699 = vmatmul.mubr.bf16.gmra.mrb[0].mxu0 %v1370
  %v2700 = vpop.f32.mrb[0].mxu0
  %v2701 = vadd.f32 %v327, %v2700
  %v2702 = vpop.f32.mrb[0].mxu0
  %v2703 = vpop.f32.mrb[0].mxu0
  %v2704 = vadd.f32 %v327, %v2703
  %v2705 = vpop.f32.mrb[0].mxu0
  %2706 = vmatprep.mubr.bf16.mxu0 %v1373
  %2707 = vmatmul.mubr.bf16.gmra.mrb[0].mxu0 %v1372
  %v2708 = vpop.f32.mrb[0].mxu0
  %v2709 = vadd.f32 %v327, %v2708
  %v2710 = vpop.f32.mrb[0].mxu0
  %v2711 = vpop.f32.mrb[0].mxu0
  %v2712 = vadd.f32 %v327, %v2711
  %v2713 = vpop.f32.mrb[0].mxu0
  %2714 = vmatprep.mubr.bf16.mxu0 %v1375
  %2715 = vmatmul.mubr.bf16.gmra.mrb[0].mxu0 %v1374
  %v2716 = vpop.f32.mrb[0].mxu0
  %v2717 = vadd.f32 %v327, %v2716
  %v2718 = vpop.f32.mrb[0].mxu0
  %v2719 = vpop.f32.mrb[0].mxu0
  %v2720 = vadd.f32 %v327, %v2719
  %v2721 = vpop.f32.mrb[0].mxu0
  %2722 = vmatprep.mubr.bf16.mxu0 %v1377
  %2723 = vmatmul.mubr.bf16.gmra.mrb[0].mxu0 %v1376
  %v2724 = vpop.f32.mrb[0].mxu0
  %v2725 = vadd.f32 %v327, %v2724
  %v2726 = vpop.f32.mrb[0].mxu0
  %v2727 = vpop.f32.mrb[0].mxu0
  %v2728 = vadd.f32 %v327, %v2727
  %v2729 = vpop.f32.mrb[0].mxu0
  %2730 = vmatprep.mubr.bf16.mxu0 %v1379
  %2731 = vmatmul.mubr.bf16.gmra.mrb[0].mxu0 %v1378
  %v2732 = vpop.f32.mrb[0].mxu0
  %v2733 = vadd.f32 %v327, %v2732
  %v2734 = vpop.f32.mrb[0].mxu0
  %v2735 = vpop.f32.mrb[0].mxu0
  %v2736 = vadd.f32 %v327, %v2735
  %v2737 = vpop.f32.mrb[0].mxu0
  %2738 = vmatprep.mubr.bf16.mxu0 %v1381
  %2739 = vmatmul.mubr.bf16.gmra.mrb[0].mxu0 %v1380
  %v2740 = vpop.f32.mrb[0].mxu0
  %v2741 = vadd.f32 %v327, %v2740
  %v2742 = vpop.f32.mrb[0].mxu0
  %v2743 = vpop.f32.mrb[0].mxu0
  %v2744 = vadd.f32 %v327, %v2743
  %v2745 = vpop.f32.mrb[0].mxu0
  %2746 = vmatprep.mubr.bf16.mxu0 %v1383
  %2747 = vmatmul.mubr.bf16.gmra.mrb[0].mxu0 %v1382
  %v2748 = vpop.f32.mrb[0].mxu0
  %v2749 = vadd.f32 %v327, %v2748
  %v2750 = vpop.f32.mrb[0].mxu0
  %v2751 = vpop.f32.mrb[0].mxu0
  %v2752 = vadd.f32 %v327, %v2751
  %v2753 = vpop.f32.mrb[0].mxu0
  %2754 = vmatprep.mubr.bf16.mxu0 %v1385
  %2755 = vmatmul.mubr.bf16.gmra.mrb[0].mxu0 %v1384
  %v2756 = vpop.f32.mrb[0].mxu0
  %v2757 = vadd.f32 %v327, %v2756
  %v2758 = vpop.f32.mrb[0].mxu0
  %v2759 = vpop.f32.mrb[0].mxu0
  %v2760 = vadd.f32 %v327, %v2759
  %v2761 = vpop.f32.mrb[0].mxu0
  %2762 = vmatprep.mubr.bf16.mxu0 %v1387
  %2763 = vmatmul.mubr.bf16.gmra.mrb[0].mxu0 %v1386
  %v2764 = vpop.f32.mrb[0].mxu0
  %v2765 = vadd.f32 %v327, %v2764
  %v2766 = vpop.f32.mrb[0].mxu0
  %v2767 = vpop.f32.mrb[0].mxu0
  %v2768 = vadd.f32 %v327, %v2767
  %v2769 = vpop.f32.mrb[0].mxu0
  %2770 = vmatprep.mubr.bf16.mxu0 %v1389
  %2771 = vmatmul.mubr.bf16.gmra.mrb[0].mxu0 %v1388
  %v2772 = vpop.f32.mrb[0].mxu0
  %v2773 = vadd.f32 %v327, %v2772
  %v2774 = vpop.f32.mrb[0].mxu0
  %v2775 = vpop.f32.mrb[0].mxu0
  %v2776 = vadd.f32 %v327, %v2775
  %v2777 = vpop.f32.mrb[0].mxu0
  %2778 = vmatprep.mubr.bf16.mxu0 %v1391
  %2779 = vmatmul.mubr.bf16.gmra.mrb[0].mxu0 %v1390
  %v2780 = vpop.f32.mrb[0].mxu0
  %v2781 = vadd.f32 %v327, %v2780
  %v2782 = vpop.f32.mrb[0].mxu0
  %v2783 = vpop.f32.mrb[0].mxu0
  %v2784 = vadd.f32 %v327, %v2783
  %v2785 = vpop.f32.mrb[0].mxu0
  %2786 = vmatprep.mubr.bf16.mxu0 %v1393
  %2787 = vmatmul.mubr.bf16.gmra.mrb[0].mxu0 %v1392
  %v2788 = vpop.f32.mrb[0].mxu0
  %v2789 = vadd.f32 %v327, %v2788
  %v2790 = vpop.f32.mrb[0].mxu0
  %v2791 = vpop.f32.mrb[0].mxu0
  %v2792 = vadd.f32 %v327, %v2791
  %v2793 = vpop.f32.mrb[0].mxu0
  %2794 = vmatprep.mubr.bf16.mxu0 %v1395
  %2795 = vmatmul.mubr.bf16.gmra.mrb[0].mxu0 %v1394
  %v2796 = vpop.f32.mrb[0].mxu0
  %v2797 = vadd.f32 %v327, %v2796
  %v2798 = vpop.f32.mrb[0].mxu0
  %v2799 = vpop.f32.mrb[0].mxu0
  %v2800 = vadd.f32 %v327, %v2799
  %v2801 = vpop.f32.mrb[0].mxu0
  %2802 = vmatprep.mubr.bf16.mxu0 %v1397
  %2803 = vmatmul.mubr.bf16.gmra.mrb[0].mxu0 %v1396
  %v2804 = vpop.f32.mrb[0].mxu0
  %v2805 = vadd.f32 %v327, %v2804
  %v2806 = vpop.f32.mrb[0].mxu0
  %v2807 = vpop.f32.mrb[0].mxu0
  %v2808 = vadd.f32 %v327, %v2807
  %v2809 = vpop.f32.mrb[0].mxu0
  %2810 = vmatprep.mubr.bf16.mxu0 %v1399
  %2811 = vmatmul.mubr.bf16.gmra.mrb[0].mxu0 %v1398
  %v2812 = vpop.f32.mrb[0].mxu0
  %v2813 = vadd.f32 %v327, %v2812
  %v2814 = vpop.f32.mrb[0].mxu0
  %v2815 = vpop.f32.mrb[0].mxu0
  %v2816 = vadd.f32 %v327, %v2815
  %v2817 = vpop.f32.mrb[0].mxu0
  %2818 = vmatprep.mubr.bf16.mxu0 %v1401
  %2819 = vmatmul.mubr.bf16.gmra.mrb[0].mxu0 %v1400
  %v2820 = vpop.f32.mrb[0].mxu0
  %v2821 = vadd.f32 %v327, %v2820
  %v2822 = vpop.f32.mrb[0].mxu0
  %v2823 = vpop.f32.mrb[0].mxu0
  %v2824 = vadd.f32 %v327, %v2823
  %v2825 = vpop.f32.mrb[0].mxu0
  %2826 = vmatprep.mubr.bf16.mxu0 %v1403
  %2827 = vmatmul.mubr.bf16.gmra.mrb[0].mxu0 %v1402
  %v2828 = vpop.f32.mrb[0].mxu0
  %v2829 = vadd.f32 %v327, %v2828
  %v2830 = vpop.f32.mrb[0].mxu0
  %v2831 = vpop.f32.mrb[0].mxu0
  %v2832 = vadd.f32 %v327, %v2831
  %v2833 = vpop.f32.mrb[0].mxu0
  %2834 = vmatprep.mubr.bf16.mxu0 %v1405
  %2835 = vmatmul.mubr.bf16.gmra.mrb[0].mxu0 %v1404
  %v2836 = vpop.f32.mrb[0].mxu0
  %v2837 = vadd.f32 %v327, %v2836
  %v2838 = vpop.f32.mrb[0].mxu0
  %v2839 = vpop.f32.mrb[0].mxu0
  %v2840 = vadd.f32 %v327, %v2839
  %v2841 = vpop.f32.mrb[0].mxu0
  %2842 = vmatprep.mubr.bf16.mxu0 %v1407
  %2843 = vmatmul.mubr.bf16.gmra.mrb[0].mxu0 %v1406
  %v2844 = vpop.f32.mrb[0].mxu0
  %v2845 = vadd.f32 %v327, %v2844
  %v2846 = vpop.f32.mrb[0].mxu0
  %v2847 = vpop.f32.mrb[0].mxu0
  %v2848 = vadd.f32 %v327, %v2847
  %v2849 = vpop.f32.mrb[0].mxu0
  %2850 = vmatprep.mubr.bf16.mxu0 %v1409
  %2851 = vmatmul.mubr.bf16.gmra.mrb[0].mxu0 %v1408
  %v2852 = vpop.f32.mrb[0].mxu0
  %v2853 = vadd.f32 %v327, %v2852
  %v2854 = vpop.f32.mrb[0].mxu0
  %v2855 = vpop.f32.mrb[0].mxu0
  %v2856 = vadd.f32 %v327, %v2855
  %v2857 = vpop.f32.mrb[0].mxu0
  %2858 = vmatprep.mubr.bf16.mxu0 %v1411
  %2859 = vmatmul.mubr.bf16.gmra.mrb[0].mxu0 %v1410
  %v2860 = vpop.f32.mrb[0].mxu0
  %v2861 = vadd.f32 %v327, %v2860
  %v2862 = vpop.f32.mrb[0].mxu0
  %v2863 = vpop.f32.mrb[0].mxu0
  %v2864 = vadd.f32 %v327, %v2863
  %v2865 = vpop.f32.mrb[0].mxu0
  %2866 = vmatprep.mubr.bf16.mxu0 %v1413
  %2867 = vmatmul.mubr.bf16.gmra.mrb[0].mxu0 %v1412
  %v2868 = vpop.f32.mrb[0].mxu0
  %v2869 = vadd.f32 %v327, %v2868
  %v2870 = vpop.f32.mrb[0].mxu0
  %v2871 = vpop.f32.mrb[0].mxu0
  %v2872 = vadd.f32 %v327, %v2871
  %v2873 = vpop.f32.mrb[0].mxu0
  %2874 = vmatprep.mubr.bf16.mxu0 %v1415
  %2875 = vmatmul.mubr.bf16.gmra.mrb[0].mxu0 %v1414
  %v2876 = vpop.f32.mrb[0].mxu0
  %v2877 = vadd.f32 %v327, %v2876
  %v2878 = vpop.f32.mrb[0].mxu0
  %v2879 = vpop.f32.mrb[0].mxu0
  %v2880 = vadd.f32 %v327, %v2879
  %v2881 = vpop.f32.mrb[0].mxu0
  %2882 = vmatprep.mubr.bf16.mxu0 %v1417
  %2883 = vmatmul.mubr.bf16.gmra.mrb[0].mxu0 %v1416
  %v2884 = vpop.f32.mrb[0].mxu0
  %v2885 = vadd.f32 %v327, %v2884
  %v2886 = vpop.f32.mrb[0].mxu0
  %v2887 = vpop.f32.mrb[0].mxu0
  %v2888 = vadd.f32 %v327, %v2887
  %v2889 = vpop.f32.mrb[0].mxu0
  %2890 = vmatprep.mubr.bf16.mxu0 %v1419
  %2891 = vmatmul.mubr.bf16.gmra.mrb[0].mxu0 %v1418
  %v2892 = vpop.f32.mrb[0].mxu0
  %v2893 = vadd.f32 %v327, %v2892
  %v2894 = vpop.f32.mrb[0].mxu0
  %v2895 = vpop.f32.mrb[0].mxu0
  %v2896 = vadd.f32 %v327, %v2895
  %v2897 = vpop.f32.mrb[0].mxu0
  %2898 = vmatprep.mubr.bf16.mxu0 %v1421
  %2899 = vmatmul.mubr.bf16.gmra.mrb[0].mxu0 %v1420
  %v2900 = vpop.f32.mrb[0].mxu0
  %v2901 = vadd.f32 %v327, %v2900
  %v2902 = vpop.f32.mrb[0].mxu0
  %v2903 = vpop.f32.mrb[0].mxu0
  %v2904 = vadd.f32 %v327, %v2903
  %v2905 = vpop.f32.mrb[0].mxu0
  %2906 = vmatprep.mubr.bf16.mxu0 %v1423
  %2907 = vmatmul.mubr.bf16.gmra.mrb[0].mxu0 %v1422
  %v2908 = vpop.f32.mrb[0].mxu0
  %v2909 = vadd.f32 %v327, %v2908
  %v2910 = vpop.f32.mrb[0].mxu0
  %v2911 = vpop.f32.mrb[0].mxu0
  %v2912 = vadd.f32 %v327, %v2911
  %v2913 = vpop.f32.mrb[0].mxu0
  %2914 = vmatprep.mubr.bf16.mxu0 %v1425
  %2915 = vmatmul.mubr.bf16.gmra.mrb[0].mxu0 %v1424
  %v2916 = vpop.f32.mrb[0].mxu0
  %v2917 = vadd.f32 %v327, %v2916
  %v2918 = vpop.f32.mrb[0].mxu0
  %v2919 = vpop.f32.mrb[0].mxu0
  %v2920 = vadd.f32 %v327, %v2919
  %v2921 = vpop.f32.mrb[0].mxu0
  %2922 = vmatprep.mubr.bf16.mxu0 %v1427
  %2923 = vmatmul.mubr.bf16.gmra.mrb[0].mxu0 %v1426
  %v2924 = vpop.f32.mrb[0].mxu0
  %v2925 = vadd.f32 %v327, %v2924
  %v2926 = vpop.f32.mrb[0].mxu0
  %v2927 = vpop.f32.mrb[0].mxu0
  %v2928 = vadd.f32 %v327, %v2927
  %v2929 = vpop.f32.mrb[0].mxu0
  %2930 = vmatprep.mubr.bf16.mxu0 %v1429
  %2931 = vmatmul.mubr.bf16.gmra.mrb[0].mxu0 %v1428
  %v2932 = vpop.f32.mrb[0].mxu0
  %v2933 = vadd.f32 %v327, %v2932
  %v2934 = vpop.f32.mrb[0].mxu0
  %v2935 = vpop.f32.mrb[0].mxu0
  %v2936 = vpop.f32.mrb[0].mxu0
  %2937 = vdwg.mxu0
  %vm2938 = vcmp.ge.f32.partialorder %v1837, 0.0
  %vm2939 = vcmp.ge.f32.partialorder %v1840, 0.0
  %vm2940 = vcmp.ge.f32.partialorder %v1845, 0.0
  %vm2941 = vcmp.ge.f32.partialorder %v1848, 0.0
  %vm2942 = vcmp.ge.f32.partialorder %v1853, 0.0
  %vm2943 = vcmp.ge.f32.partialorder %v1856, 0.0
  %vm2944 = vcmp.ge.f32.partialorder %v1861, 0.0
  %vm2945 = vcmp.ge.f32.partialorder %v1864, 0.0
  %vm2946 = vcmp.ge.f32.partialorder %v1869, 0.0
  %vm2947 = vcmp.ge.f32.partialorder %v1872, 0.0
  %vm2948 = vcmp.ge.f32.partialorder %v1877, 0.0
  %vm2949 = vcmp.ge.f32.partialorder %v1880, 0.0
  %vm2950 = vcmp.ge.f32.partialorder %v1885, 0.0
  %vm2951 = vcmp.ge.f32.partialorder %v1888, 0.0
  %vm2952 = vcmp.ge.f32.partialorder %v1893, 0.0
  %vm2953 = vcmp.ge.f32.partialorder %v1896, 0.0
  %vm2954 = vcmp.ge.f32.partialorder %v1901, 0.0
  %vm2955 = vcmp.ge.f32.partialorder %v1904, 0.0
  %vm2956 = vcmp.ge.f32.partialorder %v1909, 0.0
  %vm2957 = vcmp.ge.f32.partialorder %v1912, 0.0
  %vm2958 = vcmp.ge.f32.partialorder %v1917, 0.0
  %vm2959 = vcmp.ge.f32.partialorder %v1920, 0.0
  %vm2960 = vcmp.ge.f32.partialorder %v1925, 0.0
  %vm2961 = vcmp.ge.f32.partialorder %v1928, 0.0
  %vm2962 = vcmp.ge.f32.partialorder %v1933, 0.0
  %vm2963 = vcmp.ge.f32.partialorder %v1936, 0.0
  %vm2964 = vcmp.ge.f32.partialorder %v1941, 0.0
  %vm2965 = vcmp.ge.f32.partialorder %v1944, 0.0
  %vm2966 = vcmp.ge.f32.partialorder %v1949, 0.0
  %vm2967 = vcmp.ge.f32.partialorder %v1952, 0.0
  %vm2968 = vcmp.ge.f32.partialorder %v1957, 0.0
  %vm2969 = vcmp.ge.f32.partialorder %v1960, 0.0
  %vm2970 = vcmp.ge.f32.partialorder %v1965, 0.0
  %vm2971 = vcmp.ge.f32.partialorder %v1968, 0.0
  %vm2972 = vcmp.ge.f32.partialorder %v1973, 0.0
  %vm2973 = vcmp.ge.f32.partialorder %v1976, 0.0
  %vm2974 = vcmp.ge.f32.partialorder %v1981, 0.0
  %vm2975 = vcmp.ge.f32.partialorder %v1984, 0.0
  %vm2976 = vcmp.ge.f32.partialorder %v1989, 0.0
  %vm2977 = vcmp.ge.f32.partialorder %v1992, 0.0
  %vm2978 = vcmp.ge.f32.partialorder %v1997, 0.0
  %vm2979 = vcmp.ge.f32.partialorder %v2000, 0.0
  %vm2980 = vcmp.ge.f32.partialorder %v2005, 0.0
  %vm2981 = vcmp.ge.f32.partialorder %v2008, 0.0
  %vm2982 = vcmp.ge.f32.partialorder %v2013, 0.0
  %vm2983 = vcmp.ge.f32.partialorder %v2016, 0.0
  %vm2984 = vcmp.ge.f32.partialorder %v2021, 0.0
  %vm2985 = vcmp.ge.f32.partialorder %v2024, 0.0
  %vm2986 = vcmp.ge.f32.partialorder %v2029, 0.0
  %vm2987 = vcmp.ge.f32.partialorder %v2032, 0.0
  %vm2988 = vcmp.ge.f32.partialorder %v2037, 0.0
  %vm2989 = vcmp.ge.f32.partialorder %v2040, 0.0
  %vm2990 = vcmp.ge.f32.partialorder %v2045, 0.0
  %vm2991 = vcmp.ge.f32.partialorder %v2048, 0.0
  %vm2992 = vcmp.ge.f32.partialorder %v2053, 0.0
  %vm2993 = vcmp.ge.f32.partialorder %v2056, 0.0
  %vm2994 = vcmp.ge.f32.partialorder %v2061, 0.0
  %vm2995 = vcmp.ge.f32.partialorder %v2064, 0.0
  %vm2996 = vcmp.ge.f32.partialorder %v2069, 0.0
  %vm2997 = vcmp.ge.f32.partialorder %v2072, 0.0
  %vm2998 = vcmp.ge.f32.partialorder %v2077, 0.0
  %vm2999 = vcmp.ge.f32.partialorder %v2080, 0.0
  %vm3000 = vcmp.ge.f32.partialorder %v2085, 0.0
  %vm3001 = vcmp.ge.f32.partialorder %v2088, 0.0
  %vm3002 = vcmp.ge.f32.partialorder %v2093, 0.0
  %vm3003 = vcmp.ge.f32.partialorder %v2096, 0.0
  %vm3004 = vcmp.ge.f32.partialorder %v2101, 0.0
  %vm3005 = vcmp.ge.f32.partialorder %v2104, 0.0
  %vm3006 = vcmp.ge.f32.partialorder %v2109, 0.0
  %vm3007 = vcmp.ge.f32.partialorder %v2112, 0.0
  %vm3008 = vcmp.ge.f32.partialorder %v2117, 0.0
  %vm3009 = vcmp.ge.f32.partialorder %v2120, 0.0
  %vm3010 = vcmp.ge.f32.partialorder %v2125, 0.0
  %vm3011 = vcmp.ge.f32.partialorder %v2128, 0.0
  %vm3012 = vcmp.ge.f32.partialorder %v2133, 0.0
  %vm3013 = vcmp.ge.f32.partialorder %v2136, 0.0
  %vm3014 = vcmp.ge.f32.partialorder %v2141, 0.0
  %vm3015 = vcmp.ge.f32.partialorder %v2144, 0.0
  %vm3016 = vcmp.ge.f32.partialorder %v2149, 0.0
  %vm3017 = vcmp.ge.f32.partialorder %v2152, 0.0
  %vm3018 = vcmp.ge.f32.partialorder %v2157, 0.0
  %vm3019 = vcmp.ge.f32.partialorder %v2160, 0.0
  %vm3020 = vcmp.ge.f32.partialorder %v2165, 0.0
  %vm3021 = vcmp.ge.f32.partialorder %v2168, 0.0
  %vm3022 = vcmp.ge.f32.partialorder %v2173, 0.0
  %vm3023 = vcmp.ge.f32.partialorder %v2176, 0.0
  %vm3024 = vcmp.ge.f32.partialorder %v2181, 0.0
  %vm3025 = vcmp.ge.f32.partialorder %v2184, 0.0
  %vm3026 = vcmp.ge.f32.partialorder %v2189, 0.0
  %vm3027 = vcmp.ge.f32.partialorder %v2192, 0.0
  %vm3028 = vcmp.ge.f32.partialorder %v2197, 0.0
  %vm3029 = vcmp.ge.f32.partialorder %v2200, 0.0
  %vm3030 = vcmp.ge.f32.partialorder %v2205, 0.0
  %vm3031 = vcmp.ge.f32.partialorder %v2208, 0.0
  %vm3032 = vcmp.ge.f32.partialorder %v2213, 0.0
  %vm3033 = vcmp.ge.f32.partialorder %v2216, 0.0
  %vm3034 = vcmp.ge.f32.partialorder %v2221, 0.0
  %vm3035 = vcmp.ge.f32.partialorder %v2224, 0.0
  %vm3036 = vcmp.ge.f32.partialorder %v2229, 0.0
  %vm3037 = vcmp.ge.f32.partialorder %v2232, 0.0
  %vm3038 = vcmp.ge.f32.partialorder %v2237, 0.0
  %vm3039 = vcmp.ge.f32.partialorder %v2240, 0.0
  %vm3040 = vcmp.ge.f32.partialorder %v2245, 0.0
  %vm3041 = vcmp.ge.f32.partialorder %v2248, 0.0
  %vm3042 = vcmp.ge.f32.partialorder %v2253, 0.0
  %vm3043 = vcmp.ge.f32.partialorder %v2256, 0.0
  %vm3044 = vcmp.ge.f32.partialorder %v2261, 0.0
  %vm3045 = vcmp.ge.f32.partialorder %v2264, 0.0
  %vm3046 = vcmp.ge.f32.partialorder %v2269, 0.0
  %vm3047 = vcmp.ge.f32.partialorder %v2272, 0.0
  %vm3048 = vcmp.ge.f32.partialorder %v2277, 0.0
  %vm3049 = vcmp.ge.f32.partialorder %v2280, 0.0
  %vm3050 = vcmp.ge.f32.partialorder %v2285, 0.0
  %vm3051 = vcmp.ge.f32.partialorder %v2288, 0.0
  %vm3052 = vcmp.ge.f32.partialorder %v2293, 0.0
  %vm3053 = vcmp.ge.f32.partialorder %v2296, 0.0
  %vm3054 = vcmp.ge.f32.partialorder %v2301, 0.0
  %vm3055 = vcmp.ge.f32.partialorder %v2304, 0.0
  %vm3056 = vcmp.ge.f32.partialorder %v2309, 0.0
  %vm3057 = vcmp.ge.f32.partialorder %v2312, 0.0
  %vm3058 = vcmp.ge.f32.partialorder %v2317, 0.0
  %vm3059 = vcmp.ge.f32.partialorder %v2320, 0.0
  %vm3060 = vcmp.ge.f32.partialorder %v2325, 0.0
  %vm3061 = vcmp.ge.f32.partialorder %v2328, 0.0
  %vm3062 = vcmp.ge.f32.partialorder %v2333, 0.0
  %vm3063 = vcmp.ge.f32.partialorder %v2336, 0.0
  %vm3064 = vcmp.ge.f32.partialorder %v2341, 0.0
  %vm3065 = vcmp.ge.f32.partialorder %v2344, 0.0
  %vm3066 = vcmp.ge.f32.partialorder %v2349, 0.0
  %vm3067 = vcmp.ge.f32.partialorder %v2352, 0.0
  %vm3068 = vcmp.ge.f32.partialorder %v2357, 0.0
  %vm3069 = vcmp.ge.f32.partialorder %v2360, 0.0
  %vm3070 = vcmp.ge.f32.partialorder %v2365, 0.0
  %vm3071 = vcmp.ge.f32.partialorder %v2368, 0.0
  %vm3072 = vcmp.ge.f32.partialorder %v2373, 0.0
  %vm3073 = vcmp.ge.f32.partialorder %v2376, 0.0
  %vm3074 = vcmp.ge.f32.partialorder %v2381, 0.0
  %vm3075 = vcmp.ge.f32.partialorder %v2384, 0.0
  %vm3076 = vcmp.ge.f32.partialorder %v2389, 0.0
  %vm3077 = vcmp.ge.f32.partialorder %v2392, 0.0
  %vm3078 = vcmp.ge.f32.partialorder %v2397, 0.0
  %vm3079 = vcmp.ge.f32.partialorder %v2400, 0.0
  %vm3080 = vcmp.ge.f32.partialorder %v2405, 0.0
  %vm3081 = vcmp.ge.f32.partialorder %v2408, 0.0
  %vm3082 = vcmp.ge.f32.partialorder %v2413, 0.0
  %vm3083 = vcmp.ge.f32.partialorder %v2416, 0.0
  %vm3084 = vcmp.ge.f32.partialorder %v2421, 0.0
  %vm3085 = vcmp.ge.f32.partialorder %v2424, 0.0
  %vm3086 = vcmp.ge.f32.partialorder %v2429, 0.0
  %vm3087 = vcmp.ge.f32.partialorder %v2432, 0.0
  %vm3088 = vcmp.ge.f32.partialorder %v2437, 0.0
  %vm3089 = vcmp.ge.f32.partialorder %v2440, 0.0
  %vm3090 = vcmp.ge.f32.partialorder %v2445, 0.0
  %vm3091 = vcmp.ge.f32.partialorder %v2448, 0.0
  %vm3092 = vcmp.ge.f32.partialorder %v2453, 0.0
  %vm3093 = vcmp.ge.f32.partialorder %v2456, 0.0
  %vm3094 = vcmp.ge.f32.partialorder %v2461, 0.0
  %vm3095 = vcmp.ge.f32.partialorder %v2464, 0.0
  %vm3096 = vcmp.ge.f32.partialorder %v2469, 0.0
  %vm3097 = vcmp.ge.f32.partialorder %v2472, 0.0
  %vm3098 = vcmp.ge.f32.partialorder %v2477, 0.0
  %vm3099 = vcmp.ge.f32.partialorder %v2480, 0.0
  %vm3100 = vcmp.ge.f32.partialorder %v2485, 0.0
  %vm3101 = vcmp.ge.f32.partialorder %v2488, 0.0
  %vm3102 = vcmp.ge.f32.partialorder %v2493, 0.0
  %vm3103 = vcmp.ge.f32.partialorder %v2496, 0.0
  %vm3104 = vcmp.ge.f32.partialorder %v2501, 0.0
  %vm3105 = vcmp.ge.f32.partialorder %v2504, 0.0
  %vm3106 = vcmp.ge.f32.partialorder %v2509, 0.0
  %vm3107 = vcmp.ge.f32.partialorder %v2512, 0.0
  %vm3108 = vcmp.ge.f32.partialorder %v2517, 0.0
  %vm3109 = vcmp.ge.f32.partialorder %v2520, 0.0
  %vm3110 = vcmp.ge.f32.partialorder %v2525, 0.0
  %vm3111 = vcmp.ge.f32.partialorder %v2528, 0.0
  %vm3112 = vcmp.ge.f32.partialorder %v2533, 0.0
  %vm3113 = vcmp.ge.f32.partialorder %v2536, 0.0
  %vm3114 = vcmp.ge.f32.partialorder %v2541, 0.0
  %vm3115 = vcmp.ge.f32.partialorder %v2544, 0.0
  %vm3116 = vcmp.ge.f32.partialorder %v2549, 0.0
  %vm3117 = vcmp.ge.f32.partialorder %v2552, 0.0
  %vm3118 = vcmp.ge.f32.partialorder %v2557, 0.0
  %vm3119 = vcmp.ge.f32.partialorder %v2560, 0.0
  %vm3120 = vcmp.ge.f32.partialorder %v2565, 0.0
  %vm3121 = vcmp.ge.f32.partialorder %v2568, 0.0
  %vm3122 = vcmp.ge.f32.partialorder %v2573, 0.0
  %vm3123 = vcmp.ge.f32.partialorder %v2576, 0.0
  %vm3124 = vcmp.ge.f32.partialorder %v2581, 0.0
  %vm3125 = vcmp.ge.f32.partialorder %v2584, 0.0
  %vm3126 = vcmp.ge.f32.partialorder %v2589, 0.0
  %vm3127 = vcmp.ge.f32.partialorder %v2592, 0.0
  %vm3128 = vcmp.ge.f32.partialorder %v2597, 0.0
  %vm3129 = vcmp.ge.f32.partialorder %v2600, 0.0
  %vm3130 = vcmp.ge.f32.partialorder %v2605, 0.0
  %vm3131 = vcmp.ge.f32.partialorder %v2608, 0.0
  %vm3132 = vcmp.ge.f32.partialorder %v2613, 0.0
  %vm3133 = vcmp.ge.f32.partialorder %v2616, 0.0
  %vm3134 = vcmp.ge.f32.partialorder %v2621, 0.0
  %vm3135 = vcmp.ge.f32.partialorder %v2624, 0.0
  %vm3136 = vcmp.ge.f32.partialorder %v2629, 0.0
  %vm3137 = vcmp.ge.f32.partialorder %v2632, 0.0
  %vm3138 = vcmp.ge.f32.partialorder %v2637, 0.0
  %vm3139 = vcmp.ge.f32.partialorder %v2640, 0.0
  %vm3140 = vcmp.ge.f32.partialorder %v2645, 0.0
  %vm3141 = vcmp.ge.f32.partialorder %v2648, 0.0
  %vm3142 = vcmp.ge.f32.partialorder %v2653, 0.0
  %vm3143 = vcmp.ge.f32.partialorder %v2656, 0.0
  %vm3144 = vcmp.ge.f32.partialorder %v2661, 0.0
  %vm3145 = vcmp.ge.f32.partialorder %v2664, 0.0
  %vm3146 = vcmp.ge.f32.partialorder %v2669, 0.0
  %vm3147 = vcmp.ge.f32.partialorder %v2672, 0.0
  %vm3148 = vcmp.ge.f32.partialorder %v2677, 0.0
  %vm3149 = vcmp.ge.f32.partialorder %v2680, 0.0
  %vm3150 = vcmp.ge.f32.partialorder %v2685, 0.0
  %vm3151 = vcmp.ge.f32.partialorder %v2688, 0.0
  %vm3152 = vcmp.ge.f32.partialorder %v2693, 0.0
  %vm3153 = vcmp.ge.f32.partialorder %v2696, 0.0
  %vm3154 = vcmp.ge.f32.partialorder %v2701, 0.0
  %vm3155 = vcmp.ge.f32.partialorder %v2704, 0.0
  %vm3156 = vcmp.ge.f32.partialorder %v2709, 0.0
  %vm3157 = vcmp.ge.f32.partialorder %v2712, 0.0
  %vm3158 = vcmp.ge.f32.partialorder %v2717, 0.0
  %vm3159 = vcmp.ge.f32.partialorder %v2720, 0.0
  %vm3160 = vcmp.ge.f32.partialorder %v2725, 0.0
  %vm3161 = vcmp.ge.f32.partialorder %v2728, 0.0
  %vm3162 = vcmp.ge.f32.partialorder %v2733, 0.0
  %vm3163 = vcmp.ge.f32.partialorder %v2736, 0.0
  %vm3164 = vcmp.ge.f32.partialorder %v2741, 0.0
  %vm3165 = vcmp.ge.f32.partialorder %v2744, 0.0
  %vm3166 = vcmp.ge.f32.partialorder %v2749, 0.0
  %vm3167 = vcmp.ge.f32.partialorder %v2752, 0.0
  %vm3168 = vcmp.ge.f32.partialorder %v2757, 0.0
  %vm3169 = vcmp.ge.f32.partialorder %v2760, 0.0
  %vm3170 = vcmp.ge.f32.partialorder %v2765, 0.0
  %vm3171 = vcmp.ge.f32.partialorder %v2768, 0.0
  %vm3172 = vcmp.ge.f32.partialorder %v2773, 0.0
  %vm3173 = vcmp.ge.f32.partialorder %v2776, 0.0
  %vm3174 = vcmp.ge.f32.partialorder %v2781, 0.0
  %vm3175 = vcmp.ge.f32.partialorder %v2784, 0.0
  %vm3176 = vcmp.ge.f32.partialorder %v2789, 0.0
  %vm3177 = vcmp.ge.f32.partialorder %v2792, 0.0
  %vm3178 = vcmp.ge.f32.partialorder %v2797, 0.0
  %vm3179 = vcmp.ge.f32.partialorder %v2800, 0.0
  %vm3180 = vcmp.ge.f32.partialorder %v2805, 0.0
  %vm3181 = vcmp.ge.f32.partialorder %v2808, 0.0
  %vm3182 = vcmp.ge.f32.partialorder %v2813, 0.0
  %vm3183 = vcmp.ge.f32.partialorder %v2816, 0.0
  %vm3184 = vcmp.ge.f32.partialorder %v2821, 0.0
  %vm3185 = vcmp.ge.f32.partialorder %v2824, 0.0
  %vm3186 = vcmp.ge.f32.partialorder %v2829, 0.0
  %vm3187 = vcmp.ge.f32.partialorder %v2832, 0.0
  %vm3188 = vcmp.ge.f32.partialorder %v2837, 0.0
  %vm3189 = vcmp.ge.f32.partialorder %v2840, 0.0
  %vm3190 = vcmp.ge.f32.partialorder %v2845, 0.0
  %vm3191 = vcmp.ge.f32.partialorder %v2848, 0.0
  %vm3192 = vcmp.ge.f32.partialorder %v2853, 0.0
  %vm3193 = vcmp.ge.f32.partialorder %v2856, 0.0
  %vm3194 = vcmp.ge.f32.partialorder %v2861, 0.0
  %vm3195 = vcmp.ge.f32.partialorder %v2864, 0.0
  %vm3196 = vcmp.ge.f32.partialorder %v2869, 0.0
  %vm3197 = vcmp.ge.f32.partialorder %v2872, 0.0
  %vm3198 = vcmp.ge.f32.partialorder %v2877, 0.0
  %vm3199 = vcmp.ge.f32.partialorder %v2880, 0.0
  %vm3200 = vcmp.ge.f32.partialorder %v2885, 0.0
  %vm3201 = vcmp.ge.f32.partialorder %v2888, 0.0
  %vm3202 = vcmp.ge.f32.partialorder %v2893, 0.0
  %vm3203 = vcmp.ge.f32.partialorder %v2896, 0.0
  %vm3204 = vcmp.ge.f32.partialorder %v2901, 0.0
  %vm3205 = vcmp.ge.f32.partialorder %v2904, 0.0
  %vm3206 = vcmp.ge.f32.partialorder %v2909, 0.0
  %vm3207 = vcmp.ge.f32.partialorder %v2912, 0.0
  %vm3208 = vcmp.ge.f32.partialorder %v2917, 0.0
  %vm3209 = vcmp.ge.f32.partialorder %v2920, 0.0
  %vm3210 = vcmp.ge.f32.partialorder %v2925, 0.0
  %vm3211 = vcmp.ge.f32.partialorder %v2928, 0.0
  %vm3212 = vcmp.ge.f32.partialorder %v2933, 0.0
  %v3213 = vmul.f32 %v1837, 0.2
  %v3214 = vmul.f32 %v1840, 0.2
  %v3215 = vmul.f32 %v1845, 0.2
  %v3216 = vmul.f32 %v1848, 0.2
  %v3217 = vmul.f32 %v1853, 0.2
  %v3218 = vmul.f32 %v1856, 0.2
  %v3219 = vmul.f32 %v1861, 0.2
  %v3220 = vmul.f32 %v1864, 0.2
  %v3221 = vmul.f32 %v1869, 0.2
  %v3222 = vmul.f32 %v1872, 0.2
  %v3223 = vmul.f32 %v1877, 0.2
  %v3224 = vmul.f32 %v1880, 0.2
  %v3225 = vmul.f32 %v1885, 0.2
  %v3226 = vmul.f32 %v1888, 0.2
  %v3227 = vmul.f32 %v1893, 0.2
  %v3228 = vmul.f32 %v1896, 0.2
  %v3229 = vmul.f32 %v1901, 0.2
  %v3230 = vmul.f32 %v1904, 0.2
  %v3231 = vmul.f32 %v1909, 0.2
  %v3232 = vmul.f32 %v1912, 0.2
  %v3233 = vmul.f32 %v1917, 0.2
  %v3234 = vmul.f32 %v1920, 0.2
  %v3235 = vmul.f32 %v1925, 0.2
  %v3236 = vmul.f32 %v1928, 0.2
  %v3237 = vmul.f32 %v1933, 0.2
  %v3238 = vmul.f32 %v1936, 0.2
  %v3239 = vmul.f32 %v1941, 0.2
  %v3240 = vmul.f32 %v1944, 0.2
  %v3241 = vmul.f32 %v1949, 0.2
  %v3242 = vmul.f32 %v1952, 0.2
  %v3243 = vmul.f32 %v1957, 0.2
  %v3244 = vmul.f32 %v1960, 0.2
  %v3245 = vmul.f32 %v1965, 0.2
  %v3246 = vmul.f32 %v1968, 0.2
  %v3247 = vmul.f32 %v1973, 0.2
  %v3248 = vmul.f32 %v1976, 0.2
  %v3249 = vmul.f32 %v1981, 0.2
  %v3250 = vmul.f32 %v1984, 0.2
  %v3251 = vmul.f32 %v1989, 0.2
  %v3252 = vmul.f32 %v1992, 0.2
  %v3253 = vmul.f32 %v1997, 0.2
  %v3254 = vmul.f32 %v2000, 0.2
  %v3255 = vmul.f32 %v2005, 0.2
  %v3256 = vmul.f32 %v2008, 0.2
  %v3257 = vmul.f32 %v2013, 0.2
  %v3258 = vmul.f32 %v2016, 0.2
  %v3259 = vmul.f32 %v2021, 0.2
  %v3260 = vmul.f32 %v2024, 0.2
  %v3261 = vmul.f32 %v2029, 0.2
  %v3262 = vmul.f32 %v2032, 0.2
  %v3263 = vmul.f32 %v2037, 0.2
  %v3264 = vmul.f32 %v2040, 0.2
  %v3265 = vmul.f32 %v2045, 0.2
  %v3266 = vmul.f32 %v2048, 0.2
  %v3267 = vmul.f32 %v2053, 0.2
  %v3268 = vmul.f32 %v2056, 0.2
  %v3269 = vmul.f32 %v2061, 0.2
  %v3270 = vmul.f32 %v2064, 0.2
  %v3271 = vmul.f32 %v2069, 0.2
  %v3272 = vmul.f32 %v2072, 0.2
  %v3273 = vmul.f32 %v2077, 0.2
  %v3274 = vmul.f32 %v2080, 0.2
  %v3275 = vmul.f32 %v2085, 0.2
  %v3276 = vmul.f32 %v2088, 0.2
  %v3277 = vmul.f32 %v2093, 0.2
  %v3278 = vmul.f32 %v2096, 0.2
  %v3279 = vmul.f32 %v2101, 0.2
  %v3280 = vmul.f32 %v2104, 0.2
  %v3281 = vmul.f32 %v2109, 0.2
  %v3282 = vmul.f32 %v2112, 0.2
  %v3283 = vmul.f32 %v2117, 0.2
  %v3284 = vmul.f32 %v2120, 0.2
  %v3285 = vmul.f32 %v2125, 0.2
  %v3286 = vmul.f32 %v2128, 0.2
  %v3287 = vmul.f32 %v2133, 0.2
  %v3288 = vmul.f32 %v2136, 0.2
  %v3289 = vmul.f32 %v2141, 0.2
  %v3290 = vmul.f32 %v2144, 0.2
  %v3291 = vmul.f32 %v2149, 0.2
  %v3292 = vmul.f32 %v2152, 0.2
  %v3293 = vmul.f32 %v2157, 0.2
  %v3294 = vmul.f32 %v2160, 0.2
  %v3295 = vmul.f32 %v2165, 0.2
  %v3296 = vmul.f32 %v2168, 0.2
  %v3297 = vmul.f32 %v2173, 0.2
  %v3298 = vmul.f32 %v2176, 0.2
  %v3299 = vmul.f32 %v2181, 0.2
  %v3300 = vmul.f32 %v2184, 0.2
  %v3301 = vmul.f32 %v2189, 0.2
  %v3302 = vmul.f32 %v2192, 0.2
  %v3303 = vmul.f32 %v2197, 0.2
  %v3304 = vmul.f32 %v2200, 0.2
  %v3305 = vmul.f32 %v2205, 0.2
  %v3306 = vmul.f32 %v2208, 0.2
  %v3307 = vmul.f32 %v2213, 0.2
  %v3308 = vmul.f32 %v2216, 0.2
  %v3309 = vmul.f32 %v2221, 0.2
  %v3310 = vmul.f32 %v2224, 0.2
  %v3311 = vmul.f32 %v2229, 0.2
  %v3312 = vmul.f32 %v2232, 0.2
  %v3313 = vmul.f32 %v2237, 0.2
  %v3314 = vmul.f32 %v2240, 0.2
  %v3315 = vmul.f32 %v2245, 0.2
  %v3316 = vmul.f32 %v2248, 0.2
  %v3317 = vmul.f32 %v2253, 0.2
  %v3318 = vmul.f32 %v2256, 0.2
  %v3319 = vmul.f32 %v2261, 0.2
  %v3320 = vmul.f32 %v2264, 0.2
  %v3321 = vmul.f32 %v2269, 0.2
  %v3322 = vmul.f32 %v2272, 0.2
  %v3323 = vmul.f32 %v2277, 0.2
  %v3324 = vmul.f32 %v2280, 0.2
  %v3325 = vmul.f32 %v2285, 0.2
  %v3326 = vmul.f32 %v2288, 0.2
  %v3327 = vmul.f32 %v2293, 0.2
  %v3328 = vmul.f32 %v2296, 0.2
  %v3329 = vmul.f32 %v2301, 0.2
  %v3330 = vmul.f32 %v2304, 0.2
  %v3331 = vmul.f32 %v2309, 0.2
  %v3332 = vmul.f32 %v2312, 0.2
  %v3333 = vmul.f32 %v2317, 0.2
  %v3334 = vmul.f32 %v2320, 0.2
  %v3335 = vmul.f32 %v2325, 0.2
  %v3336 = vmul.f32 %v2328, 0.2
  %v3337 = vmul.f32 %v2333, 0.2
  %v3338 = vmul.f32 %v2336, 0.2
  %v3339 = vmul.f32 %v2341, 0.2
  %v3340 = vmul.f32 %v2344, 0.2
  %v3341 = vmul.f32 %v2349, 0.2
  %v3342 = vmul.f32 %v2352, 0.2
  %v3343 = vmul.f32 %v2357, 0.2
  %v3344 = vmul.f32 %v2360, 0.2
  %v3345 = vmul.f32 %v2365, 0.2
  %v3346 = vmul.f32 %v2368, 0.2
  %v3347 = vmul.f32 %v2373, 0.2
  %v3348 = vmul.f32 %v2376, 0.2
  %v3349 = vmul.f32 %v2381, 0.2
  %v3350 = vmul.f32 %v2384, 0.2
  %v3351 = vmul.f32 %v2389, 0.2
  %v3352 = vmul.f32 %v2392, 0.2
  %v3353 = vmul.f32 %v2397, 0.2
  %v3354 = vmul.f32 %v2400, 0.2
  %v3355 = vmul.f32 %v2405, 0.2
  %v3356 = vmul.f32 %v2408, 0.2
  %v3357 = vmul.f32 %v2413, 0.2
  %v3358 = vmul.f32 %v2416, 0.2
  %v3359 = vmul.f32 %v2421, 0.2
  %v3360 = vmul.f32 %v2424, 0.2
  %v3361 = vmul.f32 %v2429, 0.2
  %v3362 = vmul.f32 %v2432, 0.2
  %v3363 = vmul.f32 %v2437, 0.2
  %v3364 = vmul.f32 %v2440, 0.2
  %v3365 = vmul.f32 %v2445, 0.2
  %v3366 = vmul.f32 %v2448, 0.2
  %v3367 = vmul.f32 %v2453, 0.2
  %v3368 = vmul.f32 %v2456, 0.2
  %v3369 = vmul.f32 %v2461, 0.2
  %v3370 = vmul.f32 %v2464, 0.2
  %v3371 = vmul.f32 %v2469, 0.2
  %v3372 = vmul.f32 %v2472, 0.2
  %v3373 = vmul.f32 %v2477, 0.2
  %v3374 = vmul.f32 %v2480, 0.2
  %v3375 = vmul.f32 %v2485, 0.2
  %v3376 = vmul.f32 %v2488, 0.2
  %v3377 = vmul.f32 %v2493, 0.2
  %v3378 = vmul.f32 %v2496, 0.2
  %v3379 = vmul.f32 %v2501, 0.2
  %v3380 = vmul.f32 %v2504, 0.2
  %v3381 = vmul.f32 %v2509, 0.2
  %v3382 = vmul.f32 %v2512, 0.2
  %v3383 = vmul.f32 %v2517, 0.2
  %v3384 = vmul.f32 %v2520, 0.2
  %v3385 = vmul.f32 %v2525, 0.2
  %v3386 = vmul.f32 %v2528, 0.2
  %v3387 = vmul.f32 %v2533, 0.2
  %v3388 = vmul.f32 %v2536, 0.2
  %v3389 = vmul.f32 %v2541, 0.2
  %v3390 = vmul.f32 %v2544, 0.2
  %v3391 = vmul.f32 %v2549, 0.2
  %v3392 = vmul.f32 %v2552, 0.2
  %v3393 = vmul.f32 %v2557, 0.2
  %v3394 = vmul.f32 %v2560, 0.2
  %v3395 = vmul.f32 %v2565, 0.2
  %v3396 = vmul.f32 %v2568, 0.2
  %v3397 = vmul.f32 %v2573, 0.2
  %v3398 = vmul.f32 %v2576, 0.2
  %v3399 = vmul.f32 %v2581, 0.2
  %v3400 = vmul.f32 %v2584, 0.2
  %v3401 = vmul.f32 %v2589, 0.2
  %v3402 = vmul.f32 %v2592, 0.2
  %v3403 = vmul.f32 %v2597, 0.2
  %v3404 = vmul.f32 %v2600, 0.2
  %v3405 = vmul.f32 %v2605, 0.2
  %v3406 = vmul.f32 %v2608, 0.2
  %v3407 = vmul.f32 %v2613, 0.2
  %v3408 = vmul.f32 %v2616, 0.2
  %v3409 = vmul.f32 %v2621, 0.2
  %v3410 = vmul.f32 %v2624, 0.2
  %v3411 = vmul.f32 %v2629, 0.2
  %v3412 = vmul.f32 %v2632, 0.2
  %v3413 = vmul.f32 %v2637, 0.2
  %v3414 = vmul.f32 %v2640, 0.2
  %v3415 = vmul.f32 %v2645, 0.2
  %v3416 = vmul.f32 %v2648, 0.2
  %v3417 = vmul.f32 %v2653, 0.2
  %v3418 = vmul.f32 %v2656, 0.2
  %v3419 = vmul.f32 %v2661, 0.2
  %v3420 = vmul.f32 %v2664, 0.2
  %v3421 = vmul.f32 %v2669, 0.2
  %v3422 = vmul.f32 %v2672, 0.2
  %v3423 = vmul.f32 %v2677, 0.2
  %v3424 = vmul.f32 %v2680, 0.2
  %v3425 = vmul.f32 %v2685, 0.2
  %v3426 = vmul.f32 %v2688, 0.2
  %v3427 = vmul.f32 %v2693, 0.2
  %v3428 = vmul.f32 %v2696, 0.2
  %v3429 = vmul.f32 %v2701, 0.2
  %v3430 = vmul.f32 %v2704, 0.2
  %v3431 = vmul.f32 %v2709, 0.2
  %v3432 = vmul.f32 %v2712, 0.2
  %v3433 = vmul.f32 %v2717, 0.2
  %v3434 = vmul.f32 %v2720, 0.2
  %v3435 = vmul.f32 %v2725, 0.2
  %v3436 = vmul.f32 %v2728, 0.2
  %v3437 = vmul.f32 %v2733, 0.2
  %v3438 = vmul.f32 %v2736, 0.2
  %v3439 = vmul.f32 %v2741, 0.2
  %v3440 = vmul.f32 %v2744, 0.2
  %v3441 = vmul.f32 %v2749, 0.2
  %v3442 = vmul.f32 %v2752, 0.2
  %v3443 = vmul.f32 %v2757, 0.2
  %v3444 = vmul.f32 %v2760, 0.2
  %v3445 = vmul.f32 %v2765, 0.2
  %v3446 = vmul.f32 %v2768, 0.2
  %v3447 = vmul.f32 %v2773, 0.2
  %v3448 = vmul.f32 %v2776, 0.2
  %v3449 = vmul.f32 %v2781, 0.2
  %v3450 = vmul.f32 %v2784, 0.2
  %v3451 = vmul.f32 %v2789, 0.2
  %v3452 = vmul.f32 %v2792, 0.2
  %v3453 = vmul.f32 %v2797, 0.2
  %v3454 = vmul.f32 %v2800, 0.2
  %v3455 = vmul.f32 %v2805, 0.2
  %v3456 = vmul.f32 %v2808, 0.2
  %v3457 = vmul.f32 %v2813, 0.2
  %v3458 = vmul.f32 %v2816, 0.2
  %v3459 = vmul.f32 %v2821, 0.2
  %v3460 = vmul.f32 %v2824, 0.2
  %v3461 = vmul.f32 %v2829, 0.2
  %v3462 = vmul.f32 %v2832, 0.2
  %v3463 = vmul.f32 %v2837, 0.2
  %v3464 = vmul.f32 %v2840, 0.2
  %v3465 = vmul.f32 %v2845, 0.2
  %v3466 = vmul.f32 %v2848, 0.2
  %v3467 = vmul.f32 %v2853, 0.2
  %v3468 = vmul.f32 %v2856, 0.2
  %v3469 = vmul.f32 %v2861, 0.2
  %v3470 = vmul.f32 %v2864, 0.2
  %v3471 = vmul.f32 %v2869, 0.2
  %v3472 = vmul.f32 %v2872, 0.2
  %v3473 = vmul.f32 %v2877, 0.2
  %v3474 = vmul.f32 %v2880, 0.2
  %v3475 = vmul.f32 %v2885, 0.2
  %v3476 = vmul.f32 %v2888, 0.2
  %v3477 = vmul.f32 %v2893, 0.2
  %v3478 = vmul.f32 %v2896, 0.2
  %v3479 = vmul.f32 %v2901, 0.2
  %v3480 = vmul.f32 %v2904, 0.2
  %v3481 = vmul.f32 %v2909, 0.2
  %v3482 = vmul.f32 %v2912, 0.2
  %v3483 = vmul.f32 %v2917, 0.2
  %v3484 = vmul.f32 %v2920, 0.2
  %v3485 = vmul.f32 %v2925, 0.2
  %v3486 = vmul.f32 %v2928, 0.2
  %v3487 = vmul.f32 %v2933, 0.2
  %v3488 = vsel %vm2938, %v1837, %v3213
  %v3489 = vsel %vm2939, %v1840, %v3214
  %v3490 = vsel %vm2940, %v1845, %v3215
  %v3491 = vsel %vm2941, %v1848, %v3216
  %v3492 = vsel %vm2942, %v1853, %v3217
  %v3493 = vsel %vm2943, %v1856, %v3218
  %v3494 = vsel %vm2944, %v1861, %v3219
  %v3495 = vsel %vm2945, %v1864, %v3220
  %v3496 = vsel %vm2946, %v1869, %v3221
  %v3497 = vsel %vm2947, %v1872, %v3222
  %v3498 = vsel %vm2948, %v1877, %v3223
  %v3499 = vsel %vm2949, %v1880, %v3224
  %v3500 = vsel %vm2950, %v1885, %v3225
  %v3501 = vsel %vm2951, %v1888, %v3226
  %v3502 = vsel %vm2952, %v1893, %v3227
  %v3503 = vsel %vm2953, %v1896, %v3228
  %v3504 = vsel %vm2954, %v1901, %v3229
  %v3505 = vsel %vm2955, %v1904, %v3230
  %v3506 = vsel %vm2956, %v1909, %v3231
  %v3507 = vsel %vm2957, %v1912, %v3232
  %v3508 = vsel %vm2958, %v1917, %v3233
  %v3509 = vsel %vm2959, %v1920, %v3234
  %v3510 = vsel %vm2960, %v1925, %v3235
  %v3511 = vsel %vm2961, %v1928, %v3236
  %v3512 = vsel %vm2962, %v1933, %v3237
  %v3513 = vsel %vm2963, %v1936, %v3238
  %v3514 = vsel %vm2964, %v1941, %v3239
  %v3515 = vsel %vm2965, %v1944, %v3240
  %v3516 = vsel %vm2966, %v1949, %v3241
  %v3517 = vsel %vm2967, %v1952, %v3242
  %v3518 = vsel %vm2968, %v1957, %v3243
  %v3519 = vsel %vm2969, %v1960, %v3244
  %v3520 = vsel %vm2970, %v1965, %v3245
  %v3521 = vsel %vm2971, %v1968, %v3246
  %v3522 = vsel %vm2972, %v1973, %v3247
  %v3523 = vsel %vm2973, %v1976, %v3248
  %v3524 = vsel %vm2974, %v1981, %v3249
  %v3525 = vsel %vm2975, %v1984, %v3250
  %v3526 = vsel %vm2976, %v1989, %v3251
  %v3527 = vsel %vm2977, %v1992, %v3252
  %v3528 = vsel %vm2978, %v1997, %v3253
  %v3529 = vsel %vm2979, %v2000, %v3254
  %v3530 = vsel %vm2980, %v2005, %v3255
  %v3531 = vsel %vm2981, %v2008, %v3256
  %v3532 = vsel %vm2982, %v2013, %v3257
  %v3533 = vsel %vm2983, %v2016, %v3258
  %v3534 = vsel %vm2984, %v2021, %v3259
  %v3535 = vsel %vm2985, %v2024, %v3260
  %v3536 = vsel %vm2986, %v2029, %v3261
  %v3537 = vsel %vm2987, %v2032, %v3262
  %v3538 = vsel %vm2988, %v2037, %v3263
  %v3539 = vsel %vm2989, %v2040, %v3264
  %v3540 = vsel %vm2990, %v2045, %v3265
  %v3541 = vsel %vm2991, %v2048, %v3266
  %v3542 = vsel %vm2992, %v2053, %v3267
  %v3543 = vsel %vm2993, %v2056, %v3268
  %v3544 = vsel %vm2994, %v2061, %v3269
  %v3545 = vsel %vm2995, %v2064, %v3270
  %v3546 = vsel %vm2996, %v2069, %v3271
  %v3547 = vsel %vm2997, %v2072, %v3272
  %v3548 = vsel %vm2998, %v2077, %v3273
  %v3549 = vsel %vm2999, %v2080, %v3274
  %v3550 = vsel %vm3000, %v2085, %v3275
  %v3551 = vsel %vm3001, %v2088, %v3276
  %v3552 = vsel %vm3002, %v2093, %v3277
  %v3553 = vsel %vm3003, %v2096, %v3278
  %v3554 = vsel %vm3004, %v2101, %v3279
  %v3555 = vsel %vm3005, %v2104, %v3280
  %v3556 = vsel %vm3006, %v2109, %v3281
  %v3557 = vsel %vm3007, %v2112, %v3282
  %v3558 = vsel %vm3008, %v2117, %v3283
  %v3559 = vsel %vm3009, %v2120, %v3284
  %v3560 = vsel %vm3010, %v2125, %v3285
  %v3561 = vsel %vm3011, %v2128, %v3286
  %v3562 = vsel %vm3012, %v2133, %v3287
  %v3563 = vsel %vm3013, %v2136, %v3288
  %v3564 = vsel %vm3014, %v2141, %v3289
  %v3565 = vsel %vm3015, %v2144, %v3290
  %v3566 = vsel %vm3016, %v2149, %v3291
  %v3567 = vsel %vm3017, %v2152, %v3292
  %v3568 = vsel %vm3018, %v2157, %v3293
  %v3569 = vsel %vm3019, %v2160, %v3294
  %v3570 = vsel %vm3020, %v2165, %v3295
  %v3571 = vsel %vm3021, %v2168, %v3296
  %v3572 = vsel %vm3022, %v2173, %v3297
  %v3573 = vsel %vm3023, %v2176, %v3298
  %v3574 = vsel %vm3024, %v2181, %v3299
  %v3575 = vsel %vm3025, %v2184, %v3300
  %v3576 = vsel %vm3026, %v2189, %v3301
  %v3577 = vsel %vm3027, %v2192, %v3302
  %v3578 = vsel %vm3028, %v2197, %v3303
  %v3579 = vsel %vm3029, %v2200, %v3304
  %v3580 = vsel %vm3030, %v2205, %v3305
  %v3581 = vsel %vm3031, %v2208, %v3306
  %v3582 = vsel %vm3032, %v2213, %v3307
  %v3583 = vsel %vm3033, %v2216, %v3308
  %v3584 = vsel %vm3034, %v2221, %v3309
  %v3585 = vsel %vm3035, %v2224, %v3310
  %v3586 = vsel %vm3036, %v2229, %v3311
  %v3587 = vsel %vm3037, %v2232, %v3312
  %v3588 = vsel %vm3038, %v2237, %v3313
  %v3589 = vsel %vm3039, %v2240, %v3314
  %v3590 = vsel %vm3040, %v2245, %v3315
  %v3591 = vsel %vm3041, %v2248, %v3316
  %v3592 = vsel %vm3042, %v2253, %v3317
  %v3593 = vsel %vm3043, %v2256, %v3318
  %v3594 = vsel %vm3044, %v2261, %v3319
  %v3595 = vsel %vm3045, %v2264, %v3320
  %v3596 = vsel %vm3046, %v2269, %v3321
  %v3597 = vsel %vm3047, %v2272, %v3322
  %v3598 = vsel %vm3048, %v2277, %v3323
  %v3599 = vsel %vm3049, %v2280, %v3324
  %v3600 = vsel %vm3050, %v2285, %v3325
  %v3601 = vsel %vm3051, %v2288, %v3326
  %v3602 = vsel %vm3052, %v2293, %v3327
  %v3603 = vsel %vm3053, %v2296, %v3328
  %v3604 = vsel %vm3054, %v2301, %v3329
  %v3605 = vsel %vm3055, %v2304, %v3330
  %v3606 = vsel %vm3056, %v2309, %v3331
  %v3607 = vsel %vm3057, %v2312, %v3332
  %v3608 = vsel %vm3058, %v2317, %v3333
  %v3609 = vsel %vm3059, %v2320, %v3334
  %v3610 = vsel %vm3060, %v2325, %v3335
  %v3611 = vsel %vm3061, %v2328, %v3336
  %v3612 = vsel %vm3062, %v2333, %v3337
  %v3613 = vsel %vm3063, %v2336, %v3338
  %v3614 = vsel %vm3064, %v2341, %v3339
  %v3615 = vsel %vm3065, %v2344, %v3340
  %v3616 = vsel %vm3066, %v2349, %v3341
  %v3617 = vsel %vm3067, %v2352, %v3342
  %v3618 = vsel %vm3068, %v2357, %v3343
  %v3619 = vsel %vm3069, %v2360, %v3344
  %v3620 = vsel %vm3070, %v2365, %v3345
  %v3621 = vsel %vm3071, %v2368, %v3346
  %v3622 = vsel %vm3072, %v2373, %v3347
  %v3623 = vsel %vm3073, %v2376, %v3348
  %v3624 = vsel %vm3074, %v2381, %v3349
  %v3625 = vsel %vm3075, %v2384, %v3350
  %v3626 = vsel %vm3076, %v2389, %v3351
  %v3627 = vsel %vm3077, %v2392, %v3352
  %v3628 = vsel %vm3078, %v2397, %v3353
  %v3629 = vsel %vm3079, %v2400, %v3354
  %v3630 = vsel %vm3080, %v2405, %v3355
  %v3631 = vsel %vm3081, %v2408, %v3356
  %v3632 = vsel %vm3082, %v2413, %v3357
  %v3633 = vsel %vm3083, %v2416, %v3358
  %v3634 = vsel %vm3084, %v2421, %v3359
  %v3635 = vsel %vm3085, %v2424, %v3360
  %v3636 = vsel %vm3086, %v2429, %v3361
  %v3637 = vsel %vm3087, %v2432, %v3362
  %v3638 = vsel %vm3088, %v2437, %v3363
  %v3639 = vsel %vm3089, %v2440, %v3364
  %v3640 = vsel %vm3090, %v2445, %v3365
  %v3641 = vsel %vm3091, %v2448, %v3366
  %v3642 = vsel %vm3092, %v2453, %v3367
  %v3643 = vsel %vm3093, %v2456, %v3368
  %v3644 = vsel %vm3094, %v2461, %v3369
  %v3645 = vsel %vm3095, %v2464, %v3370
  %v3646 = vsel %vm3096, %v2469, %v3371
  %v3647 = vsel %vm3097, %v2472, %v3372
  %v3648 = vsel %vm3098, %v2477, %v3373
  %v3649 = vsel %vm3099, %v2480, %v3374
  %v3650 = vsel %vm3100, %v2485, %v3375
  %v3651 = vsel %vm3101, %v2488, %v3376
  %v3652 = vsel %vm3102, %v2493, %v3377
  %v3653 = vsel %vm3103, %v2496, %v3378
  %v3654 = vsel %vm3104, %v2501, %v3379
  %v3655 = vsel %vm3105, %v2504, %v3380
  %v3656 = vsel %vm3106, %v2509, %v3381
  %v3657 = vsel %vm3107, %v2512, %v3382
  %v3658 = vsel %vm3108, %v2517, %v3383
  %v3659 = vsel %vm3109, %v2520, %v3384
  %v3660 = vsel %vm3110, %v2525, %v3385
  %v3661 = vsel %vm3111, %v2528, %v3386
  %v3662 = vsel %vm3112, %v2533, %v3387
  %v3663 = vsel %vm3113, %v2536, %v3388
  %v3664 = vsel %vm3114, %v2541, %v3389
  %v3665 = vsel %vm3115, %v2544, %v3390
  %v3666 = vsel %vm3116, %v2549, %v3391
  %v3667 = vsel %vm3117, %v2552, %v3392
  %v3668 = vsel %vm3118, %v2557, %v3393
  %v3669 = vsel %vm3119, %v2560, %v3394
  %v3670 = vsel %vm3120, %v2565, %v3395
  %v3671 = vsel %vm3121, %v2568, %v3396
  %v3672 = vsel %vm3122, %v2573, %v3397
  %v3673 = vsel %vm3123, %v2576, %v3398
  %v3674 = vsel %vm3124, %v2581, %v3399
  %v3675 = vsel %vm3125, %v2584, %v3400
  %v3676 = vsel %vm3126, %v2589, %v3401
  %v3677 = vsel %vm3127, %v2592, %v3402
  %v3678 = vsel %vm3128, %v2597, %v3403
  %v3679 = vsel %vm3129, %v2600, %v3404
  %v3680 = vsel %vm3130, %v2605, %v3405
  %v3681 = vsel %vm3131, %v2608, %v3406
  %v3682 = vsel %vm3132, %v2613, %v3407
  %v3683 = vsel %vm3133, %v2616, %v3408
  %v3684 = vsel %vm3134, %v2621, %v3409
  %v3685 = vsel %vm3135, %v2624, %v3410
  %v3686 = vsel %vm3136, %v2629, %v3411
  %v3687 = vsel %vm3137, %v2632, %v3412
  %v3688 = vsel %vm3138, %v2637, %v3413
  %v3689 = vsel %vm3139, %v2640, %v3414
  %v3690 = vsel %vm3140, %v2645, %v3415
  %v3691 = vsel %vm3141, %v2648, %v3416
  %v3692 = vsel %vm3142, %v2653, %v3417
  %v3693 = vsel %vm3143, %v2656, %v3418
  %v3694 = vsel %vm3144, %v2661, %v3419
  %v3695 = vsel %vm3145, %v2664, %v3420
  %v3696 = vsel %vm3146, %v2669, %v3421
  %v3697 = vsel %vm3147, %v2672, %v3422
  %v3698 = vsel %vm3148, %v2677, %v3423
  %v3699 = vsel %vm3149, %v2680, %v3424
  %v3700 = vsel %vm3150, %v2685, %v3425
  %v3701 = vsel %vm3151, %v2688, %v3426
  %v3702 = vsel %vm3152, %v2693, %v3427
  %v3703 = vsel %vm3153, %v2696, %v3428
  %v3704 = vsel %vm3154, %v2701, %v3429
  %v3705 = vsel %vm3155, %v2704, %v3430
  %v3706 = vsel %vm3156, %v2709, %v3431
  %v3707 = vsel %vm3157, %v2712, %v3432
  %v3708 = vsel %vm3158, %v2717, %v3433
  %v3709 = vsel %vm3159, %v2720, %v3434
  %v3710 = vsel %vm3160, %v2725, %v3435
  %v3711 = vsel %vm3161, %v2728, %v3436
  %v3712 = vsel %vm3162, %v2733, %v3437
  %v3713 = vsel %vm3163, %v2736, %v3438
  %v3714 = vsel %vm3164, %v2741, %v3439
  %v3715 = vsel %vm3165, %v2744, %v3440
  %v3716 = vsel %vm3166, %v2749, %v3441
  %v3717 = vsel %vm3167, %v2752, %v3442
  %v3718 = vsel %vm3168, %v2757, %v3443
  %v3719 = vsel %vm3169, %v2760, %v3444
  %v3720 = vsel %vm3170, %v2765, %v3445
  %v3721 = vsel %vm3171, %v2768, %v3446
  %v3722 = vsel %vm3172, %v2773, %v3447
  %v3723 = vsel %vm3173, %v2776, %v3448
  %v3724 = vsel %vm3174, %v2781, %v3449
  %v3725 = vsel %vm3175, %v2784, %v3450
  %v3726 = vsel %vm3176, %v2789, %v3451
  %v3727 = vsel %vm3177, %v2792, %v3452
  %v3728 = vsel %vm3178, %v2797, %v3453
  %v3729 = vsel %vm3179, %v2800, %v3454
  %v3730 = vsel %vm3180, %v2805, %v3455
  %v3731 = vsel %vm3181, %v2808, %v3456
  %v3732 = vsel %vm3182, %v2813, %v3457
  %v3733 = vsel %vm3183, %v2816, %v3458
  %v3734 = vsel %vm3184, %v2821, %v3459
  %v3735 = vsel %vm3185, %v2824, %v3460
  %v3736 = vsel %vm3186, %v2829, %v3461
  %v3737 = vsel %vm3187, %v2832, %v3462
  %v3738 = vsel %vm3188, %v2837, %v3463
  %v3739 = vsel %vm3189, %v2840, %v3464
  %v3740 = vsel %vm3190, %v2845, %v3465
  %v3741 = vsel %vm3191, %v2848, %v3466
  %v3742 = vsel %vm3192, %v2853, %v3467
  %v3743 = vsel %vm3193, %v2856, %v3468
  %v3744 = vsel %vm3194, %v2861, %v3469
  %v3745 = vsel %vm3195, %v2864, %v3470
  %v3746 = vsel %vm3196, %v2869, %v3471
  %v3747 = vsel %vm3197, %v2872, %v3472
  %v3748 = vsel %vm3198, %v2877, %v3473
  %v3749 = vsel %vm3199, %v2880, %v3474
  %v3750 = vsel %vm3200, %v2885, %v3475
  %v3751 = vsel %vm3201, %v2888, %v3476
  %v3752 = vsel %vm3202, %v2893, %v3477
  %v3753 = vsel %vm3203, %v2896, %v3478
  %v3754 = vsel %vm3204, %v2901, %v3479
  %v3755 = vsel %vm3205, %v2904, %v3480
  %v3756 = vsel %vm3206, %v2909, %v3481
  %v3757 = vsel %vm3207, %v2912, %v3482
  %v3758 = vsel %vm3208, %v2917, %v3483
  %v3759 = vsel %vm3209, %v2920, %v3484
  %v3760 = vsel %vm3210, %v2925, %v3485
  %v3761 = vsel %vm3211, %v2928, %v3486
  %v3762 = vsel %vm3212, %v2933, %v3487
  %vm3763 = vcmask 261120
  %3764 = vst.msk [vmem:[%s3] sm:$0xff] %vm3763, %v3488
  %3765 = vst.msk [vmem:[%s3 + $0x8] sm:$0xff] %vm3763, %v3489
  %3766 = vst.msk [vmem:[%s3 + $0x10] sm:$0xff] %vm3763, %v3490
  %3767 = vst.msk [vmem:[%s3 + $0x18] sm:$0xff] %vm3763, %v3491
  %3768 = vst.msk [vmem:[%s3 + $0x20] sm:$0xff] %vm3763, %v3492
  %3769 = vst.msk [vmem:[%s3 + $0x28] sm:$0xff] %vm3763, %v3493
  %3770 = vst.msk [vmem:[%s3 + $0x30] sm:$0xff] %vm3763, %v3494
  %3771 = vst.msk [vmem:[%s3 + $0x38] sm:$0xff] %vm3763, %v3495
  %3772 = vst.msk [vmem:[%s3 + $0x40] sm:$0xff] %vm3763, %v3496
  %3773 = vst.msk [vmem:[%s3 + $0x48] sm:$0xff] %vm3763, %v3497
  %3774 = vst.msk [vmem:[%s3 + $0x50] sm:$0xff] %vm3763, %v3498
  %3775 = vst.msk [vmem:[%s3 + $0x58] sm:$0xff] %vm3763, %v3499
  %3776 = vst.msk [vmem:[%s3 + $0x60] sm:$0xff] %vm3763, %v3500
  %3777 = vst.msk [vmem:[%s3 + $0x68] sm:$0xff] %vm3763, %v3501
  %3778 = vst.msk [vmem:[%s3 + $0x70] sm:$0xff] %vm3763, %v3502
  %3779 = vst.msk [vmem:[%s3 + $0x78] sm:$0xff] %vm3763, %v3503
  %3780 = vst.msk [vmem:[%s3 + $0x80] sm:$0xff] %vm3763, %v3504
  %3781 = vst.msk [vmem:[%s3 + $0x88] sm:$0xff] %vm3763, %v3505
  %3782 = vst.msk [vmem:[%s3 + $0x90] sm:$0xff] %vm3763, %v3506
  %3783 = vst.msk [vmem:[%s3 + $0x98] sm:$0xff] %vm3763, %v3507
  %3784 = vst.msk [vmem:[%s3 + $0xa0] sm:$0xff] %vm3763, %v3508
  %3785 = vst.msk [vmem:[%s3 + $0xa8] sm:$0xff] %vm3763, %v3509
  %3786 = vst.msk [vmem:[%s3 + $0xb0] sm:$0xff] %vm3763, %v3510
  %3787 = vst.msk [vmem:[%s3 + $0xb8] sm:$0xff] %vm3763, %v3511
  %3788 = vst.msk [vmem:[%s3 + $0xc0] sm:$0xff] %vm3763, %v3512
  %3789 = vst.msk [vmem:[%s3 + $0xc8] sm:$0xff] %vm3763, %v3513
  %3790 = vst.msk [vmem:[%s3 + $0xd0] sm:$0xff] %vm3763, %v3514
  %3791 = vst.msk [vmem:[%s3 + $0xd8] sm:$0xff] %vm3763, %v3515
  %3792 = vst.msk [vmem:[%s3 + $0xe0] sm:$0xff] %vm3763, %v3516
  %3793 = vst.msk [vmem:[%s3 + $0xe8] sm:$0xff] %vm3763, %v3517
  %3794 = vst.msk [vmem:[%s3 + $0xf0] sm:$0xff] %vm3763, %v3518
  %3795 = vst.msk [vmem:[%s3 + $0xf8] sm:$0xff] %vm3763, %v3519
  %3796 = vst.msk [vmem:[%s3 + $0x100] sm:$0xff] %vm3763, %v3520
  %3797 = vst.msk [vmem:[%s3 + $0x108] sm:$0xff] %vm3763, %v3521
  %3798 = vst.msk [vmem:[%s3 + $0x110] sm:$0xff] %vm3763, %v3522
  %3799 = vst.msk [vmem:[%s3 + $0x118] sm:$0xff] %vm3763, %v3523
  %3800 = vst.msk [vmem:[%s3 + $0x120] sm:$0xff] %vm3763, %v3524
  %3801 = vst.msk [vmem:[%s3 + $0x128] sm:$0xff] %vm3763, %v3525
  %3802 = vst.msk [vmem:[%s3 + $0x130] sm:$0xff] %vm3763, %v3526
  %3803 = vst.msk [vmem:[%s3 + $0x138] sm:$0xff] %vm3763, %v3527
  %3804 = vst.msk [vmem:[%s3 + $0x140] sm:$0xff] %vm3763, %v3528
  %3805 = vst.msk [vmem:[%s3 + $0x148] sm:$0xff] %vm3763, %v3529
  %3806 = vst.msk [vmem:[%s3 + $0x150] sm:$0xff] %vm3763, %v3530
  %3807 = vst.msk [vmem:[%s3 + $0x158] sm:$0xff] %vm3763, %v3531
  %3808 = vst.msk [vmem:[%s3 + $0x160] sm:$0xff] %vm3763, %v3532
  %3809 = vst.msk [vmem:[%s3 + $0x168] sm:$0xff] %vm3763, %v3533
  %3810 = vst.msk [vmem:[%s3 + $0x170] sm:$0xff] %vm3763, %v3534
  %3811 = vst.msk [vmem:[%s3 + $0x178] sm:$0xff] %vm3763, %v3535
  %3812 = vst.msk [vmem:[%s3 + $0x180] sm:$0xff] %vm3763, %v3536
  %3813 = vst.msk [vmem:[%s3 + $0x188] sm:$0xff] %vm3763, %v3537
  %3814 = vst.msk [vmem:[%s3 + $0x190] sm:$0xff] %vm3763, %v3538
  %3815 = vst.msk [vmem:[%s3 + $0x198] sm:$0xff] %vm3763, %v3539
  %3816 = vst.msk [vmem:[%s3 + $0x1a0] sm:$0xff] %vm3763, %v3540
  %3817 = vst.msk [vmem:[%s3 + $0x1a8] sm:$0xff] %vm3763, %v3541
  %3818 = vst.msk [vmem:[%s3 + $0x1b0] sm:$0xff] %vm3763, %v3542
  %3819 = vst.msk [vmem:[%s3 + $0x1b8] sm:$0xff] %vm3763, %v3543
  %3820 = vst.msk [vmem:[%s3 + $0x1c0] sm:$0xff] %vm3763, %v3544
  %3821 = vst.msk [vmem:[%s3 + $0x1c8] sm:$0xff] %vm3763, %v3545
  %3822 = vst.msk [vmem:[%s3 + $0x1d0] sm:$0xff] %vm3763, %v3546
  %3823 = vst.msk [vmem:[%s3 + $0x1d8] sm:$0xff] %vm3763, %v3547
  %3824 = vst.msk [vmem:[%s3 + $0x1e0] sm:$0xff] %vm3763, %v3548
  %3825 = vst.msk [vmem:[%s3 + $0x1e8] sm:$0xff] %vm3763, %v3549
  %3826 = vst.msk [vmem:[%s3 + $0x1f0] sm:$0xff] %vm3763, %v3550
  %3827 = vst.msk [vmem:[%s3 + $0x1f8] sm:$0xff] %vm3763, %v3551
  %3828 = vst.msk [vmem:[%s3 + $0x200] sm:$0xff] %vm3763, %v3552
  %3829 = vst.msk [vmem:[%s3 + $0x208] sm:$0xff] %vm3763, %v3553
  %3830 = vst.msk [vmem:[%s3 + $0x210] sm:$0xff] %vm3763, %v3554
  %3831 = vst.msk [vmem:[%s3 + $0x218] sm:$0xff] %vm3763, %v3555
  %3832 = vst.msk [vmem:[%s3 + $0x220] sm:$0xff] %vm3763, %v3556
  %3833 = vst.msk [vmem:[%s3 + $0x228] sm:$0xff] %vm3763, %v3557
  %3834 = vst.msk [vmem:[%s3 + $0x230] sm:$0xff] %vm3763, %v3558
  %3835 = vst.msk [vmem:[%s3 + $0x238] sm:$0xff] %vm3763, %v3559
  %3836 = vst.msk [vmem:[%s3 + $0x240] sm:$0xff] %vm3763, %v3560
  %3837 = vst.msk [vmem:[%s3 + $0x248] sm:$0xff] %vm3763, %v3561
  %3838 = vst.msk [vmem:[%s3 + $0x250] sm:$0xff] %vm3763, %v3562
  %3839 = vst.msk [vmem:[%s3 + $0x258] sm:$0xff] %vm3763, %v3563
  %3840 = vst.msk [vmem:[%s3 + $0x260] sm:$0xff] %vm3763, %v3564
  %3841 = vst.msk [vmem:[%s3 + $0x268] sm:$0xff] %vm3763, %v3565
  %3842 = vst.msk [vmem:[%s3 + $0x270] sm:$0xff] %vm3763, %v3566
  %3843 = vst.msk [vmem:[%s3 + $0x278] sm:$0xff] %vm3763, %v3567
  %3844 = vst.msk [vmem:[%s3 + $0x280] sm:$0xff] %vm3763, %v3568
  %3845 = vst.msk [vmem:[%s3 + $0x288] sm:$0xff] %vm3763, %v3569
  %3846 = vst.msk [vmem:[%s3 + $0x290] sm:$0xff] %vm3763, %v3570
  %3847 = vst.msk [vmem:[%s3 + $0x298] sm:$0xff] %vm3763, %v3571
  %3848 = vst.msk [vmem:[%s3 + $0x2a0] sm:$0xff] %vm3763, %v3572
  %3849 = vst.msk [vmem:[%s3 + $0x2a8] sm:$0xff] %vm3763, %v3573
  %3850 = vst.msk [vmem:[%s3 + $0x2b0] sm:$0xff] %vm3763, %v3574
  %3851 = vst.msk [vmem:[%s3 + $0x2b8] sm:$0xff] %vm3763, %v3575
  %3852 = vst.msk [vmem:[%s3 + $0x2c0] sm:$0xff] %vm3763, %v3576
  %3853 = vst.msk [vmem:[%s3 + $0x2c8] sm:$0xff] %vm3763, %v3577
  %3854 = vst.msk [vmem:[%s3 + $0x2d0] sm:$0xff] %vm3763, %v3578
  %3855 = vst.msk [vmem:[%s3 + $0x2d8] sm:$0xff] %vm3763, %v3579
  %3856 = vst.msk [vmem:[%s3 + $0x2e0] sm:$0xff] %vm3763, %v3580
  %3857 = vst.msk [vmem:[%s3 + $0x2e8] sm:$0xff] %vm3763, %v3581
  %3858 = vst.msk [vmem:[%s3 + $0x2f0] sm:$0xff] %vm3763, %v3582
  %3859 = vst.msk [vmem:[%s3 + $0x2f8] sm:$0xff] %vm3763, %v3583
  %3860 = vst.msk [vmem:[%s3 + $0x300] sm:$0xff] %vm3763, %v3584
  %3861 = vst.msk [vmem:[%s3 + $0x308] sm:$0xff] %vm3763, %v3585
  %3862 = vst.msk [vmem:[%s3 + $0x310] sm:$0xff] %vm3763, %v3586
  %3863 = vst.msk [vmem:[%s3 + $0x318] sm:$0xff] %vm3763, %v3587
  %3864 = vst.msk [vmem:[%s3 + $0x320] sm:$0xff] %vm3763, %v3588
  %3865 = vst.msk [vmem:[%s3 + $0x328] sm:$0xff] %vm3763, %v3589
  %3866 = vst.msk [vmem:[%s3 + $0x330] sm:$0xff] %vm3763, %v3590
  %3867 = vst.msk [vmem:[%s3 + $0x338] sm:$0xff] %vm3763, %v3591
  %3868 = vst.msk [vmem:[%s3 + $0x340] sm:$0xff] %vm3763, %v3592
  %3869 = vst.msk [vmem:[%s3 + $0x348] sm:$0xff] %vm3763, %v3593
  %3870 = vst.msk [vmem:[%s3 + $0x350] sm:$0xff] %vm3763, %v3594
  %3871 = vst.msk [vmem:[%s3 + $0x358] sm:$0xff] %vm3763, %v3595
  %3872 = vst.msk [vmem:[%s3 + $0x360] sm:$0xff] %vm3763, %v3596
  %3873 = vst.msk [vmem:[%s3 + $0x368] sm:$0xff] %vm3763, %v3597
  %3874 = vst.msk [vmem:[%s3 + $0x370] sm:$0xff] %vm3763, %v3598
  %3875 = vst.msk [vmem:[%s3 + $0x378] sm:$0xff] %vm3763, %v3599
  %3876 = vst.msk [vmem:[%s3 + $0x380] sm:$0xff] %vm3763, %v3600
  %3877 = vst.msk [vmem:[%s3 + $0x388] sm:$0xff] %vm3763, %v3601
  %3878 = vst.msk [vmem:[%s3 + $0x390] sm:$0xff] %vm3763, %v3602
  %3879 = vst.msk [vmem:[%s3 + $0x398] sm:$0xff] %vm3763, %v3603
  %3880 = vst.msk [vmem:[%s3 + $0x3a0] sm:$0xff] %vm3763, %v3604
  %3881 = vst.msk [vmem:[%s3 + $0x3a8] sm:$0xff] %vm3763, %v3605
  %3882 = vst.msk [vmem:[%s3 + $0x3b0] sm:$0xff] %vm3763, %v3606
  %3883 = vst.msk [vmem:[%s3 + $0x3b8] sm:$0xff] %vm3763, %v3607
  %3884 = vst.msk [vmem:[%s3 + $0x3c0] sm:$0xff] %vm3763, %v3608
  %3885 = vst.msk [vmem:[%s3 + $0x3c8] sm:$0xff] %vm3763, %v3609
  %3886 = vst.msk [vmem:[%s3 + $0x3d0] sm:$0xff] %vm3763, %v3610
  %3887 = vst.msk [vmem:[%s3 + $0x3d8] sm:$0xff] %vm3763, %v3611
  %3888 = vst.msk [vmem:[%s3 + $0x3e0] sm:$0xff] %vm3763, %v3612
  %3889 = vst.msk [vmem:[%s3 + $0x3e8] sm:$0xff] %vm3763, %v3613
  %3890 = vst.msk [vmem:[%s3 + $0x3f0] sm:$0xff] %vm3763, %v3614
  %3891 = vst.msk [vmem:[%s3 + $0x3f8] sm:$0xff] %vm3763, %v3615
  %3892 = vst.msk [vmem:[%s3 + $0x400] sm:$0xff] %vm3763, %v3616
  %3893 = vst.msk [vmem:[%s3 + $0x408] sm:$0xff] %vm3763, %v3617
  %3894 = vst.msk [vmem:[%s3 + $0x410] sm:$0xff] %vm3763, %v3618
  %3895 = vst.msk [vmem:[%s3 + $0x418] sm:$0xff] %vm3763, %v3619
  %3896 = vst.msk [vmem:[%s3 + $0x420] sm:$0xff] %vm3763, %v3620
  %3897 = vst.msk [vmem:[%s3 + $0x428] sm:$0xff] %vm3763, %v3621
  %3898 = vst.msk [vmem:[%s3 + $0x430] sm:$0xff] %vm3763, %v3622
  %3899 = vst.msk [vmem:[%s3 + $0x438] sm:$0xff] %vm3763, %v3623
  %3900 = vst.msk [vmem:[%s3 + $0x440] sm:$0xff] %vm3763, %v3624
  %3901 = vst.msk [vmem:[%s3 + $0x448] sm:$0xff] %vm3763, %v3625
  %3902 = vst.msk [vmem:[%s3 + $0x450] sm:$0xff] %vm3763, %v3626
  %3903 = vst.msk [vmem:[%s3 + $0x458] sm:$0xff] %vm3763, %v3627
  %3904 = vst.msk [vmem:[%s3 + $0x460] sm:$0xff] %vm3763, %v3628
  %3905 = vst.msk [vmem:[%s3 + $0x468] sm:$0xff] %vm3763, %v3629
  %3906 = vst.msk [vmem:[%s3 + $0x470] sm:$0xff] %vm3763, %v3630
  %3907 = vst.msk [vmem:[%s3 + $0x478] sm:$0xff] %vm3763, %v3631
  %3908 = vst.msk [vmem:[%s3 + $0x480] sm:$0xff] %vm3763, %v3632
  %3909 = vst.msk [vmem:[%s3 + $0x488] sm:$0xff] %vm3763, %v3633
  %3910 = vst.msk [vmem:[%s3 + $0x490] sm:$0xff] %vm3763, %v3634
  %3911 = vst.msk [vmem:[%s3 + $0x498] sm:$0xff] %vm3763, %v3635
  %3912 = vst.msk [vmem:[%s3 + $0x4a0] sm:$0xff] %vm3763, %v3636
  %3913 = vst.msk [vmem:[%s3 + $0x4a8] sm:$0xff] %vm3763, %v3637
  %3914 = vst.msk [vmem:[%s3 + $0x4b0] sm:$0xff] %vm3763, %v3638
  %3915 = vst.msk [vmem:[%s3 + $0x4b8] sm:$0xff] %vm3763, %v3639
  %3916 = vst.msk [vmem:[%s3 + $0x4c0] sm:$0xff] %vm3763, %v3640
  %3917 = vst.msk [vmem:[%s3 + $0x4c8] sm:$0xff] %vm3763, %v3641
  %3918 = vst.msk [vmem:[%s3 + $0x4d0] sm:$0xff] %vm3763, %v3642
  %3919 = vst.msk [vmem:[%s3 + $0x4d8] sm:$0xff] %vm3763, %v3643
  %3920 = vst.msk [vmem:[%s3 + $0x4e0] sm:$0xff] %vm3763, %v3644
  %3921 = vst.msk [vmem:[%s3 + $0x4e8] sm:$0xff] %vm3763, %v3645
  %3922 = vst.msk [vmem:[%s3 + $0x4f0] sm:$0xff] %vm3763, %v3646
  %3923 = vst.msk [vmem:[%s3 + $0x4f8] sm:$0xff] %vm3763, %v3647
  %3924 = vst.msk [vmem:[%s3 + $0x500] sm:$0xff] %vm3763, %v3648
  %3925 = vst.msk [vmem:[%s3 + $0x508] sm:$0xff] %vm3763, %v3649
  %3926 = vst.msk [vmem:[%s3 + $0x510] sm:$0xff] %vm3763, %v3650
  %3927 = vst.msk [vmem:[%s3 + $0x518] sm:$0xff] %vm3763, %v3651
  %3928 = vst.msk [vmem:[%s3 + $0x520] sm:$0xff] %vm3763, %v3652
  %3929 = vst.msk [vmem:[%s3 + $0x528] sm:$0xff] %vm3763, %v3653
  %3930 = vst.msk [vmem:[%s3 + $0x530] sm:$0xff] %vm3763, %v3654
  %3931 = vst.msk [vmem:[%s3 + $0x538] sm:$0xff] %vm3763, %v3655
  %3932 = vst.msk [vmem:[%s3 + $0x540] sm:$0xff] %vm3763, %v3656
  %3933 = vst.msk [vmem:[%s3 + $0x548] sm:$0xff] %vm3763, %v3657
  %3934 = vst.msk [vmem:[%s3 + $0x550] sm:$0xff] %vm3763, %v3658
  %3935 = vst.msk [vmem:[%s3 + $0x558] sm:$0xff] %vm3763, %v3659
  %3936 = vst.msk [vmem:[%s3 + $0x560] sm:$0xff] %vm3763, %v3660
  %3937 = vst.msk [vmem:[%s3 + $0x568] sm:$0xff] %vm3763, %v3661
  %3938 = vst.msk [vmem:[%s3 + $0x570] sm:$0xff] %vm3763, %v3662
  %3939 = vst.msk [vmem:[%s3 + $0x578] sm:$0xff] %vm3763, %v3663
  %3940 = vst.msk [vmem:[%s3 + $0x580] sm:$0xff] %vm3763, %v3664
  %3941 = vst.msk [vmem:[%s3 + $0x588] sm:$0xff] %vm3763, %v3665
  %3942 = vst.msk [vmem:[%s3 + $0x590] sm:$0xff] %vm3763, %v3666
  %3943 = vst.msk [vmem:[%s3 + $0x598] sm:$0xff] %vm3763, %v3667
  %3944 = vst.msk [vmem:[%s3 + $0x5a0] sm:$0xff] %vm3763, %v3668
  %3945 = vst.msk [vmem:[%s3 + $0x5a8] sm:$0xff] %vm3763, %v3669
  %3946 = vst.msk [vmem:[%s3 + $0x5b0] sm:$0xff] %vm3763, %v3670
  %3947 = vst.msk [vmem:[%s3 + $0x5b8] sm:$0xff] %vm3763, %v3671
  %3948 = vst.msk [vmem:[%s3 + $0x5c0] sm:$0xff] %vm3763, %v3672
  %3949 = vst.msk [vmem:[%s3 + $0x5c8] sm:$0xff] %vm3763, %v3673
  %3950 = vst.msk [vmem:[%s3 + $0x5d0] sm:$0xff] %vm3763, %v3674
  %3951 = vst.msk [vmem:[%s3 + $0x5d8] sm:$0xff] %vm3763, %v3675
  %3952 = vst.msk [vmem:[%s3 + $0x5e0] sm:$0xff] %vm3763, %v3676
  %3953 = vst.msk [vmem:[%s3 + $0x5e8] sm:$0xff] %vm3763, %v3677
  %3954 = vst.msk [vmem:[%s3 + $0x5f0] sm:$0xff] %vm3763, %v3678
  %3955 = vst.msk [vmem:[%s3 + $0x5f8] sm:$0xff] %vm3763, %v3679
  %3956 = vst.msk [vmem:[%s3 + $0x600] sm:$0xff] %vm3763, %v3680
  %3957 = vst.msk [vmem:[%s3 + $0x608] sm:$0xff] %vm3763, %v3681
  %3958 = vst.msk [vmem:[%s3 + $0x610] sm:$0xff] %vm3763, %v3682
  %3959 = vst.msk [vmem:[%s3 + $0x618] sm:$0xff] %vm3763, %v3683
  %3960 = vst.msk [vmem:[%s3 + $0x620] sm:$0xff] %vm3763, %v3684
  %3961 = vst.msk [vmem:[%s3 + $0x628] sm:$0xff] %vm3763, %v3685
  %3962 = vst.msk [vmem:[%s3 + $0x630] sm:$0xff] %vm3763, %v3686
  %3963 = vst.msk [vmem:[%s3 + $0x638] sm:$0xff] %vm3763, %v3687
  %3964 = vst.msk [vmem:[%s3 + $0x640] sm:$0xff] %vm3763, %v3688
  %3965 = vst.msk [vmem:[%s3 + $0x648] sm:$0xff] %vm3763, %v3689
  %3966 = vst.msk [vmem:[%s3 + $0x650] sm:$0xff] %vm3763, %v3690
  %3967 = vst.msk [vmem:[%s3 + $0x658] sm:$0xff] %vm3763, %v3691
  %3968 = vst.msk [vmem:[%s3 + $0x660] sm:$0xff] %vm3763, %v3692
  %3969 = vst.msk [vmem:[%s3 + $0x668] sm:$0xff] %vm3763, %v3693
  %3970 = vst.msk [vmem:[%s3 + $0x670] sm:$0xff] %vm3763, %v3694
  %3971 = vst.msk [vmem:[%s3 + $0x678] sm:$0xff] %vm3763, %v3695
  %3972 = vst.msk [vmem:[%s3 + $0x680] sm:$0xff] %vm3763, %v3696
  %3973 = vst.msk [vmem:[%s3 + $0x688] sm:$0xff] %vm3763, %v3697
  %3974 = vst.msk [vmem:[%s3 + $0x690] sm:$0xff] %vm3763, %v3698
  %3975 = vst.msk [vmem:[%s3 + $0x698] sm:$0xff] %vm3763, %v3699
  %3976 = vst.msk [vmem:[%s3 + $0x6a0] sm:$0xff] %vm3763, %v3700
  %3977 = vst.msk [vmem:[%s3 + $0x6a8] sm:$0xff] %vm3763, %v3701
  %3978 = vst.msk [vmem:[%s3 + $0x6b0] sm:$0xff] %vm3763, %v3702
  %3979 = vst.msk [vmem:[%s3 + $0x6b8] sm:$0xff] %vm3763, %v3703
  %3980 = vst.msk [vmem:[%s3 + $0x6c0] sm:$0xff] %vm3763, %v3704
  %3981 = vst.msk [vmem:[%s3 + $0x6c8] sm:$0xff] %vm3763, %v3705
  %3982 = vst.msk [vmem:[%s3 + $0x6d0] sm:$0xff] %vm3763, %v3706
  %3983 = vst.msk [vmem:[%s3 + $0x6d8] sm:$0xff] %vm3763, %v3707
  %3984 = vst.msk [vmem:[%s3 + $0x6e0] sm:$0xff] %vm3763, %v3708
  %3985 = vst.msk [vmem:[%s3 + $0x6e8] sm:$0xff] %vm3763, %v3709
  %3986 = vst.msk [vmem:[%s3 + $0x6f0] sm:$0xff] %vm3763, %v3710
  %3987 = vst.msk [vmem:[%s3 + $0x6f8] sm:$0xff] %vm3763, %v3711
  %3988 = vst.msk [vmem:[%s3 + $0x700] sm:$0xff] %vm3763, %v3712
  %3989 = vst.msk [vmem:[%s3 + $0x708] sm:$0xff] %vm3763, %v3713
  %3990 = vst.msk [vmem:[%s3 + $0x710] sm:$0xff] %vm3763, %v3714
  %3991 = vst.msk [vmem:[%s3 + $0x718] sm:$0xff] %vm3763, %v3715
  %3992 = vst.msk [vmem:[%s3 + $0x720] sm:$0xff] %vm3763, %v3716
  %3993 = vst.msk [vmem:[%s3 + $0x728] sm:$0xff] %vm3763, %v3717
  %3994 = vst.msk [vmem:[%s3 + $0x730] sm:$0xff] %vm3763, %v3718
  %3995 = vst.msk [vmem:[%s3 + $0x738] sm:$0xff] %vm3763, %v3719
  %3996 = vst.msk [vmem:[%s3 + $0x740] sm:$0xff] %vm3763, %v3720
  %3997 = vst.msk [vmem:[%s3 + $0x748] sm:$0xff] %vm3763, %v3721
  %3998 = vst.msk [vmem:[%s3 + $0x750] sm:$0xff] %vm3763, %v3722
  %3999 = vst.msk [vmem:[%s3 + $0x758] sm:$0xff] %vm3763, %v3723
  %4000 = vst.msk [vmem:[%s3 + $0x760] sm:$0xff] %vm3763, %v3724
  %4001 = vst.msk [vmem:[%s3 + $0x768] sm:$0xff] %vm3763, %v3725
  %4002 = vst.msk [vmem:[%s3 + $0x770] sm:$0xff] %vm3763, %v3726
  %4003 = vst.msk [vmem:[%s3 + $0x778] sm:$0xff] %vm3763, %v3727
  %4004 = vst.msk [vmem:[%s3 + $0x780] sm:$0xff] %vm3763, %v3728
  %4005 = vst.msk [vmem:[%s3 + $0x788] sm:$0xff] %vm3763, %v3729
  %4006 = vst.msk [vmem:[%s3 + $0x790] sm:$0xff] %vm3763, %v3730
  %4007 = vst.msk [vmem:[%s3 + $0x798] sm:$0xff] %vm3763, %v3731
  %4008 = vst.msk [vmem:[%s3 + $0x7a0] sm:$0xff] %vm3763, %v3732
  %4009 = vst.msk [vmem:[%s3 + $0x7a8] sm:$0xff] %vm3763, %v3733
  %4010 = vst.msk [vmem:[%s3 + $0x7b0] sm:$0xff] %vm3763, %v3734
  %4011 = vst.msk [vmem:[%s3 + $0x7b8] sm:$0xff] %vm3763, %v3735
  %4012 = vst.msk [vmem:[%s3 + $0x7c0] sm:$0xff] %vm3763, %v3736
  %4013 = vst.msk [vmem:[%s3 + $0x7c8] sm:$0xff] %vm3763, %v3737
  %4014 = vst.msk [vmem:[%s3 + $0x7d0] sm:$0xff] %vm3763, %v3738
  %4015 = vst.msk [vmem:[%s3 + $0x7d8] sm:$0xff] %vm3763, %v3739
  %4016 = vst.msk [vmem:[%s3 + $0x7e0] sm:$0xff] %vm3763, %v3740
  %4017 = vst.msk [vmem:[%s3 + $0x7e8] sm:$0xff] %vm3763, %v3741
  %4018 = vst.msk [vmem:[%s3 + $0x7f0] sm:$0xff] %vm3763, %v3742
  %4019 = vst.msk [vmem:[%s3 + $0x7f8] sm:$0xff] %vm3763, %v3743
  %4020 = vst.msk [vmem:[%s3 + $0x800] sm:$0xff] %vm3763, %v3744
  %4021 = vst.msk [vmem:[%s3 + $0x808] sm:$0xff] %vm3763, %v3745
  %4022 = vst.msk [vmem:[%s3 + $0x810] sm:$0xff] %vm3763, %v3746
  %4023 = vst.msk [vmem:[%s3 + $0x818] sm:$0xff] %vm3763, %v3747
  %4024 = vst.msk [vmem:[%s3 + $0x820] sm:$0xff] %vm3763, %v3748
  %4025 = vst.msk [vmem:[%s3 + $0x828] sm:$0xff] %vm3763, %v3749
  %4026 = vst.msk [vmem:[%s3 + $0x830] sm:$0xff] %vm3763, %v3750
  %4027 = vst.msk [vmem:[%s3 + $0x838] sm:$0xff] %vm3763, %v3751
  %4028 = vst.msk [vmem:[%s3 + $0x840] sm:$0xff] %vm3763, %v3752
  %4029 = vst.msk [vmem:[%s3 + $0x848] sm:$0xff] %vm3763, %v3753
  %4030 = vst.msk [vmem:[%s3 + $0x850] sm:$0xff] %vm3763, %v3754
  %4031 = vst.msk [vmem:[%s3 + $0x858] sm:$0xff] %vm3763, %v3755
  %4032 = vst.msk [vmem:[%s3 + $0x860] sm:$0xff] %vm3763, %v3756
  %4033 = vst.msk [vmem:[%s3 + $0x868] sm:$0xff] %vm3763, %v3757
  %4034 = vst.msk [vmem:[%s3 + $0x870] sm:$0xff] %vm3763, %v3758
  %4035 = vst.msk [vmem:[%s3 + $0x878] sm:$0xff] %vm3763, %v3759
  %4036 = vst.msk [vmem:[%s3 + $0x880] sm:$0xff] %vm3763, %v3760
  %4037 = vst.msk [vmem:[%s3 + $0x888] sm:$0xff] %vm3763, %v3761
  %4038 = vst.msk [vmem:[%s3 + $0x890] sm:$0xff] %vm3763, %v3762
  // Predicated region
  $region14: #{discriminator_forward.5} parent=0 // pred_check
    _
  $region15: #{discriminator_forward.5} parent=0 // pred_check_branch
    %4040 = sbr.rel (0) target = $region17
  $region16: #{discriminator_forward.5} parent=0 // pred_region
    _
  $region17: #{discriminator_forward.5} parent=0 // pred_fallthru
    _
  // Predicated region
  $region18: #{discriminator_forward.5} parent=0 // pred_check
    _
  $region19: #{discriminator_forward.5} parent=0 // pred_check_branch
    %4042 = sbr.rel (0) target = $region21
  $region20: #{discriminator_forward.5} parent=0 // pred_region
    _
  $region21: #{discriminator_forward.5} parent=0 // pred_fallthru
    _

// kernel: discriminator_forward.6
$region0: #{discriminator_forward.6}
  #allocation0 [shape = 'u32[]', space=smem, size = 0x4, offset = 0x4, fixed_abs, tag = 'smem constant byte address 0x4 - core index']
  #allocation1 [shape = 'u32[144,128]{1,0:T(1,128)}', space=vmem, size = 0x12000, scoped, tag = 'internal scratch']
  %s0 = inlined_call_operand.vmem [shape: bf16[480,512], index: 0, kind: input, shape index: {}]
  %s1 = inlined_call_operand.vmem [shape: bf16[512,48], index: 1, kind: input, shape index: {}]
  %s2 = inlined_call_operand.vmem [shape: f32[1,48], index: 2, kind: input, shape index: {}]
  %s3 = inlined_call_operand.vmem [shape: f32[480,48], index: 3, kind: output, shape index: {}]
  %s4 = sld [smem:[#allocation0]]
  $region22: #{discriminator_forward.6} parent=0
    _
  %s6 = ssub.s32 1, %s4
  %s7 = scalar_select 0, %s6, %s4
  // Predicated region
  $region2: #{discriminator_forward.6} parent=0 // pred_check
    _
  $region3: #{discriminator_forward.6} parent=0 // pred_check_branch
    %9 = sbr.rel (0) target = $region5
  $region4: #{discriminator_forward.6} parent=0 // pred_region
    _
  $region5: #{discriminator_forward.6} parent=0 // pred_fallthru
    _
  // Predicated region
  $region6: #{discriminator_forward.6} parent=0 // pred_check
    _
  $region7: #{discriminator_forward.6} parent=0 // pred_check_branch
    %11 = sbr.rel (0) target = $region9
  $region8: #{discriminator_forward.6} parent=0 // pred_region
    _
  $region9: #{discriminator_forward.6} parent=0 // pred_fallthru
    _
  // Predicated region
  $region10: #{discriminator_forward.6} parent=0 // pred_check
    _
  $region11: #{discriminator_forward.6} parent=0 // pred_check_branch
    %13 = sbr.rel (0) target = $region13
  $region12: #{discriminator_forward.6} parent=0 // pred_region
    _
  $region13: #{discriminator_forward.6} parent=0 // pred_fallthru
    _
  %v15 = vld [vmem:[%s0] sm:$0xff]
  %v16 = vld [vmem:[%s0 + $0x8] sm:$0xff]
  %v17 = vld [vmem:[%s0 + $0x10] sm:$0xff]
  %v18 = vld [vmem:[%s0 + $0x18] sm:$0xff]
  %v19 = vld [vmem:[%s0 + $0x20] sm:$0xff]
  %v20 = vld [vmem:[%s0 + $0x28] sm:$0xff]
  %v21 = vld [vmem:[%s0 + $0x30] sm:$0xff]
  %v22 = vld [vmem:[%s0 + $0x38] sm:$0xff]
  %v23 = vld [vmem:[%s0 + $0x40] sm:$0xff]
  %v24 = vld [vmem:[%s0 + $0x48] sm:$0xff]
  %v25 = vld [vmem:[%s0 + $0x50] sm:$0xff]
  %v26 = vld [vmem:[%s0 + $0x58] sm:$0xff]
  %v27 = vld [vmem:[%s0 + $0x60] sm:$0xff]
  %v28 = vld [vmem:[%s0 + $0x68] sm:$0xff]
  %v29 = vld [vmem:[%s0 + $0x70] sm:$0xff]
  %v30 = vld [vmem:[%s0 + $0x78] sm:$0xff]
  %v31 = vld [vmem:[%s0 + $0x80] sm:$0xff]
  %v32 = vld [vmem:[%s0 + $0x88] sm:$0xff]
  %v33 = vld [vmem:[%s0 + $0x90] sm:$0xff]
  %v34 = vld [vmem:[%s0 + $0x98] sm:$0xff]
  %v35 = vld [vmem:[%s0 + $0xa0] sm:$0xff]
  %v36 = vld [vmem:[%s0 + $0xa8] sm:$0xff]
  %v37 = vld [vmem:[%s0 + $0xb0] sm:$0xff]
  %v38 = vld [vmem:[%s0 + $0xb8] sm:$0xff]
  %v39 = vld [vmem:[%s0 + $0xc0] sm:$0xff]
  %v40 = vld [vmem:[%s0 + $0xc8] sm:$0xff]
  %v41 = vld [vmem:[%s0 + $0xd0] sm:$0xff]
  %v42 = vld [vmem:[%s0 + $0xd8] sm:$0xff]
  %v43 = vld [vmem:[%s0 + $0xe0] sm:$0xff]
  %v44 = vld [vmem:[%s0 + $0xe8] sm:$0xff]
  %v45 = vld [vmem:[%s0 + $0xf0] sm:$0xff]
  %v46 = vld [vmem:[%s0 + $0xf8] sm:$0xff]
  %v47 = vld [vmem:[%s0 + $0x100] sm:$0xff]
  %v48 = vld [vmem:[%s0 + $0x108] sm:$0xff]
  %v49 = vld [vmem:[%s0 + $0x110] sm:$0xff]
  %v50 = vld [vmem:[%s0 + $0x118] sm:$0xff]
  %v51 = vld [vmem:[%s0 + $0x120] sm:$0xff]
  %v52 = vld [vmem:[%s0 + $0x128] sm:$0xff]
  %v53 = vld [vmem:[%s0 + $0x130] sm:$0xff]
  %v54 = vld [vmem:[%s0 + $0x138] sm:$0xff]
  %v55 = vld [vmem:[%s0 + $0x140] sm:$0xff]
  %v56 = vld [vmem:[%s0 + $0x148] sm:$0xff]
  %v57 = vld [vmem:[%s0 + $0x150] sm:$0xff]
  %v58 = vld [vmem:[%s0 + $0x158] sm:$0xff]
  %v59 = vld [vmem:[%s0 + $0x160] sm:$0xff]
  %v60 = vld [vmem:[%s0 + $0x168] sm:$0xff]
  %v61 = vld [vmem:[%s0 + $0x170] sm:$0xff]
  %v62 = vld [vmem:[%s0 + $0x178] sm:$0xff]
  %v63 = vld [vmem:[%s0 + $0x180] sm:$0xff]
  %v64 = vld [vmem:[%s0 + $0x188] sm:$0xff]
  %v65 = vld [vmem:[%s0 + $0x190] sm:$0xff]
  %v66 = vld [vmem:[%s0 + $0x198] sm:$0xff]
  %v67 = vld [vmem:[%s0 + $0x1a0] sm:$0xff]
  %v68 = vld [vmem:[%s0 + $0x1a8] sm:$0xff]
  %v69 = vld [vmem:[%s0 + $0x1b0] sm:$0xff]
  %v70 = vld [vmem:[%s0 + $0x1b8] sm:$0xff]
  %v71 = vld [vmem:[%s0 + $0x1c0] sm:$0xff]
  %v72 = vld [vmem:[%s0 + $0x1c8] sm:$0xff]
  %v73 = vld [vmem:[%s0 + $0x1d0] sm:$0xff]
  %v74 = vld [vmem:[%s0 + $0x1d8] sm:$0xff]
  %v75 = vld [vmem:[%s0 + $0x1e0] sm:$0xff]
  %v76 = vld [vmem:[%s0 + $0x1e8] sm:$0xff]
  %v77 = vld [vmem:[%s0 + $0x1f0] sm:$0xff]
  %v78 = vld [vmem:[%s0 + $0x1f8] sm:$0xff]
  %v79 = vld [vmem:[%s0 + $0x200] sm:$0xff]
  %v80 = vld [vmem:[%s0 + $0x208] sm:$0xff]
  %v81 = vld [vmem:[%s0 + $0x210] sm:$0xff]
  %v82 = vld [vmem:[%s0 + $0x218] sm:$0xff]
  %v83 = vld [vmem:[%s0 + $0x220] sm:$0xff]
  %v84 = vld [vmem:[%s0 + $0x228] sm:$0xff]
  %v85 = vld [vmem:[%s0 + $0x230] sm:$0xff]
  %v86 = vld [vmem:[%s0 + $0x238] sm:$0xff]
  %v87 = vld [vmem:[%s0 + $0x240] sm:$0xff]
  %v88 = vld [vmem:[%s0 + $0x248] sm:$0xff]
  %v89 = vld [vmem:[%s0 + $0x250] sm:$0xff]
  %v90 = vld [vmem:[%s0 + $0x258] sm:$0xff]
  %v91 = vld [vmem:[%s0 + $0x260] sm:$0xff]
  %v92 = vld [vmem:[%s0 + $0x268] sm:$0xff]
  %v93 = vld [vmem:[%s0 + $0x270] sm:$0xff]
  %v94 = vld [vmem:[%s0 + $0x278] sm:$0xff]
  %v95 = vld [vmem:[%s0 + $0x280] sm:$0xff]
  %v96 = vld [vmem:[%s0 + $0x288] sm:$0xff]
  %v97 = vld [vmem:[%s0 + $0x290] sm:$0xff]
  %v98 = vld [vmem:[%s0 + $0x298] sm:$0xff]
  %v99 = vld [vmem:[%s0 + $0x2a0] sm:$0xff]
  %v100 = vld [vmem:[%s0 + $0x2a8] sm:$0xff]
  %v101 = vld [vmem:[%s0 + $0x2b0] sm:$0xff]
  %v102 = vld [vmem:[%s0 + $0x2b8] sm:$0xff]
  %v103 = vld [vmem:[%s0 + $0x2c0] sm:$0xff]
  %v104 = vld [vmem:[%s0 + $0x2c8] sm:$0xff]
  %v105 = vld [vmem:[%s0 + $0x2d0] sm:$0xff]
  %v106 = vld [vmem:[%s0 + $0x2d8] sm:$0xff]
  %v107 = vld [vmem:[%s0 + $0x2e0] sm:$0xff]
  %v108 = vld [vmem:[%s0 + $0x2e8] sm:$0xff]
  %v109 = vld [vmem:[%s0 + $0x2f0] sm:$0xff]
  %v110 = vld [vmem:[%s0 + $0x2f8] sm:$0xff]
  %v111 = vld [vmem:[%s0 + $0x300] sm:$0xff]
  %v112 = vld [vmem:[%s0 + $0x308] sm:$0xff]
  %v113 = vld [vmem:[%s0 + $0x310] sm:$0xff]
  %v114 = vld [vmem:[%s0 + $0x318] sm:$0xff]
  %v115 = vld [vmem:[%s0 + $0x320] sm:$0xff]
  %v116 = vld [vmem:[%s0 + $0x328] sm:$0xff]
  %v117 = vld [vmem:[%s0 + $0x330] sm:$0xff]
  %v118 = vld [vmem:[%s0 + $0x338] sm:$0xff]
  %v119 = vld [vmem:[%s0 + $0x340] sm:$0xff]
  %v120 = vld [vmem:[%s0 + $0x348] sm:$0xff]
  %v121 = vld [vmem:[%s0 + $0x350] sm:$0xff]
  %v122 = vld [vmem:[%s0 + $0x358] sm:$0xff]
  %v123 = vld [vmem:[%s0 + $0x360] sm:$0xff]
  %v124 = vld [vmem:[%s0 + $0x368] sm:$0xff]
  %v125 = vld [vmem:[%s0 + $0x370] sm:$0xff]
  %v126 = vld [vmem:[%s0 + $0x378] sm:$0xff]
  %v127 = vld [vmem:[%s0 + $0x380] sm:$0xff]
  %v128 = vld [vmem:[%s0 + $0x388] sm:$0xff]
  %v129 = vld [vmem:[%s0 + $0x390] sm:$0xff]
  %v130 = vld [vmem:[%s0 + $0x398] sm:$0xff]
  %v131 = vld [vmem:[%s0 + $0x3a0] sm:$0xff]
  %v132 = vld [vmem:[%s0 + $0x3a8] sm:$0xff]
  %v133 = vld [vmem:[%s0 + $0x3b0] sm:$0xff]
  %v134 = vld [vmem:[%s0 + $0x3b8] sm:$0xff]
  %v135 = vld [vmem:[%s1] sm:$0xf]
  %v136 = vld [vmem:[%s1 + $0x4] sm:$0xf]
  %v137 = vld [vmem:[%s1 + $0x8] sm:$0xf]
  %v138 = vld [vmem:[%s1 + $0xc] sm:$0xf]
  %v139 = vld [vmem:[%s1 + $0x10] sm:$0xf]
  %v140 = vld [vmem:[%s1 + $0x14] sm:$0xf]
  %v141 = vld [vmem:[%s1 + $0x18] sm:$0xf]
  %v142 = vld [vmem:[%s1 + $0x1c] sm:$0xf]
  %v143 = vld [vmem:[%s1 + $0x20] sm:$0xf]
  %v144 = vld [vmem:[%s1 + $0x24] sm:$0xf]
  %v145 = vld [vmem:[%s1 + $0x28] sm:$0xf]
  %v146 = vld [vmem:[%s1 + $0x2c] sm:$0xf]
  %v147 = vld [vmem:[%s1 + $0x30] sm:$0xf]
  %v148 = vld [vmem:[%s1 + $0x34] sm:$0xf]
  %v149 = vld [vmem:[%s1 + $0x38] sm:$0xf]
  %v150 = vld [vmem:[%s1 + $0x3c] sm:$0xf]
  %v151 = vld [vmem:[%s1 + $0x40] sm:$0xf]
  %v152 = vld [vmem:[%s1 + $0x44] sm:$0xf]
  %v153 = vld [vmem:[%s1 + $0x48] sm:$0xf]
  %v154 = vld [vmem:[%s1 + $0x4c] sm:$0xf]
  %v155 = vld [vmem:[%s1 + $0x50] sm:$0xf]
  %v156 = vld [vmem:[%s1 + $0x54] sm:$0xf]
  %v157 = vld [vmem:[%s1 + $0x58] sm:$0xf]
  %v158 = vld [vmem:[%s1 + $0x5c] sm:$0xf]
  %v159 = vld [vmem:[%s1 + $0x60] sm:$0xf]
  %v160 = vld [vmem:[%s1 + $0x64] sm:$0xf]
  %v161 = vld [vmem:[%s1 + $0x68] sm:$0xf]
  %v162 = vld [vmem:[%s1 + $0x6c] sm:$0xf]
  %v163 = vld [vmem:[%s1 + $0x70] sm:$0xf]
  %v164 = vld [vmem:[%s1 + $0x74] sm:$0xf]
  %v165 = vld [vmem:[%s1 + $0x78] sm:$0xf]
  %v166 = vld [vmem:[%s1 + $0x7c] sm:$0xf]
  %v167 = vld [vmem:[%s1 + $0x80] sm:$0xf]
  %v168 = vld [vmem:[%s1 + $0x84] sm:$0xf]
  %v169 = vld [vmem:[%s1 + $0x88] sm:$0xf]
  %v170 = vld [vmem:[%s1 + $0x8c] sm:$0xf]
  %v171 = vld [vmem:[%s1 + $0x90] sm:$0xf]
  %v172 = vld [vmem:[%s1 + $0x94] sm:$0xf]
  %v173 = vld [vmem:[%s1 + $0x98] sm:$0xf]
  %v174 = vld [vmem:[%s1 + $0x9c] sm:$0xf]
  %v175 = vld [vmem:[%s1 + $0xa0] sm:$0xf]
  %v176 = vld [vmem:[%s1 + $0xa4] sm:$0xf]
  %v177 = vld [vmem:[%s1 + $0xa8] sm:$0xf]
  %v178 = vld [vmem:[%s1 + $0xac] sm:$0xf]
  %v179 = vld [vmem:[%s1 + $0xb0] sm:$0xf]
  %v180 = vld [vmem:[%s1 + $0xb4] sm:$0xf]
  %v181 = vld [vmem:[%s1 + $0xb8] sm:$0xf]
  %v182 = vld [vmem:[%s1 + $0xbc] sm:$0xf]
  %v183 = vld [vmem:[%s1 + $0xc0] sm:$0xf]
  %v184 = vld [vmem:[%s1 + $0xc4] sm:$0xf]
  %v185 = vld [vmem:[%s1 + $0xc8] sm:$0xf]
  %v186 = vld [vmem:[%s1 + $0xcc] sm:$0xf]
  %v187 = vld [vmem:[%s1 + $0xd0] sm:$0xf]
  %v188 = vld [vmem:[%s1 + $0xd4] sm:$0xf]
  %v189 = vld [vmem:[%s1 + $0xd8] sm:$0xf]
  %v190 = vld [vmem:[%s1 + $0xdc] sm:$0xf]
  %v191 = vld [vmem:[%s1 + $0xe0] sm:$0xf]
  %v192 = vld [vmem:[%s1 + $0xe4] sm:$0xf]
  %v193 = vld [vmem:[%s1 + $0xe8] sm:$0xf]
  %v194 = vld [vmem:[%s1 + $0xec] sm:$0xf]
  %v195 = vld [vmem:[%s1 + $0xf0] sm:$0xf]
  %v196 = vld [vmem:[%s1 + $0xf4] sm:$0xf]
  %v197 = vld [vmem:[%s1 + $0xf8] sm:$0xf]
  %v198 = vld [vmem:[%s1 + $0xfc] sm:$0xf]
  %v199 = vld [vmem:[%s2] sm:$0x1]
  %v201 = vlaneseq
  %v202 = vshrl.u32 %v201, 7
  %v203 = vsub.s32 0, %v202
  %v204 = vrot.slane %v199, %v203
  %v326 = vunpack.c.l.b16 %v15
  %v327 = vunpack.c.h.b16 %v15
  %v328 = vunpack.c.l.b16 %v16
  %v329 = vunpack.c.h.b16 %v16
  %v330 = vunpack.c.l.b16 %v17
  %v331 = vunpack.c.h.b16 %v17
  %v332 = vunpack.c.l.b16 %v18
  %v333 = vunpack.c.h.b16 %v18
  %v334 = vunpack.c.l.b16 %v19
  %v335 = vunpack.c.h.b16 %v19
  %v336 = vunpack.c.l.b16 %v20
  %v337 = vunpack.c.h.b16 %v20
  %v338 = vunpack.c.l.b16 %v21
  %v339 = vunpack.c.h.b16 %v21
  %v340 = vunpack.c.l.b16 %v22
  %v341 = vunpack.c.h.b16 %v22
  %v342 = vunpack.c.l.b16 %v23
  %v343 = vunpack.c.h.b16 %v23
  %v344 = vunpack.c.l.b16 %v24
  %v345 = vunpack.c.h.b16 %v24
  %v346 = vunpack.c.l.b16 %v25
  %v347 = vunpack.c.h.b16 %v25
  %v348 = vunpack.c.l.b16 %v26
  %v349 = vunpack.c.h.b16 %v26
  %v350 = vunpack.c.l.b16 %v27
  %v351 = vunpack.c.h.b16 %v27
  %v352 = vunpack.c.l.b16 %v28
  %v353 = vunpack.c.h.b16 %v28
  %v354 = vunpack.c.l.b16 %v29
  %v355 = vunpack.c.h.b16 %v29
  %v356 = vunpack.c.l.b16 %v30
  %v357 = vunpack.c.h.b16 %v30
  %v358 = vunpack.c.l.b16 %v31
  %v359 = vunpack.c.h.b16 %v31
  %v360 = vunpack.c.l.b16 %v32
  %v361 = vunpack.c.h.b16 %v32
  %v362 = vunpack.c.l.b16 %v33
  %v363 = vunpack.c.h.b16 %v33
  %v364 = vunpack.c.l.b16 %v34
  %v365 = vunpack.c.h.b16 %v34
  %v366 = vunpack.c.l.b16 %v35
  %v367 = vunpack.c.h.b16 %v35
  %v368 = vunpack.c.l.b16 %v36
  %v369 = vunpack.c.h.b16 %v36
  %v370 = vunpack.c.l.b16 %v37
  %v371 = vunpack.c.h.b16 %v37
  %v372 = vunpack.c.l.b16 %v38
  %v373 = vunpack.c.h.b16 %v38
  %v374 = vunpack.c.l.b16 %v39
  %v375 = vunpack.c.h.b16 %v39
  %v376 = vunpack.c.l.b16 %v40
  %v377 = vunpack.c.h.b16 %v40
  %v378 = vunpack.c.l.b16 %v41
  %v379 = vunpack.c.h.b16 %v41
  %v380 = vunpack.c.l.b16 %v42
  %v381 = vunpack.c.h.b16 %v42
  %v382 = vunpack.c.l.b16 %v43
  %v383 = vunpack.c.h.b16 %v43
  %v384 = vunpack.c.l.b16 %v44
  %v385 = vunpack.c.h.b16 %v44
  %v386 = vunpack.c.l.b16 %v45
  %v387 = vunpack.c.h.b16 %v45
  %v388 = vunpack.c.l.b16 %v46
  %v389 = vunpack.c.h.b16 %v46
  %v390 = vunpack.c.l.b16 %v47
  %v391 = vunpack.c.h.b16 %v47
  %v392 = vunpack.c.l.b16 %v48
  %v393 = vunpack.c.h.b16 %v48
  %v394 = vunpack.c.l.b16 %v49
  %v395 = vunpack.c.h.b16 %v49
  %v396 = vunpack.c.l.b16 %v50
  %v397 = vunpack.c.h.b16 %v50
  %v398 = vunpack.c.l.b16 %v51
  %v399 = vunpack.c.h.b16 %v51
  %v400 = vunpack.c.l.b16 %v52
  %v401 = vunpack.c.h.b16 %v52
  %v402 = vunpack.c.l.b16 %v53
  %v403 = vunpack.c.h.b16 %v53
  %v404 = vunpack.c.l.b16 %v54
  %v405 = vunpack.c.h.b16 %v54
  %v406 = vunpack.c.l.b16 %v55
  %v407 = vunpack.c.h.b16 %v55
  %v408 = vunpack.c.l.b16 %v56
  %v409 = vunpack.c.h.b16 %v56
  %v410 = vunpack.c.l.b16 %v57
  %v411 = vunpack.c.h.b16 %v57
  %v412 = vunpack.c.l.b16 %v58
  %v413 = vunpack.c.h.b16 %v58
  %v414 = vunpack.c.l.b16 %v59
  %v415 = vunpack.c.h.b16 %v59
  %v416 = vunpack.c.l.b16 %v60
  %v417 = vunpack.c.h.b16 %v60
  %v418 = vunpack.c.l.b16 %v61
  %v419 = vunpack.c.h.b16 %v61
  %v420 = vunpack.c.l.b16 %v62
  %v421 = vunpack.c.h.b16 %v62
  %v422 = vunpack.c.l.b16 %v63
  %v423 = vunpack.c.h.b16 %v63
  %v424 = vunpack.c.l.b16 %v64
  %v425 = vunpack.c.h.b16 %v64
  %v426 = vunpack.c.l.b16 %v65
  %v427 = vunpack.c.h.b16 %v65
  %v428 = vunpack.c.l.b16 %v66
  %v429 = vunpack.c.h.b16 %v66
  %v430 = vunpack.c.l.b16 %v67
  %v431 = vunpack.c.h.b16 %v67
  %v432 = vunpack.c.l.b16 %v68
  %v433 = vunpack.c.h.b16 %v68
  %v434 = vunpack.c.l.b16 %v69
  %v435 = vunpack.c.h.b16 %v69
  %v436 = vunpack.c.l.b16 %v70
  %v437 = vunpack.c.h.b16 %v70
  %v438 = vunpack.c.l.b16 %v71
  %v439 = vunpack.c.h.b16 %v71
  %v440 = vunpack.c.l.b16 %v72
  %v441 = vunpack.c.h.b16 %v72
  %v442 = vunpack.c.l.b16 %v73
  %v443 = vunpack.c.h.b16 %v73
  %v444 = vunpack.c.l.b16 %v74
  %v445 = vunpack.c.h.b16 %v74
  %v446 = vunpack.c.l.b16 %v75
  %v447 = vunpack.c.h.b16 %v75
  %v448 = vunpack.c.l.b16 %v76
  %v449 = vunpack.c.h.b16 %v76
  %v450 = vunpack.c.l.b16 %v77
  %v451 = vunpack.c.h.b16 %v77
  %v452 = vunpack.c.l.b16 %v78
  %v453 = vunpack.c.h.b16 %v78
  %v454 = vunpack.c.l.b16 %v79
  %v455 = vunpack.c.h.b16 %v79
  %v456 = vunpack.c.l.b16 %v80
  %v457 = vunpack.c.h.b16 %v80
  %v458 = vunpack.c.l.b16 %v81
  %v459 = vunpack.c.h.b16 %v81
  %v460 = vunpack.c.l.b16 %v82
  %v461 = vunpack.c.h.b16 %v82
  %v462 = vunpack.c.l.b16 %v83
  %v463 = vunpack.c.h.b16 %v83
  %v464 = vunpack.c.l.b16 %v84
  %v465 = vunpack.c.h.b16 %v84
  %v466 = vunpack.c.l.b16 %v85
  %v467 = vunpack.c.h.b16 %v85
  %v468 = vunpack.c.l.b16 %v86
  %v469 = vunpack.c.h.b16 %v86
  %v470 = vunpack.c.l.b16 %v87
  %v471 = vunpack.c.h.b16 %v87
  %v472 = vunpack.c.l.b16 %v88
  %v473 = vunpack.c.h.b16 %v88
  %v474 = vunpack.c.l.b16 %v89
  %v475 = vunpack.c.h.b16 %v89
  %v476 = vunpack.c.l.b16 %v90
  %v477 = vunpack.c.h.b16 %v90
  %v478 = vunpack.c.l.b16 %v91
  %v479 = vunpack.c.h.b16 %v91
  %v480 = vunpack.c.l.b16 %v92
  %v481 = vunpack.c.h.b16 %v92
  %v482 = vunpack.c.l.b16 %v93
  %v483 = vunpack.c.h.b16 %v93
  %v484 = vunpack.c.l.b16 %v94
  %v485 = vunpack.c.h.b16 %v94
  %v486 = vunpack.c.l.b16 %v95
  %v487 = vunpack.c.h.b16 %v95
  %v488 = vunpack.c.l.b16 %v96
  %v489 = vunpack.c.h.b16 %v96
  %v490 = vunpack.c.l.b16 %v97
  %v491 = vunpack.c.h.b16 %v97
  %v492 = vunpack.c.l.b16 %v98
  %v493 = vunpack.c.h.b16 %v98
  %v494 = vunpack.c.l.b16 %v99
  %v495 = vunpack.c.h.b16 %v99
  %v496 = vunpack.c.l.b16 %v100
  %v497 = vunpack.c.h.b16 %v100
  %v498 = vunpack.c.l.b16 %v101
  %v499 = vunpack.c.h.b16 %v101
  %v500 = vunpack.c.l.b16 %v102
  %v501 = vunpack.c.h.b16 %v102
  %v502 = vunpack.c.l.b16 %v103
  %v503 = vunpack.c.h.b16 %v103
  %v504 = vunpack.c.l.b16 %v104
  %v505 = vunpack.c.h.b16 %v104
  %v506 = vunpack.c.l.b16 %v105
  %v507 = vunpack.c.h.b16 %v105
  %v508 = vunpack.c.l.b16 %v106
  %v509 = vunpack.c.h.b16 %v106
  %v510 = vunpack.c.l.b16 %v107
  %v511 = vunpack.c.h.b16 %v107
  %v512 = vunpack.c.l.b16 %v108
  %v513 = vunpack.c.h.b16 %v108
  %v514 = vunpack.c.l.b16 %v109
  %v515 = vunpack.c.h.b16 %v109
  %v516 = vunpack.c.l.b16 %v110
  %v517 = vunpack.c.h.b16 %v110
  %v518 = vunpack.c.l.b16 %v111
  %v519 = vunpack.c.h.b16 %v111
  %v520 = vunpack.c.l.b16 %v112
  %v521 = vunpack.c.h.b16 %v112
  %v522 = vunpack.c.l.b16 %v113
  %v523 = vunpack.c.h.b16 %v113
  %v524 = vunpack.c.l.b16 %v114
  %v525 = vunpack.c.h.b16 %v114
  %v526 = vunpack.c.l.b16 %v115
  %v527 = vunpack.c.h.b16 %v115
  %v528 = vunpack.c.l.b16 %v116
  %v529 = vunpack.c.h.b16 %v116
  %v530 = vunpack.c.l.b16 %v117
  %v531 = vunpack.c.h.b16 %v117
  %v532 = vunpack.c.l.b16 %v118
  %v533 = vunpack.c.h.b16 %v118
  %v534 = vunpack.c.l.b16 %v119
  %v535 = vunpack.c.h.b16 %v119
  %v536 = vunpack.c.l.b16 %v120
  %v537 = vunpack.c.h.b16 %v120
  %v538 = vunpack.c.l.b16 %v121
  %v539 = vunpack.c.h.b16 %v121
  %v540 = vunpack.c.l.b16 %v122
  %v541 = vunpack.c.h.b16 %v122
  %v542 = vunpack.c.l.b16 %v123
  %v543 = vunpack.c.h.b16 %v123
  %v544 = vunpack.c.l.b16 %v124
  %v545 = vunpack.c.h.b16 %v124
  %v546 = vunpack.c.l.b16 %v125
  %v547 = vunpack.c.h.b16 %v125
  %v548 = vunpack.c.l.b16 %v126
  %v549 = vunpack.c.h.b16 %v126
  %v550 = vunpack.c.l.b16 %v127
  %v551 = vunpack.c.h.b16 %v127
  %v552 = vunpack.c.l.b16 %v128
  %v553 = vunpack.c.h.b16 %v128
  %v554 = vunpack.c.l.b16 %v129
  %v555 = vunpack.c.h.b16 %v129
  %v556 = vunpack.c.l.b16 %v130
  %v557 = vunpack.c.h.b16 %v130
  %v558 = vunpack.c.l.b16 %v131
  %v559 = vunpack.c.h.b16 %v131
  %v560 = vunpack.c.l.b16 %v132
  %v561 = vunpack.c.h.b16 %v132
  %v562 = vunpack.c.l.b16 %v133
  %v563 = vunpack.c.h.b16 %v133
  %v564 = vunpack.c.l.b16 %v134
  %v565 = vunpack.c.h.b16 %v134
  %v566 = vpack.c.b16 %v330, %v326
  %v567 = vpack.c.b16 %v331, %v327
  %v568 = vpack.c.b16 %v332, %v328
  %v569 = vpack.c.b16 %v333, %v329
  %v570 = vpack.c.b16 %v338, %v334
  %v571 = vpack.c.b16 %v339, %v335
  %v572 = vpack.c.b16 %v340, %v336
  %v573 = vpack.c.b16 %v341, %v337
  %v574 = vpack.c.b16 %v346, %v342
  %v575 = vpack.c.b16 %v347, %v343
  %v576 = vpack.c.b16 %v348, %v344
  %v577 = vpack.c.b16 %v349, %v345
  %v578 = vpack.c.b16 %v354, %v350
  %v579 = vpack.c.b16 %v355, %v351
  %v580 = vpack.c.b16 %v356, %v352
  %v581 = vpack.c.b16 %v357, %v353
  %v582 = vpack.c.b16 %v362, %v358
  %v583 = vpack.c.b16 %v363, %v359
  %v584 = vpack.c.b16 %v364, %v360
  %v585 = vpack.c.b16 %v365, %v361
  %v586 = vpack.c.b16 %v370, %v366
  %v587 = vpack.c.b16 %v371, %v367
  %v588 = vpack.c.b16 %v372, %v368
  %v589 = vpack.c.b16 %v373, %v369
  %v590 = vpack.c.b16 %v378, %v374
  %v591 = vpack.c.b16 %v379, %v375
  %v592 = vpack.c.b16 %v380, %v376
  %v593 = vpack.c.b16 %v381, %v377
  %v594 = vpack.c.b16 %v386, %v382
  %v595 = vpack.c.b16 %v387, %v383
  %v596 = vpack.c.b16 %v388, %v384
  %v597 = vpack.c.b16 %v389, %v385
  %v598 = vpack.c.b16 %v394, %v390
  %v599 = vpack.c.b16 %v395, %v391
  %v600 = vpack.c.b16 %v396, %v392
  %v601 = vpack.c.b16 %v397, %v393
  %v602 = vpack.c.b16 %v402, %v398
  %v603 = vpack.c.b16 %v403, %v399
  %v604 = vpack.c.b16 %v404, %v400
  %v605 = vpack.c.b16 %v405, %v401
  %v606 = vpack.c.b16 %v410, %v406
  %v607 = vpack.c.b16 %v411, %v407
  %v608 = vpack.c.b16 %v412, %v408
  %v609 = vpack.c.b16 %v413, %v409
  %v610 = vpack.c.b16 %v418, %v414
  %v611 = vpack.c.b16 %v419, %v415
  %v612 = vpack.c.b16 %v420, %v416
  %v613 = vpack.c.b16 %v421, %v417
  %v614 = vpack.c.b16 %v426, %v422
  %v615 = vpack.c.b16 %v427, %v423
  %v616 = vpack.c.b16 %v428, %v424
  %v617 = vpack.c.b16 %v429, %v425
  %v618 = vpack.c.b16 %v434, %v430
  %v619 = vpack.c.b16 %v435, %v431
  %v620 = vpack.c.b16 %v436, %v432
  %v621 = vpack.c.b16 %v437, %v433
  %v622 = vpack.c.b16 %v442, %v438
  %v623 = vpack.c.b16 %v443, %v439
  %v624 = vpack.c.b16 %v444, %v440
  %v625 = vpack.c.b16 %v445, %v441
  %v626 = vpack.c.b16 %v450, %v446
  %v627 = vpack.c.b16 %v451, %v447
  %v628 = vpack.c.b16 %v452, %v448
  %v629 = vpack.c.b16 %v453, %v449
  %v630 = vpack.c.b16 %v458, %v454
  %v631 = vpack.c.b16 %v459, %v455
  %v632 = vpack.c.b16 %v460, %v456
  %v633 = vpack.c.b16 %v461, %v457
  %v634 = vpack.c.b16 %v466, %v462
  %v635 = vpack.c.b16 %v467, %v463
  %v636 = vpack.c.b16 %v468, %v464
  %v637 = vpack.c.b16 %v469, %v465
  %v638 = vpack.c.b16 %v474, %v470
  %v639 = vpack.c.b16 %v475, %v471
  %v640 = vpack.c.b16 %v476, %v472
  %v641 = vpack.c.b16 %v477, %v473
  %v642 = vpack.c.b16 %v482, %v478
  %v643 = vpack.c.b16 %v483, %v479
  %v644 = vpack.c.b16 %v484, %v480
  %v645 = vpack.c.b16 %v485, %v481
  %v646 = vpack.c.b16 %v490, %v486
  %v647 = vpack.c.b16 %v491, %v487
  %v648 = vpack.c.b16 %v492, %v488
  %v649 = vpack.c.b16 %v493, %v489
  %v650 = vpack.c.b16 %v498, %v494
  %v651 = vpack.c.b16 %v499, %v495
  %v652 = vpack.c.b16 %v500, %v496
  %v653 = vpack.c.b16 %v501, %v497
  %v654 = vpack.c.b16 %v506, %v502
  %v655 = vpack.c.b16 %v507, %v503
  %v656 = vpack.c.b16 %v508, %v504
  %v657 = vpack.c.b16 %v509, %v505
  %v658 = vpack.c.b16 %v514, %v510
  %v659 = vpack.c.b16 %v515, %v511
  %v660 = vpack.c.b16 %v516, %v512
  %v661 = vpack.c.b16 %v517, %v513
  %v662 = vpack.c.b16 %v522, %v518
  %v663 = vpack.c.b16 %v523, %v519
  %v664 = vpack.c.b16 %v524, %v520
  %v665 = vpack.c.b16 %v525, %v521
  %v666 = vpack.c.b16 %v530, %v526
  %v667 = vpack.c.b16 %v531, %v527
  %v668 = vpack.c.b16 %v532, %v528
  %v669 = vpack.c.b16 %v533, %v529
  %v670 = vpack.c.b16 %v538, %v534
  %v671 = vpack.c.b16 %v539, %v535
  %v672 = vpack.c.b16 %v540, %v536
  %v673 = vpack.c.b16 %v541, %v537
  %v674 = vpack.c.b16 %v546, %v542
  %v675 = vpack.c.b16 %v547, %v543
  %v676 = vpack.c.b16 %v548, %v544
  %v677 = vpack.c.b16 %v549, %v545
  %v678 = vpack.c.b16 %v554, %v550
  %v679 = vpack.c.b16 %v555, %v551
  %v680 = vpack.c.b16 %v556, %v552
  %v681 = vpack.c.b16 %v557, %v553
  %v682 = vpack.c.b16 %v562, %v558
  %v683 = vpack.c.b16 %v563, %v559
  %v684 = vpack.c.b16 %v564, %v560
  %v685 = vpack.c.b16 %v565, %v561
  %v870 = vunpack.c.l.b16 %v135
  %v871 = vunpack.c.l.b16 %v136
  %v872 = vunpack.c.l.b16 %v137
  %v873 = vunpack.c.l.b16 %v138
  %v874 = vunpack.c.l.b16 %v139
  %v875 = vunpack.c.l.b16 %v140
  %v876 = vunpack.c.l.b16 %v141
  %v877 = vunpack.c.l.b16 %v142
  %v878 = vunpack.c.l.b16 %v143
  %v879 = vunpack.c.l.b16 %v144
  %v880 = vunpack.c.l.b16 %v145
  %v881 = vunpack.c.l.b16 %v146
  %v882 = vunpack.c.l.b16 %v147
  %v883 = vunpack.c.l.b16 %v148
  %v884 = vunpack.c.l.b16 %v149
  %v885 = vunpack.c.l.b16 %v150
  %v886 = vunpack.c.l.b16 %v151
  %v887 = vunpack.c.l.b16 %v152
  %v888 = vunpack.c.l.b16 %v153
  %v889 = vunpack.c.l.b16 %v154
  %v890 = vunpack.c.l.b16 %v155
  %v891 = vunpack.c.l.b16 %v156
  %v892 = vunpack.c.l.b16 %v157
  %v893 = vunpack.c.l.b16 %v158
  %v894 = vunpack.c.l.b16 %v159
  %v895 = vunpack.c.l.b16 %v160
  %v896 = vunpack.c.l.b16 %v161
  %v897 = vunpack.c.l.b16 %v162
  %v898 = vunpack.c.l.b16 %v163
  %v899 = vunpack.c.l.b16 %v164
  %v900 = vunpack.c.l.b16 %v165
  %v901 = vunpack.c.l.b16 %v166
  %v902 = vunpack.c.l.b16 %v167
  %v903 = vunpack.c.l.b16 %v168
  %v904 = vunpack.c.l.b16 %v169
  %v905 = vunpack.c.l.b16 %v170
  %v906 = vunpack.c.l.b16 %v171
  %v907 = vunpack.c.l.b16 %v172
  %v908 = vunpack.c.l.b16 %v173
  %v909 = vunpack.c.l.b16 %v174
  %v910 = vunpack.c.l.b16 %v175
  %v911 = vunpack.c.l.b16 %v176
  %v912 = vunpack.c.l.b16 %v177
  %v913 = vunpack.c.l.b16 %v178
  %v914 = vunpack.c.l.b16 %v179
  %v915 = vunpack.c.l.b16 %v180
  %v916 = vunpack.c.l.b16 %v181
  %v917 = vunpack.c.l.b16 %v182
  %v918 = vunpack.c.l.b16 %v183
  %v919 = vunpack.c.l.b16 %v184
  %v920 = vunpack.c.l.b16 %v185
  %v921 = vunpack.c.l.b16 %v186
  %v922 = vunpack.c.l.b16 %v187
  %v923 = vunpack.c.l.b16 %v188
  %v924 = vunpack.c.l.b16 %v189
  %v925 = vunpack.c.l.b16 %v190
  %v926 = vunpack.c.l.b16 %v191
  %v927 = vunpack.c.l.b16 %v192
  %v928 = vunpack.c.l.b16 %v193
  %v929 = vunpack.c.l.b16 %v194
  %v930 = vunpack.c.l.b16 %v195
  %v931 = vunpack.c.l.b16 %v196
  %v932 = vunpack.c.l.b16 %v197
  %v933 = vunpack.c.l.b16 %v198
  %v934 = vpack.c.b16 %v871, %v870
  %v935 = vpack.c.b16 %v873, %v872
  %v936 = vpack.c.b16 %v875, %v874
  %v937 = vpack.c.b16 %v877, %v876
  %v938 = vpack.c.b16 %v879, %v878
  %v939 = vpack.c.b16 %v881, %v880
  %v940 = vpack.c.b16 %v883, %v882
  %v941 = vpack.c.b16 %v885, %v884
  %v942 = vpack.c.b16 %v887, %v886
  %v943 = vpack.c.b16 %v889, %v888
  %v944 = vpack.c.b16 %v891, %v890
  %v945 = vpack.c.b16 %v893, %v892
  %v946 = vpack.c.b16 %v895, %v894
  %v947 = vpack.c.b16 %v897, %v896
  %v948 = vpack.c.b16 %v899, %v898
  %v949 = vpack.c.b16 %v901, %v900
  %v950 = vpack.c.b16 %v903, %v902
  %v951 = vpack.c.b16 %v905, %v904
  %v952 = vpack.c.b16 %v907, %v906
  %v953 = vpack.c.b16 %v909, %v908
  %v954 = vpack.c.b16 %v911, %v910
  %v955 = vpack.c.b16 %v913, %v912
  %v956 = vpack.c.b16 %v915, %v914
  %v957 = vpack.c.b16 %v917, %v916
  %v958 = vpack.c.b16 %v919, %v918
  %v959 = vpack.c.b16 %v921, %v920
  %v960 = vpack.c.b16 %v923, %v922
  %v961 = vpack.c.b16 %v925, %v924
  %v962 = vpack.c.b16 %v927, %v926
  %v963 = vpack.c.b16 %v929, %v928
  %v964 = vpack.c.b16 %v931, %v930
  %v965 = vpack.c.b16 %v933, %v932
  %998 = vmatprep.subr.bf16.mxu0 0
  %999 = vmatpush1.bf16.msra.mxu0 %v934
  %1000 = vmatprep.subr.bf16.mxu0 0
  %1001 = vmatpush1.bf16.msra.mxu0 %v935
  %1002 = vmatprep.subr.bf16.mxu0 0
  %1003 = vmatpush1.bf16.msra.mxu0 %v936
  %1004 = vmatprep.subr.bf16.mxu0 0
  %1005 = vmatpush1.bf16.msra.mxu0 %v937
  %1006 = vmatprep.subr.bf16.mxu0 0
  %1007 = vmatpush1.bf16.msra.mxu0 %v938
  %1008 = vmatprep.subr.bf16.mxu0 0
  %1009 = vmatpush1.bf16.msra.mxu0 %v939
  %1010 = vmatprep.subr.bf16.mxu0 0
  %1011 = vmatpush1.bf16.msra.mxu0 %v940
  %1012 = vmatprep.subr.bf16.mxu0 0
  %1013 = vmatpush1.bf16.msra.mxu0 %v941
  %1014 = vmatprep.subr.bf16.mxu0 0
  %1015 = vmatpush1.bf16.msra.mxu0 %v942
  %1016 = vmatprep.subr.bf16.mxu0 0
  %1017 = vmatpush1.bf16.msra.mxu0 %v943
  %1018 = vmatprep.subr.bf16.mxu0 0
  %1019 = vmatpush1.bf16.msra.mxu0 %v944
  %1020 = vmatprep.subr.bf16.mxu0 0
  %1021 = vmatpush1.bf16.msra.mxu0 %v945
  %1022 = vmatprep.subr.bf16.mxu0 0
  %1023 = vmatpush1.bf16.msra.mxu0 %v946
  %1024 = vmatprep.subr.bf16.mxu0 0
  %1025 = vmatpush1.bf16.msra.mxu0 %v947
  %1026 = vmatprep.subr.bf16.mxu0 0
  %1027 = vmatpush1.bf16.msra.mxu0 %v948
  %1028 = vmatprep.subr.bf16.mxu0 0
  %1029 = vmatpush1.bf16.msra.mxu0 %v949
  %1030 = vmatprep.mubr.bf16.mxu0 %v567
  %1031 = vmatmul.mubr.bf16.gmra.mrb[0].mxu0 %v566
  %v1032 = vpop.f32.mrb[0].mxu0
  %v1033 = vadd.f32 %v204, %v1032
  %v1034 = vpop.f32.mrb[0].mxu0
  %v1035 = vpop.f32.mrb[0].mxu0
  %v1036 = vadd.f32 %v204, %v1035
  %v1037 = vpop.f32.mrb[0].mxu0
  %1038 = vmatprep.mubr.bf16.mxu0 %v571
  %1039 = vmatmul.mubr.bf16.gmra.mrb[0].mxu0 %v570
  %v1040 = vpop.f32.mrb[0].mxu0
  %v1041 = vadd.f32 %v204, %v1040
  %v1042 = vpop.f32.mrb[0].mxu0
  %v1043 = vpop.f32.mrb[0].mxu0
  %v1044 = vadd.f32 %v204, %v1043
  %v1045 = vpop.f32.mrb[0].mxu0
  %1046 = vmatprep.mubr.bf16.mxu0 %v575
  %1047 = vmatmul.mubr.bf16.gmra.mrb[0].mxu0 %v574
  %v1048 = vpop.f32.mrb[0].mxu0
  %v1049 = vadd.f32 %v204, %v1048
  %v1050 = vpop.f32.mrb[0].mxu0
  %v1051 = vpop.f32.mrb[0].mxu0
  %v1052 = vadd.f32 %v204, %v1051
  %v1053 = vpop.f32.mrb[0].mxu0
  %1054 = vmatprep.mubr.bf16.mxu0 %v579
  %1055 = vmatmul.mubr.bf16.gmra.mrb[0].mxu0 %v578
  %v1056 = vpop.f32.mrb[0].mxu0
  %v1057 = vadd.f32 %v204, %v1056
  %v1058 = vpop.f32.mrb[0].mxu0
  %v1059 = vpop.f32.mrb[0].mxu0
  %v1060 = vadd.f32 %v204, %v1059
  %v1061 = vpop.f32.mrb[0].mxu0
  %1062 = vmatprep.mubr.bf16.mxu0 %v583
  %1063 = vmatmul.mubr.bf16.gmra.mrb[0].mxu0 %v582
  %v1064 = vpop.f32.mrb[0].mxu0
  %v1065 = vadd.f32 %v204, %v1064
  %v1066 = vpop.f32.mrb[0].mxu0
  %v1067 = vpop.f32.mrb[0].mxu0
  %v1068 = vadd.f32 %v204, %v1067
  %v1069 = vpop.f32.mrb[0].mxu0
  %1070 = vmatprep.mubr.bf16.mxu0 %v587
  %1071 = vmatmul.mubr.bf16.gmra.mrb[0].mxu0 %v586
  %v1072 = vpop.f32.mrb[0].mxu0
  %v1073 = vadd.f32 %v204, %v1072
  %v1074 = vpop.f32.mrb[0].mxu0
  %v1075 = vpop.f32.mrb[0].mxu0
  %v1076 = vadd.f32 %v204, %v1075
  %v1077 = vpop.f32.mrb[0].mxu0
  %1078 = vmatprep.mubr.bf16.mxu0 %v591
  %1079 = vmatmul.mubr.bf16.gmra.mrb[0].mxu0 %v590
  %v1080 = vpop.f32.mrb[0].mxu0
  %v1081 = vadd.f32 %v204, %v1080
  %v1082 = vpop.f32.mrb[0].mxu0
  %v1083 = vpop.f32.mrb[0].mxu0
  %v1084 = vadd.f32 %v204, %v1083
  %v1085 = vpop.f32.mrb[0].mxu0
  %1086 = vmatprep.mubr.bf16.mxu0 %v595
  %1087 = vmatmul.mubr.bf16.gmra.mrb[0].mxu0 %v594
  %v1088 = vpop.f32.mrb[0].mxu0
  %v1089 = vadd.f32 %v204, %v1088
  %v1090 = vpop.f32.mrb[0].mxu0
  %v1091 = vpop.f32.mrb[0].mxu0
  %v1092 = vadd.f32 %v204, %v1091
  %v1093 = vpop.f32.mrb[0].mxu0
  %1094 = vmatprep.mubr.bf16.mxu0 %v599
  %1095 = vmatmul.mubr.bf16.gmra.mrb[0].mxu0 %v598
  %v1096 = vpop.f32.mrb[0].mxu0
  %v1097 = vadd.f32 %v204, %v1096
  %v1098 = vpop.f32.mrb[0].mxu0
  %v1099 = vpop.f32.mrb[0].mxu0
  %v1100 = vadd.f32 %v204, %v1099
  %v1101 = vpop.f32.mrb[0].mxu0
  %1102 = vmatprep.mubr.bf16.mxu0 %v603
  %1103 = vmatmul.mubr.bf16.gmra.mrb[0].mxu0 %v602
  %v1104 = vpop.f32.mrb[0].mxu0
  %v1105 = vadd.f32 %v204, %v1104
  %v1106 = vpop.f32.mrb[0].mxu0
  %v1107 = vpop.f32.mrb[0].mxu0
  %v1108 = vadd.f32 %v204, %v1107
  %v1109 = vpop.f32.mrb[0].mxu0
  %1110 = vmatprep.mubr.bf16.mxu0 %v607
  %1111 = vmatmul.mubr.bf16.gmra.mrb[0].mxu0 %v606
  %v1112 = vpop.f32.mrb[0].mxu0
  %v1113 = vadd.f32 %v204, %v1112
  %v1114 = vpop.f32.mrb[0].mxu0
  %v1115 = vpop.f32.mrb[0].mxu0
  %v1116 = vadd.f32 %v204, %v1115
  %v1117 = vpop.f32.mrb[0].mxu0
  %1118 = vmatprep.mubr.bf16.mxu0 %v611
  %1119 = vmatmul.mubr.bf16.gmra.mrb[0].mxu0 %v610
  %v1120 = vpop.f32.mrb[0].mxu0
  %v1121 = vadd.f32 %v204, %v1120
  %v1122 = vpop.f32.mrb[0].mxu0
  %v1123 = vpop.f32.mrb[0].mxu0
  %v1124 = vadd.f32 %v204, %v1123
  %v1125 = vpop.f32.mrb[0].mxu0
  %1126 = vmatprep.mubr.bf16.mxu0 %v615
  %1127 = vmatmul.mubr.bf16.gmra.mrb[0].mxu0 %v614
  %v1128 = vpop.f32.mrb[0].mxu0
  %v1129 = vadd.f32 %v204, %v1128
  %v1130 = vpop.f32.mrb[0].mxu0
  %v1131 = vpop.f32.mrb[0].mxu0
  %v1132 = vadd.f32 %v204, %v1131
  %v1133 = vpop.f32.mrb[0].mxu0
  %1134 = vmatprep.mubr.bf16.mxu0 %v619
  %1135 = vmatmul.mubr.bf16.gmra.mrb[0].mxu0 %v618
  %v1136 = vpop.f32.mrb[0].mxu0
  %v1137 = vadd.f32 %v204, %v1136
  %v1138 = vpop.f32.mrb[0].mxu0
  %v1139 = vpop.f32.mrb[0].mxu0
  %v1140 = vadd.f32 %v204, %v1139
  %v1141 = vpop.f32.mrb[0].mxu0
  %1142 = vmatprep.mubr.bf16.mxu0 %v623
  %1143 = vmatmul.mubr.bf16.gmra.mrb[0].mxu0 %v622
  %v1144 = vpop.f32.mrb[0].mxu0
  %v1145 = vadd.f32 %v204, %v1144
  %v1146 = vpop.f32.mrb[0].mxu0
  %v1147 = vpop.f32.mrb[0].mxu0
  %v1148 = vadd.f32 %v204, %v1147
  %v1149 = vpop.f32.mrb[0].mxu0
  %1150 = vmatprep.mubr.bf16.mxu0 %v627
  %1151 = vmatmul.mubr.bf16.gmra.mrb[0].mxu0 %v626
  %v1152 = vpop.f32.mrb[0].mxu0
  %v1153 = vadd.f32 %v204, %v1152
  %v1154 = vpop.f32.mrb[0].mxu0
  %v1155 = vpop.f32.mrb[0].mxu0
  %v1156 = vadd.f32 %v204, %v1155
  %v1157 = vpop.f32.mrb[0].mxu0
  %1158 = vmatprep.mubr.bf16.mxu0 %v631
  %1159 = vmatmul.mubr.bf16.gmra.mrb[0].mxu0 %v630
  %v1160 = vpop.f32.mrb[0].mxu0
  %v1161 = vadd.f32 %v204, %v1160
  %v1162 = vpop.f32.mrb[0].mxu0
  %v1163 = vpop.f32.mrb[0].mxu0
  %v1164 = vadd.f32 %v204, %v1163
  %v1165 = vpop.f32.mrb[0].mxu0
  %1166 = vmatprep.mubr.bf16.mxu0 %v635
  %1167 = vmatmul.mubr.bf16.gmra.mrb[0].mxu0 %v634
  %v1168 = vpop.f32.mrb[0].mxu0
  %v1169 = vadd.f32 %v204, %v1168
  %v1170 = vpop.f32.mrb[0].mxu0
  %v1171 = vpop.f32.mrb[0].mxu0
  %v1172 = vadd.f32 %v204, %v1171
  %v1173 = vpop.f32.mrb[0].mxu0
  %1174 = vmatprep.mubr.bf16.mxu0 %v639
  %1175 = vmatmul.mubr.bf16.gmra.mrb[0].mxu0 %v638
  %v1176 = vpop.f32.mrb[0].mxu0
  %v1177 = vadd.f32 %v204, %v1176
  %v1178 = vpop.f32.mrb[0].mxu0
  %v1179 = vpop.f32.mrb[0].mxu0
  %v1180 = vadd.f32 %v204, %v1179
  %v1181 = vpop.f32.mrb[0].mxu0
  %1182 = vmatprep.mubr.bf16.mxu0 %v643
  %1183 = vmatmul.mubr.bf16.gmra.mrb[0].mxu0 %v642
  %v1184 = vpop.f32.mrb[0].mxu0
  %v1185 = vadd.f32 %v204, %v1184
  %v1186 = vpop.f32.mrb[0].mxu0
  %v1187 = vpop.f32.mrb[0].mxu0
  %v1188 = vadd.f32 %v204, %v1187
  %v1189 = vpop.f32.mrb[0].mxu0
  %1190 = vmatprep.mubr.bf16.mxu0 %v647
  %1191 = vmatmul.mubr.bf16.gmra.mrb[0].mxu0 %v646
  %v1192 = vpop.f32.mrb[0].mxu0
  %v1193 = vadd.f32 %v204, %v1192
  %v1194 = vpop.f32.mrb[0].mxu0
  %v1195 = vpop.f32.mrb[0].mxu0
  %v1196 = vadd.f32 %v204, %v1195
  %v1197 = vpop.f32.mrb[0].mxu0
  %1198 = vmatprep.mubr.bf16.mxu0 %v651
  %1199 = vmatmul.mubr.bf16.gmra.mrb[0].mxu0 %v650
  %v1200 = vpop.f32.mrb[0].mxu0
  %v1201 = vadd.f32 %v204, %v1200
  %v1202 = vpop.f32.mrb[0].mxu0
  %v1203 = vpop.f32.mrb[0].mxu0
  %v1204 = vadd.f32 %v204, %v1203
  %v1205 = vpop.f32.mrb[0].mxu0
  %1206 = vmatprep.mubr.bf16.mxu0 %v655
  %1207 = vmatmul.mubr.bf16.gmra.mrb[0].mxu0 %v654
  %v1208 = vpop.f32.mrb[0].mxu0
  %v1209 = vadd.f32 %v204, %v1208
  %v1210 = vpop.f32.mrb[0].mxu0
  %v1211 = vpop.f32.mrb[0].mxu0
  %v1212 = vadd.f32 %v204, %v1211
  %v1213 = vpop.f32.mrb[0].mxu0
  %1214 = vmatprep.mubr.bf16.mxu0 %v659
  %1215 = vmatmul.mubr.bf16.gmra.mrb[0].mxu0 %v658
  %v1216 = vpop.f32.mrb[0].mxu0
  %v1217 = vadd.f32 %v204, %v1216
  %v1218 = vpop.f32.mrb[0].mxu0
  %v1219 = vpop.f32.mrb[0].mxu0
  %v1220 = vadd.f32 %v204, %v1219
  %v1221 = vpop.f32.mrb[0].mxu0
  %1222 = vmatprep.mubr.bf16.mxu0 %v663
  %1223 = vmatmul.mubr.bf16.gmra.mrb[0].mxu0 %v662
  %v1224 = vpop.f32.mrb[0].mxu0
  %v1225 = vadd.f32 %v204, %v1224
  %v1226 = vpop.f32.mrb[0].mxu0
  %v1227 = vpop.f32.mrb[0].mxu0
  %v1228 = vadd.f32 %v204, %v1227
  %v1229 = vpop.f32.mrb[0].mxu0
  %1230 = vmatprep.mubr.bf16.mxu0 %v667
  %1231 = vmatmul.mubr.bf16.gmra.mrb[0].mxu0 %v666
  %v1232 = vpop.f32.mrb[0].mxu0
  %v1233 = vadd.f32 %v204, %v1232
  %v1234 = vpop.f32.mrb[0].mxu0
  %v1235 = vpop.f32.mrb[0].mxu0
  %v1236 = vadd.f32 %v204, %v1235
  %v1237 = vpop.f32.mrb[0].mxu0
  %1238 = vmatprep.mubr.bf16.mxu0 %v671
  %1239 = vmatmul.mubr.bf16.gmra.mrb[0].mxu0 %v670
  %v1240 = vpop.f32.mrb[0].mxu0
  %v1241 = vadd.f32 %v204, %v1240
  %v1242 = vpop.f32.mrb[0].mxu0
  %v1243 = vpop.f32.mrb[0].mxu0
  %v1244 = vadd.f32 %v204, %v1243
  %v1245 = vpop.f32.mrb[0].mxu0
  %1246 = vmatprep.mubr.bf16.mxu0 %v675
  %1247 = vmatmul.mubr.bf16.gmra.mrb[0].mxu0 %v674
  %v1248 = vpop.f32.mrb[0].mxu0
  %v1249 = vadd.f32 %v204, %v1248
  %v1250 = vpop.f32.mrb[0].mxu0
  %v1251 = vpop.f32.mrb[0].mxu0
  %v1252 = vadd.f32 %v204, %v1251
  %v1253 = vpop.f32.mrb[0].mxu0
  %1254 = vmatprep.mubr.bf16.mxu0 %v679
  %1255 = vmatmul.mubr.bf16.gmra.mrb[0].mxu0 %v678
  %v1256 = vpop.f32.mrb[0].mxu0
  %v1257 = vadd.f32 %v204, %v1256
  %v1258 = vpop.f32.mrb[0].mxu0
  %v1259 = vpop.f32.mrb[0].mxu0
  %v1260 = vadd.f32 %v204, %v1259
  %v1261 = vpop.f32.mrb[0].mxu0
  %1262 = vmatprep.mubr.bf16.mxu0 %v683
  %1263 = vmatmul.mubr.bf16.gmra.mrb[0].mxu0 %v682
  %v1264 = vpop.f32.mrb[0].mxu0
  %v1265 = vadd.f32 %v204, %v1264
  %v1266 = vpop.f32.mrb[0].mxu0
  %v1267 = vpop.f32.mrb[0].mxu0
  %v1268 = vadd.f32 %v204, %v1267
  %v1269 = vpop.f32.mrb[0].mxu0
  %1270 = vdwg.mxu0
  %1271 = vmatprep.subr.bf16.mxu0 0
  %1272 = vmatpush1.bf16.msra.mxu0 %v950
  %1273 = vmatprep.subr.bf16.mxu0 0
  %1274 = vmatpush1.bf16.msra.mxu0 %v951
  %1275 = vmatprep.subr.bf16.mxu0 0
  %1276 = vmatpush1.bf16.msra.mxu0 %v952
  %1277 = vmatprep.subr.bf16.mxu0 0
  %1278 = vmatpush1.bf16.msra.mxu0 %v953
  %1279 = vmatprep.subr.bf16.mxu0 0
  %1280 = vmatpush1.bf16.msra.mxu0 %v954
  %1281 = vmatprep.subr.bf16.mxu0 0
  %1282 = vmatpush1.bf16.msra.mxu0 %v955
  %1283 = vmatprep.subr.bf16.mxu0 0
  %1284 = vmatpush1.bf16.msra.mxu0 %v956
  %1285 = vmatprep.subr.bf16.mxu0 0
  %1286 = vmatpush1.bf16.msra.mxu0 %v957
  %1287 = vmatprep.subr.bf16.mxu0 0
  %1288 = vmatpush1.bf16.msra.mxu0 %v958
  %1289 = vmatprep.subr.bf16.mxu0 0
  %1290 = vmatpush1.bf16.msra.mxu0 %v959
  %1291 = vmatprep.subr.bf16.mxu0 0
  %1292 = vmatpush1.bf16.msra.mxu0 %v960
  %1293 = vmatprep.subr.bf16.mxu0 0
  %1294 = vmatpush1.bf16.msra.mxu0 %v961
  %1295 = vmatprep.subr.bf16.mxu0 0
  %1296 = vmatpush1.bf16.msra.mxu0 %v962
  %1297 = vmatprep.subr.bf16.mxu0 0
  %1298 = vmatpush1.bf16.msra.mxu0 %v963
  %1299 = vmatprep.subr.bf16.mxu0 0
  %1300 = vmatpush1.bf16.msra.mxu0 %v964
  %1301 = vmatprep.subr.bf16.mxu0 0
  %1302 = vmatpush1.bf16.msra.mxu0 %v965
  %1303 = vmatprep.mubr.bf16.mxu0 %v569
  %1304 = vmatmul.mubr.bf16.gmra.mrb[0].mxu0 %v568
  %v1305 = vpop.f32.mrb[0].mxu0
  %v1306 = vadd.f32 %v1033, %v1305
  %v1307 = vpop.f32.mrb[0].mxu0
  %v1308 = vpop.f32.mrb[0].mxu0
  %v1309 = vadd.f32 %v1036, %v1308
  %v1310 = vpop.f32.mrb[0].mxu0
  %1311 = vmatprep.mubr.bf16.mxu0 %v573
  %1312 = vmatmul.mubr.bf16.gmra.mrb[0].mxu0 %v572
  %v1313 = vpop.f32.mrb[0].mxu0
  %v1314 = vadd.f32 %v1041, %v1313
  %v1315 = vpop.f32.mrb[0].mxu0
  %v1316 = vpop.f32.mrb[0].mxu0
  %v1317 = vadd.f32 %v1044, %v1316
  %v1318 = vpop.f32.mrb[0].mxu0
  %1319 = vmatprep.mubr.bf16.mxu0 %v577
  %1320 = vmatmul.mubr.bf16.gmra.mrb[0].mxu0 %v576
  %v1321 = vpop.f32.mrb[0].mxu0
  %v1322 = vadd.f32 %v1049, %v1321
  %v1323 = vpop.f32.mrb[0].mxu0
  %v1324 = vpop.f32.mrb[0].mxu0
  %v1325 = vadd.f32 %v1052, %v1324
  %v1326 = vpop.f32.mrb[0].mxu0
  %1327 = vmatprep.mubr.bf16.mxu0 %v581
  %1328 = vmatmul.mubr.bf16.gmra.mrb[0].mxu0 %v580
  %v1329 = vpop.f32.mrb[0].mxu0
  %v1330 = vadd.f32 %v1057, %v1329
  %v1331 = vpop.f32.mrb[0].mxu0
  %v1332 = vpop.f32.mrb[0].mxu0
  %v1333 = vadd.f32 %v1060, %v1332
  %v1334 = vpop.f32.mrb[0].mxu0
  %1335 = vmatprep.mubr.bf16.mxu0 %v585
  %1336 = vmatmul.mubr.bf16.gmra.mrb[0].mxu0 %v584
  %v1337 = vpop.f32.mrb[0].mxu0
  %v1338 = vadd.f32 %v1065, %v1337
  %v1339 = vpop.f32.mrb[0].mxu0
  %v1340 = vpop.f32.mrb[0].mxu0
  %v1341 = vadd.f32 %v1068, %v1340
  %v1342 = vpop.f32.mrb[0].mxu0
  %1343 = vmatprep.mubr.bf16.mxu0 %v589
  %1344 = vmatmul.mubr.bf16.gmra.mrb[0].mxu0 %v588
  %v1345 = vpop.f32.mrb[0].mxu0
  %v1346 = vadd.f32 %v1073, %v1345
  %v1347 = vpop.f32.mrb[0].mxu0
  %v1348 = vpop.f32.mrb[0].mxu0
  %v1349 = vadd.f32 %v1076, %v1348
  %v1350 = vpop.f32.mrb[0].mxu0
  %1351 = vmatprep.mubr.bf16.mxu0 %v593
  %1352 = vmatmul.mubr.bf16.gmra.mrb[0].mxu0 %v592
  %v1353 = vpop.f32.mrb[0].mxu0
  %v1354 = vadd.f32 %v1081, %v1353
  %v1355 = vpop.f32.mrb[0].mxu0
  %v1356 = vpop.f32.mrb[0].mxu0
  %v1357 = vadd.f32 %v1084, %v1356
  %v1358 = vpop.f32.mrb[0].mxu0
  %1359 = vmatprep.mubr.bf16.mxu0 %v597
  %1360 = vmatmul.mubr.bf16.gmra.mrb[0].mxu0 %v596
  %v1361 = vpop.f32.mrb[0].mxu0
  %v1362 = vadd.f32 %v1089, %v1361
  %v1363 = vpop.f32.mrb[0].mxu0
  %v1364 = vpop.f32.mrb[0].mxu0
  %v1365 = vadd.f32 %v1092, %v1364
  %v1366 = vpop.f32.mrb[0].mxu0
  %1367 = vmatprep.mubr.bf16.mxu0 %v601
  %1368 = vmatmul.mubr.bf16.gmra.mrb[0].mxu0 %v600
  %v1369 = vpop.f32.mrb[0].mxu0
  %v1370 = vadd.f32 %v1097, %v1369
  %v1371 = vpop.f32.mrb[0].mxu0
  %v1372 = vpop.f32.mrb[0].mxu0
  %v1373 = vadd.f32 %v1100, %v1372
  %v1374 = vpop.f32.mrb[0].mxu0
  %1375 = vmatprep.mubr.bf16.mxu0 %v605
  %1376 = vmatmul.mubr.bf16.gmra.mrb[0].mxu0 %v604
  %v1377 = vpop.f32.mrb[0].mxu0
  %v1378 = vadd.f32 %v1105, %v1377
  %v1379 = vpop.f32.mrb[0].mxu0
  %v1380 = vpop.f32.mrb[0].mxu0
  %v1381 = vadd.f32 %v1108, %v1380
  %v1382 = vpop.f32.mrb[0].mxu0
  %1383 = vmatprep.mubr.bf16.mxu0 %v609
  %1384 = vmatmul.mubr.bf16.gmra.mrb[0].mxu0 %v608
  %v1385 = vpop.f32.mrb[0].mxu0
  %v1386 = vadd.f32 %v1113, %v1385
  %v1387 = vpop.f32.mrb[0].mxu0
  %v1388 = vpop.f32.mrb[0].mxu0
  %v1389 = vadd.f32 %v1116, %v1388
  %v1390 = vpop.f32.mrb[0].mxu0
  %1391 = vmatprep.mubr.bf16.mxu0 %v613
  %1392 = vmatmul.mubr.bf16.gmra.mrb[0].mxu0 %v612
  %v1393 = vpop.f32.mrb[0].mxu0
  %v1394 = vadd.f32 %v1121, %v1393
  %v1395 = vpop.f32.mrb[0].mxu0
  %v1396 = vpop.f32.mrb[0].mxu0
  %v1397 = vadd.f32 %v1124, %v1396
  %v1398 = vpop.f32.mrb[0].mxu0
  %1399 = vmatprep.mubr.bf16.mxu0 %v617
  %1400 = vmatmul.mubr.bf16.gmra.mrb[0].mxu0 %v616
  %v1401 = vpop.f32.mrb[0].mxu0
  %v1402 = vadd.f32 %v1129, %v1401
  %v1403 = vpop.f32.mrb[0].mxu0
  %v1404 = vpop.f32.mrb[0].mxu0
  %v1405 = vadd.f32 %v1132, %v1404
  %v1406 = vpop.f32.mrb[0].mxu0
  %1407 = vmatprep.mubr.bf16.mxu0 %v621
  %1408 = vmatmul.mubr.bf16.gmra.mrb[0].mxu0 %v620
  %v1409 = vpop.f32.mrb[0].mxu0
  %v1410 = vadd.f32 %v1137, %v1409
  %v1411 = vpop.f32.mrb[0].mxu0
  %v1412 = vpop.f32.mrb[0].mxu0
  %v1413 = vadd.f32 %v1140, %v1412
  %v1414 = vpop.f32.mrb[0].mxu0
  %1415 = vmatprep.mubr.bf16.mxu0 %v625
  %1416 = vmatmul.mubr.bf16.gmra.mrb[0].mxu0 %v624
  %v1417 = vpop.f32.mrb[0].mxu0
  %v1418 = vadd.f32 %v1145, %v1417
  %v1419 = vpop.f32.mrb[0].mxu0
  %v1420 = vpop.f32.mrb[0].mxu0
  %v1421 = vadd.f32 %v1148, %v1420
  %v1422 = vpop.f32.mrb[0].mxu0
  %1423 = vmatprep.mubr.bf16.mxu0 %v629
  %1424 = vmatmul.mubr.bf16.gmra.mrb[0].mxu0 %v628
  %v1425 = vpop.f32.mrb[0].mxu0
  %v1426 = vadd.f32 %v1153, %v1425
  %v1427 = vpop.f32.mrb[0].mxu0
  %v1428 = vpop.f32.mrb[0].mxu0
  %v1429 = vadd.f32 %v1156, %v1428
  %v1430 = vpop.f32.mrb[0].mxu0
  %1431 = vmatprep.mubr.bf16.mxu0 %v633
  %1432 = vmatmul.mubr.bf16.gmra.mrb[0].mxu0 %v632
  %v1433 = vpop.f32.mrb[0].mxu0
  %v1434 = vadd.f32 %v1161, %v1433
  %v1435 = vpop.f32.mrb[0].mxu0
  %v1436 = vpop.f32.mrb[0].mxu0
  %v1437 = vadd.f32 %v1164, %v1436
  %v1438 = vpop.f32.mrb[0].mxu0
  %1439 = vmatprep.mubr.bf16.mxu0 %v637
  %1440 = vmatmul.mubr.bf16.gmra.mrb[0].mxu0 %v636
  %v1441 = vpop.f32.mrb[0].mxu0
  %v1442 = vadd.f32 %v1169, %v1441
  %v1443 = vpop.f32.mrb[0].mxu0
  %v1444 = vpop.f32.mrb[0].mxu0
  %v1445 = vadd.f32 %v1172, %v1444
  %v1446 = vpop.f32.mrb[0].mxu0
  %1447 = vmatprep.mubr.bf16.mxu0 %v641
  %1448 = vmatmul.mubr.bf16.gmra.mrb[0].mxu0 %v640
  %v1449 = vpop.f32.mrb[0].mxu0
  %v1450 = vadd.f32 %v1177, %v1449
  %v1451 = vpop.f32.mrb[0].mxu0
  %v1452 = vpop.f32.mrb[0].mxu0
  %v1453 = vadd.f32 %v1180, %v1452
  %v1454 = vpop.f32.mrb[0].mxu0
  %1455 = vmatprep.mubr.bf16.mxu0 %v645
  %1456 = vmatmul.mubr.bf16.gmra.mrb[0].mxu0 %v644
  %v1457 = vpop.f32.mrb[0].mxu0
  %v1458 = vadd.f32 %v1185, %v1457
  %v1459 = vpop.f32.mrb[0].mxu0
  %v1460 = vpop.f32.mrb[0].mxu0
  %v1461 = vadd.f32 %v1188, %v1460
  %v1462 = vpop.f32.mrb[0].mxu0
  %1463 = vmatprep.mubr.bf16.mxu0 %v649
  %1464 = vmatmul.mubr.bf16.gmra.mrb[0].mxu0 %v648
  %v1465 = vpop.f32.mrb[0].mxu0
  %v1466 = vadd.f32 %v1193, %v1465
  %v1467 = vpop.f32.mrb[0].mxu0
  %v1468 = vpop.f32.mrb[0].mxu0
  %v1469 = vadd.f32 %v1196, %v1468
  %v1470 = vpop.f32.mrb[0].mxu0
  %1471 = vmatprep.mubr.bf16.mxu0 %v653
  %1472 = vmatmul.mubr.bf16.gmra.mrb[0].mxu0 %v652
  %v1473 = vpop.f32.mrb[0].mxu0
  %v1474 = vadd.f32 %v1201, %v1473
  %v1475 = vpop.f32.mrb[0].mxu0
  %v1476 = vpop.f32.mrb[0].mxu0
  %v1477 = vadd.f32 %v1204, %v1476
  %v1478 = vpop.f32.mrb[0].mxu0
  %1479 = vmatprep.mubr.bf16.mxu0 %v657
  %1480 = vmatmul.mubr.bf16.gmra.mrb[0].mxu0 %v656
  %v1481 = vpop.f32.mrb[0].mxu0
  %v1482 = vadd.f32 %v1209, %v1481
  %v1483 = vpop.f32.mrb[0].mxu0
  %v1484 = vpop.f32.mrb[0].mxu0
  %v1485 = vadd.f32 %v1212, %v1484
  %v1486 = vpop.f32.mrb[0].mxu0
  %1487 = vmatprep.mubr.bf16.mxu0 %v661
  %1488 = vmatmul.mubr.bf16.gmra.mrb[0].mxu0 %v660
  %v1489 = vpop.f32.mrb[0].mxu0
  %v1490 = vadd.f32 %v1217, %v1489
  %v1491 = vpop.f32.mrb[0].mxu0
  %v1492 = vpop.f32.mrb[0].mxu0
  %v1493 = vadd.f32 %v1220, %v1492
  %v1494 = vpop.f32.mrb[0].mxu0
  %1495 = vmatprep.mubr.bf16.mxu0 %v665
  %1496 = vmatmul.mubr.bf16.gmra.mrb[0].mxu0 %v664
  %v1497 = vpop.f32.mrb[0].mxu0
  %v1498 = vadd.f32 %v1225, %v1497
  %v1499 = vpop.f32.mrb[0].mxu0
  %v1500 = vpop.f32.mrb[0].mxu0
  %v1501 = vadd.f32 %v1228, %v1500
  %v1502 = vpop.f32.mrb[0].mxu0
  %1503 = vmatprep.mubr.bf16.mxu0 %v669
  %1504 = vmatmul.mubr.bf16.gmra.mrb[0].mxu0 %v668
  %v1505 = vpop.f32.mrb[0].mxu0
  %v1506 = vadd.f32 %v1233, %v1505
  %v1507 = vpop.f32.mrb[0].mxu0
  %v1508 = vpop.f32.mrb[0].mxu0
  %v1509 = vadd.f32 %v1236, %v1508
  %v1510 = vpop.f32.mrb[0].mxu0
  %1511 = vmatprep.mubr.bf16.mxu0 %v673
  %1512 = vmatmul.mubr.bf16.gmra.mrb[0].mxu0 %v672
  %v1513 = vpop.f32.mrb[0].mxu0
  %v1514 = vadd.f32 %v1241, %v1513
  %v1515 = vpop.f32.mrb[0].mxu0
  %v1516 = vpop.f32.mrb[0].mxu0
  %v1517 = vadd.f32 %v1244, %v1516
  %v1518 = vpop.f32.mrb[0].mxu0
  %1519 = vmatprep.mubr.bf16.mxu0 %v677
  %1520 = vmatmul.mubr.bf16.gmra.mrb[0].mxu0 %v676
  %v1521 = vpop.f32.mrb[0].mxu0
  %v1522 = vadd.f32 %v1249, %v1521
  %v1523 = vpop.f32.mrb[0].mxu0
  %v1524 = vpop.f32.mrb[0].mxu0
  %v1525 = vadd.f32 %v1252, %v1524
  %v1526 = vpop.f32.mrb[0].mxu0
  %1527 = vmatprep.mubr.bf16.mxu0 %v681
  %1528 = vmatmul.mubr.bf16.gmra.mrb[0].mxu0 %v680
  %v1529 = vpop.f32.mrb[0].mxu0
  %v1530 = vadd.f32 %v1257, %v1529
  %v1531 = vpop.f32.mrb[0].mxu0
  %v1532 = vpop.f32.mrb[0].mxu0
  %v1533 = vadd.f32 %v1260, %v1532
  %v1534 = vpop.f32.mrb[0].mxu0
  %1535 = vmatprep.mubr.bf16.mxu0 %v685
  %1536 = vmatmul.mubr.bf16.gmra.mrb[0].mxu0 %v684
  %v1537 = vpop.f32.mrb[0].mxu0
  %v1538 = vadd.f32 %v1265, %v1537
  %v1539 = vpop.f32.mrb[0].mxu0
  %v1540 = vpop.f32.mrb[0].mxu0
  %v1541 = vadd.f32 %v1268, %v1540
  %v1542 = vpop.f32.mrb[0].mxu0
  %1543 = vdwg.mxu0
  %vm1544 = vcmp.ge.f32.partialorder %v1306, 0.0
  %vm1545 = vcmp.ge.f32.partialorder %v1309, 0.0
  %vm1546 = vcmp.ge.f32.partialorder %v1314, 0.0
  %vm1547 = vcmp.ge.f32.partialorder %v1317, 0.0
  %vm1548 = vcmp.ge.f32.partialorder %v1322, 0.0
  %vm1549 = vcmp.ge.f32.partialorder %v1325, 0.0
  %vm1550 = vcmp.ge.f32.partialorder %v1330, 0.0
  %vm1551 = vcmp.ge.f32.partialorder %v1333, 0.0
  %vm1552 = vcmp.ge.f32.partialorder %v1338, 0.0
  %vm1553 = vcmp.ge.f32.partialorder %v1341, 0.0
  %vm1554 = vcmp.ge.f32.partialorder %v1346, 0.0
  %vm1555 = vcmp.ge.f32.partialorder %v1349, 0.0
  %vm1556 = vcmp.ge.f32.partialorder %v1354, 0.0
  %vm1557 = vcmp.ge.f32.partialorder %v1357, 0.0
  %vm1558 = vcmp.ge.f32.partialorder %v1362, 0.0
  %vm1559 = vcmp.ge.f32.partialorder %v1365, 0.0
  %vm1560 = vcmp.ge.f32.partialorder %v1370, 0.0
  %vm1561 = vcmp.ge.f32.partialorder %v1373, 0.0
  %vm1562 = vcmp.ge.f32.partialorder %v1378, 0.0
  %vm1563 = vcmp.ge.f32.partialorder %v1381, 0.0
  %vm1564 = vcmp.ge.f32.partialorder %v1386, 0.0
  %vm1565 = vcmp.ge.f32.partialorder %v1389, 0.0
  %vm1566 = vcmp.ge.f32.partialorder %v1394, 0.0
  %vm1567 = vcmp.ge.f32.partialorder %v1397, 0.0
  %vm1568 = vcmp.ge.f32.partialorder %v1402, 0.0
  %vm1569 = vcmp.ge.f32.partialorder %v1405, 0.0
  %vm1570 = vcmp.ge.f32.partialorder %v1410, 0.0
  %vm1571 = vcmp.ge.f32.partialorder %v1413, 0.0
  %vm1572 = vcmp.ge.f32.partialorder %v1418, 0.0
  %vm1573 = vcmp.ge.f32.partialorder %v1421, 0.0
  %vm1574 = vcmp.ge.f32.partialorder %v1426, 0.0
  %vm1575 = vcmp.ge.f32.partialorder %v1429, 0.0
  %vm1576 = vcmp.ge.f32.partialorder %v1434, 0.0
  %vm1577 = vcmp.ge.f32.partialorder %v1437, 0.0
  %vm1578 = vcmp.ge.f32.partialorder %v1442, 0.0
  %vm1579 = vcmp.ge.f32.partialorder %v1445, 0.0
  %vm1580 = vcmp.ge.f32.partialorder %v1450, 0.0
  %vm1581 = vcmp.ge.f32.partialorder %v1453, 0.0
  %vm1582 = vcmp.ge.f32.partialorder %v1458, 0.0
  %vm1583 = vcmp.ge.f32.partialorder %v1461, 0.0
  %vm1584 = vcmp.ge.f32.partialorder %v1466, 0.0
  %vm1585 = vcmp.ge.f32.partialorder %v1469, 0.0
  %vm1586 = vcmp.ge.f32.partialorder %v1474, 0.0
  %vm1587 = vcmp.ge.f32.partialorder %v1477, 0.0
  %vm1588 = vcmp.ge.f32.partialorder %v1482, 0.0
  %vm1589 = vcmp.ge.f32.partialorder %v1485, 0.0
  %vm1590 = vcmp.ge.f32.partialorder %v1490, 0.0
  %vm1591 = vcmp.ge.f32.partialorder %v1493, 0.0
  %vm1592 = vcmp.ge.f32.partialorder %v1498, 0.0
  %vm1593 = vcmp.ge.f32.partialorder %v1501, 0.0
  %vm1594 = vcmp.ge.f32.partialorder %v1506, 0.0
  %vm1595 = vcmp.ge.f32.partialorder %v1509, 0.0
  %vm1596 = vcmp.ge.f32.partialorder %v1514, 0.0
  %vm1597 = vcmp.ge.f32.partialorder %v1517, 0.0
  %vm1598 = vcmp.ge.f32.partialorder %v1522, 0.0
  %vm1599 = vcmp.ge.f32.partialorder %v1525, 0.0
  %vm1600 = vcmp.ge.f32.partialorder %v1530, 0.0
  %vm1601 = vcmp.ge.f32.partialorder %v1533, 0.0
  %vm1602 = vcmp.ge.f32.partialorder %v1538, 0.0
  %vm1603 = vcmp.ge.f32.partialorder %v1541, 0.0
  %v1604 = vmul.f32 %v1306, 0.2
  %v1605 = vmul.f32 %v1309, 0.2
  %v1606 = vmul.f32 %v1314, 0.2
  %v1607 = vmul.f32 %v1317, 0.2
  %v1608 = vmul.f32 %v1322, 0.2
  %v1609 = vmul.f32 %v1325, 0.2
  %v1610 = vmul.f32 %v1330, 0.2
  %v1611 = vmul.f32 %v1333, 0.2
  %v1612 = vmul.f32 %v1338, 0.2
  %v1613 = vmul.f32 %v1341, 0.2
  %v1614 = vmul.f32 %v1346, 0.2
  %v1615 = vmul.f32 %v1349, 0.2
  %v1616 = vmul.f32 %v1354, 0.2
  %v1617 = vmul.f32 %v1357, 0.2
  %v1618 = vmul.f32 %v1362, 0.2
  %v1619 = vmul.f32 %v1365, 0.2
  %v1620 = vmul.f32 %v1370, 0.2
  %v1621 = vmul.f32 %v1373, 0.2
  %v1622 = vmul.f32 %v1378, 0.2
  %v1623 = vmul.f32 %v1381, 0.2
  %v1624 = vmul.f32 %v1386, 0.2
  %v1625 = vmul.f32 %v1389, 0.2
  %v1626 = vmul.f32 %v1394, 0.2
  %v1627 = vmul.f32 %v1397, 0.2
  %v1628 = vmul.f32 %v1402, 0.2
  %v1629 = vmul.f32 %v1405, 0.2
  %v1630 = vmul.f32 %v1410, 0.2
  %v1631 = vmul.f32 %v1413, 0.2
  %v1632 = vmul.f32 %v1418, 0.2
  %v1633 = vmul.f32 %v1421, 0.2
  %v1634 = vmul.f32 %v1426, 0.2
  %v1635 = vmul.f32 %v1429, 0.2
  %v1636 = vmul.f32 %v1434, 0.2
  %v1637 = vmul.f32 %v1437, 0.2
  %v1638 = vmul.f32 %v1442, 0.2
  %v1639 = vmul.f32 %v1445, 0.2
  %v1640 = vmul.f32 %v1450, 0.2
  %v1641 = vmul.f32 %v1453, 0.2
  %v1642 = vmul.f32 %v1458, 0.2
  %v1643 = vmul.f32 %v1461, 0.2
  %v1644 = vmul.f32 %v1466, 0.2
  %v1645 = vmul.f32 %v1469, 0.2
  %v1646 = vmul.f32 %v1474, 0.2
  %v1647 = vmul.f32 %v1477, 0.2
  %v1648 = vmul.f32 %v1482, 0.2
  %v1649 = vmul.f32 %v1485, 0.2
  %v1650 = vmul.f32 %v1490, 0.2
  %v1651 = vmul.f32 %v1493, 0.2
  %v1652 = vmul.f32 %v1498, 0.2
  %v1653 = vmul.f32 %v1501, 0.2
  %v1654 = vmul.f32 %v1506, 0.2
  %v1655 = vmul.f32 %v1509, 0.2
  %v1656 = vmul.f32 %v1514, 0.2
  %v1657 = vmul.f32 %v1517, 0.2
  %v1658 = vmul.f32 %v1522, 0.2
  %v1659 = vmul.f32 %v1525, 0.2
  %v1660 = vmul.f32 %v1530, 0.2
  %v1661 = vmul.f32 %v1533, 0.2
  %v1662 = vmul.f32 %v1538, 0.2
  %v1663 = vmul.f32 %v1541, 0.2
  %v1664 = vsel %vm1544, %v1306, %v1604
  %v1665 = vsel %vm1545, %v1309, %v1605
  %v1666 = vsel %vm1546, %v1314, %v1606
  %v1667 = vsel %vm1547, %v1317, %v1607
  %v1668 = vsel %vm1548, %v1322, %v1608
  %v1669 = vsel %vm1549, %v1325, %v1609
  %v1670 = vsel %vm1550, %v1330, %v1610
  %v1671 = vsel %vm1551, %v1333, %v1611
  %v1672 = vsel %vm1552, %v1338, %v1612
  %v1673 = vsel %vm1553, %v1341, %v1613
  %v1674 = vsel %vm1554, %v1346, %v1614
  %v1675 = vsel %vm1555, %v1349, %v1615
  %v1676 = vsel %vm1556, %v1354, %v1616
  %v1677 = vsel %vm1557, %v1357, %v1617
  %v1678 = vsel %vm1558, %v1362, %v1618
  %v1679 = vsel %vm1559, %v1365, %v1619
  %v1680 = vsel %vm1560, %v1370, %v1620
  %v1681 = vsel %vm1561, %v1373, %v1621
  %v1682 = vsel %vm1562, %v1378, %v1622
  %v1683 = vsel %vm1563, %v1381, %v1623
  %v1684 = vsel %vm1564, %v1386, %v1624
  %v1685 = vsel %vm1565, %v1389, %v1625
  %v1686 = vsel %vm1566, %v1394, %v1626
  %v1687 = vsel %vm1567, %v1397, %v1627
  %v1688 = vsel %vm1568, %v1402, %v1628
  %v1689 = vsel %vm1569, %v1405, %v1629
  %v1690 = vsel %vm1570, %v1410, %v1630
  %v1691 = vsel %vm1571, %v1413, %v1631
  %v1692 = vsel %vm1572, %v1418, %v1632
  %v1693 = vsel %vm1573, %v1421, %v1633
  %v1694 = vsel %vm1574, %v1426, %v1634
  %v1695 = vsel %vm1575, %v1429, %v1635
  %v1696 = vsel %vm1576, %v1434, %v1636
  %v1697 = vsel %vm1577, %v1437, %v1637
  %v1698 = vsel %vm1578, %v1442, %v1638
  %v1699 = vsel %vm1579, %v1445, %v1639
  %v1700 = vsel %vm1580, %v1450, %v1640
  %v1701 = vsel %vm1581, %v1453, %v1641
  %v1702 = vsel %vm1582, %v1458, %v1642
  %v1703 = vsel %vm1583, %v1461, %v1643
  %v1704 = vsel %vm1584, %v1466, %v1644
  %v1705 = vsel %vm1585, %v1469, %v1645
  %v1706 = vsel %vm1586, %v1474, %v1646
  %v1707 = vsel %vm1587, %v1477, %v1647
  %v1708 = vsel %vm1588, %v1482, %v1648
  %v1709 = vsel %vm1589, %v1485, %v1649
  %v1710 = vsel %vm1590, %v1490, %v1650
  %v1711 = vsel %vm1591, %v1493, %v1651
  %v1712 = vsel %vm1592, %v1498, %v1652
  %v1713 = vsel %vm1593, %v1501, %v1653
  %v1714 = vsel %vm1594, %v1506, %v1654
  %v1715 = vsel %vm1595, %v1509, %v1655
  %v1716 = vsel %vm1596, %v1514, %v1656
  %v1717 = vsel %vm1597, %v1517, %v1657
  %v1718 = vsel %vm1598, %v1522, %v1658
  %v1719 = vsel %vm1599, %v1525, %v1659
  %v1720 = vsel %vm1600, %v1530, %v1660
  %v1721 = vsel %vm1601, %v1533, %v1661
  %v1722 = vsel %vm1602, %v1538, %v1662
  %v1723 = vsel %vm1603, %v1541, %v1663
  %vm1724 = vcmask 392192
  %1725 = vst.msk [vmem:[%s3] sm:$0xff] %vm1724, %v1664
  %1726 = vst.msk [vmem:[%s3 + $0x8] sm:$0xff] %vm1724, %v1665
  %1727 = vst.msk [vmem:[%s3 + $0x10] sm:$0xff] %vm1724, %v1666
  %1728 = vst.msk [vmem:[%s3 + $0x18] sm:$0xff] %vm1724, %v1667
  %1729 = vst.msk [vmem:[%s3 + $0x20] sm:$0xff] %vm1724, %v1668
  %1730 = vst.msk [vmem:[%s3 + $0x28] sm:$0xff] %vm1724, %v1669
  %1731 = vst.msk [vmem:[%s3 + $0x30] sm:$0xff] %vm1724, %v1670
  %1732 = vst.msk [vmem:[%s3 + $0x38] sm:$0xff] %vm1724, %v1671
  %1733 = vst.msk [vmem:[%s3 + $0x40] sm:$0xff] %vm1724, %v1672
  %1734 = vst.msk [vmem:[%s3 + $0x48] sm:$0xff] %vm1724, %v1673
  %1735 = vst.msk [vmem:[%s3 + $0x50] sm:$0xff] %vm1724, %v1674
  %1736 = vst.msk [vmem:[%s3 + $0x58] sm:$0xff] %vm1724, %v1675
  %1737 = vst.msk [vmem:[%s3 + $0x60] sm:$0xff] %vm1724, %v1676
  %1738 = vst.msk [vmem:[%s3 + $0x68] sm:$0xff] %vm1724, %v1677
  %1739 = vst.msk [vmem:[%s3 + $0x70] sm:$0xff] %vm1724, %v1678
  %1740 = vst.msk [vmem:[%s3 + $0x78] sm:$0xff] %vm1724, %v1679
  %1741 = vst.msk [vmem:[%s3 + $0x80] sm:$0xff] %vm1724, %v1680
  %1742 = vst.msk [vmem:[%s3 + $0x88] sm:$0xff] %vm1724, %v1681
  %1743 = vst.msk [vmem:[%s3 + $0x90] sm:$0xff] %vm1724, %v1682
  %1744 = vst.msk [vmem:[%s3 + $0x98] sm:$0xff] %vm1724, %v1683
  %1745 = vst.msk [vmem:[%s3 + $0xa0] sm:$0xff] %vm1724, %v1684
  %1746 = vst.msk [vmem:[%s3 + $0xa8] sm:$0xff] %vm1724, %v1685
  %1747 = vst.msk [vmem:[%s3 + $0xb0] sm:$0xff] %vm1724, %v1686
  %1748 = vst.msk [vmem:[%s3 + $0xb8] sm:$0xff] %vm1724, %v1687
  %1749 = vst.msk [vmem:[%s3 + $0xc0] sm:$0xff] %vm1724, %v1688
  %1750 = vst.msk [vmem:[%s3 + $0xc8] sm:$0xff] %vm1724, %v1689
  %1751 = vst.msk [vmem:[%s3 + $0xd0] sm:$0xff] %vm1724, %v1690
  %1752 = vst.msk [vmem:[%s3 + $0xd8] sm:$0xff] %vm1724, %v1691
  %1753 = vst.msk [vmem:[%s3 + $0xe0] sm:$0xff] %vm1724, %v1692
  %1754 = vst.msk [vmem:[%s3 + $0xe8] sm:$0xff] %vm1724, %v1693
  %1755 = vst.msk [vmem:[%s3 + $0xf0] sm:$0xff] %vm1724, %v1694
  %1756 = vst.msk [vmem:[%s3 + $0xf8] sm:$0xff] %vm1724, %v1695
  %1757 = vst.msk [vmem:[%s3 + $0x100] sm:$0xff] %vm1724, %v1696
  %1758 = vst.msk [vmem:[%s3 + $0x108] sm:$0xff] %vm1724, %v1697
  %1759 = vst.msk [vmem:[%s3 + $0x110] sm:$0xff] %vm1724, %v1698
  %1760 = vst.msk [vmem:[%s3 + $0x118] sm:$0xff] %vm1724, %v1699
  %1761 = vst.msk [vmem:[%s3 + $0x120] sm:$0xff] %vm1724, %v1700
  %1762 = vst.msk [vmem:[%s3 + $0x128] sm:$0xff] %vm1724, %v1701
  %1763 = vst.msk [vmem:[%s3 + $0x130] sm:$0xff] %vm1724, %v1702
  %1764 = vst.msk [vmem:[%s3 + $0x138] sm:$0xff] %vm1724, %v1703
  %1765 = vst.msk [vmem:[%s3 + $0x140] sm:$0xff] %vm1724, %v1704
  %1766 = vst.msk [vmem:[%s3 + $0x148] sm:$0xff] %vm1724, %v1705
  %1767 = vst.msk [vmem:[%s3 + $0x150] sm:$0xff] %vm1724, %v1706
  %1768 = vst.msk [vmem:[%s3 + $0x158] sm:$0xff] %vm1724, %v1707
  %1769 = vst.msk [vmem:[%s3 + $0x160] sm:$0xff] %vm1724, %v1708
  %1770 = vst.msk [vmem:[%s3 + $0x168] sm:$0xff] %vm1724, %v1709
  %1771 = vst.msk [vmem:[%s3 + $0x170] sm:$0xff] %vm1724, %v1710
  %1772 = vst.msk [vmem:[%s3 + $0x178] sm:$0xff] %vm1724, %v1711
  %1773 = vst.msk [vmem:[%s3 + $0x180] sm:$0xff] %vm1724, %v1712
  %1774 = vst.msk [vmem:[%s3 + $0x188] sm:$0xff] %vm1724, %v1713
  %1775 = vst.msk [vmem:[%s3 + $0x190] sm:$0xff] %vm1724, %v1714
  %1776 = vst.msk [vmem:[%s3 + $0x198] sm:$0xff] %vm1724, %v1715
  %1777 = vst.msk [vmem:[%s3 + $0x1a0] sm:$0xff] %vm1724, %v1716
  %1778 = vst.msk [vmem:[%s3 + $0x1a8] sm:$0xff] %vm1724, %v1717
  %1779 = vst.msk [vmem:[%s3 + $0x1b0] sm:$0xff] %vm1724, %v1718
  %1780 = vst.msk [vmem:[%s3 + $0x1b8] sm:$0xff] %vm1724, %v1719
  %1781 = vst.msk [vmem:[%s3 + $0x1c0] sm:$0xff] %vm1724, %v1720
  %1782 = vst.msk [vmem:[%s3 + $0x1c8] sm:$0xff] %vm1724, %v1721
  %1783 = vst.msk [vmem:[%s3 + $0x1d0] sm:$0xff] %vm1724, %v1722
  %1784 = vst.msk [vmem:[%s3 + $0x1d8] sm:$0xff] %vm1724, %v1723
  // Predicated region
  $region14: #{discriminator_forward.6} parent=0 // pred_check
    _
  $region15: #{discriminator_forward.6} parent=0 // pred_check_branch
    %1786 = sbr.rel (0) target = $region17
  $region16: #{discriminator_forward.6} parent=0 // pred_region
    _
  $region17: #{discriminator_forward.6} parent=0 // pred_fallthru
    _
  // Predicated region
  $region18: #{discriminator_forward.6} parent=0 // pred_check
    _
  $region19: #{discriminator_forward.6} parent=0 // pred_check_branch
    %1788 = sbr.rel (0) target = $region21
  $region20: #{discriminator_forward.6} parent=0 // pred_region
    _
  $region21: #{discriminator_forward.6} parent=0 // pred_fallthru
    _

// kernel: discriminator_forward.7
$region0: #{discriminator_forward.7}
  #allocation0 [shape = 'u32[]', space=smem, size = 0x4, offset = 0x4, fixed_abs, tag = 'smem constant byte address 0x4 - core index']
  #allocation1 [shape = 'u32[144,128]{1,0:T(1,128)}', space=vmem, size = 0x12000, scoped, tag = 'internal scratch']
  #allocation2 [shape = 'f32[1,1]{1,0:T(1,128)S(1)}', space=vmem, size = 0x200, scoped, tag = 'scoped memory for discriminator_forward.7']
  %s0 = inlined_call_operand.vmem [shape: bf16[88,768], index: 0, kind: input, shape index: {}]
  %s1 = inlined_call_operand.vmem [shape: bf16[768,64], index: 1, kind: input, shape index: {}]
  %s2 = inlined_call_operand.vmem [shape: f32[1,64], index: 2, kind: input, shape index: {}]
  %s3 = inlined_call_operand.vmem [shape: f32[88,64], index: 3, kind: input, shape index: {}]
  %s4 = inlined_call_operand.vmem [shape: f32[2,88], index: 4, kind: input, shape index: {}]
  %s5 = inlined_call_operand.<no memory space> [shape: f32[1,1], index: 5, kind: input, shape index: {}]
  %s6 = inlined_call_operand.vmem [shape: f32[2,1], index: 6, kind: output, shape index: {}]
  %s7 = sld [smem:[#allocation0]]
  $region34: #{discriminator_forward.7} parent=0
    _
  %s9 = ssub.s32 1, %s7
  %s10 = scalar_select 0, %s9, %s7
  %v11 = vstv %s5
  %12 = vst [vmem:[#allocation2] sm:$0x1] %v11
  // Predicated region
  $region2: #{discriminator_forward.7} parent=0 // pred_check
    _
  $region3: #{discriminator_forward.7} parent=0 // pred_check_branch
    %14 = sbr.rel (0) target = $region5
  $region4: #{discriminator_forward.7} parent=0 // pred_region
    _
  $region5: #{discriminator_forward.7} parent=0 // pred_fallthru
    _
  // Predicated region
  $region6: #{discriminator_forward.7} parent=0 // pred_check
    _
  $region7: #{discriminator_forward.7} parent=0 // pred_check_branch
    %16 = sbr.rel (0) target = $region9
  $region8: #{discriminator_forward.7} parent=0 // pred_region
    _
  $region9: #{discriminator_forward.7} parent=0 // pred_fallthru
    _
  // Predicated region
  $region10: #{discriminator_forward.7} parent=0 // pred_check
    _
  $region11: #{discriminator_forward.7} parent=0 // pred_check_branch
    %18 = sbr.rel (0) target = $region13
  $region12: #{discriminator_forward.7} parent=0 // pred_region
    _
  $region13: #{discriminator_forward.7} parent=0 // pred_fallthru
    _
  // Predicated region
  $region14: #{discriminator_forward.7} parent=0 // pred_check
    _
  $region15: #{discriminator_forward.7} parent=0 // pred_check_branch
    %20 = sbr.rel (0) target = $region17
  $region16: #{discriminator_forward.7} parent=0 // pred_region
    _
  $region17: #{discriminator_forward.7} parent=0 // pred_fallthru
    _
  // Predicated region
  $region18: #{discriminator_forward.7} parent=0 // pred_check
    _
  $region19: #{discriminator_forward.7} parent=0 // pred_check_branch
    %22 = sbr.rel (0) target = $region21
  $region20: #{discriminator_forward.7} parent=0 // pred_region
    _
  $region21: #{discriminator_forward.7} parent=0 // pred_fallthru
    _
  // Predicated region
  $region22: #{discriminator_forward.7} parent=0 // pred_check
    _
  $region23: #{discriminator_forward.7} parent=0 // pred_check_branch
    %24 = sbr.rel (0) target = $region25
  $region24: #{discriminator_forward.7} parent=0 // pred_region
    _
  $region25: #{discriminator_forward.7} parent=0 // pred_fallthru
    _
  %v26 = vld [vmem:[%s0] sm:$0xff]
  %v27 = vld [vmem:[%s0 + $0x8] sm:$0xff]
  %v28 = vld [vmem:[%s0 + $0x10] sm:$0xff]
  %v29 = vld [vmem:[%s0 + $0x18] sm:$0xff]
  %v30 = vld [vmem:[%s0 + $0x20] sm:$0xff]
  %v31 = vld [vmem:[%s0 + $0x28] sm:$0xff]
  %v32 = vld [vmem:[%s0 + $0x30] sm:$0xff]
  %v33 = vld [vmem:[%s0 + $0x38] sm:$0xff]
  %v34 = vld [vmem:[%s0 + $0x40] sm:$0xff]
  %v35 = vld [vmem:[%s0 + $0x48] sm:$0xff]
  %v36 = vld [vmem:[%s0 + $0x50] sm:$0xff]
  %v37 = vld [vmem:[%s0 + $0x58] sm:$0xff]
  %v38 = vld [vmem:[%s0 + $0x60] sm:$0xff]
  %v39 = vld [vmem:[%s0 + $0x68] sm:$0xff]
  %v40 = vld [vmem:[%s0 + $0x70] sm:$0xff]
  %v41 = vld [vmem:[%s0 + $0x78] sm:$0xff]
  %v42 = vld [vmem:[%s0 + $0x80] sm:$0xff]
  %v43 = vld [vmem:[%s0 + $0x88] sm:$0xff]
  %v44 = vld [vmem:[%s0 + $0x90] sm:$0xff]
  %v45 = vld [vmem:[%s0 + $0x98] sm:$0xff]
  %v46 = vld [vmem:[%s0 + $0xa0] sm:$0xff]
  %v47 = vld [vmem:[%s0 + $0xa8] sm:$0xff]
  %v48 = vld [vmem:[%s0 + $0xb0] sm:$0xff]
  %v49 = vld [vmem:[%s0 + $0xb8] sm:$0xff]
  %v50 = vld [vmem:[%s0 + $0xc0] sm:$0xff]
  %v51 = vld [vmem:[%s0 + $0xc8] sm:$0xff]
  %v52 = vld [vmem:[%s0 + $0xd0] sm:$0xff]
  %v53 = vld [vmem:[%s0 + $0xd8] sm:$0xff]
  %v54 = vld [vmem:[%s0 + $0xe0] sm:$0xff]
  %v55 = vld [vmem:[%s0 + $0xe8] sm:$0xff]
  %v56 = vld [vmem:[%s0 + $0xf0] sm:$0xff]
  %v57 = vld [vmem:[%s0 + $0xf8] sm:$0xff]
  %v58 = vld [vmem:[%s0 + $0x100] sm:$0xff]
  %v59 = vld [vmem:[%s1] sm:$0xf]
  %v60 = vld [vmem:[%s1 + $0x4] sm:$0xf]
  %v61 = vld [vmem:[%s1 + $0x8] sm:$0xf]
  %v62 = vld [vmem:[%s1 + $0xc] sm:$0xf]
  %v63 = vld [vmem:[%s1 + $0x10] sm:$0xf]
  %v64 = vld [vmem:[%s1 + $0x14] sm:$0xf]
  %v65 = vld [vmem:[%s1 + $0x18] sm:$0xf]
  %v66 = vld [vmem:[%s1 + $0x1c] sm:$0xf]
  %v67 = vld [vmem:[%s1 + $0x20] sm:$0xf]
  %v68 = vld [vmem:[%s1 + $0x24] sm:$0xf]
  %v69 = vld [vmem:[%s1 + $0x28] sm:$0xf]
  %v70 = vld [vmem:[%s1 + $0x2c] sm:$0xf]
  %v71 = vld [vmem:[%s1 + $0x30] sm:$0xf]
  %v72 = vld [vmem:[%s1 + $0x34] sm:$0xf]
  %v73 = vld [vmem:[%s1 + $0x38] sm:$0xf]
  %v74 = vld [vmem:[%s1 + $0x3c] sm:$0xf]
  %v75 = vld [vmem:[%s1 + $0x40] sm:$0xf]
  %v76 = vld [vmem:[%s1 + $0x44] sm:$0xf]
  %v77 = vld [vmem:[%s1 + $0x48] sm:$0xf]
  %v78 = vld [vmem:[%s1 + $0x4c] sm:$0xf]
  %v79 = vld [vmem:[%s1 + $0x50] sm:$0xf]
  %v80 = vld [vmem:[%s1 + $0x54] sm:$0xf]
  %v81 = vld [vmem:[%s1 + $0x58] sm:$0xf]
  %v82 = vld [vmem:[%s1 + $0x5c] sm:$0xf]
  %v83 = vld [vmem:[%s1 + $0x60] sm:$0xf]
  %v84 = vld [vmem:[%s1 + $0x64] sm:$0xf]
  %v85 = vld [vmem:[%s1 + $0x68] sm:$0xf]
  %v86 = vld [vmem:[%s1 + $0x6c] sm:$0xf]
  %v87 = vld [vmem:[%s1 + $0x70] sm:$0xf]
  %v88 = vld [vmem:[%s1 + $0x74] sm:$0xf]
  %v89 = vld [vmem:[%s1 + $0x78] sm:$0xf]
  %v90 = vld [vmem:[%s1 + $0x7c] sm:$0xf]
  %v91 = vld [vmem:[%s1 + $0x80] sm:$0xf]
  %v92 = vld [vmem:[%s1 + $0x84] sm:$0xf]
  %v93 = vld [vmem:[%s1 + $0x88] sm:$0xf]
  %v94 = vld [vmem:[%s1 + $0x8c] sm:$0xf]
  %v95 = vld [vmem:[%s1 + $0x90] sm:$0xf]
  %v96 = vld [vmem:[%s1 + $0x94] sm:$0xf]
  %v97 = vld [vmem:[%s1 + $0x98] sm:$0xf]
  %v98 = vld [vmem:[%s1 + $0x9c] sm:$0xf]
  %v99 = vld [vmem:[%s1 + $0xa0] sm:$0xf]
  %v100 = vld [vmem:[%s1 + $0xa4] sm:$0xf]
  %v101 = vld [vmem:[%s1 + $0xa8] sm:$0xf]
  %v102 = vld [vmem:[%s1 + $0xac] sm:$0xf]
  %v103 = vld [vmem:[%s1 + $0xb0] sm:$0xf]
  %v104 = vld [vmem:[%s1 + $0xb4] sm:$0xf]
  %v105 = vld [vmem:[%s1 + $0xb8] sm:$0xf]
  %v106 = vld [vmem:[%s1 + $0xbc] sm:$0xf]
  %v107 = vld [vmem:[%s1 + $0xc0] sm:$0xf]
  %v108 = vld [vmem:[%s1 + $0xc4] sm:$0xf]
  %v109 = vld [vmem:[%s1 + $0xc8] sm:$0xf]
  %v110 = vld [vmem:[%s1 + $0xcc] sm:$0xf]
  %v111 = vld [vmem:[%s1 + $0xd0] sm:$0xf]
  %v112 = vld [vmem:[%s1 + $0xd4] sm:$0xf]
  %v113 = vld [vmem:[%s1 + $0xd8] sm:$0xf]
  %v114 = vld [vmem:[%s1 + $0xdc] sm:$0xf]
  %v115 = vld [vmem:[%s1 + $0xe0] sm:$0xf]
  %v116 = vld [vmem:[%s1 + $0xe4] sm:$0xf]
  %v117 = vld [vmem:[%s1 + $0xe8] sm:$0xf]
  %v118 = vld [vmem:[%s1 + $0xec] sm:$0xf]
  %v119 = vld [vmem:[%s1 + $0xf0] sm:$0xf]
  %v120 = vld [vmem:[%s1 + $0xf4] sm:$0xf]
  %v121 = vld [vmem:[%s1 + $0xf8] sm:$0xf]
  %v122 = vld [vmem:[%s1 + $0xfc] sm:$0xf]
  %v123 = vld [vmem:[%s1 + $0x100] sm:$0xf]
  %v124 = vld [vmem:[%s1 + $0x104] sm:$0xf]
  %v125 = vld [vmem:[%s1 + $0x108] sm:$0xf]
  %v126 = vld [vmem:[%s1 + $0x10c] sm:$0xf]
  %v127 = vld [vmem:[%s1 + $0x110] sm:$0xf]
  %v128 = vld [vmem:[%s1 + $0x114] sm:$0xf]
  %v129 = vld [vmem:[%s1 + $0x118] sm:$0xf]
  %v130 = vld [vmem:[%s1 + $0x11c] sm:$0xf]
  %v131 = vld [vmem:[%s1 + $0x120] sm:$0xf]
  %v132 = vld [vmem:[%s1 + $0x124] sm:$0xf]
  %v133 = vld [vmem:[%s1 + $0x128] sm:$0xf]
  %v134 = vld [vmem:[%s1 + $0x12c] sm:$0xf]
  %v135 = vld [vmem:[%s1 + $0x130] sm:$0xf]
  %v136 = vld [vmem:[%s1 + $0x134] sm:$0xf]
  %v137 = vld [vmem:[%s1 + $0x138] sm:$0xf]
  %v138 = vld [vmem:[%s1 + $0x13c] sm:$0xf]
  %v139 = vld [vmem:[%s1 + $0x140] sm:$0xf]
  %v140 = vld [vmem:[%s1 + $0x144] sm:$0xf]
  %v141 = vld [vmem:[%s1 + $0x148] sm:$0xf]
  %v142 = vld [vmem:[%s1 + $0x14c] sm:$0xf]
  %v143 = vld [vmem:[%s1 + $0x150] sm:$0xf]
  %v144 = vld [vmem:[%s1 + $0x154] sm:$0xf]
  %v145 = vld [vmem:[%s1 + $0x158] sm:$0xf]
  %v146 = vld [vmem:[%s1 + $0x15c] sm:$0xf]
  %v147 = vld [vmem:[%s1 + $0x160] sm:$0xf]
  %v148 = vld [vmem:[%s1 + $0x164] sm:$0xf]
  %v149 = vld [vmem:[%s1 + $0x168] sm:$0xf]
  %v150 = vld [vmem:[%s1 + $0x16c] sm:$0xf]
  %v151 = vld [vmem:[%s1 + $0x170] sm:$0xf]
  %v152 = vld [vmem:[%s1 + $0x174] sm:$0xf]
  %v153 = vld [vmem:[%s1 + $0x178] sm:$0xf]
  %v154 = vld [vmem:[%s1 + $0x17c] sm:$0xf]
  %v155 = vld [vmem:[%s2] sm:$0x1]
  %v157 = vlaneseq
  %v158 = vshrl.u32 %v157, 7
  %v159 = vsub.s32 0, %v158
  %v160 = vrot.slane %v155, %v159
  %v195 = vunpack.c.l.b16 %v26
  %v196 = vunpack.c.h.b16 %v26
  %v197 = vunpack.c.l.b16 %v27
  %v198 = vunpack.c.h.b16 %v27
  %v199 = vunpack.c.l.b16 %v28
  %v200 = vunpack.c.h.b16 %v28
  %v201 = vunpack.c.l.b16 %v29
  %v202 = vunpack.c.h.b16 %v29
  %v203 = vunpack.c.l.b16 %v30
  %v204 = vunpack.c.h.b16 %v30
  %v205 = vunpack.c.l.b16 %v31
  %v206 = vunpack.c.h.b16 %v31
  %v207 = vunpack.c.l.b16 %v32
  %v208 = vunpack.c.h.b16 %v32
  %v209 = vunpack.c.l.b16 %v33
  %v210 = vunpack.c.h.b16 %v33
  %v211 = vunpack.c.l.b16 %v34
  %v212 = vunpack.c.h.b16 %v34
  %v213 = vunpack.c.l.b16 %v35
  %v214 = vunpack.c.h.b16 %v35
  %v215 = vunpack.c.l.b16 %v36
  %v216 = vunpack.c.h.b16 %v36
  %v217 = vunpack.c.l.b16 %v37
  %v218 = vunpack.c.h.b16 %v37
  %v219 = vunpack.c.l.b16 %v38
  %v220 = vunpack.c.h.b16 %v38
  %v221 = vunpack.c.l.b16 %v39
  %v222 = vunpack.c.h.b16 %v39
  %v223 = vunpack.c.l.b16 %v40
  %v224 = vunpack.c.h.b16 %v40
  %v225 = vunpack.c.l.b16 %v41
  %v226 = vunpack.c.h.b16 %v41
  %v227 = vunpack.c.l.b16 %v42
  %v228 = vunpack.c.h.b16 %v42
  %v229 = vunpack.c.l.b16 %v43
  %v230 = vunpack.c.h.b16 %v43
  %v231 = vunpack.c.l.b16 %v44
  %v232 = vunpack.c.h.b16 %v44
  %v233 = vunpack.c.l.b16 %v45
  %v234 = vunpack.c.h.b16 %v45
  %v235 = vunpack.c.l.b16 %v46
  %v236 = vunpack.c.h.b16 %v46
  %v237 = vunpack.c.l.b16 %v47
  %v238 = vunpack.c.h.b16 %v47
  %v239 = vunpack.c.l.b16 %v48
  %v240 = vunpack.c.h.b16 %v48
  %v241 = vunpack.c.l.b16 %v49
  %v242 = vunpack.c.h.b16 %v49
  %v243 = vunpack.c.l.b16 %v50
  %v244 = vunpack.c.h.b16 %v50
  %v245 = vunpack.c.l.b16 %v51
  %v246 = vunpack.c.h.b16 %v51
  %v247 = vunpack.c.l.b16 %v52
  %v248 = vunpack.c.h.b16 %v52
  %v249 = vunpack.c.l.b16 %v53
  %v250 = vunpack.c.h.b16 %v53
  %v251 = vunpack.c.l.b16 %v54
  %v252 = vunpack.c.h.b16 %v54
  %v253 = vunpack.c.l.b16 %v55
  %v254 = vunpack.c.h.b16 %v55
  %v255 = vunpack.c.l.b16 %v56
  %v256 = vunpack.c.h.b16 %v56
  %v257 = vunpack.c.l.b16 %v57
  %v258 = vunpack.c.h.b16 %v57
  %v259 = vunpack.c.l.b16 %v58
  %v260 = vunpack.c.h.b16 %v58
  %v261 = vpack.c.b16 %v201, %v195
  %v262 = vpack.c.b16 %v202, %v196
  %v263 = vpack.c.b16 %v203, %v197
  %v264 = vpack.c.b16 %v204, %v198
  %v265 = vpack.c.b16 %v205, %v199
  %v266 = vpack.c.b16 %v206, %v200
  %v267 = vpack.c.b16 %v213, %v207
  %v268 = vpack.c.b16 %v214, %v208
  %v269 = vpack.c.b16 %v215, %v209
  %v270 = vpack.c.b16 %v216, %v210
  %v271 = vpack.c.b16 %v217, %v211
  %v272 = vpack.c.b16 %v218, %v212
  %v273 = vpack.c.b16 %v225, %v219
  %v274 = vpack.c.b16 %v226, %v220
  %v275 = vpack.c.b16 %v227, %v221
  %v276 = vpack.c.b16 %v228, %v222
  %v277 = vpack.c.b16 %v229, %v223
  %v278 = vpack.c.b16 %v230, %v224
  %v279 = vpack.c.b16 %v237, %v231
  %v280 = vpack.c.b16 %v238, %v232
  %v281 = vpack.c.b16 %v239, %v233
  %v282 = vpack.c.b16 %v240, %v234
  %v283 = vpack.c.b16 %v241, %v235
  %v284 = vpack.c.b16 %v242, %v236
  %v285 = vpack.c.b16 %v249, %v243
  %v286 = vpack.c.b16 %v250, %v244
  %v287 = vpack.c.b16 %v251, %v245
  %v288 = vpack.c.b16 %v252, %v246
  %v289 = vpack.c.b16 %v253, %v247
  %v290 = vpack.c.b16 %v254, %v248
  %v291 = vpack.c.b16 %v255, %v255
  %v292 = vpack.c.b16 %v256, %v256
  %v293 = vpack.c.b16 %v257, %v257
  %v294 = vpack.c.b16 %v258, %v258
  %v295 = vpack.c.b16 %v259, %v259
  %v296 = vpack.c.b16 %v260, %v260
  %v429 = vunpack.c.l.b16 %v59
  %v430 = vunpack.c.l.b16 %v60
  %v431 = vunpack.c.l.b16 %v61
  %v432 = vunpack.c.l.b16 %v62
  %v433 = vunpack.c.l.b16 %v63
  %v434 = vunpack.c.l.b16 %v64
  %v435 = vunpack.c.l.b16 %v65
  %v436 = vunpack.c.l.b16 %v66
  %v437 = vunpack.c.l.b16 %v67
  %v438 = vunpack.c.l.b16 %v68
  %v439 = vunpack.c.l.b16 %v69
  %v440 = vunpack.c.l.b16 %v70
  %v441 = vunpack.c.l.b16 %v71
  %v442 = vunpack.c.l.b16 %v72
  %v443 = vunpack.c.l.b16 %v73
  %v444 = vunpack.c.l.b16 %v74
  %v445 = vunpack.c.l.b16 %v75
  %v446 = vunpack.c.l.b16 %v76
  %v447 = vunpack.c.l.b16 %v77
  %v448 = vunpack.c.l.b16 %v78
  %v449 = vunpack.c.l.b16 %v79
  %v450 = vunpack.c.l.b16 %v80
  %v451 = vunpack.c.l.b16 %v81
  %v452 = vunpack.c.l.b16 %v82
  %v453 = vunpack.c.l.b16 %v83
  %v454 = vunpack.c.l.b16 %v84
  %v455 = vunpack.c.l.b16 %v85
  %v456 = vunpack.c.l.b16 %v86
  %v457 = vunpack.c.l.b16 %v87
  %v458 = vunpack.c.l.b16 %v88
  %v459 = vunpack.c.l.b16 %v89
  %v460 = vunpack.c.l.b16 %v90
  %v461 = vunpack.c.l.b16 %v91
  %v462 = vunpack.c.l.b16 %v92
  %v463 = vunpack.c.l.b16 %v93
  %v464 = vunpack.c.l.b16 %v94
  %v465 = vunpack.c.l.b16 %v95
  %v466 = vunpack.c.l.b16 %v96
  %v467 = vunpack.c.l.b16 %v97
  %v468 = vunpack.c.l.b16 %v98
  %v469 = vunpack.c.l.b16 %v99
  %v470 = vunpack.c.l.b16 %v100
  %v471 = vunpack.c.l.b16 %v101
  %v472 = vunpack.c.l.b16 %v102
  %v473 = vunpack.c.l.b16 %v103
  %v474 = vunpack.c.l.b16 %v104
  %v475 = vunpack.c.l.b16 %v105
  %v476 = vunpack.c.l.b16 %v106
  %v477 = vunpack.c.l.b16 %v107
  %v478 = vunpack.c.l.b16 %v108
  %v479 = vunpack.c.l.b16 %v109
  %v480 = vunpack.c.l.b16 %v110
  %v481 = vunpack.c.l.b16 %v111
  %v482 = vunpack.c.l.b16 %v112
  %v483 = vunpack.c.l.b16 %v113
  %v484 = vunpack.c.l.b16 %v114
  %v485 = vunpack.c.l.b16 %v115
  %v486 = vunpack.c.l.b16 %v116
  %v487 = vunpack.c.l.b16 %v117
  %v488 = vunpack.c.l.b16 %v118
  %v489 = vunpack.c.l.b16 %v119
  %v490 = vunpack.c.l.b16 %v120
  %v491 = vunpack.c.l.b16 %v121
  %v492 = vunpack.c.l.b16 %v122
  %v493 = vunpack.c.l.b16 %v123
  %v494 = vunpack.c.l.b16 %v124
  %v495 = vunpack.c.l.b16 %v125
  %v496 = vunpack.c.l.b16 %v126
  %v497 = vunpack.c.l.b16 %v127
  %v498 = vunpack.c.l.b16 %v128
  %v499 = vunpack.c.l.b16 %v129
  %v500 = vunpack.c.l.b16 %v130
  %v501 = vunpack.c.l.b16 %v131
  %v502 = vunpack.c.l.b16 %v132
  %v503 = vunpack.c.l.b16 %v133
  %v504 = vunpack.c.l.b16 %v134
  %v505 = vunpack.c.l.b16 %v135
  %v506 = vunpack.c.l.b16 %v136
  %v507 = vunpack.c.l.b16 %v137
  %v508 = vunpack.c.l.b16 %v138
  %v509 = vunpack.c.l.b16 %v139
  %v510 = vunpack.c.l.b16 %v140
  %v511 = vunpack.c.l.b16 %v141
  %v512 = vunpack.c.l.b16 %v142
  %v513 = vunpack.c.l.b16 %v143
  %v514 = vunpack.c.l.b16 %v144
  %v515 = vunpack.c.l.b16 %v145
  %v516 = vunpack.c.l.b16 %v146
  %v517 = vunpack.c.l.b16 %v147
  %v518 = vunpack.c.l.b16 %v148
  %v519 = vunpack.c.l.b16 %v149
  %v520 = vunpack.c.l.b16 %v150
  %v521 = vunpack.c.l.b16 %v151
  %v522 = vunpack.c.l.b16 %v152
  %v523 = vunpack.c.l.b16 %v153
  %v524 = vunpack.c.l.b16 %v154
  %v525 = vpack.c.b16 %v430, %v429
  %v526 = vpack.c.b16 %v432, %v431
  %v527 = vpack.c.b16 %v434, %v433
  %v528 = vpack.c.b16 %v436, %v435
  %v529 = vpack.c.b16 %v438, %v437
  %v530 = vpack.c.b16 %v440, %v439
  %v531 = vpack.c.b16 %v442, %v441
  %v532 = vpack.c.b16 %v444, %v443
  %v533 = vpack.c.b16 %v446, %v445
  %v534 = vpack.c.b16 %v448, %v447
  %v535 = vpack.c.b16 %v450, %v449
  %v536 = vpack.c.b16 %v452, %v451
  %v537 = vpack.c.b16 %v454, %v453
  %v538 = vpack.c.b16 %v456, %v455
  %v539 = vpack.c.b16 %v458, %v457
  %v540 = vpack.c.b16 %v460, %v459
  %v541 = vpack.c.b16 %v462, %v461
  %v542 = vpack.c.b16 %v464, %v463
  %v543 = vpack.c.b16 %v466, %v465
  %v544 = vpack.c.b16 %v468, %v467
  %v545 = vpack.c.b16 %v470, %v469
  %v546 = vpack.c.b16 %v472, %v471
  %v547 = vpack.c.b16 %v474, %v473
  %v548 = vpack.c.b16 %v476, %v475
  %v549 = vpack.c.b16 %v478, %v477
  %v550 = vpack.c.b16 %v480, %v479
  %v551 = vpack.c.b16 %v482, %v481
  %v552 = vpack.c.b16 %v484, %v483
  %v553 = vpack.c.b16 %v486, %v485
  %v554 = vpack.c.b16 %v488, %v487
  %v555 = vpack.c.b16 %v490, %v489
  %v556 = vpack.c.b16 %v492, %v491
  %v557 = vpack.c.b16 %v494, %v493
  %v558 = vpack.c.b16 %v496, %v495
  %v559 = vpack.c.b16 %v498, %v497
  %v560 = vpack.c.b16 %v500, %v499
  %v561 = vpack.c.b16 %v502, %v501
  %v562 = vpack.c.b16 %v504, %v503
  %v563 = vpack.c.b16 %v506, %v505
  %v564 = vpack.c.b16 %v508, %v507
  %v565 = vpack.c.b16 %v510, %v509
  %v566 = vpack.c.b16 %v512, %v511
  %v567 = vpack.c.b16 %v514, %v513
  %v568 = vpack.c.b16 %v516, %v515
  %v569 = vpack.c.b16 %v518, %v517
  %v570 = vpack.c.b16 %v520, %v519
  %v571 = vpack.c.b16 %v522, %v521
  %v572 = vpack.c.b16 %v524, %v523
  %621 = vmatprep.subr.bf16.mxu0 0
  %622 = vmatpush1.bf16.msra.mxu0 %v525
  %623 = vmatprep.subr.bf16.mxu0 0
  %624 = vmatpush1.bf16.msra.mxu0 %v526
  %625 = vmatprep.subr.bf16.mxu0 0
  %626 = vmatpush1.bf16.msra.mxu0 %v527
  %627 = vmatprep.subr.bf16.mxu0 0
  %628 = vmatpush1.bf16.msra.mxu0 %v528
  %629 = vmatprep.subr.bf16.mxu0 0
  %630 = vmatpush1.bf16.msra.mxu0 %v529
  %631 = vmatprep.subr.bf16.mxu0 0
  %632 = vmatpush1.bf16.msra.mxu0 %v530
  %633 = vmatprep.subr.bf16.mxu0 0
  %634 = vmatpush1.bf16.msra.mxu0 %v531
  %635 = vmatprep.subr.bf16.mxu0 0
  %636 = vmatpush1.bf16.msra.mxu0 %v532
  %637 = vmatprep.subr.bf16.mxu0 0
  %638 = vmatpush1.bf16.msra.mxu0 %v533
  %639 = vmatprep.subr.bf16.mxu0 0
  %640 = vmatpush1.bf16.msra.mxu0 %v534
  %641 = vmatprep.subr.bf16.mxu0 0
  %642 = vmatpush1.bf16.msra.mxu0 %v535
  %643 = vmatprep.subr.bf16.mxu0 0
  %644 = vmatpush1.bf16.msra.mxu0 %v536
  %645 = vmatprep.subr.bf16.mxu0 0
  %646 = vmatpush1.bf16.msra.mxu0 %v537
  %647 = vmatprep.subr.bf16.mxu0 0
  %648 = vmatpush1.bf16.msra.mxu0 %v538
  %649 = vmatprep.subr.bf16.mxu0 0
  %650 = vmatpush1.bf16.msra.mxu0 %v539
  %651 = vmatprep.subr.bf16.mxu0 0
  %652 = vmatpush1.bf16.msra.mxu0 %v540
  %653 = vmatprep.mubr.bf16.mxu0 %v262
  %654 = vmatmul.mubr.bf16.gmra.mrb[0].mxu0 %v261
  %v655 = vpop.f32.mrb[0].mxu0
  %v656 = vadd.f32 %v160, %v655
  %v657 = vpop.f32.mrb[0].mxu0
  %v658 = vpop.f32.mrb[0].mxu0
  %v659 = vadd.f32 %v160, %v658
  %v660 = vpop.f32.mrb[0].mxu0
  %661 = vmatprep.mubr.bf16.mxu0 %v268
  %662 = vmatmul.mubr.bf16.gmra.mrb[0].mxu0 %v267
  %v663 = vpop.f32.mrb[0].mxu0
  %v664 = vadd.f32 %v160, %v663
  %v665 = vpop.f32.mrb[0].mxu0
  %v666 = vpop.f32.mrb[0].mxu0
  %v667 = vadd.f32 %v160, %v666
  %v668 = vpop.f32.mrb[0].mxu0
  %669 = vmatprep.mubr.bf16.mxu0 %v274
  %670 = vmatmul.mubr.bf16.gmra.mrb[0].mxu0 %v273
  %v671 = vpop.f32.mrb[0].mxu0
  %v672 = vadd.f32 %v160, %v671
  %v673 = vpop.f32.mrb[0].mxu0
  %v674 = vpop.f32.mrb[0].mxu0
  %v675 = vadd.f32 %v160, %v674
  %v676 = vpop.f32.mrb[0].mxu0
  %677 = vmatprep.mubr.bf16.mxu0 %v280
  %678 = vmatmul.mubr.bf16.gmra.mrb[0].mxu0 %v279
  %v679 = vpop.f32.mrb[0].mxu0
  %v680 = vadd.f32 %v160, %v679
  %v681 = vpop.f32.mrb[0].mxu0
  %v682 = vpop.f32.mrb[0].mxu0
  %v683 = vadd.f32 %v160, %v682
  %v684 = vpop.f32.mrb[0].mxu0
  %685 = vmatprep.mubr.bf16.mxu0 %v286
  %686 = vmatmul.mubr.bf16.gmra.mrb[0].mxu0 %v285
  %v687 = vpop.f32.mrb[0].mxu0
  %v688 = vadd.f32 %v160, %v687
  %v689 = vpop.f32.mrb[0].mxu0
  %v690 = vpop.f32.mrb[0].mxu0
  %v691 = vadd.f32 %v160, %v690
  %v692 = vpop.f32.mrb[0].mxu0
  %693 = vmatprep.mubr.bf16.mxu0 %v292
  %694 = vmatmul.mubr.bf16.gmra.mrb[0].mxu0 %v291
  %v695 = vpop.f32.mrb[0].mxu0
  %v696 = vadd.f32 %v160, %v695
  %v697 = vpop.f32.mrb[0].mxu0
  %v698 = vpop.f32.mrb[0].mxu0
  %v699 = vpop.f32.mrb[0].mxu0
  %700 = vdwg.mxu0
  %701 = vmatprep.subr.bf16.mxu0 0
  %702 = vmatpush1.bf16.msra.mxu0 %v541
  %703 = vmatprep.subr.bf16.mxu0 0
  %704 = vmatpush1.bf16.msra.mxu0 %v542
  %705 = vmatprep.subr.bf16.mxu0 0
  %706 = vmatpush1.bf16.msra.mxu0 %v543
  %707 = vmatprep.subr.bf16.mxu0 0
  %708 = vmatpush1.bf16.msra.mxu0 %v544
  %709 = vmatprep.subr.bf16.mxu0 0
  %710 = vmatpush1.bf16.msra.mxu0 %v545
  %711 = vmatprep.subr.bf16.mxu0 0
  %712 = vmatpush1.bf16.msra.mxu0 %v546
  %713 = vmatprep.subr.bf16.mxu0 0
  %714 = vmatpush1.bf16.msra.mxu0 %v547
  %715 = vmatprep.subr.bf16.mxu0 0
  %716 = vmatpush1.bf16.msra.mxu0 %v548
  %717 = vmatprep.subr.bf16.mxu0 0
  %718 = vmatpush1.bf16.msra.mxu0 %v549
  %719 = vmatprep.subr.bf16.mxu0 0
  %720 = vmatpush1.bf16.msra.mxu0 %v550
  %721 = vmatprep.subr.bf16.mxu0 0
  %722 = vmatpush1.bf16.msra.mxu0 %v551
  %723 = vmatprep.subr.bf16.mxu0 0
  %724 = vmatpush1.bf16.msra.mxu0 %v552
  %725 = vmatprep.subr.bf16.mxu0 0
  %726 = vmatpush1.bf16.msra.mxu0 %v553
  %727 = vmatprep.subr.bf16.mxu0 0
  %728 = vmatpush1.bf16.msra.mxu0 %v554
  %729 = vmatprep.subr.bf16.mxu0 0
  %730 = vmatpush1.bf16.msra.mxu0 %v555
  %731 = vmatprep.subr.bf16.mxu0 0
  %732 = vmatpush1.bf16.msra.mxu0 %v556
  %733 = vmatprep.mubr.bf16.mxu0 %v264
  %734 = vmatmul.mubr.bf16.gmra.mrb[0].mxu0 %v263
  %v735 = vpop.f32.mrb[0].mxu0
  %v736 = vadd.f32 %v656, %v735
  %v737 = vpop.f32.mrb[0].mxu0
  %v738 = vpop.f32.mrb[0].mxu0
  %v739 = vadd.f32 %v659, %v738
  %v740 = vpop.f32.mrb[0].mxu0
  %741 = vmatprep.mubr.bf16.mxu0 %v270
  %742 = vmatmul.mubr.bf16.gmra.mrb[0].mxu0 %v269
  %v743 = vpop.f32.mrb[0].mxu0
  %v744 = vadd.f32 %v664, %v743
  %v745 = vpop.f32.mrb[0].mxu0
  %v746 = vpop.f32.mrb[0].mxu0
  %v747 = vadd.f32 %v667, %v746
  %v748 = vpop.f32.mrb[0].mxu0
  %749 = vmatprep.mubr.bf16.mxu0 %v276
  %750 = vmatmul.mubr.bf16.gmra.mrb[0].mxu0 %v275
  %v751 = vpop.f32.mrb[0].mxu0
  %v752 = vadd.f32 %v672, %v751
  %v753 = vpop.f32.mrb[0].mxu0
  %v754 = vpop.f32.mrb[0].mxu0
  %v755 = vadd.f32 %v675, %v754
  %v756 = vpop.f32.mrb[0].mxu0
  %757 = vmatprep.mubr.bf16.mxu0 %v282
  %758 = vmatmul.mubr.bf16.gmra.mrb[0].mxu0 %v281
  %v759 = vpop.f32.mrb[0].mxu0
  %v760 = vadd.f32 %v680, %v759
  %v761 = vpop.f32.mrb[0].mxu0
  %v762 = vpop.f32.mrb[0].mxu0
  %v763 = vadd.f32 %v683, %v762
  %v764 = vpop.f32.mrb[0].mxu0
  %765 = vmatprep.mubr.bf16.mxu0 %v288
  %766 = vmatmul.mubr.bf16.gmra.mrb[0].mxu0 %v287
  %v767 = vpop.f32.mrb[0].mxu0
  %v768 = vadd.f32 %v688, %v767
  %v769 = vpop.f32.mrb[0].mxu0
  %v770 = vpop.f32.mrb[0].mxu0
  %v771 = vadd.f32 %v691, %v770
  %v772 = vpop.f32.mrb[0].mxu0
  %773 = vmatprep.mubr.bf16.mxu0 %v294
  %774 = vmatmul.mubr.bf16.gmra.mrb[0].mxu0 %v293
  %v775 = vpop.f32.mrb[0].mxu0
  %v776 = vadd.f32 %v696, %v775
  %v777 = vpop.f32.mrb[0].mxu0
  %v778 = vpop.f32.mrb[0].mxu0
  %v779 = vpop.f32.mrb[0].mxu0
  %780 = vdwg.mxu0
  %781 = vmatprep.subr.bf16.mxu0 0
  %782 = vmatpush1.bf16.msra.mxu0 %v557
  %783 = vmatprep.subr.bf16.mxu0 0
  %784 = vmatpush1.bf16.msra.mxu0 %v558
  %785 = vmatprep.subr.bf16.mxu0 0
  %786 = vmatpush1.bf16.msra.mxu0 %v559
  %787 = vmatprep.subr.bf16.mxu0 0
  %788 = vmatpush1.bf16.msra.mxu0 %v560
  %789 = vmatprep.subr.bf16.mxu0 0
  %790 = vmatpush1.bf16.msra.mxu0 %v561
  %791 = vmatprep.subr.bf16.mxu0 0
  %792 = vmatpush1.bf16.msra.mxu0 %v562
  %793 = vmatprep.subr.bf16.mxu0 0
  %794 = vmatpush1.bf16.msra.mxu0 %v563
  %795 = vmatprep.subr.bf16.mxu0 0
  %796 = vmatpush1.bf16.msra.mxu0 %v564
  %797 = vmatprep.subr.bf16.mxu0 0
  %798 = vmatpush1.bf16.msra.mxu0 %v565
  %799 = vmatprep.subr.bf16.mxu0 0
  %800 = vmatpush1.bf16.msra.mxu0 %v566
  %801 = vmatprep.subr.bf16.mxu0 0
  %802 = vmatpush1.bf16.msra.mxu0 %v567
  %803 = vmatprep.subr.bf16.mxu0 0
  %804 = vmatpush1.bf16.msra.mxu0 %v568
  %805 = vmatprep.subr.bf16.mxu0 0
  %806 = vmatpush1.bf16.msra.mxu0 %v569
  %807 = vmatprep.subr.bf16.mxu0 0
  %808 = vmatpush1.bf16.msra.mxu0 %v570
  %809 = vmatprep.subr.bf16.mxu0 0
  %810 = vmatpush1.bf16.msra.mxu0 %v571
  %811 = vmatprep.subr.bf16.mxu0 0
  %812 = vmatpush1.bf16.msra.mxu0 %v572
  %813 = vmatprep.mubr.bf16.mxu0 %v266
  %814 = vmatmul.mubr.bf16.gmra.mrb[0].mxu0 %v265
  %v815 = vpop.f32.mrb[0].mxu0
  %v816 = vadd.f32 %v736, %v815
  %v817 = vpop.f32.mrb[0].mxu0
  %v818 = vpop.f32.mrb[0].mxu0
  %v819 = vadd.f32 %v739, %v818
  %v820 = vpop.f32.mrb[0].mxu0
  %821 = vmatprep.mubr.bf16.mxu0 %v272
  %822 = vmatmul.mubr.bf16.gmra.mrb[0].mxu0 %v271
  %v823 = vpop.f32.mrb[0].mxu0
  %v824 = vadd.f32 %v744, %v823
  %v825 = vpop.f32.mrb[0].mxu0
  %v826 = vpop.f32.mrb[0].mxu0
  %v827 = vadd.f32 %v747, %v826
  %v828 = vpop.f32.mrb[0].mxu0
  %829 = vmatprep.mubr.bf16.mxu0 %v278
  %830 = vmatmul.mubr.bf16.gmra.mrb[0].mxu0 %v277
  %v831 = vpop.f32.mrb[0].mxu0
  %v832 = vadd.f32 %v752, %v831
  %v833 = vpop.f32.mrb[0].mxu0
  %v834 = vpop.f32.mrb[0].mxu0
  %v835 = vadd.f32 %v755, %v834
  %v836 = vpop.f32.mrb[0].mxu0
  %837 = vmatprep.mubr.bf16.mxu0 %v284
  %838 = vmatmul.mubr.bf16.gmra.mrb[0].mxu0 %v283
  %v839 = vpop.f32.mrb[0].mxu0
  %v840 = vadd.f32 %v760, %v839
  %v841 = vpop.f32.mrb[0].mxu0
  %v842 = vpop.f32.mrb[0].mxu0
  %v843 = vadd.f32 %v763, %v842
  %v844 = vpop.f32.mrb[0].mxu0
  %845 = vmatprep.mubr.bf16.mxu0 %v290
  %846 = vmatmul.mubr.bf16.gmra.mrb[0].mxu0 %v289
  %v847 = vpop.f32.mrb[0].mxu0
  %v848 = vadd.f32 %v768, %v847
  %v849 = vpop.f32.mrb[0].mxu0
  %v850 = vpop.f32.mrb[0].mxu0
  %v851 = vadd.f32 %v771, %v850
  %v852 = vpop.f32.mrb[0].mxu0
  %853 = vmatprep.mubr.bf16.mxu0 %v296
  %854 = vmatmul.mubr.bf16.gmra.mrb[0].mxu0 %v295
  %v855 = vpop.f32.mrb[0].mxu0
  %v856 = vadd.f32 %v776, %v855
  %v857 = vpop.f32.mrb[0].mxu0
  %v858 = vpop.f32.mrb[0].mxu0
  %v859 = vpop.f32.mrb[0].mxu0
  %860 = vdwg.mxu0
  %vm861 = vcmp.ge.f32.partialorder %v816, 0.0
  %vm862 = vcmp.ge.f32.partialorder %v819, 0.0
  %vm863 = vcmp.ge.f32.partialorder %v824, 0.0
  %vm864 = vcmp.ge.f32.partialorder %v827, 0.0
  %vm865 = vcmp.ge.f32.partialorder %v832, 0.0
  %vm866 = vcmp.ge.f32.partialorder %v835, 0.0
  %vm867 = vcmp.ge.f32.partialorder %v840, 0.0
  %vm868 = vcmp.ge.f32.partialorder %v843, 0.0
  %vm869 = vcmp.ge.f32.partialorder %v848, 0.0
  %vm870 = vcmp.ge.f32.partialorder %v851, 0.0
  %vm871 = vcmp.ge.f32.partialorder %v856, 0.0
  %v872 = vmul.f32 %v816, 0.2
  %v873 = vmul.f32 %v819, 0.2
  %v874 = vmul.f32 %v824, 0.2
  %v875 = vmul.f32 %v827, 0.2
  %v876 = vmul.f32 %v832, 0.2
  %v877 = vmul.f32 %v835, 0.2
  %v878 = vmul.f32 %v840, 0.2
  %v879 = vmul.f32 %v843, 0.2
  %v880 = vmul.f32 %v848, 0.2
  %v881 = vmul.f32 %v851, 0.2
  %v882 = vmul.f32 %v856, 0.2
  %v883 = vsel %vm861, %v816, %v872
  %v884 = vsel %vm862, %v819, %v873
  %v885 = vsel %vm863, %v824, %v874
  %v886 = vsel %vm864, %v827, %v875
  %v887 = vsel %vm865, %v832, %v876
  %v888 = vsel %vm866, %v835, %v877
  %v889 = vsel %vm867, %v840, %v878
  %v890 = vsel %vm868, %v843, %v879
  %v891 = vsel %vm869, %v848, %v880
  %v892 = vsel %vm870, %v851, %v881
  %v893 = vsel %vm871, %v856, %v882
  %v894 = vld [vmem:[%s3] sm:$0xff]
  %v895 = vld [vmem:[%s3 + $0x8] sm:$0xff]
  %v896 = vld [vmem:[%s3 + $0x10] sm:$0xff]
  %v897 = vld [vmem:[%s3 + $0x18] sm:$0xff]
  %v898 = vld [vmem:[%s3 + $0x20] sm:$0xff]
  %v899 = vld [vmem:[%s3 + $0x28] sm:$0xff]
  %v900 = vld [vmem:[%s3 + $0x30] sm:$0xff]
  %v901 = vld [vmem:[%s3 + $0x38] sm:$0xff]
  %v902 = vld [vmem:[%s3 + $0x40] sm:$0xff]
  %v903 = vld [vmem:[%s3 + $0x48] sm:$0xff]
  %v904 = vld [vmem:[%s3 + $0x50] sm:$0xff]
  %v905 = vmul.f32 %v883, %v894
  %v906 = vmul.f32 %v884, %v895
  %v907 = vmul.f32 %v885, %v896
  %v908 = vmul.f32 %v886, %v897
  %v909 = vmul.f32 %v887, %v898
  %v910 = vmul.f32 %v888, %v899
  %v911 = vmul.f32 %v889, %v900
  %v912 = vmul.f32 %v890, %v901
  %v913 = vmul.f32 %v891, %v902
  %v914 = vmul.f32 %v892, %v903
  %v915 = vmul.f32 %v893, %v904
  %v916 = vld [vmem:[%s4] sm:$0x3]
  %vm917 = vcmask 719872
  %v919 = vsel %vm917, %v916, 0
  %921 = vmatprep.subr.mxu0 0.0
  %922 = vmatpush1.msra.mxu0 %v905
  %923 = vmatprep.subr.mxu0 0.0
  %924 = vmatpush1.msra.mxu0 %v906
  %925 = vmatprep.subr.mxu0 0.0
  %926 = vmatpush1.msra.mxu0 %v907
  %927 = vmatprep.subr.mxu0 0.0
  %928 = vmatpush1.msra.mxu0 %v908
  %929 = vmatprep.subr.mxu0 0.0
  %930 = vmatpush1.msra.mxu0 %v909
  %931 = vmatprep.subr.mxu0 0.0
  %932 = vmatpush1.msra.mxu0 %v910
  %933 = vmatprep.subr.mxu0 0.0
  %934 = vmatpush1.msra.mxu0 %v911
  %935 = vmatprep.subr.mxu0 0.0
  %936 = vmatpush1.msra.mxu0 %v912
  %937 = vmatprep.subr.mxu0 0.0
  %938 = vmatpush1.msra.mxu0 %v913
  %939 = vmatprep.subr.mxu0 0.0
  %940 = vmatpush1.msra.mxu0 %v914
  %941 = vmatprep.subr.mxu0 0.0
  %942 = vmatpush1.msra.mxu0 %v915
  %943 = vmatprep.subr.mxu0 0.0
  %944 = vmatpush1.msra.mxu0 0.0
  %945 = vmatprep.subr.mxu0 0.0
  %946 = vmatpush1.msra.mxu0 0.0
  %947 = vmatprep.subr.mxu0 0.0
  %948 = vmatpush1.msra.mxu0 0.0
  %949 = vmatprep.subr.mxu0 0.0
  %950 = vmatpush1.msra.mxu0 0.0
  %951 = vmatprep.subr.mxu0 0.0
  %952 = vmatpush1.msra.mxu0 0.0
  %953 = vmatprep.subr.mxu0 0.0
  %954 = vmatpush1.msra.mxu0 0.0
  %955 = vmatprep.subr.mxu0 0.0
  %956 = vmatpush1.msra.mxu0 0.0
  %957 = vmatprep.subr.mxu0 0.0
  %958 = vmatpush1.msra.mxu0 0.0
  %959 = vmatprep.subr.mxu0 0.0
  %960 = vmatpush1.msra.mxu0 0.0
  %961 = vmatprep.subr.mxu0 0.0
  %962 = vmatpush1.msra.mxu0 0.0
  %963 = vmatprep.subr.mxu0 0.0
  %964 = vmatpush1.msra.mxu0 0.0
  %965 = vmatprep.subr.mxu0 0.0
  %966 = vmatpush1.msra.mxu0 0.0
  %967 = vmatprep.subr.mxu0 0.0
  %968 = vmatpush1.msra.mxu0 0.0
  %969 = vmatprep.subr.mxu0 0.0
  %970 = vmatpush1.msra.mxu0 0.0
  %971 = vmatprep.subr.mxu0 0.0
  %972 = vmatpush1.msra.mxu0 0.0
  %973 = vmatprep.subr.mxu0 0.0
  %974 = vmatpush1.msra.mxu0 0.0
  %975 = vmatprep.subr.mxu0 0.0
  %976 = vmatpush1.msra.mxu0 0.0
  %977 = vmatprep.subr.mxu0 0.0
  %978 = vmatpush1.msra.mxu0 0.0
  %979 = vmatprep.subr.mxu0 0.0
  %980 = vmatpush1.msra.mxu0 0.0
  %981 = vmatprep.subr.mxu0 0.0
  %982 = vmatpush1.msra.mxu0 0.0
  %983 = vmatprep.subr.mxu0 0.0
  %984 = vmatpush1.msra.mxu0 0.0
  %985 = vmatprep.mubr.f32.mxu0 0.0
  %986 = vmatmul.mubr.f32.gmra.mrb[0].mxu0 %v919
  %v987 = vpop.f32.mrb[0].mxu0
  %v988 = vadd.f32 0.0, %v987
  %v989 = vpop.f32.mrb[0].mxu0
  %990 = vdwg.mxu0
  %vm991 = vcmask 517120
  %v992 = vsel %vm991, %v988, 0.0
  %993 = vadd.xlane.f32.xlu0 %v992
  %v994 = vpop.xlane.xlu0 %993
  %v995 = vld [vmem:[#allocation2] sm:$0x1]
  %v997 = vlaneseq
  %v998 = vshrl.u32 %v997, 7
  %v999 = vsub.s32 0, %v998
  %v1000 = vrot.slane %v995, %v999
  %v1002 = vadd.f32 %v994, %v1000
  %v1003 = vsub.f32 0.0, %v1002
  %v1004 = vmul.f32 %v1003, 1.442695
  %v1005 = vpow.pop %v1004
  %v1006 = vadd.f32 %v1005, 1.0
  %v1007 = vrcp.pop %v1006
  %v1008 = vmul.f32 1.0, %v1007
  %vm1009 = vcmask 1024
  %1010 = vst.msk [vmem:[%s6] sm:$0x3] %vm1009, %v1008
  // Predicated region
  $region26: #{discriminator_forward.7} parent=0 // pred_check
    _
  $region27: #{discriminator_forward.7} parent=0 // pred_check_branch
    %1012 = sbr.rel (0) target = $region29
  $region28: #{discriminator_forward.7} parent=0 // pred_region
    _
  $region29: #{discriminator_forward.7} parent=0 // pred_fallthru
    _
  // Predicated region
  $region30: #{discriminator_forward.7} parent=0 // pred_check
    _
  $region31: #{discriminator_forward.7} parent=0 // pred_check_branch
    %1014 = sbr.rel (0) target = $region33
  $region32: #{discriminator_forward.7} parent=0 // pred_region
    _
  $region33: #{discriminator_forward.7} parent=0 // pred_fallthru
    _

</llo_original>
